<compile_context>
chip_gen: v7x
topology: tpu7x:2x2x1
jax: 0.10.0
libtpu: 0.0.40
codegen_flags: <defaults>
</compile_context>

<pallas_src>
import functools
import math

import jax
import jax.numpy as jnp
from jax.experimental import pallas as pl
from jax.experimental.pallas import tpu as pltpu


def _round_up(x, m):
    return ((x + m - 1) // m) * m


def _layer_norm(x, gamma, beta, eps=1e-5):
    m = jnp.mean(x, axis=-1, keepdims=True)
    d = x - m
    var = jnp.mean(d * d, axis=-1, keepdims=True)
    return d * jax.lax.rsqrt(var + eps) * gamma + beta


def _mm(a, b):
    # MXU matmul: bf16 operands, f32 accumulation.
    return jnp.dot(a.astype(jnp.bfloat16), b.astype(jnp.bfloat16),
                   preferred_element_type=jnp.float32)


def _model_kernel(n_heads, n_vars, n_tokens,
                  tok_ref,
                  wemb_ref, bemb_ref,
                  wqkv_ref, bqkv_ref, wo_ref, bo_ref,
                  g1_ref, be1_ref, w1_ref, b1_ref, w2_ref, b2_ref,
                  g2_ref, be2_ref, gf_ref, bf_ref,
                  wp_ref, bp_ref, wh_ref, bh_ref,
                  out_ref):
    tok = tok_ref[...]                               # (Bblk, Vp, L) f32
    bblk, vp, seq = tok.shape
    d_model = wemb_ref.shape[1]
    e_layers = wqkv_ref.shape[0]
    dh = d_model // n_heads
    scale = 1.0 / math.sqrt(dh)
    t = bblk * vp

    # ---- use_norm: normalize each real variate token over time (lane axis) ----
    mean = jnp.mean(tok, axis=-1, keepdims=True)
    cent = tok - mean
    var = jnp.mean(cent * cent, axis=-1, keepdims=True)       # unbiased=False
    normed = cent * jax.lax.rsqrt(var + 1e-5)
    row_id = jax.lax.broadcasted_iota(jnp.int32, (vp, seq), 0)
    x_in = jnp.where(row_id < n_vars, normed, tok)            # mark/pad rows untouched

    # ---- DataEmbedding_inverted: Linear(seq_len -> d_model) on variate tokens ----
    enc = _mm(x_in.reshape(t, seq), wemb_ref[...]) + bemb_ref[...]   # (T, D) f32

    # key-side mask: padded tokens are never attended to
    col_id = jax.lax.broadcasted_iota(jnp.int32, (1, vp), 1)
    key_bias = jnp.where(col_id < n_tokens, 0.0, -1e30)

    # ---- encoder layers ----
    for l in range(e_layers):
        qkv = _mm(enc, wqkv_ref[l]) + bqkv_ref[l]             # fused QKV  (T, 3D)
        qkv3 = qkv.reshape(bblk, vp, 3 * d_model).astype(jnp.bfloat16)
        wo_l = wo_ref[l]                                       # (D, D) f32
        attn = jnp.zeros((t, d_model), jnp.float32)
        for h in range(n_heads):
            q = qkv3[:, :, h * dh:(h + 1) * dh]
            k = qkv3[:, :, d_model + h * dh: d_model + (h + 1) * dh]
            v = qkv3[:, :, 2 * d_model + h * dh: 2 * d_model + (h + 1) * dh]
            s = jnp.einsum('bqd,bkd->bqk', q, k,
                           preferred_element_type=jnp.float32) * scale
            s = s + key_bias
            m = jnp.max(s, axis=-1, keepdims=True)
            p = jnp.exp(s - m)
            p = p * pl.reciprocal(jnp.sum(p, axis=-1, keepdims=True), approx=True)
            o = jnp.einsum('bqk,bkd->bqd', p.astype(jnp.bfloat16), v,
                           preferred_element_type=jnp.float32)          # (Bblk, Vp, dh)
            # accumulate head directly through its slice of the output projection
            attn = attn + _mm(o.reshape(t, dh), wo_l[h * dh:(h + 1) * dh, :])
        attn = attn + bo_ref[l]

        xres = enc + attn
        xn = _layer_norm(xres, g1_ref[l], be1_ref[l])
        y = _mm(xn, w1_ref[l]) + b1_ref[l]                     # conv1 (k=1) == Linear
        y = jnp.maximum(y, 0.0)                                # activation = relu
        y = _mm(y, w2_ref[l]) + b2_ref[l]                      # conv2 (k=1) == Linear
        enc = _layer_norm(xn + y, g2_ref[l], be2_ref[l])

    # ---- encoder final LayerNorm ----
    enc = _layer_norm(enc, gf_ref[...], bf_ref[...])

    # ---- projector: Linear(d_model -> seq_len) on every token ----
    dec = _mm(enc, wp_ref[...]) + bp_ref[...]                  # (T, L)
    dec3 = dec.reshape(bblk, vp, seq).astype(jnp.bfloat16)

    # ---- fused classification + stopping heads ----
    # wh is (Bblk, C+1, Vp) with zero columns for mark/padded tokens, so this
    # implements  dec_out = projector(enc).permute(0,2,1)[:, :, :N]  @ heads.
    heads = jnp.einsum('bcv,bvl->bcl', wh_ref[...], dec3,
                       preferred_element_type=jnp.float32) + bh_ref[...]
    out_ref[...] = heads.astype(out_ref.dtype)                 # (Bblk, C+1, L)


def init_params(key, *, seq_len, d_model, n_heads, d_ff, e_layers,
                n_vars, num_classes):
    del n_heads
    ks = iter(jax.random.split(key, 32))

    def nrm(shape, scale=0.1):
        return jax.random.normal(next(ks), shape, jnp.float32) * scale

    p = {}
    p["wemb"] = nrm((seq_len, d_model))
    p["bemb"] = nrm((1, d_model), 0.02)
    p["wq"] = nrm((e_layers, d_model, d_model))
    p["bq"] = nrm((e_layers, 1, d_model), 0.02)
    p["wk"] = nrm((e_layers, d_model, d_model))
    p["bk"] = nrm((e_layers, 1, d_model), 0.02)
    p["wv"] = nrm((e_layers, d_model, d_model))
    p["bv"] = nrm((e_layers, 1, d_model), 0.02)
    p["wo"] = nrm((e_layers, d_model, d_model))
    p["bo"] = nrm((e_layers, 1, d_model), 0.02)
    p["g1"] = jnp.ones((e_layers, 1, d_model), jnp.float32)
    p["be1"] = jnp.zeros((e_layers, 1, d_model), jnp.float32)
    p["w1"] = nrm((e_layers, d_model, d_ff))
    p["b1"] = nrm((e_layers, 1, d_ff), 0.02)
    p["w2"] = nrm((e_layers, d_ff, d_model))
    p["b2"] = nrm((e_layers, 1, d_model), 0.02)
    p["g2"] = jnp.ones((e_layers, 1, d_model), jnp.float32)
    p["be2"] = jnp.zeros((e_layers, 1, d_model), jnp.float32)
    p["gf"] = jnp.ones((1, d_model), jnp.float32)
    p["bf"] = jnp.zeros((1, d_model), jnp.float32)
    p["wp"] = nrm((d_model, seq_len))
    p["bp"] = nrm((1, seq_len), 0.02)
    p["wc"] = nrm((n_vars, num_classes))          # ClassificationHead(9, C)
    p["bc"] = nrm((1, num_classes), 0.02)
    p["wd"] = nrm((n_vars, 1))                    # DecisionHead(9)
    p["bd"] = nrm((1, 1), 0.02)
    return p


def build_forward(params, *, B, L, N, M, C, n_heads, block_b=8):
    f32, bf16 = jnp.float32, jnp.bfloat16
    V = N + M
    Vp = _round_up(V, 8)                          # token dim padded for (8,128) layout
    Bp = _round_up(B, block_b)
    grid_b = Bp // block_b

    # ---- fuse / cast parameters in the wrapper ----
    wqkv = jnp.concatenate([params["wq"], params["wk"], params["wv"]], axis=2).astype(bf16)
    bqkv = jnp.concatenate([params["bq"], params["bk"], params["bv"]], axis=2).astype(f32)

    w_heads = jnp.concatenate([params["wc"], params["wd"]], axis=1)       # (N, C+1)
    whT = jnp.zeros((C + 1, Vp), f32).at[:, :N].set(w_heads.T)            # zero pad/mark cols
    whT_b = jnp.broadcast_to(whT[None], (block_b, C + 1, Vp)).astype(bf16)
    bh = jnp.concatenate([params["bc"], params["bd"]], axis=1).T.astype(f32)   # (C+1, 1)

    plist = [
        params["wemb"].astype(bf16), params["bemb"].astype(f32),
        wqkv, bqkv,
        params["wo"].astype(f32), params["bo"].astype(f32),
        params["g1"].astype(f32), params["be1"].astype(f32),
        params["w1"].astype(bf16), params["b1"].astype(f32),
        params["w2"].astype(bf16), params["b2"].astype(f32),
        params["g2"].astype(f32), params["be2"].astype(f32),
        params["gf"].astype(f32), params["bf"].astype(f32),
        params["wp"].astype(bf16), params["bp"].astype(f32),
        whT_b, bh,
    ]

    def full_spec(a):
        nd = a.ndim
        return pl.BlockSpec(a.shape, lambda b, _nd=nd: (0,) * _nd)

    in_specs = ([pl.BlockSpec((block_b, Vp, L), lambda b: (b, 0, 0))]
                + [full_spec(a) for a in plist])
    out_specs = pl.BlockSpec((block_b, C + 1, L), lambda b: (b, 0, 0))
    out_shape = jax.ShapeDtypeStruct((Bp, C + 1, L), jnp.float32)

    kernel = functools.partial(_model_kernel, n_heads, N, V)

    fwd = pl.pallas_call(
        kernel,
        out_shape=out_shape,
        grid_spec=pltpu.PrefetchScalarGridSpec(
            num_scalar_prefetch=0,
            grid=(grid_b,),
            in_specs=in_specs,
            out_specs=out_specs,
        ),
        compiler_params=pltpu.CompilerParams(
            dimension_semantics=("parallel",)),
    )

    @jax.jit
    def forward(x_enc, x_mark_enc):
        # inversion done in the wrapper: (B, L, N)+(B, L, M) -> (B, Vp, L) tokens
        tok = jnp.concatenate([jnp.swapaxes(x_enc, 1, 2),
                               jnp.swapaxes(x_mark_enc, 1, 2)], axis=1)
        tok = jnp.pad(tok, ((0, Bp - B), (0, Vp - V), (0, 0))).astype(jnp.float32)
        raw = fwd(tok, *plist)                     # (Bp, C+1, L)
        raw = jnp.transpose(raw[:B], (0, 2, 1))    # (B, L, C+1)
        log_probs = jax.nn.log_softmax(raw[..., :C], axis=-1)
        prob_stop = jax.nn.sigmoid(raw[..., C])
        # (log_class_probabilities [B,L,C], probability_stopping [B,L])
        return log_probs, prob_stop

    return forward


if __name__ == "__main__":
    # small, module-consistent shapes
    B = 8            # batch (2 grid steps of block_b=4)
    L = 16           # seq_len
    N = 9            # x_enc variates (heads hard-code input dim 9)
    M = 4            # time-mark features
    D = 32           # d_model
    H = 4            # n_heads
    DFF = 64         # d_ff
    E = 2            # e_layers
    C = 5            # num_classes

    key = jax.random.PRNGKey(0)
    k_x, k_m, k_p = jax.random.split(key, 3)
    x_enc = jax.random.normal(k_x, (B, L, N), jnp.float32)
    x_mark_enc = jax.random.normal(k_m, (B, L, M), jnp.float32)
    # x_dec / x_mark_dec are unused by the PyTorch forward, so not needed here.

    params = init_params(k_p, seq_len=L, d_model=D, n_heads=H, d_ff=DFF,
                         e_layers=E, n_vars=N, num_classes=C)

    forward = build_forward(params, B=B, L=L, N=N, M=M, C=C, n_heads=H, block_b=4)
    log_probs, prob_stop = forward(x_enc, x_mark_enc)
    jax.block_until_ready((log_probs, prob_stop))

    assert log_probs.shape == (B, L, C), log_probs.shape
    assert prob_stop.shape == (B, L), prob_stop.shape
    assert bool(jnp.all(jnp.isfinite(log_probs)))
    assert bool(jnp.all(jnp.isfinite(prob_stop)))
    # log_softmax rows exponentiate to a probability distribution
    assert bool(jnp.allclose(jnp.sum(jnp.exp(log_probs), axis=-1), 1.0, atol=1e-3))
    # sigmoid output is a probability
    assert bool(jnp.all((prob_stop >= 0.0) & (prob_stop <= 1.0)))

    # TODO(synk): the torch `predict` method (Categorical sampling of stop
    # decisions) is host-side inference glue, intentionally not ported.
    print("KERNEL_OK")
</pallas_src>

<mosaic_0001>
module attributes {stable_mosaic.version = 11 : i64} {
  func.func @_model_kernel(%arg0: i32, %arg1: memref<4x16x16xf32, #tpu.memory_space<vmem>>, %arg2: memref<16x32xbf16, #tpu.memory_space<vmem>>, %arg3: memref<1x32xf32, #tpu.memory_space<vmem>>, %arg4: memref<2x32x96xbf16, #tpu.memory_space<vmem>>, %arg5: memref<2x1x96xf32, #tpu.memory_space<vmem>>, %arg6: memref<2x32x32xf32, #tpu.memory_space<vmem>>, %arg7: memref<2x1x32xf32, #tpu.memory_space<vmem>>, %arg8: memref<2x1x32xf32, #tpu.memory_space<vmem>>, %arg9: memref<2x1x32xf32, #tpu.memory_space<vmem>>, %arg10: memref<2x32x64xbf16, #tpu.memory_space<vmem>>, %arg11: memref<2x1x64xf32, #tpu.memory_space<vmem>>, %arg12: memref<2x64x32xbf16, #tpu.memory_space<vmem>>, %arg13: memref<2x1x32xf32, #tpu.memory_space<vmem>>, %arg14: memref<2x1x32xf32, #tpu.memory_space<vmem>>, %arg15: memref<2x1x32xf32, #tpu.memory_space<vmem>>, %arg16: memref<1x32xf32, #tpu.memory_space<vmem>>, %arg17: memref<1x32xf32, #tpu.memory_space<vmem>>, %arg18: memref<32x16xbf16, #tpu.memory_space<vmem>>, %arg19: memref<1x16xf32, #tpu.memory_space<vmem>>, %arg20: memref<4x6x16xbf16, #tpu.memory_space<vmem>>, %arg21: memref<6x1xf32, #tpu.memory_space<vmem>>, %arg22: memref<4x6x16xf32, #tpu.memory_space<vmem>>) attributes {dimension_semantics = [#tpu.dimension_semantics<parallel>], iteration_bounds = array<i64: 2>, scalar_prefetch = 0 : i64, scratch_operands = 0 : i64, tpu.core_type = #tpu.core_type<tc>, window_params = [{transform_indices = @transform_0, window_bounds = array<i64: 4, 16, 16>}, {pipeline_mode = #tpu.pipeline_mode<synchronous>, transform_indices = @transform_1, window_bounds = array<i64: 16, 32>}, {pipeline_mode = #tpu.pipeline_mode<synchronous>, transform_indices = @transform_2, window_bounds = array<i64: 1, 32>}, {pipeline_mode = #tpu.pipeline_mode<synchronous>, transform_indices = @transform_3, window_bounds = array<i64: 2, 32, 96>}, {pipeline_mode = #tpu.pipeline_mode<synchronous>, transform_indices = @transform_4, window_bounds = array<i64: 2, 1, 96>}, {pipeline_mode = #tpu.pipeline_mode<synchronous>, transform_indices = @transform_5, window_bounds = array<i64: 2, 32, 32>}, {pipeline_mode = #tpu.pipeline_mode<synchronous>, transform_indices = @transform_6, window_bounds = array<i64: 2, 1, 32>}, {pipeline_mode = #tpu.pipeline_mode<synchronous>, transform_indices = @transform_7, window_bounds = array<i64: 2, 1, 32>}, {pipeline_mode = #tpu.pipeline_mode<synchronous>, transform_indices = @transform_8, window_bounds = array<i64: 2, 1, 32>}, {pipeline_mode = #tpu.pipeline_mode<synchronous>, transform_indices = @transform_9, window_bounds = array<i64: 2, 32, 64>}, {pipeline_mode = #tpu.pipeline_mode<synchronous>, transform_indices = @transform_10, window_bounds = array<i64: 2, 1, 64>}, {pipeline_mode = #tpu.pipeline_mode<synchronous>, transform_indices = @transform_11, window_bounds = array<i64: 2, 64, 32>}, {pipeline_mode = #tpu.pipeline_mode<synchronous>, transform_indices = @transform_12, window_bounds = array<i64: 2, 1, 32>}, {pipeline_mode = #tpu.pipeline_mode<synchronous>, transform_indices = @transform_13, window_bounds = array<i64: 2, 1, 32>}, {pipeline_mode = #tpu.pipeline_mode<synchronous>, transform_indices = @transform_14, window_bounds = array<i64: 2, 1, 32>}, {pipeline_mode = #tpu.pipeline_mode<synchronous>, transform_indices = @transform_15, window_bounds = array<i64: 1, 32>}, {pipeline_mode = #tpu.pipeline_mode<synchronous>, transform_indices = @transform_16, window_bounds = array<i64: 1, 32>}, {pipeline_mode = #tpu.pipeline_mode<synchronous>, transform_indices = @transform_17, window_bounds = array<i64: 32, 16>}, {pipeline_mode = #tpu.pipeline_mode<synchronous>, transform_indices = @transform_18, window_bounds = array<i64: 1, 16>}, {pipeline_mode = #tpu.pipeline_mode<synchronous>, transform_indices = @transform_19, window_bounds = array<i64: 4, 6, 16>}, {pipeline_mode = #tpu.pipeline_mode<synchronous>, transform_indices = @transform_20, window_bounds = array<i64: 6, 1>}, {transform_indices = @transform_21, window_bounds = array<i64: 4, 6, 16>}]} {
    %c0 = arith.constant 0 : index
    %c0_0 = arith.constant 0 : index
    %c0_1 = arith.constant 0 : index
    %0 = vector.load %arg1[%c0, %c0_0, %c0_1] : memref<4x16x16xf32, #tpu.memory_space<vmem>>, vector<4x16x16xf32>
    %cst = arith.constant dense<0.000000e+00> : vector<4x16xf32>
    %1 = vector.multi_reduction <add>, %0, %cst [2] : vector<4x16x16xf32> to vector<4x16xf32>
    %2 = vector.shape_cast %1 : vector<4x16xf32> to vector<4x16x1xf32>
    %cst_2 = arith.constant 1.600000e+01 : f32
    %3 = vector.broadcast %cst_2 : f32 to vector<4x16x1xf32>
    %4 = arith.divf %2, %3 : vector<4x16x1xf32>
    %5 = vector.broadcast %4 : vector<4x16x1xf32> to vector<4x16x16xf32>
    %6 = arith.subf %0, %5 : vector<4x16x16xf32>
    %7 = arith.mulf %6, %6 : vector<4x16x16xf32>
    %cst_3 = arith.constant dense<0.000000e+00> : vector<4x16xf32>
    %8 = vector.multi_reduction <add>, %7, %cst_3 [2] : vector<4x16x16xf32> to vector<4x16xf32>
    %9 = vector.shape_cast %8 : vector<4x16xf32> to vector<4x16x1xf32>
    %cst_4 = arith.constant 1.600000e+01 : f32
    %10 = vector.broadcast %cst_4 : f32 to vector<4x16x1xf32>
    %11 = arith.divf %9, %10 : vector<4x16x1xf32>
    %cst_5 = arith.constant 9.99999974E-6 : f32
    %12 = vector.broadcast %cst_5 : f32 to vector<4x16x1xf32>
    %13 = arith.addf %11, %12 : vector<4x16x1xf32>
    %14 = math.rsqrt %13 : vector<4x16x1xf32>
    %15 = vector.broadcast %14 : vector<4x16x1xf32> to vector<4x16x16xf32>
    %16 = arith.mulf %6, %15 : vector<4x16x16xf32>
    %17 = tpu.iota {dimensions = array<i32: 0>} : vector<16x16xi32>
    %c9_i32 = arith.constant 9 : i32
    %18 = vector.broadcast %c9_i32 : i32 to vector<16x16xi32>
    %19 = arith.cmpi slt, %17, %18 : vector<16x16xi32>
    %20 = vector.shape_cast %19 : vector<16x16xi1> to vector<1x16x16xi1>
    %21 = vector.broadcast %20 : vector<1x16x16xi1> to vector<4x16x16xi1>
    %22 = arith.select %21, %16, %0 : vector<4x16x16xi1>, vector<4x16x16xf32>
    %23 = vector.shape_cast %22 : vector<4x16x16xf32> to vector<64x16xf32>
    %c0_6 = arith.constant 0 : index
    %c0_7 = arith.constant 0 : index
    %24 = vector.load %arg2[%c0_6, %c0_7] : memref<16x32xbf16, #tpu.memory_space<vmem>>, vector<16x32xbf16>
    %25 = arith.truncf %23 : vector<64x16xf32> to vector<64x16xbf16>
    %cst_8 = arith.constant dense<0.000000e+00> : vector<64x32xf32>
    %26 = tpu.matmul %25, %24, %cst_8 {dimension_numbers = #tpu.dot_dimension_numbers<[1], [0], [0], [1], [0, 0, 1, 1], [], []>} : vector<64x16xbf16>, vector<16x32xbf16>, vector<64x32xf32> -> vector<64x32xf32>
    %c0_9 = arith.constant 0 : index
    %c0_10 = arith.constant 0 : index
    %27 = vector.load %arg3[%c0_9, %c0_10] : memref<1x32xf32, #tpu.memory_space<vmem>>, vector<1x32xf32>
    %28 = vector.broadcast %27 : vector<1x32xf32> to vector<64x32xf32>
    %29 = arith.addf %26, %28 : vector<64x32xf32>
    %30 = tpu.iota {dimensions = array<i32: 1>} : vector<1x16xi32>
    %c13_i32 = arith.constant 13 : i32
    %31 = vector.broadcast %c13_i32 : i32 to vector<1x16xi32>
    %32 = arith.cmpi slt, %30, %31 : vector<1x16xi32>
    %cst_11 = arith.constant 0.000000e+00 : f32
    %cst_12 = arith.constant -1.000000e+30 : f32
    %33 = vector.broadcast %cst_11 : f32 to vector<1x16xf32>
    %34 = vector.broadcast %cst_12 : f32 to vector<1x16xf32>
    %35 = arith.select %32, %33, %34 : vector<1x16xi1>, vector<1x16xf32>
    %c0_13 = arith.constant 0 : index
    %c0_14 = arith.constant 0 : index
    %c0_15 = arith.constant 0 : index
    %36 = vector.load %arg4[%c0_13, %c0_14, %c0_15] : memref<2x32x96xbf16, #tpu.memory_space<vmem>>, vector<1x32x96xbf16>
    %37 = vector.shape_cast %36 : vector<1x32x96xbf16> to vector<32x96xbf16>
    %38 = arith.truncf %29 : vector<64x32xf32> to vector<64x32xbf16>
    %cst_16 = arith.constant dense<0.000000e+00> : vector<64x96xf32>
    %39 = tpu.matmul %38, %37, %cst_16 {dimension_numbers = #tpu.dot_dimension_numbers<[1], [0], [0], [1], [0, 0, 1, 1], [], []>} : vector<64x32xbf16>, vector<32x96xbf16>, vector<64x96xf32> -> vector<64x96xf32>
    %c0_17 = arith.constant 0 : index
    %c0_18 = arith.constant 0 : index
    %c0_19 = arith.constant 0 : index
    %40 = vector.load %arg5[%c0_17, %c0_18, %c0_19] : memref<2x1x96xf32, #tpu.memory_space<vmem>>, vector<1x1x96xf32>
    %41 = vector.shape_cast %40 : vector<1x1x96xf32> to vector<1x96xf32>
    %42 = vector.broadcast %41 : vector<1x96xf32> to vector<64x96xf32>
    %43 = arith.addf %39, %42 : vector<64x96xf32>
    %44 = vector.shape_cast %43 : vector<64x96xf32> to vector<4x16x96xf32>
    %45 = arith.truncf %44 : vector<4x16x96xf32> to vector<4x16x96xbf16>
    %c0_20 = arith.constant 0 : index
    %c0_21 = arith.constant 0 : index
    %c0_22 = arith.constant 0 : index
    %46 = vector.load %arg6[%c0_20, %c0_21, %c0_22] : memref<2x32x32xf32, #tpu.memory_space<vmem>>, vector<1x32x32xf32>
    %47 = vector.shape_cast %46 : vector<1x32x32xf32> to vector<32x32xf32>
    %cst_23 = arith.constant 0.000000e+00 : f32
    %48 = vector.broadcast %cst_23 : f32 to vector<64x32xf32>
    %49 = vector.extract_strided_slice %45 {offsets = [0, 0, 0], sizes = [4, 16, 8], strides = [1, 1, 1]} : vector<4x16x96xbf16> to vector<4x16x8xbf16>
    %50 = vector.extract_strided_slice %45 {offsets = [0, 0, 32], sizes = [4, 16, 8], strides = [1, 1, 1]} : vector<4x16x96xbf16> to vector<4x16x8xbf16>
    %51 = vector.extract_strided_slice %45 {offsets = [0, 0, 64], sizes = [4, 16, 8], strides = [1, 1, 1]} : vector<4x16x96xbf16> to vector<4x16x8xbf16>
    "tpu.trace_start"() <{level = 10 : i32, message = "bqd,bkd->bqk"}> : () -> ()
    %cst_24 = arith.constant dense<0.000000e+00> : vector<4x16x16xf32>
    %52 = tpu.matmul %49, %50, %cst_24 {dimension_numbers = #tpu.dot_dimension_numbers<[2], [2], [1], [1], [0, 0, 0, 1, 1, 1], [0], [0]>} : vector<4x16x8xbf16>, vector<4x16x8xbf16>, vector<4x16x16xf32> -> vector<4x16x16xf32>
    "tpu.trace_stop"() : () -> ()
    %cst_25 = arith.constant 0.353553385 : f32
    %53 = vector.broadcast %cst_25 : f32 to vector<4x16x16xf32>
    %54 = arith.mulf %52, %53 : vector<4x16x16xf32>
    %55 = vector.shape_cast %35 : vector<1x16xf32> to vector<1x1x16xf32>
    %56 = vector.broadcast %55 : vector<1x1x16xf32> to vector<4x16x16xf32>
    %57 = arith.addf %54, %56 : vector<4x16x16xf32>
    %cst_26 = arith.constant dense<0xFF800000> : vector<4x16xf32>
    %58 = vector.multi_reduction <maximumf>, %57, %cst_26 [2] : vector<4x16x16xf32> to vector<4x16xf32>
    %59 = vector.shape_cast %58 : vector<4x16xf32> to vector<4x16x1xf32>
    %60 = vector.broadcast %59 : vector<4x16x1xf32> to vector<4x16x16xf32>
    %61 = arith.subf %57, %60 : vector<4x16x16xf32>
    %62 = math.exp %61 : vector<4x16x16xf32>
    %cst_27 = arith.constant dense<0.000000e+00> : vector<4x16xf32>
    %63 = vector.multi_reduction <add>, %62, %cst_27 [2] : vector<4x16x16xf32> to vector<4x16xf32>
    %64 = vector.shape_cast %63 : vector<4x16xf32> to vector<4x16x1xf32>
    %65 = tpu.reciprocal %64 {approx = true} : vector<4x16x1xf32> -> vector<4x16x1xf32>
    %66 = vector.broadcast %65 : vector<4x16x1xf32> to vector<4x16x16xf32>
    %67 = arith.mulf %62, %66 : vector<4x16x16xf32>
    %68 = arith.truncf %67 : vector<4x16x16xf32> to vector<4x16x16xbf16>
    "tpu.trace_start"() <{level = 10 : i32, message = "bqk,bkd->bqd"}> : () -> ()
    %cst_28 = arith.constant dense<0.000000e+00> : vector<4x16x8xf32>
    %69 = tpu.matmul %68, %51, %cst_28 {dimension_numbers = #tpu.dot_dimension_numbers<[2], [1], [1], [2], [0, 0, 0, 1, 1, 2], [0], [0]>} : vector<4x16x16xbf16>, vector<4x16x8xbf16>, vector<4x16x8xf32> -> vector<4x16x8xf32>
    "tpu.trace_stop"() : () -> ()
    %70 = vector.shape_cast %69 : vector<4x16x8xf32> to vector<64x8xf32>
    %71 = vector.extract_strided_slice %47 {offsets = [0, 0], sizes = [8, 32], strides = [1, 1]} : vector<32x32xf32> to vector<8x32xf32>
    %72 = arith.truncf %70 : vector<64x8xf32> to vector<64x8xbf16>
    %73 = arith.truncf %71 : vector<8x32xf32> to vector<8x32xbf16>
    %cst_29 = arith.constant dense<0.000000e+00> : vector<64x32xf32>
    %74 = tpu.matmul %72, %73, %cst_29 {dimension_numbers = #tpu.dot_dimension_numbers<[1], [0], [0], [1], [0, 0, 1, 1], [], []>} : vector<64x8xbf16>, vector<8x32xbf16>, vector<64x32xf32> -> vector<64x32xf32>
    %75 = arith.addf %48, %74 : vector<64x32xf32>
    %76 = vector.extract_strided_slice %45 {offsets = [0, 0, 8], sizes = [4, 16, 8], strides = [1, 1, 1]} : vector<4x16x96xbf16> to vector<4x16x8xbf16>
    %77 = vector.extract_strided_slice %45 {offsets = [0, 0, 40], sizes = [4, 16, 8], strides = [1, 1, 1]} : vector<4x16x96xbf16> to vector<4x16x8xbf16>
    %78 = vector.extract_strided_slice %45 {offsets = [0, 0, 72], sizes = [4, 16, 8], strides = [1, 1, 1]} : vector<4x16x96xbf16> to vector<4x16x8xbf16>
    "tpu.trace_start"() <{level = 10 : i32, message = "bqd,bkd->bqk"}> : () -> ()
    %cst_30 = arith.constant dense<0.000000e+00> : vector<4x16x16xf32>
    %79 = tpu.matmul %76, %77, %cst_30 {dimension_numbers = #tpu.dot_dimension_numbers<[2], [2], [1], [1], [0, 0, 0, 1, 1, 1], [0], [0]>} : vector<4x16x8xbf16>, vector<4x16x8xbf16>, vector<4x16x16xf32> -> vector<4x16x16xf32>
    "tpu.trace_stop"() : () -> ()
    %cst_31 = arith.constant 0.353553385 : f32
    %80 = vector.broadcast %cst_31 : f32 to vector<4x16x16xf32>
    %81 = arith.mulf %79, %80 : vector<4x16x16xf32>
    %82 = vector.shape_cast %35 : vector<1x16xf32> to vector<1x1x16xf32>
    %83 = vector.broadcast %82 : vector<1x1x16xf32> to vector<4x16x16xf32>
    %84 = arith.addf %81, %83 : vector<4x16x16xf32>
    %cst_32 = arith.constant dense<0xFF800000> : vector<4x16xf32>
    %85 = vector.multi_reduction <maximumf>, %84, %cst_32 [2] : vector<4x16x16xf32> to vector<4x16xf32>
    %86 = vector.shape_cast %85 : vector<4x16xf32> to vector<4x16x1xf32>
    %87 = vector.broadcast %86 : vector<4x16x1xf32> to vector<4x16x16xf32>
    %88 = arith.subf %84, %87 : vector<4x16x16xf32>
    %89 = math.exp %88 : vector<4x16x16xf32>
    %cst_33 = arith.constant dense<0.000000e+00> : vector<4x16xf32>
    %90 = vector.multi_reduction <add>, %89, %cst_33 [2] : vector<4x16x16xf32> to vector<4x16xf32>
    %91 = vector.shape_cast %90 : vector<4x16xf32> to vector<4x16x1xf32>
    %92 = tpu.reciprocal %91 {approx = true} : vector<4x16x1xf32> -> vector<4x16x1xf32>
    %93 = vector.broadcast %92 : vector<4x16x1xf32> to vector<4x16x16xf32>
    %94 = arith.mulf %89, %93 : vector<4x16x16xf32>
    %95 = arith.truncf %94 : vector<4x16x16xf32> to vector<4x16x16xbf16>
    "tpu.trace_start"() <{level = 10 : i32, message = "bqk,bkd->bqd"}> : () -> ()
    %cst_34 = arith.constant dense<0.000000e+00> : vector<4x16x8xf32>
    %96 = tpu.matmul %95, %78, %cst_34 {dimension_numbers = #tpu.dot_dimension_numbers<[2], [1], [1], [2], [0, 0, 0, 1, 1, 2], [0], [0]>} : vector<4x16x16xbf16>, vector<4x16x8xbf16>, vector<4x16x8xf32> -> vector<4x16x8xf32>
    "tpu.trace_stop"() : () -> ()
    %97 = vector.shape_cast %96 : vector<4x16x8xf32> to vector<64x8xf32>
    %98 = vector.extract_strided_slice %47 {offsets = [8, 0], sizes = [8, 32], strides = [1, 1]} : vector<32x32xf32> to vector<8x32xf32>
    %99 = arith.truncf %97 : vector<64x8xf32> to vector<64x8xbf16>
    %100 = arith.truncf %98 : vector<8x32xf32> to vector<8x32xbf16>
    %cst_35 = arith.constant dense<0.000000e+00> : vector<64x32xf32>
    %101 = tpu.matmul %99, %100, %cst_35 {dimension_numbers = #tpu.dot_dimension_numbers<[1], [0], [0], [1], [0, 0, 1, 1], [], []>} : vector<64x8xbf16>, vector<8x32xbf16>, vector<64x32xf32> -> vector<64x32xf32>
    %102 = arith.addf %75, %101 : vector<64x32xf32>
    %103 = vector.extract_strided_slice %45 {offsets = [0, 0, 16], sizes = [4, 16, 8], strides = [1, 1, 1]} : vector<4x16x96xbf16> to vector<4x16x8xbf16>
    %104 = vector.extract_strided_slice %45 {offsets = [0, 0, 48], sizes = [4, 16, 8], strides = [1, 1, 1]} : vector<4x16x96xbf16> to vector<4x16x8xbf16>
    %105 = vector.extract_strided_slice %45 {offsets = [0, 0, 80], sizes = [4, 16, 8], strides = [1, 1, 1]} : vector<4x16x96xbf16> to vector<4x16x8xbf16>
    "tpu.trace_start"() <{level = 10 : i32, message = "bqd,bkd->bqk"}> : () -> ()
    %cst_36 = arith.constant dense<0.000000e+00> : vector<4x16x16xf32>
    %106 = tpu.matmul %103, %104, %cst_36 {dimension_numbers = #tpu.dot_dimension_numbers<[2], [2], [1], [1], [0, 0, 0, 1, 1, 1], [0], [0]>} : vector<4x16x8xbf16>, vector<4x16x8xbf16>, vector<4x16x16xf32> -> vector<4x16x16xf32>
    "tpu.trace_stop"() : () -> ()
    %cst_37 = arith.constant 0.353553385 : f32
    %107 = vector.broadcast %cst_37 : f32 to vector<4x16x16xf32>
    %108 = arith.mulf %106, %107 : vector<4x16x16xf32>
    %109 = vector.shape_cast %35 : vector<1x16xf32> to vector<1x1x16xf32>
    %110 = vector.broadcast %109 : vector<1x1x16xf32> to vector<4x16x16xf32>
    %111 = arith.addf %108, %110 : vector<4x16x16xf32>
    %cst_38 = arith.constant dense<0xFF800000> : vector<4x16xf32>
    %112 = vector.multi_reduction <maximumf>, %111, %cst_38 [2] : vector<4x16x16xf32> to vector<4x16xf32>
    %113 = vector.shape_cast %112 : vector<4x16xf32> to vector<4x16x1xf32>
    %114 = vector.broadcast %113 : vector<4x16x1xf32> to vector<4x16x16xf32>
    %115 = arith.subf %111, %114 : vector<4x16x16xf32>
    %116 = math.exp %115 : vector<4x16x16xf32>
    %cst_39 = arith.constant dense<0.000000e+00> : vector<4x16xf32>
    %117 = vector.multi_reduction <add>, %116, %cst_39 [2] : vector<4x16x16xf32> to vector<4x16xf32>
    %118 = vector.shape_cast %117 : vector<4x16xf32> to vector<4x16x1xf32>
    %119 = tpu.reciprocal %118 {approx = true} : vector<4x16x1xf32> -> vector<4x16x1xf32>
    %120 = vector.broadcast %119 : vector<4x16x1xf32> to vector<4x16x16xf32>
    %121 = arith.mulf %116, %120 : vector<4x16x16xf32>
    %122 = arith.truncf %121 : vector<4x16x16xf32> to vector<4x16x16xbf16>
    "tpu.trace_start"() <{level = 10 : i32, message = "bqk,bkd->bqd"}> : () -> ()
    %cst_40 = arith.constant dense<0.000000e+00> : vector<4x16x8xf32>
    %123 = tpu.matmul %122, %105, %cst_40 {dimension_numbers = #tpu.dot_dimension_numbers<[2], [1], [1], [2], [0, 0, 0, 1, 1, 2], [0], [0]>} : vector<4x16x16xbf16>, vector<4x16x8xbf16>, vector<4x16x8xf32> -> vector<4x16x8xf32>
    "tpu.trace_stop"() : () -> ()
    %124 = vector.shape_cast %123 : vector<4x16x8xf32> to vector<64x8xf32>
    %125 = vector.extract_strided_slice %47 {offsets = [16, 0], sizes = [8, 32], strides = [1, 1]} : vector<32x32xf32> to vector<8x32xf32>
    %126 = arith.truncf %124 : vector<64x8xf32> to vector<64x8xbf16>
    %127 = arith.truncf %125 : vector<8x32xf32> to vector<8x32xbf16>
    %cst_41 = arith.constant dense<0.000000e+00> : vector<64x32xf32>
    %128 = tpu.matmul %126, %127, %cst_41 {dimension_numbers = #tpu.dot_dimension_numbers<[1], [0], [0], [1], [0, 0, 1, 1], [], []>} : vector<64x8xbf16>, vector<8x32xbf16>, vector<64x32xf32> -> vector<64x32xf32>
    %129 = arith.addf %102, %128 : vector<64x32xf32>
    %130 = vector.extract_strided_slice %45 {offsets = [0, 0, 24], sizes = [4, 16, 8], strides = [1, 1, 1]} : vector<4x16x96xbf16> to vector<4x16x8xbf16>
    %131 = vector.extract_strided_slice %45 {offsets = [0, 0, 56], sizes = [4, 16, 8], strides = [1, 1, 1]} : vector<4x16x96xbf16> to vector<4x16x8xbf16>
    %132 = vector.extract_strided_slice %45 {offsets = [0, 0, 88], sizes = [4, 16, 8], strides = [1, 1, 1]} : vector<4x16x96xbf16> to vector<4x16x8xbf16>
    "tpu.trace_start"() <{level = 10 : i32, message = "bqd,bkd->bqk"}> : () -> ()
    %cst_42 = arith.constant dense<0.000000e+00> : vector<4x16x16xf32>
    %133 = tpu.matmul %130, %131, %cst_42 {dimension_numbers = #tpu.dot_dimension_numbers<[2], [2], [1], [1], [0, 0, 0, 1, 1, 1], [0], [0]>} : vector<4x16x8xbf16>, vector<4x16x8xbf16>, vector<4x16x16xf32> -> vector<4x16x16xf32>
    "tpu.trace_stop"() : () -> ()
    %cst_43 = arith.constant 0.353553385 : f32
    %134 = vector.broadcast %cst_43 : f32 to vector<4x16x16xf32>
    %135 = arith.mulf %133, %134 : vector<4x16x16xf32>
    %136 = vector.shape_cast %35 : vector<1x16xf32> to vector<1x1x16xf32>
    %137 = vector.broadcast %136 : vector<1x1x16xf32> to vector<4x16x16xf32>
    %138 = arith.addf %135, %137 : vector<4x16x16xf32>
    %cst_44 = arith.constant dense<0xFF800000> : vector<4x16xf32>
    %139 = vector.multi_reduction <maximumf>, %138, %cst_44 [2] : vector<4x16x16xf32> to vector<4x16xf32>
    %140 = vector.shape_cast %139 : vector<4x16xf32> to vector<4x16x1xf32>
    %141 = vector.broadcast %140 : vector<4x16x1xf32> to vector<4x16x16xf32>
    %142 = arith.subf %138, %141 : vector<4x16x16xf32>
    %143 = math.exp %142 : vector<4x16x16xf32>
    %cst_45 = arith.constant dense<0.000000e+00> : vector<4x16xf32>
    %144 = vector.multi_reduction <add>, %143, %cst_45 [2] : vector<4x16x16xf32> to vector<4x16xf32>
    %145 = vector.shape_cast %144 : vector<4x16xf32> to vector<4x16x1xf32>
    %146 = tpu.reciprocal %145 {approx = true} : vector<4x16x1xf32> -> vector<4x16x1xf32>
    %147 = vector.broadcast %146 : vector<4x16x1xf32> to vector<4x16x16xf32>
    %148 = arith.mulf %143, %147 : vector<4x16x16xf32>
    %149 = arith.truncf %148 : vector<4x16x16xf32> to vector<4x16x16xbf16>
    "tpu.trace_start"() <{level = 10 : i32, message = "bqk,bkd->bqd"}> : () -> ()
    %cst_46 = arith.constant dense<0.000000e+00> : vector<4x16x8xf32>
    %150 = tpu.matmul %149, %132, %cst_46 {dimension_numbers = #tpu.dot_dimension_numbers<[2], [1], [1], [2], [0, 0, 0, 1, 1, 2], [0], [0]>} : vector<4x16x16xbf16>, vector<4x16x8xbf16>, vector<4x16x8xf32> -> vector<4x16x8xf32>
    "tpu.trace_stop"() : () -> ()
    %151 = vector.shape_cast %150 : vector<4x16x8xf32> to vector<64x8xf32>
    %152 = vector.extract_strided_slice %47 {offsets = [24, 0], sizes = [8, 32], strides = [1, 1]} : vector<32x32xf32> to vector<8x32xf32>
    %153 = arith.truncf %151 : vector<64x8xf32> to vector<64x8xbf16>
    %154 = arith.truncf %152 : vector<8x32xf32> to vector<8x32xbf16>
    %cst_47 = arith.constant dense<0.000000e+00> : vector<64x32xf32>
    %155 = tpu.matmul %153, %154, %cst_47 {dimension_numbers = #tpu.dot_dimension_numbers<[1], [0], [0], [1], [0, 0, 1, 1], [], []>} : vector<64x8xbf16>, vector<8x32xbf16>, vector<64x32xf32> -> vector<64x32xf32>
    %156 = arith.addf %129, %155 : vector<64x32xf32>
    %c0_48 = arith.constant 0 : index
    %c0_49 = arith.constant 0 : index
    %c0_50 = arith.constant 0 : index
    %157 = vector.load %arg7[%c0_48, %c0_49, %c0_50] : memref<2x1x32xf32, #tpu.memory_space<vmem>>, vector<1x1x32xf32>
    %158 = vector.shape_cast %157 : vector<1x1x32xf32> to vector<1x32xf32>
    %159 = vector.broadcast %158 : vector<1x32xf32> to vector<64x32xf32>
    %160 = arith.addf %156, %159 : vector<64x32xf32>
    %161 = arith.addf %29, %160 : vector<64x32xf32>
    %c0_51 = arith.constant 0 : index
    %c0_52 = arith.constant 0 : index
    %c0_53 = arith.constant 0 : index
    %162 = vector.load %arg8[%c0_51, %c0_52, %c0_53] : memref<2x1x32xf32, #tpu.memory_space<vmem>>, vector<1x1x32xf32>
    %163 = vector.shape_cast %162 : vector<1x1x32xf32> to vector<1x32xf32>
    %c0_54 = arith.constant 0 : index
    %c0_55 = arith.constant 0 : index
    %c0_56 = arith.constant 0 : index
    %164 = vector.load %arg9[%c0_54, %c0_55, %c0_56] : memref<2x1x32xf32, #tpu.memory_space<vmem>>, vector<1x1x32xf32>
    %165 = vector.shape_cast %164 : vector<1x1x32xf32> to vector<1x32xf32>
    %cst_57 = arith.constant dense<0.000000e+00> : vector<64xf32>
    %166 = vector.multi_reduction <add>, %161, %cst_57 [1] : vector<64x32xf32> to vector<64xf32>
    %167 = vector.shape_cast %166 : vector<64xf32> to vector<64x1xf32>
    %cst_58 = arith.constant 3.200000e+01 : f32
    %168 = vector.broadcast %cst_58 : f32 to vector<64x1xf32>
    %169 = arith.divf %167, %168 : vector<64x1xf32>
    %170 = vector.broadcast %169 : vector<64x1xf32> to vector<64x32xf32>
    %171 = arith.subf %161, %170 : vector<64x32xf32>
    %172 = arith.mulf %171, %171 : vector<64x32xf32>
    %cst_59 = arith.constant dense<0.000000e+00> : vector<64xf32>
    %173 = vector.multi_reduction <add>, %172, %cst_59 [1] : vector<64x32xf32> to vector<64xf32>
    %174 = vector.shape_cast %173 : vector<64xf32> to vector<64x1xf32>
    %cst_60 = arith.constant 3.200000e+01 : f32
    %175 = vector.broadcast %cst_60 : f32 to vector<64x1xf32>
    %176 = arith.divf %174, %175 : vector<64x1xf32>
    %cst_61 = arith.constant 9.99999974E-6 : f32
    %177 = vector.broadcast %cst_61 : f32 to vector<64x1xf32>
    %178 = arith.addf %176, %177 : vector<64x1xf32>
    %179 = math.rsqrt %178 : vector<64x1xf32>
    %180 = vector.broadcast %179 : vector<64x1xf32> to vector<64x32xf32>
    %181 = arith.mulf %171, %180 : vector<64x32xf32>
    %182 = vector.broadcast %163 : vector<1x32xf32> to vector<64x32xf32>
    %183 = arith.mulf %181, %182 : vector<64x32xf32>
    %184 = vector.broadcast %165 : vector<1x32xf32> to vector<64x32xf32>
    %185 = arith.addf %183, %184 : vector<64x32xf32>
    %c0_62 = arith.constant 0 : index
    %c0_63 = arith.constant 0 : index
    %c0_64 = arith.constant 0 : index
    %186 = vector.load %arg10[%c0_62, %c0_63, %c0_64] : memref<2x32x64xbf16, #tpu.memory_space<vmem>>, vector<1x32x64xbf16>
    %187 = vector.shape_cast %186 : vector<1x32x64xbf16> to vector<32x64xbf16>
    %188 = arith.truncf %185 : vector<64x32xf32> to vector<64x32xbf16>
    %cst_65 = arith.constant dense<0.000000e+00> : vector<64x64xf32>
    %189 = tpu.matmul %188, %187, %cst_65 {dimension_numbers = #tpu.dot_dimension_numbers<[1], [0], [0], [1], [0, 0, 1, 1], [], []>} : vector<64x32xbf16>, vector<32x64xbf16>, vector<64x64xf32> -> vector<64x64xf32>
    %c0_66 = arith.constant 0 : index
    %c0_67 = arith.constant 0 : index
    %c0_68 = arith.constant 0 : index
    %190 = vector.load %arg11[%c0_66, %c0_67, %c0_68] : memref<2x1x64xf32, #tpu.memory_space<vmem>>, vector<1x1x64xf32>
    %191 = vector.shape_cast %190 : vector<1x1x64xf32> to vector<1x64xf32>
    %192 = vector.broadcast %191 : vector<1x64xf32> to vector<64x64xf32>
    %193 = arith.addf %189, %192 : vector<64x64xf32>
    %cst_69 = arith.constant 0.000000e+00 : f32
    %194 = vector.broadcast %cst_69 : f32 to vector<64x64xf32>
    %195 = arith.maximumf %193, %194 : vector<64x64xf32>
    %c0_70 = arith.constant 0 : index
    %c0_71 = arith.constant 0 : index
    %c0_72 = arith.constant 0 : index
    %196 = vector.load %arg12[%c0_70, %c0_71, %c0_72] : memref<2x64x32xbf16, #tpu.memory_space<vmem>>, vector<1x64x32xbf16>
    %197 = vector.shape_cast %196 : vector<1x64x32xbf16> to vector<64x32xbf16>
    %198 = arith.truncf %195 : vector<64x64xf32> to vector<64x64xbf16>
    %cst_73 = arith.constant dense<0.000000e+00> : vector<64x32xf32>
    %199 = tpu.matmul %198, %197, %cst_73 {dimension_numbers = #tpu.dot_dimension_numbers<[1], [0], [0], [1], [0, 0, 1, 1], [], []>} : vector<64x64xbf16>, vector<64x32xbf16>, vector<64x32xf32> -> vector<64x32xf32>
    %c0_74 = arith.constant 0 : index
    %c0_75 = arith.constant 0 : index
    %c0_76 = arith.constant 0 : index
    %200 = vector.load %arg13[%c0_74, %c0_75, %c0_76] : memref<2x1x32xf32, #tpu.memory_space<vmem>>, vector<1x1x32xf32>
    %201 = vector.shape_cast %200 : vector<1x1x32xf32> to vector<1x32xf32>
    %202 = vector.broadcast %201 : vector<1x32xf32> to vector<64x32xf32>
    %203 = arith.addf %199, %202 : vector<64x32xf32>
    %204 = arith.addf %185, %203 : vector<64x32xf32>
    %c0_77 = arith.constant 0 : index
    %c0_78 = arith.constant 0 : index
    %c0_79 = arith.constant 0 : index
    %205 = vector.load %arg14[%c0_77, %c0_78, %c0_79] : memref<2x1x32xf32, #tpu.memory_space<vmem>>, vector<1x1x32xf32>
    %206 = vector.shape_cast %205 : vector<1x1x32xf32> to vector<1x32xf32>
    %c0_80 = arith.constant 0 : index
    %c0_81 = arith.constant 0 : index
    %c0_82 = arith.constant 0 : index
    %207 = vector.load %arg15[%c0_80, %c0_81, %c0_82] : memref<2x1x32xf32, #tpu.memory_space<vmem>>, vector<1x1x32xf32>
    %208 = vector.shape_cast %207 : vector<1x1x32xf32> to vector<1x32xf32>
    %cst_83 = arith.constant dense<0.000000e+00> : vector<64xf32>
    %209 = vector.multi_reduction <add>, %204, %cst_83 [1] : vector<64x32xf32> to vector<64xf32>
    %210 = vector.shape_cast %209 : vector<64xf32> to vector<64x1xf32>
    %cst_84 = arith.constant 3.200000e+01 : f32
    %211 = vector.broadcast %cst_84 : f32 to vector<64x1xf32>
    %212 = arith.divf %210, %211 : vector<64x1xf32>
    %213 = vector.broadcast %212 : vector<64x1xf32> to vector<64x32xf32>
    %214 = arith.subf %204, %213 : vector<64x32xf32>
    %215 = arith.mulf %214, %214 : vector<64x32xf32>
    %cst_85 = arith.constant dense<0.000000e+00> : vector<64xf32>
    %216 = vector.multi_reduction <add>, %215, %cst_85 [1] : vector<64x32xf32> to vector<64xf32>
    %217 = vector.shape_cast %216 : vector<64xf32> to vector<64x1xf32>
    %cst_86 = arith.constant 3.200000e+01 : f32
    %218 = vector.broadcast %cst_86 : f32 to vector<64x1xf32>
    %219 = arith.divf %217, %218 : vector<64x1xf32>
    %cst_87 = arith.constant 9.99999974E-6 : f32
    %220 = vector.broadcast %cst_87 : f32 to vector<64x1xf32>
    %221 = arith.addf %219, %220 : vector<64x1xf32>
    %222 = math.rsqrt %221 : vector<64x1xf32>
    %223 = vector.broadcast %222 : vector<64x1xf32> to vector<64x32xf32>
    %224 = arith.mulf %214, %223 : vector<64x32xf32>
    %225 = vector.broadcast %206 : vector<1x32xf32> to vector<64x32xf32>
    %226 = arith.mulf %224, %225 : vector<64x32xf32>
    %227 = vector.broadcast %208 : vector<1x32xf32> to vector<64x32xf32>
    %228 = arith.addf %226, %227 : vector<64x32xf32>
    %c1 = arith.constant 1 : index
    %c0_88 = arith.constant 0 : index
    %c0_89 = arith.constant 0 : index
    %229 = vector.load %arg4[%c1, %c0_88, %c0_89] : memref<2x32x96xbf16, #tpu.memory_space<vmem>>, vector<1x32x96xbf16>
    %230 = vector.shape_cast %229 : vector<1x32x96xbf16> to vector<32x96xbf16>
    %231 = arith.truncf %228 : vector<64x32xf32> to vector<64x32xbf16>
    %cst_90 = arith.constant dense<0.000000e+00> : vector<64x96xf32>
    %232 = tpu.matmul %231, %230, %cst_90 {dimension_numbers = #tpu.dot_dimension_numbers<[1], [0], [0], [1], [0, 0, 1, 1], [], []>} : vector<64x32xbf16>, vector<32x96xbf16>, vector<64x96xf32> -> vector<64x96xf32>
    %c1_91 = arith.constant 1 : index
    %c0_92 = arith.constant 0 : index
    %c0_93 = arith.constant 0 : index
    %233 = vector.load %arg5[%c1_91, %c0_92, %c0_93] : memref<2x1x96xf32, #tpu.memory_space<vmem>>, vector<1x1x96xf32>
    %234 = vector.shape_cast %233 : vector<1x1x96xf32> to vector<1x96xf32>
    %235 = vector.broadcast %234 : vector<1x96xf32> to vector<64x96xf32>
    %236 = arith.addf %232, %235 : vector<64x96xf32>
    %237 = vector.shape_cast %236 : vector<64x96xf32> to vector<4x16x96xf32>
    %238 = arith.truncf %237 : vector<4x16x96xf32> to vector<4x16x96xbf16>
    %c1_94 = arith.constant 1 : index
    %c0_95 = arith.constant 0 : index
    %c0_96 = arith.constant 0 : index
    %239 = vector.load %arg6[%c1_94, %c0_95, %c0_96] : memref<2x32x32xf32, #tpu.memory_space<vmem>>, vector<1x32x32xf32>
    %240 = vector.shape_cast %239 : vector<1x32x32xf32> to vector<32x32xf32>
    %cst_97 = arith.constant 0.000000e+00 : f32
    %241 = vector.broadcast %cst_97 : f32 to vector<64x32xf32>
    %242 = vector.extract_strided_slice %238 {offsets = [0, 0, 0], sizes = [4, 16, 8], strides = [1, 1, 1]} : vector<4x16x96xbf16> to vector<4x16x8xbf16>
    %243 = vector.extract_strided_slice %238 {offsets = [0, 0, 32], sizes = [4, 16, 8], strides = [1, 1, 1]} : vector<4x16x96xbf16> to vector<4x16x8xbf16>
    %244 = vector.extract_strided_slice %238 {offsets = [0, 0, 64], sizes = [4, 16, 8], strides = [1, 1, 1]} : vector<4x16x96xbf16> to vector<4x16x8xbf16>
    "tpu.trace_start"() <{level = 10 : i32, message = "bqd,bkd->bqk"}> : () -> ()
    %cst_98 = arith.constant dense<0.000000e+00> : vector<4x16x16xf32>
    %245 = tpu.matmul %242, %243, %cst_98 {dimension_numbers = #tpu.dot_dimension_numbers<[2], [2], [1], [1], [0, 0, 0, 1, 1, 1], [0], [0]>} : vector<4x16x8xbf16>, vector<4x16x8xbf16>, vector<4x16x16xf32> -> vector<4x16x16xf32>
    "tpu.trace_stop"() : () -> ()
    %cst_99 = arith.constant 0.353553385 : f32
    %246 = vector.broadcast %cst_99 : f32 to vector<4x16x16xf32>
    %247 = arith.mulf %245, %246 : vector<4x16x16xf32>
    %248 = vector.shape_cast %35 : vector<1x16xf32> to vector<1x1x16xf32>
    %249 = vector.broadcast %248 : vector<1x1x16xf32> to vector<4x16x16xf32>
    %250 = arith.addf %247, %249 : vector<4x16x16xf32>
    %cst_100 = arith.constant dense<0xFF800000> : vector<4x16xf32>
    %251 = vector.multi_reduction <maximumf>, %250, %cst_100 [2] : vector<4x16x16xf32> to vector<4x16xf32>
    %252 = vector.shape_cast %251 : vector<4x16xf32> to vector<4x16x1xf32>
    %253 = vector.broadcast %252 : vector<4x16x1xf32> to vector<4x16x16xf32>
    %254 = arith.subf %250, %253 : vector<4x16x16xf32>
    %255 = math.exp %254 : vector<4x16x16xf32>
    %cst_101 = arith.constant dense<0.000000e+00> : vector<4x16xf32>
    %256 = vector.multi_reduction <add>, %255, %cst_101 [2] : vector<4x16x16xf32> to vector<4x16xf32>
    %257 = vector.shape_cast %256 : vector<4x16xf32> to vector<4x16x1xf32>
    %258 = tpu.reciprocal %257 {approx = true} : vector<4x16x1xf32> -> vector<4x16x1xf32>
    %259 = vector.broadcast %258 : vector<4x16x1xf32> to vector<4x16x16xf32>
    %260 = arith.mulf %255, %259 : vector<4x16x16xf32>
    %261 = arith.truncf %260 : vector<4x16x16xf32> to vector<4x16x16xbf16>
    "tpu.trace_start"() <{level = 10 : i32, message = "bqk,bkd->bqd"}> : () -> ()
    %cst_102 = arith.constant dense<0.000000e+00> : vector<4x16x8xf32>
    %262 = tpu.matmul %261, %244, %cst_102 {dimension_numbers = #tpu.dot_dimension_numbers<[2], [1], [1], [2], [0, 0, 0, 1, 1, 2], [0], [0]>} : vector<4x16x16xbf16>, vector<4x16x8xbf16>, vector<4x16x8xf32> -> vector<4x16x8xf32>
    "tpu.trace_stop"() : () -> ()
    %263 = vector.shape_cast %262 : vector<4x16x8xf32> to vector<64x8xf32>
    %264 = vector.extract_strided_slice %240 {offsets = [0, 0], sizes = [8, 32], strides = [1, 1]} : vector<32x32xf32> to vector<8x32xf32>
    %265 = arith.truncf %263 : vector<64x8xf32> to vector<64x8xbf16>
    %266 = arith.truncf %264 : vector<8x32xf32> to vector<8x32xbf16>
    %cst_103 = arith.constant dense<0.000000e+00> : vector<64x32xf32>
    %267 = tpu.matmul %265, %266, %cst_103 {dimension_numbers = #tpu.dot_dimension_numbers<[1], [0], [0], [1], [0, 0, 1, 1], [], []>} : vector<64x8xbf16>, vector<8x32xbf16>, vector<64x32xf32> -> vector<64x32xf32>
    %268 = arith.addf %241, %267 : vector<64x32xf32>
    %269 = vector.extract_strided_slice %238 {offsets = [0, 0, 8], sizes = [4, 16, 8], strides = [1, 1, 1]} : vector<4x16x96xbf16> to vector<4x16x8xbf16>
    %270 = vector.extract_strided_slice %238 {offsets = [0, 0, 40], sizes = [4, 16, 8], strides = [1, 1, 1]} : vector<4x16x96xbf16> to vector<4x16x8xbf16>
    %271 = vector.extract_strided_slice %238 {offsets = [0, 0, 72], sizes = [4, 16, 8], strides = [1, 1, 1]} : vector<4x16x96xbf16> to vector<4x16x8xbf16>
    "tpu.trace_start"() <{level = 10 : i32, message = "bqd,bkd->bqk"}> : () -> ()
    %cst_104 = arith.constant dense<0.000000e+00> : vector<4x16x16xf32>
    %272 = tpu.matmul %269, %270, %cst_104 {dimension_numbers = #tpu.dot_dimension_numbers<[2], [2], [1], [1], [0, 0, 0, 1, 1, 1], [0], [0]>} : vector<4x16x8xbf16>, vector<4x16x8xbf16>, vector<4x16x16xf32> -> vector<4x16x16xf32>
    "tpu.trace_stop"() : () -> ()
    %cst_105 = arith.constant 0.353553385 : f32
    %273 = vector.broadcast %cst_105 : f32 to vector<4x16x16xf32>
    %274 = arith.mulf %272, %273 : vector<4x16x16xf32>
    %275 = vector.shape_cast %35 : vector<1x16xf32> to vector<1x1x16xf32>
    %276 = vector.broadcast %275 : vector<1x1x16xf32> to vector<4x16x16xf32>
    %277 = arith.addf %274, %276 : vector<4x16x16xf32>
    %cst_106 = arith.constant dense<0xFF800000> : vector<4x16xf32>
    %278 = vector.multi_reduction <maximumf>, %277, %cst_106 [2] : vector<4x16x16xf32> to vector<4x16xf32>
    %279 = vector.shape_cast %278 : vector<4x16xf32> to vector<4x16x1xf32>
    %280 = vector.broadcast %279 : vector<4x16x1xf32> to vector<4x16x16xf32>
    %281 = arith.subf %277, %280 : vector<4x16x16xf32>
    %282 = math.exp %281 : vector<4x16x16xf32>
    %cst_107 = arith.constant dense<0.000000e+00> : vector<4x16xf32>
    %283 = vector.multi_reduction <add>, %282, %cst_107 [2] : vector<4x16x16xf32> to vector<4x16xf32>
    %284 = vector.shape_cast %283 : vector<4x16xf32> to vector<4x16x1xf32>
    %285 = tpu.reciprocal %284 {approx = true} : vector<4x16x1xf32> -> vector<4x16x1xf32>
    %286 = vector.broadcast %285 : vector<4x16x1xf32> to vector<4x16x16xf32>
    %287 = arith.mulf %282, %286 : vector<4x16x16xf32>
    %288 = arith.truncf %287 : vector<4x16x16xf32> to vector<4x16x16xbf16>
    "tpu.trace_start"() <{level = 10 : i32, message = "bqk,bkd->bqd"}> : () -> ()
    %cst_108 = arith.constant dense<0.000000e+00> : vector<4x16x8xf32>
    %289 = tpu.matmul %288, %271, %cst_108 {dimension_numbers = #tpu.dot_dimension_numbers<[2], [1], [1], [2], [0, 0, 0, 1, 1, 2], [0], [0]>} : vector<4x16x16xbf16>, vector<4x16x8xbf16>, vector<4x16x8xf32> -> vector<4x16x8xf32>
    "tpu.trace_stop"() : () -> ()
    %290 = vector.shape_cast %289 : vector<4x16x8xf32> to vector<64x8xf32>
    %291 = vector.extract_strided_slice %240 {offsets = [8, 0], sizes = [8, 32], strides = [1, 1]} : vector<32x32xf32> to vector<8x32xf32>
    %292 = arith.truncf %290 : vector<64x8xf32> to vector<64x8xbf16>
    %293 = arith.truncf %291 : vector<8x32xf32> to vector<8x32xbf16>
    %cst_109 = arith.constant dense<0.000000e+00> : vector<64x32xf32>
    %294 = tpu.matmul %292, %293, %cst_109 {dimension_numbers = #tpu.dot_dimension_numbers<[1], [0], [0], [1], [0, 0, 1, 1], [], []>} : vector<64x8xbf16>, vector<8x32xbf16>, vector<64x32xf32> -> vector<64x32xf32>
    %295 = arith.addf %268, %294 : vector<64x32xf32>
    %296 = vector.extract_strided_slice %238 {offsets = [0, 0, 16], sizes = [4, 16, 8], strides = [1, 1, 1]} : vector<4x16x96xbf16> to vector<4x16x8xbf16>
    %297 = vector.extract_strided_slice %238 {offsets = [0, 0, 48], sizes = [4, 16, 8], strides = [1, 1, 1]} : vector<4x16x96xbf16> to vector<4x16x8xbf16>
    %298 = vector.extract_strided_slice %238 {offsets = [0, 0, 80], sizes = [4, 16, 8], strides = [1, 1, 1]} : vector<4x16x96xbf16> to vector<4x16x8xbf16>
    "tpu.trace_start"() <{level = 10 : i32, message = "bqd,bkd->bqk"}> : () -> ()
    %cst_110 = arith.constant dense<0.000000e+00> : vector<4x16x16xf32>
    %299 = tpu.matmul %296, %297, %cst_110 {dimension_numbers = #tpu.dot_dimension_numbers<[2], [2], [1], [1], [0, 0, 0, 1, 1, 1], [0], [0]>} : vector<4x16x8xbf16>, vector<4x16x8xbf16>, vector<4x16x16xf32> -> vector<4x16x16xf32>
    "tpu.trace_stop"() : () -> ()
    %cst_111 = arith.constant 0.353553385 : f32
    %300 = vector.broadcast %cst_111 : f32 to vector<4x16x16xf32>
    %301 = arith.mulf %299, %300 : vector<4x16x16xf32>
    %302 = vector.shape_cast %35 : vector<1x16xf32> to vector<1x1x16xf32>
    %303 = vector.broadcast %302 : vector<1x1x16xf32> to vector<4x16x16xf32>
    %304 = arith.addf %301, %303 : vector<4x16x16xf32>
    %cst_112 = arith.constant dense<0xFF800000> : vector<4x16xf32>
    %305 = vector.multi_reduction <maximumf>, %304, %cst_112 [2] : vector<4x16x16xf32> to vector<4x16xf32>
    %306 = vector.shape_cast %305 : vector<4x16xf32> to vector<4x16x1xf32>
    %307 = vector.broadcast %306 : vector<4x16x1xf32> to vector<4x16x16xf32>
    %308 = arith.subf %304, %307 : vector<4x16x16xf32>
    %309 = math.exp %308 : vector<4x16x16xf32>
    %cst_113 = arith.constant dense<0.000000e+00> : vector<4x16xf32>
    %310 = vector.multi_reduction <add>, %309, %cst_113 [2] : vector<4x16x16xf32> to vector<4x16xf32>
    %311 = vector.shape_cast %310 : vector<4x16xf32> to vector<4x16x1xf32>
    %312 = tpu.reciprocal %311 {approx = true} : vector<4x16x1xf32> -> vector<4x16x1xf32>
    %313 = vector.broadcast %312 : vector<4x16x1xf32> to vector<4x16x16xf32>
    %314 = arith.mulf %309, %313 : vector<4x16x16xf32>
    %315 = arith.truncf %314 : vector<4x16x16xf32> to vector<4x16x16xbf16>
    "tpu.trace_start"() <{level = 10 : i32, message = "bqk,bkd->bqd"}> : () -> ()
    %cst_114 = arith.constant dense<0.000000e+00> : vector<4x16x8xf32>
    %316 = tpu.matmul %315, %298, %cst_114 {dimension_numbers = #tpu.dot_dimension_numbers<[2], [1], [1], [2], [0, 0, 0, 1, 1, 2], [0], [0]>} : vector<4x16x16xbf16>, vector<4x16x8xbf16>, vector<4x16x8xf32> -> vector<4x16x8xf32>
    "tpu.trace_stop"() : () -> ()
    %317 = vector.shape_cast %316 : vector<4x16x8xf32> to vector<64x8xf32>
    %318 = vector.extract_strided_slice %240 {offsets = [16, 0], sizes = [8, 32], strides = [1, 1]} : vector<32x32xf32> to vector<8x32xf32>
    %319 = arith.truncf %317 : vector<64x8xf32> to vector<64x8xbf16>
    %320 = arith.truncf %318 : vector<8x32xf32> to vector<8x32xbf16>
    %cst_115 = arith.constant dense<0.000000e+00> : vector<64x32xf32>
    %321 = tpu.matmul %319, %320, %cst_115 {dimension_numbers = #tpu.dot_dimension_numbers<[1], [0], [0], [1], [0, 0, 1, 1], [], []>} : vector<64x8xbf16>, vector<8x32xbf16>, vector<64x32xf32> -> vector<64x32xf32>
    %322 = arith.addf %295, %321 : vector<64x32xf32>
    %323 = vector.extract_strided_slice %238 {offsets = [0, 0, 24], sizes = [4, 16, 8], strides = [1, 1, 1]} : vector<4x16x96xbf16> to vector<4x16x8xbf16>
    %324 = vector.extract_strided_slice %238 {offsets = [0, 0, 56], sizes = [4, 16, 8], strides = [1, 1, 1]} : vector<4x16x96xbf16> to vector<4x16x8xbf16>
    %325 = vector.extract_strided_slice %238 {offsets = [0, 0, 88], sizes = [4, 16, 8], strides = [1, 1, 1]} : vector<4x16x96xbf16> to vector<4x16x8xbf16>
    "tpu.trace_start"() <{level = 10 : i32, message = "bqd,bkd->bqk"}> : () -> ()
    %cst_116 = arith.constant dense<0.000000e+00> : vector<4x16x16xf32>
    %326 = tpu.matmul %323, %324, %cst_116 {dimension_numbers = #tpu.dot_dimension_numbers<[2], [2], [1], [1], [0, 0, 0, 1, 1, 1], [0], [0]>} : vector<4x16x8xbf16>, vector<4x16x8xbf16>, vector<4x16x16xf32> -> vector<4x16x16xf32>
    "tpu.trace_stop"() : () -> ()
    %cst_117 = arith.constant 0.353553385 : f32
    %327 = vector.broadcast %cst_117 : f32 to vector<4x16x16xf32>
    %328 = arith.mulf %326, %327 : vector<4x16x16xf32>
    %329 = vector.shape_cast %35 : vector<1x16xf32> to vector<1x1x16xf32>
    %330 = vector.broadcast %329 : vector<1x1x16xf32> to vector<4x16x16xf32>
    %331 = arith.addf %328, %330 : vector<4x16x16xf32>
    %cst_118 = arith.constant dense<0xFF800000> : vector<4x16xf32>
    %332 = vector.multi_reduction <maximumf>, %331, %cst_118 [2] : vector<4x16x16xf32> to vector<4x16xf32>
    %333 = vector.shape_cast %332 : vector<4x16xf32> to vector<4x16x1xf32>
    %334 = vector.broadcast %333 : vector<4x16x1xf32> to vector<4x16x16xf32>
    %335 = arith.subf %331, %334 : vector<4x16x16xf32>
    %336 = math.exp %335 : vector<4x16x16xf32>
    %cst_119 = arith.constant dense<0.000000e+00> : vector<4x16xf32>
    %337 = vector.multi_reduction <add>, %336, %cst_119 [2] : vector<4x16x16xf32> to vector<4x16xf32>
    %338 = vector.shape_cast %337 : vector<4x16xf32> to vector<4x16x1xf32>
    %339 = tpu.reciprocal %338 {approx = true} : vector<4x16x1xf32> -> vector<4x16x1xf32>
    %340 = vector.broadcast %339 : vector<4x16x1xf32> to vector<4x16x16xf32>
    %341 = arith.mulf %336, %340 : vector<4x16x16xf32>
    %342 = arith.truncf %341 : vector<4x16x16xf32> to vector<4x16x16xbf16>
    "tpu.trace_start"() <{level = 10 : i32, message = "bqk,bkd->bqd"}> : () -> ()
    %cst_120 = arith.constant dense<0.000000e+00> : vector<4x16x8xf32>
    %343 = tpu.matmul %342, %325, %cst_120 {dimension_numbers = #tpu.dot_dimension_numbers<[2], [1], [1], [2], [0, 0, 0, 1, 1, 2], [0], [0]>} : vector<4x16x16xbf16>, vector<4x16x8xbf16>, vector<4x16x8xf32> -> vector<4x16x8xf32>
    "tpu.trace_stop"() : () -> ()
    %344 = vector.shape_cast %343 : vector<4x16x8xf32> to vector<64x8xf32>
    %345 = vector.extract_strided_slice %240 {offsets = [24, 0], sizes = [8, 32], strides = [1, 1]} : vector<32x32xf32> to vector<8x32xf32>
    %346 = arith.truncf %344 : vector<64x8xf32> to vector<64x8xbf16>
    %347 = arith.truncf %345 : vector<8x32xf32> to vector<8x32xbf16>
    %cst_121 = arith.constant dense<0.000000e+00> : vector<64x32xf32>
    %348 = tpu.matmul %346, %347, %cst_121 {dimension_numbers = #tpu.dot_dimension_numbers<[1], [0], [0], [1], [0, 0, 1, 1], [], []>} : vector<64x8xbf16>, vector<8x32xbf16>, vector<64x32xf32> -> vector<64x32xf32>
    %349 = arith.addf %322, %348 : vector<64x32xf32>
    %c1_122 = arith.constant 1 : index
    %c0_123 = arith.constant 0 : index
    %c0_124 = arith.constant 0 : index
    %350 = vector.load %arg7[%c1_122, %c0_123, %c0_124] : memref<2x1x32xf32, #tpu.memory_space<vmem>>, vector<1x1x32xf32>
    %351 = vector.shape_cast %350 : vector<1x1x32xf32> to vector<1x32xf32>
    %352 = vector.broadcast %351 : vector<1x32xf32> to vector<64x32xf32>
    %353 = arith.addf %349, %352 : vector<64x32xf32>
    %354 = arith.addf %228, %353 : vector<64x32xf32>
    %c1_125 = arith.constant 1 : index
    %c0_126 = arith.constant 0 : index
    %c0_127 = arith.constant 0 : index
    %355 = vector.load %arg8[%c1_125, %c0_126, %c0_127] : memref<2x1x32xf32, #tpu.memory_space<vmem>>, vector<1x1x32xf32>
    %356 = vector.shape_cast %355 : vector<1x1x32xf32> to vector<1x32xf32>
    %c1_128 = arith.constant 1 : index
    %c0_129 = arith.constant 0 : index
    %c0_130 = arith.constant 0 : index
    %357 = vector.load %arg9[%c1_128, %c0_129, %c0_130] : memref<2x1x32xf32, #tpu.memory_space<vmem>>, vector<1x1x32xf32>
    %358 = vector.shape_cast %357 : vector<1x1x32xf32> to vector<1x32xf32>
    %cst_131 = arith.constant dense<0.000000e+00> : vector<64xf32>
    %359 = vector.multi_reduction <add>, %354, %cst_131 [1] : vector<64x32xf32> to vector<64xf32>
    %360 = vector.shape_cast %359 : vector<64xf32> to vector<64x1xf32>
    %cst_132 = arith.constant 3.200000e+01 : f32
    %361 = vector.broadcast %cst_132 : f32 to vector<64x1xf32>
    %362 = arith.divf %360, %361 : vector<64x1xf32>
    %363 = vector.broadcast %362 : vector<64x1xf32> to vector<64x32xf32>
    %364 = arith.subf %354, %363 : vector<64x32xf32>
    %365 = arith.mulf %364, %364 : vector<64x32xf32>
    %cst_133 = arith.constant dense<0.000000e+00> : vector<64xf32>
    %366 = vector.multi_reduction <add>, %365, %cst_133 [1] : vector<64x32xf32> to vector<64xf32>
    %367 = vector.shape_cast %366 : vector<64xf32> to vector<64x1xf32>
    %cst_134 = arith.constant 3.200000e+01 : f32
    %368 = vector.broadcast %cst_134 : f32 to vector<64x1xf32>
    %369 = arith.divf %367, %368 : vector<64x1xf32>
    %cst_135 = arith.constant 9.99999974E-6 : f32
    %370 = vector.broadcast %cst_135 : f32 to vector<64x1xf32>
    %371 = arith.addf %369, %370 : vector<64x1xf32>
    %372 = math.rsqrt %371 : vector<64x1xf32>
    %373 = vector.broadcast %372 : vector<64x1xf32> to vector<64x32xf32>
    %374 = arith.mulf %364, %373 : vector<64x32xf32>
    %375 = vector.broadcast %356 : vector<1x32xf32> to vector<64x32xf32>
    %376 = arith.mulf %374, %375 : vector<64x32xf32>
    %377 = vector.broadcast %358 : vector<1x32xf32> to vector<64x32xf32>
    %378 = arith.addf %376, %377 : vector<64x32xf32>
    %c1_136 = arith.constant 1 : index
    %c0_137 = arith.constant 0 : index
    %c0_138 = arith.constant 0 : index
    %379 = vector.load %arg10[%c1_136, %c0_137, %c0_138] : memref<2x32x64xbf16, #tpu.memory_space<vmem>>, vector<1x32x64xbf16>
    %380 = vector.shape_cast %379 : vector<1x32x64xbf16> to vector<32x64xbf16>
    %381 = arith.truncf %378 : vector<64x32xf32> to vector<64x32xbf16>
    %cst_139 = arith.constant dense<0.000000e+00> : vector<64x64xf32>
    %382 = tpu.matmul %381, %380, %cst_139 {dimension_numbers = #tpu.dot_dimension_numbers<[1], [0], [0], [1], [0, 0, 1, 1], [], []>} : vector<64x32xbf16>, vector<32x64xbf16>, vector<64x64xf32> -> vector<64x64xf32>
    %c1_140 = arith.constant 1 : index
    %c0_141 = arith.constant 0 : index
    %c0_142 = arith.constant 0 : index
    %383 = vector.load %arg11[%c1_140, %c0_141, %c0_142] : memref<2x1x64xf32, #tpu.memory_space<vmem>>, vector<1x1x64xf32>
    %384 = vector.shape_cast %383 : vector<1x1x64xf32> to vector<1x64xf32>
    %385 = vector.broadcast %384 : vector<1x64xf32> to vector<64x64xf32>
    %386 = arith.addf %382, %385 : vector<64x64xf32>
    %cst_143 = arith.constant 0.000000e+00 : f32
    %387 = vector.broadcast %cst_143 : f32 to vector<64x64xf32>
    %388 = arith.maximumf %386, %387 : vector<64x64xf32>
    %c1_144 = arith.constant 1 : index
    %c0_145 = arith.constant 0 : index
    %c0_146 = arith.constant 0 : index
    %389 = vector.load %arg12[%c1_144, %c0_145, %c0_146] : memref<2x64x32xbf16, #tpu.memory_space<vmem>>, vector<1x64x32xbf16>
    %390 = vector.shape_cast %389 : vector<1x64x32xbf16> to vector<64x32xbf16>
    %391 = arith.truncf %388 : vector<64x64xf32> to vector<64x64xbf16>
    %cst_147 = arith.constant dense<0.000000e+00> : vector<64x32xf32>
    %392 = tpu.matmul %391, %390, %cst_147 {dimension_numbers = #tpu.dot_dimension_numbers<[1], [0], [0], [1], [0, 0, 1, 1], [], []>} : vector<64x64xbf16>, vector<64x32xbf16>, vector<64x32xf32> -> vector<64x32xf32>
    %c1_148 = arith.constant 1 : index
    %c0_149 = arith.constant 0 : index
    %c0_150 = arith.constant 0 : index
    %393 = vector.load %arg13[%c1_148, %c0_149, %c0_150] : memref<2x1x32xf32, #tpu.memory_space<vmem>>, vector<1x1x32xf32>
    %394 = vector.shape_cast %393 : vector<1x1x32xf32> to vector<1x32xf32>
    %395 = vector.broadcast %394 : vector<1x32xf32> to vector<64x32xf32>
    %396 = arith.addf %392, %395 : vector<64x32xf32>
    %397 = arith.addf %378, %396 : vector<64x32xf32>
    %c1_151 = arith.constant 1 : index
    %c0_152 = arith.constant 0 : index
    %c0_153 = arith.constant 0 : index
    %398 = vector.load %arg14[%c1_151, %c0_152, %c0_153] : memref<2x1x32xf32, #tpu.memory_space<vmem>>, vector<1x1x32xf32>
    %399 = vector.shape_cast %398 : vector<1x1x32xf32> to vector<1x32xf32>
    %c1_154 = arith.constant 1 : index
    %c0_155 = arith.constant 0 : index
    %c0_156 = arith.constant 0 : index
    %400 = vector.load %arg15[%c1_154, %c0_155, %c0_156] : memref<2x1x32xf32, #tpu.memory_space<vmem>>, vector<1x1x32xf32>
    %401 = vector.shape_cast %400 : vector<1x1x32xf32> to vector<1x32xf32>
    %cst_157 = arith.constant dense<0.000000e+00> : vector<64xf32>
    %402 = vector.multi_reduction <add>, %397, %cst_157 [1] : vector<64x32xf32> to vector<64xf32>
    %403 = vector.shape_cast %402 : vector<64xf32> to vector<64x1xf32>
    %cst_158 = arith.constant 3.200000e+01 : f32
    %404 = vector.broadcast %cst_158 : f32 to vector<64x1xf32>
    %405 = arith.divf %403, %404 : vector<64x1xf32>
    %406 = vector.broadcast %405 : vector<64x1xf32> to vector<64x32xf32>
    %407 = arith.subf %397, %406 : vector<64x32xf32>
    %408 = arith.mulf %407, %407 : vector<64x32xf32>
    %cst_159 = arith.constant dense<0.000000e+00> : vector<64xf32>
    %409 = vector.multi_reduction <add>, %408, %cst_159 [1] : vector<64x32xf32> to vector<64xf32>
    %410 = vector.shape_cast %409 : vector<64xf32> to vector<64x1xf32>
    %cst_160 = arith.constant 3.200000e+01 : f32
    %411 = vector.broadcast %cst_160 : f32 to vector<64x1xf32>
    %412 = arith.divf %410, %411 : vector<64x1xf32>
    %cst_161 = arith.constant 9.99999974E-6 : f32
    %413 = vector.broadcast %cst_161 : f32 to vector<64x1xf32>
    %414 = arith.addf %412, %413 : vector<64x1xf32>
    %415 = math.rsqrt %414 : vector<64x1xf32>
    %416 = vector.broadcast %415 : vector<64x1xf32> to vector<64x32xf32>
    %417 = arith.mulf %407, %416 : vector<64x32xf32>
    %418 = vector.broadcast %399 : vector<1x32xf32> to vector<64x32xf32>
    %419 = arith.mulf %417, %418 : vector<64x32xf32>
    %420 = vector.broadcast %401 : vector<1x32xf32> to vector<64x32xf32>
    %421 = arith.addf %419, %420 : vector<64x32xf32>
    %c0_162 = arith.constant 0 : index
    %c0_163 = arith.constant 0 : index
    %422 = vector.load %arg16[%c0_162, %c0_163] : memref<1x32xf32, #tpu.memory_space<vmem>>, vector<1x32xf32>
    %c0_164 = arith.constant 0 : index
    %c0_165 = arith.constant 0 : index
    %423 = vector.load %arg17[%c0_164, %c0_165] : memref<1x32xf32, #tpu.memory_space<vmem>>, vector<1x32xf32>
    %cst_166 = arith.constant dense<0.000000e+00> : vector<64xf32>
    %424 = vector.multi_reduction <add>, %421, %cst_166 [1] : vector<64x32xf32> to vector<64xf32>
    %425 = vector.shape_cast %424 : vector<64xf32> to vector<64x1xf32>
    %cst_167 = arith.constant 3.200000e+01 : f32
    %426 = vector.broadcast %cst_167 : f32 to vector<64x1xf32>
    %427 = arith.divf %425, %426 : vector<64x1xf32>
    %428 = vector.broadcast %427 : vector<64x1xf32> to vector<64x32xf32>
    %429 = arith.subf %421, %428 : vector<64x32xf32>
    %430 = arith.mulf %429, %429 : vector<64x32xf32>
    %cst_168 = arith.constant dense<0.000000e+00> : vector<64xf32>
    %431 = vector.multi_reduction <add>, %430, %cst_168 [1] : vector<64x32xf32> to vector<64xf32>
    %432 = vector.shape_cast %431 : vector<64xf32> to vector<64x1xf32>
    %cst_169 = arith.constant 3.200000e+01 : f32
    %433 = vector.broadcast %cst_169 : f32 to vector<64x1xf32>
    %434 = arith.divf %432, %433 : vector<64x1xf32>
    %cst_170 = arith.constant 9.99999974E-6 : f32
    %435 = vector.broadcast %cst_170 : f32 to vector<64x1xf32>
    %436 = arith.addf %434, %435 : vector<64x1xf32>
    %437 = math.rsqrt %436 : vector<64x1xf32>
    %438 = vector.broadcast %437 : vector<64x1xf32> to vector<64x32xf32>
    %439 = arith.mulf %429, %438 : vector<64x32xf32>
    %440 = vector.broadcast %422 : vector<1x32xf32> to vector<64x32xf32>
    %441 = arith.mulf %439, %440 : vector<64x32xf32>
    %442 = vector.broadcast %423 : vector<1x32xf32> to vector<64x32xf32>
    %443 = arith.addf %441, %442 : vector<64x32xf32>
    %c0_171 = arith.constant 0 : index
    %c0_172 = arith.constant 0 : index
    %444 = vector.load %arg18[%c0_171, %c0_172] : memref<32x16xbf16, #tpu.memory_space<vmem>>, vector<32x16xbf16>
    %445 = arith.truncf %443 : vector<64x32xf32> to vector<64x32xbf16>
    %cst_173 = arith.constant dense<0.000000e+00> : vector<64x16xf32>
    %446 = tpu.matmul %445, %444, %cst_173 {dimension_numbers = #tpu.dot_dimension_numbers<[1], [0], [0], [1], [0, 0, 1, 1], [], []>} : vector<64x32xbf16>, vector<32x16xbf16>, vector<64x16xf32> -> vector<64x16xf32>
    %c0_174 = arith.constant 0 : index
    %c0_175 = arith.constant 0 : index
    %447 = vector.load %arg19[%c0_174, %c0_175] : memref<1x16xf32, #tpu.memory_space<vmem>>, vector<1x16xf32>
    %448 = vector.broadcast %447 : vector<1x16xf32> to vector<64x16xf32>
    %449 = arith.addf %446, %448 : vector<64x16xf32>
    %450 = vector.shape_cast %449 : vector<64x16xf32> to vector<4x16x16xf32>
    %451 = arith.truncf %450 : vector<4x16x16xf32> to vector<4x16x16xbf16>
    %c0_176 = arith.constant 0 : index
    %c0_177 = arith.constant 0 : index
    %c0_178 = arith.constant 0 : index
    %452 = vector.load %arg20[%c0_176, %c0_177, %c0_178] : memref<4x6x16xbf16, #tpu.memory_space<vmem>>, vector<4x6x16xbf16>
    "tpu.trace_start"() <{level = 10 : i32, message = "bcv,bvl->bcl"}> : () -> ()
    %cst_179 = arith.constant dense<0.000000e+00> : vector<4x6x16xf32>
    %453 = tpu.matmul %452, %451, %cst_179 {dimension_numbers = #tpu.dot_dimension_numbers<[2], [1], [1], [2], [0, 0, 0, 1, 1, 2], [0], [0]>} : vector<4x6x16xbf16>, vector<4x16x16xbf16>, vector<4x6x16xf32> -> vector<4x6x16xf32>
    "tpu.trace_stop"() : () -> ()
    %c0_180 = arith.constant 0 : index
    %c0_181 = arith.constant 0 : index
    %454 = vector.load %arg21[%c0_180, %c0_181] : memref<6x1xf32, #tpu.memory_space<vmem>>, vector<6x1xf32>
    %455 = vector.shape_cast %454 : vector<6x1xf32> to vector<1x6x1xf32>
    %456 = vector.broadcast %455 : vector<1x6x1xf32> to vector<4x6x16xf32>
    %457 = arith.addf %453, %456 : vector<4x6x16xf32>
    %c0_182 = arith.constant 0 : index
    %c0_183 = arith.constant 0 : index
    %c0_184 = arith.constant 0 : index
    %458 = vector.load %arg22[%c0_182, %c0_183, %c0_184] : memref<4x6x16xf32, #tpu.memory_space<vmem>>, vector<4x6x16xf32>
    tpu.vector_store %arg22[%c0_182, %c0_183, %c0_184], %457 {strides = array<i32>} : memref<4x6x16xf32, #tpu.memory_space<vmem>>, vector<4x6x16xf32>,
    return
  }
  func.func @transform_0(%arg0: i32) -> (i32, i32, i32) {
    %c0_i32 = arith.constant 0 : i32
    %c0_i32_0 = arith.constant 0 : i32
    %c0_i32_1 = arith.constant 0 : i32
    return %arg0, %c0_i32, %c0_i32_0 : i32, i32, i32
  }
  func.func @transform_1(%arg0: i32) -> (i32, i32) {
    %c0_i32 = arith.constant 0 : i32
    %c0_i32_0 = arith.constant 0 : i32
    %c0_i32_1 = arith.constant 0 : i32
    return %c0_i32, %c0_i32_0 : i32, i32
  }
  func.func @transform_2(%arg0: i32) -> (i32, i32) {
    %c0_i32 = arith.constant 0 : i32
    %c0_i32_0 = arith.constant 0 : i32
    %c0_i32_1 = arith.constant 0 : i32
    return %c0_i32, %c0_i32_0 : i32, i32
  }
  func.func @transform_3(%arg0: i32) -> (i32, i32, i32) {
    %c0_i32 = arith.constant 0 : i32
    %c0_i32_0 = arith.constant 0 : i32
    %c0_i32_1 = arith.constant 0 : i32
    %c0_i32_2 = arith.constant 0 : i32
    return %c0_i32, %c0_i32_0, %c0_i32_1 : i32, i32, i32
  }
  func.func @transform_4(%arg0: i32) -> (i32, i32, i32) {
    %c0_i32 = arith.constant 0 : i32
    %c0_i32_0 = arith.constant 0 : i32
    %c0_i32_1 = arith.constant 0 : i32
    %c0_i32_2 = arith.constant 0 : i32
    return %c0_i32, %c0_i32_0, %c0_i32_1 : i32, i32, i32
  }
  func.func @transform_5(%arg0: i32) -> (i32, i32, i32) {
    %c0_i32 = arith.constant 0 : i32
    %c0_i32_0 = arith.constant 0 : i32
    %c0_i32_1 = arith.constant 0 : i32
    %c0_i32_2 = arith.constant 0 : i32
    return %c0_i32, %c0_i32_0, %c0_i32_1 : i32, i32, i32
  }
  func.func @transform_6(%arg0: i32) -> (i32, i32, i32) {
    %c0_i32 = arith.constant 0 : i32
    %c0_i32_0 = arith.constant 0 : i32
    %c0_i32_1 = arith.constant 0 : i32
    %c0_i32_2 = arith.constant 0 : i32
    return %c0_i32, %c0_i32_0, %c0_i32_1 : i32, i32, i32
  }
  func.func @transform_7(%arg0: i32) -> (i32, i32, i32) {
    %c0_i32 = arith.constant 0 : i32
    %c0_i32_0 = arith.constant 0 : i32
    %c0_i32_1 = arith.constant 0 : i32
    %c0_i32_2 = arith.constant 0 : i32
    return %c0_i32, %c0_i32_0, %c0_i32_1 : i32, i32, i32
  }
  func.func @transform_8(%arg0: i32) -> (i32, i32, i32) {
    %c0_i32 = arith.constant 0 : i32
    %c0_i32_0 = arith.constant 0 : i32
    %c0_i32_1 = arith.constant 0 : i32
    %c0_i32_2 = arith.constant 0 : i32
    return %c0_i32, %c0_i32_0, %c0_i32_1 : i32, i32, i32
  }
  func.func @transform_9(%arg0: i32) -> (i32, i32, i32) {
    %c0_i32 = arith.constant 0 : i32
    %c0_i32_0 = arith.constant 0 : i32
    %c0_i32_1 = arith.constant 0 : i32
    %c0_i32_2 = arith.constant 0 : i32
    return %c0_i32, %c0_i32_0, %c0_i32_1 : i32, i32, i32
  }
  func.func @transform_10(%arg0: i32) -> (i32, i32, i32) {
    %c0_i32 = arith.constant 0 : i32
    %c0_i32_0 = arith.constant 0 : i32
    %c0_i32_1 = arith.constant 0 : i32
    %c0_i32_2 = arith.constant 0 : i32
    return %c0_i32, %c0_i32_0, %c0_i32_1 : i32, i32, i32
  }
  func.func @transform_11(%arg0: i32) -> (i32, i32, i32) {
    %c0_i32 = arith.constant 0 : i32
    %c0_i32_0 = arith.constant 0 : i32
    %c0_i32_1 = arith.constant 0 : i32
    %c0_i32_2 = arith.constant 0 : i32
    return %c0_i32, %c0_i32_0, %c0_i32_1 : i32, i32, i32
  }
  func.func @transform_12(%arg0: i32) -> (i32, i32, i32) {
    %c0_i32 = arith.constant 0 : i32
    %c0_i32_0 = arith.constant 0 : i32
    %c0_i32_1 = arith.constant 0 : i32
    %c0_i32_2 = arith.constant 0 : i32
    return %c0_i32, %c0_i32_0, %c0_i32_1 : i32, i32, i32
  }
  func.func @transform_13(%arg0: i32) -> (i32, i32, i32) {
    %c0_i32 = arith.constant 0 : i32
    %c0_i32_0 = arith.constant 0 : i32
    %c0_i32_1 = arith.constant 0 : i32
    %c0_i32_2 = arith.constant 0 : i32
    return %c0_i32, %c0_i32_0, %c0_i32_1 : i32, i32, i32
  }
  func.func @transform_14(%arg0: i32) -> (i32, i32, i32) {
    %c0_i32 = arith.constant 0 : i32
    %c0_i32_0 = arith.constant 0 : i32
    %c0_i32_1 = arith.constant 0 : i32
    %c0_i32_2 = arith.constant 0 : i32
    return %c0_i32, %c0_i32_0, %c0_i32_1 : i32, i32, i32
  }
  func.func @transform_15(%arg0: i32) -> (i32, i32) {
    %c0_i32 = arith.constant 0 : i32
    %c0_i32_0 = arith.constant 0 : i32
    %c0_i32_1 = arith.constant 0 : i32
    return %c0_i32, %c0_i32_0 : i32, i32
  }
  func.func @transform_16(%arg0: i32) -> (i32, i32) {
    %c0_i32 = arith.constant 0 : i32
    %c0_i32_0 = arith.constant 0 : i32
    %c0_i32_1 = arith.constant 0 : i32
    return %c0_i32, %c0_i32_0 : i32, i32
  }
  func.func @transform_17(%arg0: i32) -> (i32, i32) {
    %c0_i32 = arith.constant 0 : i32
    %c0_i32_0 = arith.constant 0 : i32
    %c0_i32_1 = arith.constant 0 : i32
    return %c0_i32, %c0_i32_0 : i32, i32
  }
  func.func @transform_18(%arg0: i32) -> (i32, i32) {
    %c0_i32 = arith.constant 0 : i32
    %c0_i32_0 = arith.constant 0 : i32
    %c0_i32_1 = arith.constant 0 : i32
    return %c0_i32, %c0_i32_0 : i32, i32
  }
  func.func @transform_19(%arg0: i32) -> (i32, i32, i32) {
    %c0_i32 = arith.constant 0 : i32
    %c0_i32_0 = arith.constant 0 : i32
    %c0_i32_1 = arith.constant 0 : i32
    %c0_i32_2 = arith.constant 0 : i32
    return %c0_i32, %c0_i32_0, %c0_i32_1 : i32, i32, i32
  }
  func.func @transform_20(%arg0: i32) -> (i32, i32) {
    %c0_i32 = arith.constant 0 : i32
    %c0_i32_0 = arith.constant 0 : i32
    %c0_i32_1 = arith.constant 0 : i32
    return %c0_i32, %c0_i32_0 : i32, i32
  }
  func.func @transform_21(%arg0: i32) -> (i32, i32, i32) {
    %c0_i32 = arith.constant 0 : i32
    %c0_i32_0 = arith.constant 0 : i32
    %c0_i32_1 = arith.constant 0 : i32
    return %arg0, %c0_i32, %c0_i32_0 : i32, i32, i32
  }
}

</mosaic_0001>

<llo_original>
// kernel: forward.1
$region0: #{forward.1}
  #allocation0 [shape = 'u32[]', space=smem, size = 0x4, offset = 0x4, fixed_abs, tag = 'smem constant byte address 0x4 - core index']
  #allocation1 [shape = 'u32[144,128]{1,0:T(1,128)}', space=vmem, size = 0x12000, scoped, tag = 'internal scratch']
  %s0 = inlined_call_operand.vmem [shape: f32[8,16,16], index: 0, kind: input, shape index: {}]
  %s1 = inlined_call_operand.vmem [shape: bf16[16,32], index: 1, kind: input, shape index: {}]
  %s2 = inlined_call_operand.vmem [shape: f32[1,32], index: 2, kind: input, shape index: {}]
  %s3 = inlined_call_operand.vmem [shape: bf16[2,32,96], index: 3, kind: input, shape index: {}]
  %s4 = inlined_call_operand.vmem [shape: f32[2,1,96], index: 4, kind: input, shape index: {}]
  %s5 = inlined_call_operand.vmem [shape: f32[2,32,32], index: 5, kind: input, shape index: {}]
  %s6 = inlined_call_operand.vmem [shape: f32[2,1,32], index: 6, kind: input, shape index: {}]
  %s7 = inlined_call_operand.vmem [shape: f32[2,1,32], index: 7, kind: input, shape index: {}, may-alias: {7,13}]
  %s8 = inlined_call_operand.vmem [shape: f32[2,1,32], index: 8, kind: input, shape index: {}, may-alias: {8,14}]
  %s9 = inlined_call_operand.vmem [shape: bf16[2,32,64], index: 9, kind: input, shape index: {}]
  %s10 = inlined_call_operand.vmem [shape: f32[2,1,64], index: 10, kind: input, shape index: {}]
  %s11 = inlined_call_operand.vmem [shape: bf16[2,64,32], index: 11, kind: input, shape index: {}]
  %s12 = inlined_call_operand.vmem [shape: f32[2,1,32], index: 12, kind: input, shape index: {}]
  %s13 = inlined_call_operand.vmem [shape: f32[2,1,32], index: 13, kind: input, shape index: {}, may-alias: {7,13}]
  %s14 = inlined_call_operand.vmem [shape: f32[2,1,32], index: 14, kind: input, shape index: {}, may-alias: {8,14}]
  %s15 = inlined_call_operand.vmem [shape: f32[1,32], index: 15, kind: input, shape index: {}]
  %s16 = inlined_call_operand.vmem [shape: f32[1,32], index: 16, kind: input, shape index: {}]
  %s17 = inlined_call_operand.vmem [shape: bf16[32,16], index: 17, kind: input, shape index: {}]
  %s18 = inlined_call_operand.vmem [shape: f32[1,16], index: 18, kind: input, shape index: {}]
  %s19 = inlined_call_operand.vmem [shape: bf16[4,6,16], index: 19, kind: input, shape index: {}]
  %s20 = inlined_call_operand.vmem [shape: f32[6,1], index: 20, kind: input, shape index: {}]
  %s21 = inlined_call_operand.vmem [shape: f32[8,6,16], index: 21, kind: output, shape index: {}]
  %s22 = sld [smem:[#allocation0]]
  $region117: #{forward.1} parent=0
    _
  %s24 = ssub.s32 1, %s22
  %s25 = scalar_select 0, %s24, %s22
  loop: start=0, step=1, limit=4
  $region2: #{forward.1} parent=0 // loop_pre_header
    _
  $region3: #{forward.1} parent=0 // loop_header
    %s27 = sphi 0, %s31
    %p28 = scmp.ge.s32.totalorder %s27, 4
    %s37 = sphi 0, %s39
    %s40 = sphi 0, %s37
    %s41 = sphi 0, %s40
    %s57 = sphi 0, %s41
    %s61 = sphi 0, %s61
    %s63 = sphi 0, %s61
    %s64 = sphi 0, %s63
    %s78 = sphi 0, %s64
    %s82 = sphi 0, %s82
    %s84 = sphi 0, %s82
    %s85 = sphi 0, %s84
    %s99 = sphi 0, %s85
    %s103 = sphi 0, %s103
    %s105 = sphi 0, %s103
    %s106 = sphi 0, %s105
    %s120 = sphi 0, %s106
    %s124 = sphi 0, %s124
    %s126 = sphi 0, %s124
    %s127 = sphi 0, %s126
    %s141 = sphi 0, %s127
    %s145 = sphi 0, %s145
    %s147 = sphi 0, %s145
    %s148 = sphi 0, %s147
    %s162 = sphi 0, %s148
    %s166 = sphi 0, %s166
    %s168 = sphi 0, %s166
    %s169 = sphi 0, %s168
    %s183 = sphi 0, %s169
    %s187 = sphi 0, %s187
    %s189 = sphi 0, %s187
    %s190 = sphi 0, %s189
    %s204 = sphi 0, %s190
    %s208 = sphi 0, %s208
    %s210 = sphi 0, %s208
    %s211 = sphi 0, %s210
    %s225 = sphi 0, %s211
    %s229 = sphi 0, %s229
    %s231 = sphi 0, %s229
    %s232 = sphi 0, %s231
    %s246 = sphi 0, %s232
    %s250 = sphi 0, %s250
    %s252 = sphi 0, %s250
    %s253 = sphi 0, %s252
    %s267 = sphi 0, %s253
    %s271 = sphi 0, %s271
    %s273 = sphi 0, %s271
    %s274 = sphi 0, %s273
    %s288 = sphi 0, %s274
    %s292 = sphi 0, %s292
    %s294 = sphi 0, %s292
    %s295 = sphi 0, %s294
    %s309 = sphi 0, %s295
    %s313 = sphi 0, %s313
    %s315 = sphi 0, %s313
    %s316 = sphi 0, %s315
    %s330 = sphi 0, %s316
    %s334 = sphi 0, %s334
    %s336 = sphi 0, %s334
    %s337 = sphi 0, %s336
    %s351 = sphi 0, %s337
    %s355 = sphi 0, %s355
    %s357 = sphi 0, %s355
    %s358 = sphi 0, %s357
    %s372 = sphi 0, %s358
    %s376 = sphi 0, %s376
    %s378 = sphi 0, %s376
    %s379 = sphi 0, %s378
    %s393 = sphi 0, %s379
    %s397 = sphi 0, %s397
    %s399 = sphi 0, %s397
    %s400 = sphi 0, %s399
    %s414 = sphi 0, %s400
    %s418 = sphi 0, %s418
    %s420 = sphi 0, %s418
    %s421 = sphi 0, %s420
    %s435 = sphi 0, %s421
    %s439 = sphi 0, %s439
    %s441 = sphi 0, %s439
    %s442 = sphi 0, %s441
    %s456 = sphi 0, %s442
    %s460 = sphi 0, %s460
    %s462 = sphi 0, %s460
    %s463 = sphi 0, %s462
    %s477 = sphi 0, %s463
    %s483 = sphi 0, %s485
    %s486 = sphi 0, %s483
    %s487 = sphi 0, %s486
    %s503 = sphi 0, %s487
  $region4: #{forward.1} parent=0 // loop_header_branch
    %30 = sbr.rel (%p28) target = $region8
  $region5: #{forward.1} parent=0 // loop_body
    %s32 = ssub.s32 %s27, 1
    %s33 = ssub.s32 %s27, 2
    %s34 = sadd.s32 %s27, 1
    %s35 = ssub.s32 %s27, %s34
    %p36 = scmp.eq.s32.totalorder %s35, 0
    %s38 = sadd.s32 %s37, 1
    %s39 = scalar_select %p36, %s37, %s38
    %p42 = pneg %p36
    %p43 = scmp.eq.s32.totalorder %s27, 1
    %p44 = por %p42, %p43
    %p45 = scmp.ne.s32.totalorder %s37, %s40
    %p46 = scmp.eq.s32.totalorder %s27, 0
    %p47 = por %p45, %p46
    %p48 = scmp.ne.s32.totalorder %s37, %s40
    %p49 = scmp.eq.s32.totalorder %s32, 1
    %p50 = por %p48, %p49
    %p51 = scmp.ne.s32.totalorder %s40, %s41
    %p52 = scmp.eq.s32.totalorder %s32, 0
    %p53 = por %p51, %p52
    %p54 = scmp.ne.s32.totalorder %s40, %s41
    %p55 = scmp.eq.s32.totalorder %s33, 1
    %p56 = por %p54, %p55
    %p58 = scmp.ne.s32.totalorder %s41, %s57
    %p59 = scmp.eq.s32.totalorder %s33, 0
    %p60 = por %p58, %p59
    %s62 = sadd.s32 %s61, 1
    %p65 = scmp.eq.s32.totalorder %s27, 1
    %p66 = scmp.ne.s32.totalorder %s61, %s63
    %p67 = scmp.eq.s32.totalorder %s27, 0
    %p68 = por %p66, %p67
    %p69 = scmp.ne.s32.totalorder %s61, %s63
    %p70 = scmp.eq.s32.totalorder %s32, 1
    %p71 = por %p69, %p70
    %p72 = scmp.ne.s32.totalorder %s63, %s64
    %p73 = scmp.eq.s32.totalorder %s32, 0
    %p74 = por %p72, %p73
    %p75 = scmp.ne.s32.totalorder %s63, %s64
    %p76 = scmp.eq.s32.totalorder %s33, 1
    %p77 = por %p75, %p76
    %p79 = scmp.ne.s32.totalorder %s64, %s78
    %p80 = scmp.eq.s32.totalorder %s33, 0
    %p81 = por %p79, %p80
    %s83 = sadd.s32 %s82, 1
    %p86 = scmp.eq.s32.totalorder %s27, 1
    %p87 = scmp.ne.s32.totalorder %s82, %s84
    %p88 = scmp.eq.s32.totalorder %s27, 0
    %p89 = por %p87, %p88
    %p90 = scmp.ne.s32.totalorder %s82, %s84
    %p91 = scmp.eq.s32.totalorder %s32, 1
    %p92 = por %p90, %p91
    %p93 = scmp.ne.s32.totalorder %s84, %s85
    %p94 = scmp.eq.s32.totalorder %s32, 0
    %p95 = por %p93, %p94
    %p96 = scmp.ne.s32.totalorder %s84, %s85
    %p97 = scmp.eq.s32.totalorder %s33, 1
    %p98 = por %p96, %p97
    %p100 = scmp.ne.s32.totalorder %s85, %s99
    %p101 = scmp.eq.s32.totalorder %s33, 0
    %p102 = por %p100, %p101
    %s104 = sadd.s32 %s103, 1
    %p107 = scmp.eq.s32.totalorder %s27, 1
    %p108 = scmp.ne.s32.totalorder %s103, %s105
    %p109 = scmp.eq.s32.totalorder %s27, 0
    %p110 = por %p108, %p109
    %p111 = scmp.ne.s32.totalorder %s103, %s105
    %p112 = scmp.eq.s32.totalorder %s32, 1
    %p113 = por %p111, %p112
    %p114 = scmp.ne.s32.totalorder %s105, %s106
    %p115 = scmp.eq.s32.totalorder %s32, 0
    %p116 = por %p114, %p115
    %p117 = scmp.ne.s32.totalorder %s105, %s106
    %p118 = scmp.eq.s32.totalorder %s33, 1
    %p119 = por %p117, %p118
    %p121 = scmp.ne.s32.totalorder %s106, %s120
    %p122 = scmp.eq.s32.totalorder %s33, 0
    %p123 = por %p121, %p122
    %s125 = sadd.s32 %s124, 1
    %p128 = scmp.eq.s32.totalorder %s27, 1
    %p129 = scmp.ne.s32.totalorder %s124, %s126
    %p130 = scmp.eq.s32.totalorder %s27, 0
    %p131 = por %p129, %p130
    %p132 = scmp.ne.s32.totalorder %s124, %s126
    %p133 = scmp.eq.s32.totalorder %s32, 1
    %p134 = por %p132, %p133
    %p135 = scmp.ne.s32.totalorder %s126, %s127
    %p136 = scmp.eq.s32.totalorder %s32, 0
    %p137 = por %p135, %p136
    %p138 = scmp.ne.s32.totalorder %s126, %s127
    %p139 = scmp.eq.s32.totalorder %s33, 1
    %p140 = por %p138, %p139
    %p142 = scmp.ne.s32.totalorder %s127, %s141
    %p143 = scmp.eq.s32.totalorder %s33, 0
    %p144 = por %p142, %p143
    %s146 = sadd.s32 %s145, 1
    %p149 = scmp.eq.s32.totalorder %s27, 1
    %p150 = scmp.ne.s32.totalorder %s145, %s147
    %p151 = scmp.eq.s32.totalorder %s27, 0
    %p152 = por %p150, %p151
    %p153 = scmp.ne.s32.totalorder %s145, %s147
    %p154 = scmp.eq.s32.totalorder %s32, 1
    %p155 = por %p153, %p154
    %p156 = scmp.ne.s32.totalorder %s147, %s148
    %p157 = scmp.eq.s32.totalorder %s32, 0
    %p158 = por %p156, %p157
    %p159 = scmp.ne.s32.totalorder %s147, %s148
    %p160 = scmp.eq.s32.totalorder %s33, 1
    %p161 = por %p159, %p160
    %p163 = scmp.ne.s32.totalorder %s148, %s162
    %p164 = scmp.eq.s32.totalorder %s33, 0
    %p165 = por %p163, %p164
    %s167 = sadd.s32 %s166, 1
    %p170 = scmp.eq.s32.totalorder %s27, 1
    %p171 = scmp.ne.s32.totalorder %s166, %s168
    %p172 = scmp.eq.s32.totalorder %s27, 0
    %p173 = por %p171, %p172
    %p174 = scmp.ne.s32.totalorder %s166, %s168
    %p175 = scmp.eq.s32.totalorder %s32, 1
    %p176 = por %p174, %p175
    %p177 = scmp.ne.s32.totalorder %s168, %s169
    %p178 = scmp.eq.s32.totalorder %s32, 0
    %p179 = por %p177, %p178
    %p180 = scmp.ne.s32.totalorder %s168, %s169
    %p181 = scmp.eq.s32.totalorder %s33, 1
    %p182 = por %p180, %p181
    %p184 = scmp.ne.s32.totalorder %s169, %s183
    %p185 = scmp.eq.s32.totalorder %s33, 0
    %p186 = por %p184, %p185
    %s188 = sadd.s32 %s187, 1
    %p191 = scmp.eq.s32.totalorder %s27, 1
    %p192 = scmp.ne.s32.totalorder %s187, %s189
    %p193 = scmp.eq.s32.totalorder %s27, 0
    %p194 = por %p192, %p193
    %p195 = scmp.ne.s32.totalorder %s187, %s189
    %p196 = scmp.eq.s32.totalorder %s32, 1
    %p197 = por %p195, %p196
    %p198 = scmp.ne.s32.totalorder %s189, %s190
    %p199 = scmp.eq.s32.totalorder %s32, 0
    %p200 = por %p198, %p199
    %p201 = scmp.ne.s32.totalorder %s189, %s190
    %p202 = scmp.eq.s32.totalorder %s33, 1
    %p203 = por %p201, %p202
    %p205 = scmp.ne.s32.totalorder %s190, %s204
    %p206 = scmp.eq.s32.totalorder %s33, 0
    %p207 = por %p205, %p206
    %s209 = sadd.s32 %s208, 1
    %p212 = scmp.eq.s32.totalorder %s27, 1
    %p213 = scmp.ne.s32.totalorder %s208, %s210
    %p214 = scmp.eq.s32.totalorder %s27, 0
    %p215 = por %p213, %p214
    %p216 = scmp.ne.s32.totalorder %s208, %s210
    %p217 = scmp.eq.s32.totalorder %s32, 1
    %p218 = por %p216, %p217
    %p219 = scmp.ne.s32.totalorder %s210, %s211
    %p220 = scmp.eq.s32.totalorder %s32, 0
    %p221 = por %p219, %p220
    %p222 = scmp.ne.s32.totalorder %s210, %s211
    %p223 = scmp.eq.s32.totalorder %s33, 1
    %p224 = por %p222, %p223
    %p226 = scmp.ne.s32.totalorder %s211, %s225
    %p227 = scmp.eq.s32.totalorder %s33, 0
    %p228 = por %p226, %p227
    %s230 = sadd.s32 %s229, 1
    %p233 = scmp.eq.s32.totalorder %s27, 1
    %p234 = scmp.ne.s32.totalorder %s229, %s231
    %p235 = scmp.eq.s32.totalorder %s27, 0
    %p236 = por %p234, %p235
    %p237 = scmp.ne.s32.totalorder %s229, %s231
    %p238 = scmp.eq.s32.totalorder %s32, 1
    %p239 = por %p237, %p238
    %p240 = scmp.ne.s32.totalorder %s231, %s232
    %p241 = scmp.eq.s32.totalorder %s32, 0
    %p242 = por %p240, %p241
    %p243 = scmp.ne.s32.totalorder %s231, %s232
    %p244 = scmp.eq.s32.totalorder %s33, 1
    %p245 = por %p243, %p244
    %p247 = scmp.ne.s32.totalorder %s232, %s246
    %p248 = scmp.eq.s32.totalorder %s33, 0
    %p249 = por %p247, %p248
    %s251 = sadd.s32 %s250, 1
    %p254 = scmp.eq.s32.totalorder %s27, 1
    %p255 = scmp.ne.s32.totalorder %s250, %s252
    %p256 = scmp.eq.s32.totalorder %s27, 0
    %p257 = por %p255, %p256
    %p258 = scmp.ne.s32.totalorder %s250, %s252
    %p259 = scmp.eq.s32.totalorder %s32, 1
    %p260 = por %p258, %p259
    %p261 = scmp.ne.s32.totalorder %s252, %s253
    %p262 = scmp.eq.s32.totalorder %s32, 0
    %p263 = por %p261, %p262
    %p264 = scmp.ne.s32.totalorder %s252, %s253
    %p265 = scmp.eq.s32.totalorder %s33, 1
    %p266 = por %p264, %p265
    %p268 = scmp.ne.s32.totalorder %s253, %s267
    %p269 = scmp.eq.s32.totalorder %s33, 0
    %p270 = por %p268, %p269
    %s272 = sadd.s32 %s271, 1
    %p275 = scmp.eq.s32.totalorder %s27, 1
    %p276 = scmp.ne.s32.totalorder %s271, %s273
    %p277 = scmp.eq.s32.totalorder %s27, 0
    %p278 = por %p276, %p277
    %p279 = scmp.ne.s32.totalorder %s271, %s273
    %p280 = scmp.eq.s32.totalorder %s32, 1
    %p281 = por %p279, %p280
    %p282 = scmp.ne.s32.totalorder %s273, %s274
    %p283 = scmp.eq.s32.totalorder %s32, 0
    %p284 = por %p282, %p283
    %p285 = scmp.ne.s32.totalorder %s273, %s274
    %p286 = scmp.eq.s32.totalorder %s33, 1
    %p287 = por %p285, %p286
    %p289 = scmp.ne.s32.totalorder %s274, %s288
    %p290 = scmp.eq.s32.totalorder %s33, 0
    %p291 = por %p289, %p290
    %s293 = sadd.s32 %s292, 1
    %p296 = scmp.eq.s32.totalorder %s27, 1
    %p297 = scmp.ne.s32.totalorder %s292, %s294
    %p298 = scmp.eq.s32.totalorder %s27, 0
    %p299 = por %p297, %p298
    %p300 = scmp.ne.s32.totalorder %s292, %s294
    %p301 = scmp.eq.s32.totalorder %s32, 1
    %p302 = por %p300, %p301
    %p303 = scmp.ne.s32.totalorder %s294, %s295
    %p304 = scmp.eq.s32.totalorder %s32, 0
    %p305 = por %p303, %p304
    %p306 = scmp.ne.s32.totalorder %s294, %s295
    %p307 = scmp.eq.s32.totalorder %s33, 1
    %p308 = por %p306, %p307
    %p310 = scmp.ne.s32.totalorder %s295, %s309
    %p311 = scmp.eq.s32.totalorder %s33, 0
    %p312 = por %p310, %p311
    %s314 = sadd.s32 %s313, 1
    %p317 = scmp.eq.s32.totalorder %s27, 1
    %p318 = scmp.ne.s32.totalorder %s313, %s315
    %p319 = scmp.eq.s32.totalorder %s27, 0
    %p320 = por %p318, %p319
    %p321 = scmp.ne.s32.totalorder %s313, %s315
    %p322 = scmp.eq.s32.totalorder %s32, 1
    %p323 = por %p321, %p322
    %p324 = scmp.ne.s32.totalorder %s315, %s316
    %p325 = scmp.eq.s32.totalorder %s32, 0
    %p326 = por %p324, %p325
    %p327 = scmp.ne.s32.totalorder %s315, %s316
    %p328 = scmp.eq.s32.totalorder %s33, 1
    %p329 = por %p327, %p328
    %p331 = scmp.ne.s32.totalorder %s316, %s330
    %p332 = scmp.eq.s32.totalorder %s33, 0
    %p333 = por %p331, %p332
    %s335 = sadd.s32 %s334, 1
    %p338 = scmp.eq.s32.totalorder %s27, 1
    %p339 = scmp.ne.s32.totalorder %s334, %s336
    %p340 = scmp.eq.s32.totalorder %s27, 0
    %p341 = por %p339, %p340
    %p342 = scmp.ne.s32.totalorder %s334, %s336
    %p343 = scmp.eq.s32.totalorder %s32, 1
    %p344 = por %p342, %p343
    %p345 = scmp.ne.s32.totalorder %s336, %s337
    %p346 = scmp.eq.s32.totalorder %s32, 0
    %p347 = por %p345, %p346
    %p348 = scmp.ne.s32.totalorder %s336, %s337
    %p349 = scmp.eq.s32.totalorder %s33, 1
    %p350 = por %p348, %p349
    %p352 = scmp.ne.s32.totalorder %s337, %s351
    %p353 = scmp.eq.s32.totalorder %s33, 0
    %p354 = por %p352, %p353
    %s356 = sadd.s32 %s355, 1
    %p359 = scmp.eq.s32.totalorder %s27, 1
    %p360 = scmp.ne.s32.totalorder %s355, %s357
    %p361 = scmp.eq.s32.totalorder %s27, 0
    %p362 = por %p360, %p361
    %p363 = scmp.ne.s32.totalorder %s355, %s357
    %p364 = scmp.eq.s32.totalorder %s32, 1
    %p365 = por %p363, %p364
    %p366 = scmp.ne.s32.totalorder %s357, %s358
    %p367 = scmp.eq.s32.totalorder %s32, 0
    %p368 = por %p366, %p367
    %p369 = scmp.ne.s32.totalorder %s357, %s358
    %p370 = scmp.eq.s32.totalorder %s33, 1
    %p371 = por %p369, %p370
    %p373 = scmp.ne.s32.totalorder %s358, %s372
    %p374 = scmp.eq.s32.totalorder %s33, 0
    %p375 = por %p373, %p374
    %s377 = sadd.s32 %s376, 1
    %p380 = scmp.eq.s32.totalorder %s27, 1
    %p381 = scmp.ne.s32.totalorder %s376, %s378
    %p382 = scmp.eq.s32.totalorder %s27, 0
    %p383 = por %p381, %p382
    %p384 = scmp.ne.s32.totalorder %s376, %s378
    %p385 = scmp.eq.s32.totalorder %s32, 1
    %p386 = por %p384, %p385
    %p387 = scmp.ne.s32.totalorder %s378, %s379
    %p388 = scmp.eq.s32.totalorder %s32, 0
    %p389 = por %p387, %p388
    %p390 = scmp.ne.s32.totalorder %s378, %s379
    %p391 = scmp.eq.s32.totalorder %s33, 1
    %p392 = por %p390, %p391
    %p394 = scmp.ne.s32.totalorder %s379, %s393
    %p395 = scmp.eq.s32.totalorder %s33, 0
    %p396 = por %p394, %p395
    %s398 = sadd.s32 %s397, 1
    %p401 = scmp.eq.s32.totalorder %s27, 1
    %p402 = scmp.ne.s32.totalorder %s397, %s399
    %p403 = scmp.eq.s32.totalorder %s27, 0
    %p404 = por %p402, %p403
    %p405 = scmp.ne.s32.totalorder %s397, %s399
    %p406 = scmp.eq.s32.totalorder %s32, 1
    %p407 = por %p405, %p406
    %p408 = scmp.ne.s32.totalorder %s399, %s400
    %p409 = scmp.eq.s32.totalorder %s32, 0
    %p410 = por %p408, %p409
    %p411 = scmp.ne.s32.totalorder %s399, %s400
    %p412 = scmp.eq.s32.totalorder %s33, 1
    %p413 = por %p411, %p412
    %p415 = scmp.ne.s32.totalorder %s400, %s414
    %p416 = scmp.eq.s32.totalorder %s33, 0
    %p417 = por %p415, %p416
    %s419 = sadd.s32 %s418, 1
    %p422 = scmp.eq.s32.totalorder %s27, 1
    %p423 = scmp.ne.s32.totalorder %s418, %s420
    %p424 = scmp.eq.s32.totalorder %s27, 0
    %p425 = por %p423, %p424
    %p426 = scmp.ne.s32.totalorder %s418, %s420
    %p427 = scmp.eq.s32.totalorder %s32, 1
    %p428 = por %p426, %p427
    %p429 = scmp.ne.s32.totalorder %s420, %s421
    %p430 = scmp.eq.s32.totalorder %s32, 0
    %p431 = por %p429, %p430
    %p432 = scmp.ne.s32.totalorder %s420, %s421
    %p433 = scmp.eq.s32.totalorder %s33, 1
    %p434 = por %p432, %p433
    %p436 = scmp.ne.s32.totalorder %s421, %s435
    %p437 = scmp.eq.s32.totalorder %s33, 0
    %p438 = por %p436, %p437
    %s440 = sadd.s32 %s439, 1
    %p443 = scmp.eq.s32.totalorder %s27, 1
    %p444 = scmp.ne.s32.totalorder %s439, %s441
    %p445 = scmp.eq.s32.totalorder %s27, 0
    %p446 = por %p444, %p445
    %p447 = scmp.ne.s32.totalorder %s439, %s441
    %p448 = scmp.eq.s32.totalorder %s32, 1
    %p449 = por %p447, %p448
    %p450 = scmp.ne.s32.totalorder %s441, %s442
    %p451 = scmp.eq.s32.totalorder %s32, 0
    %p452 = por %p450, %p451
    %p453 = scmp.ne.s32.totalorder %s441, %s442
    %p454 = scmp.eq.s32.totalorder %s33, 1
    %p455 = por %p453, %p454
    %p457 = scmp.ne.s32.totalorder %s442, %s456
    %p458 = scmp.eq.s32.totalorder %s33, 0
    %p459 = por %p457, %p458
    %s461 = sadd.s32 %s460, 1
    %p464 = scmp.eq.s32.totalorder %s27, 1
    %p465 = scmp.ne.s32.totalorder %s460, %s462
    %p466 = scmp.eq.s32.totalorder %s27, 0
    %p467 = por %p465, %p466
    %p468 = scmp.ne.s32.totalorder %s460, %s462
    %p469 = scmp.eq.s32.totalorder %s32, 1
    %p470 = por %p468, %p469
    %p471 = scmp.ne.s32.totalorder %s462, %s463
    %p472 = scmp.eq.s32.totalorder %s32, 0
    %p473 = por %p471, %p472
    %p474 = scmp.ne.s32.totalorder %s462, %s463
    %p475 = scmp.eq.s32.totalorder %s33, 1
    %p476 = por %p474, %p475
    %p478 = scmp.ne.s32.totalorder %s463, %s477
    %p479 = scmp.eq.s32.totalorder %s33, 0
    %p480 = por %p478, %p479
    %s481 = ssub.s32 %s27, %s34
    %p482 = scmp.eq.s32.totalorder %s481, 0
    %s484 = sadd.s32 %s483, 1
    %s485 = scalar_select %p482, %s483, %s484
    %p488 = pneg %p482
    %p489 = scmp.eq.s32.totalorder %s27, 1
    %p490 = por %p488, %p489
    %p491 = scmp.ne.s32.totalorder %s483, %s486
    %p492 = scmp.eq.s32.totalorder %s27, 0
    %p493 = por %p491, %p492
    %p494 = scmp.ne.s32.totalorder %s483, %s486
    %p495 = scmp.eq.s32.totalorder %s32, 1
    %p496 = por %p494, %p495
    %p497 = scmp.ne.s32.totalorder %s486, %s487
    %p498 = scmp.eq.s32.totalorder %s32, 0
    %p499 = por %p497, %p498
    %p500 = scmp.ne.s32.totalorder %s486, %s487
    %p501 = scmp.eq.s32.totalorder %s33, 1
    %p502 = por %p500, %p501
    %p504 = scmp.ne.s32.totalorder %s487, %s503
    %p505 = scmp.eq.s32.totalorder %s33, 0
    %p506 = por %p504, %p505
    %p507 = scmp.le.s32.totalorder 1, %s27
    %p508 = scmp.lt.s32.totalorder %s27, 3
    %p509 = pnand %p507, %p508
    %p510 = pneg %p509
    // Predicated region
    $region9: #{forward.1} parent=5 // pred_check
      _
    $region10: #{forward.1} parent=5 // pred_check_branch
      %512 = sbr.rel (%p509) target = $region12
    $region11: #{forward.1} parent=5 // pred_region
      %s513 = ssub.s32 %s27, 1
      // Predicated region
      $region13: #{forward.1} parent=11 // pred_check
        %p514 = pneg %p74
      $region14: #{forward.1} parent=11 // pred_check_branch
        %516 = sbr.rel (%p514) target = $region16
      $region15: #{forward.1} parent=11 // pred_region
        _
      $region16: #{forward.1} parent=11 // pred_fallthru
        _
      // Predicated region
      $region17: #{forward.1} parent=11 // pred_check
        %p517 = pneg %p95
      $region18: #{forward.1} parent=11 // pred_check_branch
        %519 = sbr.rel (%p517) target = $region20
      $region19: #{forward.1} parent=11 // pred_region
        _
      $region20: #{forward.1} parent=11 // pred_fallthru
        _
      // Predicated region
      $region21: #{forward.1} parent=11 // pred_check
        %p520 = pneg %p116
      $region22: #{forward.1} parent=11 // pred_check_branch
        %522 = sbr.rel (%p520) target = $region24
      $region23: #{forward.1} parent=11 // pred_region
        _
      $region24: #{forward.1} parent=11 // pred_fallthru
        _
      // Predicated region
      $region25: #{forward.1} parent=11 // pred_check
        %p523 = pneg %p137
      $region26: #{forward.1} parent=11 // pred_check_branch
        %525 = sbr.rel (%p523) target = $region28
      $region27: #{forward.1} parent=11 // pred_region
        _
      $region28: #{forward.1} parent=11 // pred_fallthru
        _
      // Predicated region
      $region29: #{forward.1} parent=11 // pred_check
        %p526 = pneg %p158
      $region30: #{forward.1} parent=11 // pred_check_branch
        %528 = sbr.rel (%p526) target = $region32
      $region31: #{forward.1} parent=11 // pred_region
        _
      $region32: #{forward.1} parent=11 // pred_fallthru
        _
      // Predicated region
      $region33: #{forward.1} parent=11 // pred_check
        %p529 = pneg %p179
      $region34: #{forward.1} parent=11 // pred_check_branch
        %531 = sbr.rel (%p529) target = $region36
      $region35: #{forward.1} parent=11 // pred_region
        _
      $region36: #{forward.1} parent=11 // pred_fallthru
        _
      // Predicated region
      $region37: #{forward.1} parent=11 // pred_check
        %p532 = pneg %p200
      $region38: #{forward.1} parent=11 // pred_check_branch
        %534 = sbr.rel (%p532) target = $region40
      $region39: #{forward.1} parent=11 // pred_region
        _
      $region40: #{forward.1} parent=11 // pred_fallthru
        _
      // Predicated region
      $region41: #{forward.1} parent=11 // pred_check
        %p535 = pneg %p221
      $region42: #{forward.1} parent=11 // pred_check_branch
        %537 = sbr.rel (%p535) target = $region44
      $region43: #{forward.1} parent=11 // pred_region
        _
      $region44: #{forward.1} parent=11 // pred_fallthru
        _
      // Predicated region
      $region45: #{forward.1} parent=11 // pred_check
        %p538 = pneg %p242
      $region46: #{forward.1} parent=11 // pred_check_branch
        %540 = sbr.rel (%p538) target = $region48
      $region47: #{forward.1} parent=11 // pred_region
        _
      $region48: #{forward.1} parent=11 // pred_fallthru
        _
      // Predicated region
      $region49: #{forward.1} parent=11 // pred_check
        %p541 = pneg %p263
      $region50: #{forward.1} parent=11 // pred_check_branch
        %543 = sbr.rel (%p541) target = $region52
      $region51: #{forward.1} parent=11 // pred_region
        _
      $region52: #{forward.1} parent=11 // pred_fallthru
        _
      // Predicated region
      $region53: #{forward.1} parent=11 // pred_check
        %p544 = pneg %p284
      $region54: #{forward.1} parent=11 // pred_check_branch
        %546 = sbr.rel (%p544) target = $region56
      $region55: #{forward.1} parent=11 // pred_region
        _
      $region56: #{forward.1} parent=11 // pred_fallthru
        _
      // Predicated region
      $region57: #{forward.1} parent=11 // pred_check
        %p547 = pneg %p305
      $region58: #{forward.1} parent=11 // pred_check_branch
        %549 = sbr.rel (%p547) target = $region60
      $region59: #{forward.1} parent=11 // pred_region
        _
      $region60: #{forward.1} parent=11 // pred_fallthru
        _
      // Predicated region
      $region61: #{forward.1} parent=11 // pred_check
        %p550 = pneg %p326
      $region62: #{forward.1} parent=11 // pred_check_branch
        %552 = sbr.rel (%p550) target = $region64
      $region63: #{forward.1} parent=11 // pred_region
        _
      $region64: #{forward.1} parent=11 // pred_fallthru
        _
      // Predicated region
      $region65: #{forward.1} parent=11 // pred_check
        %p553 = pneg %p347
      $region66: #{forward.1} parent=11 // pred_check_branch
        %555 = sbr.rel (%p553) target = $region68
      $region67: #{forward.1} parent=11 // pred_region
        _
      $region68: #{forward.1} parent=11 // pred_fallthru
        _
      // Predicated region
      $region69: #{forward.1} parent=11 // pred_check
        %p556 = pneg %p368
      $region70: #{forward.1} parent=11 // pred_check_branch
        %558 = sbr.rel (%p556) target = $region72
      $region71: #{forward.1} parent=11 // pred_region
        _
      $region72: #{forward.1} parent=11 // pred_fallthru
        _
      // Predicated region
      $region73: #{forward.1} parent=11 // pred_check
        %p559 = pneg %p389
      $region74: #{forward.1} parent=11 // pred_check_branch
        %561 = sbr.rel (%p559) target = $region76
      $region75: #{forward.1} parent=11 // pred_region
        _
      $region76: #{forward.1} parent=11 // pred_fallthru
        _
      // Predicated region
      $region77: #{forward.1} parent=11 // pred_check
        %p562 = pneg %p410
      $region78: #{forward.1} parent=11 // pred_check_branch
        %564 = sbr.rel (%p562) target = $region80
      $region79: #{forward.1} parent=11 // pred_region
        _
      $region80: #{forward.1} parent=11 // pred_fallthru
        _
      // Predicated region
      $region81: #{forward.1} parent=11 // pred_check
        %p565 = pneg %p431
      $region82: #{forward.1} parent=11 // pred_check_branch
        %567 = sbr.rel (%p565) target = $region84
      $region83: #{forward.1} parent=11 // pred_region
        _
      $region84: #{forward.1} parent=11 // pred_fallthru
        _
      // Predicated region
      $region85: #{forward.1} parent=11 // pred_check
        %p568 = pneg %p452
      $region86: #{forward.1} parent=11 // pred_check_branch
        %570 = sbr.rel (%p568) target = $region88
      $region87: #{forward.1} parent=11 // pred_region
        _
      $region88: #{forward.1} parent=11 // pred_fallthru
        _
      // Predicated region
      $region89: #{forward.1} parent=11 // pred_check
        %p571 = pneg %p473
      $region90: #{forward.1} parent=11 // pred_check_branch
        %573 = sbr.rel (%p571) target = $region92
      $region91: #{forward.1} parent=11 // pred_region
        _
      $region92: #{forward.1} parent=11 // pred_fallthru
        _
    $region12: #{forward.1} parent=5 // pred_fallthru
      _
    %p574 = scmp.lt.s32.totalorder %s27, 2
    // Predicated region
    $region93: #{forward.1} parent=5 // pred_check
      %p575 = pneg %p574
    $region94: #{forward.1} parent=5 // pred_check_branch
      %577 = sbr.rel (%p575) target = $region96
    $region95: #{forward.1} parent=5 // pred_region
      // Predicated region
      $region97: #{forward.1} parent=95 // pred_check
        %p578 = pneg %p47
      $region98: #{forward.1} parent=95 // pred_check_branch
        %580 = sbr.rel (%p578) target = $region100
      $region99: #{forward.1} parent=95 // pred_region
        %s581 = smul.u32 4, %s27
        %p582 = scmp.lt.s32.totalorder %s581, 7
        %s583 = scalar_select %p582, %s581, 7
        %s584 = smul.addr %s583, 2
        %s585 = smul.addr %s584, 8
        %s586 = scalar_lea.vmem %s0, %s585
        %s587 = smul.u32 4, %s27
      $region100: #{forward.1} parent=95 // pred_fallthru
        _
    $region96: #{forward.1} parent=5 // pred_fallthru
      _
    %p588 = scmp.le.s32.totalorder 1, %s27
    %p589 = scmp.lt.s32.totalorder %s27, 3
    %p590 = pnand %p588, %p589
    %p591 = pneg %p590
    // Predicated region
    $region101: #{forward.1} parent=5 // pred_check
      _
    $region102: #{forward.1} parent=5 // pred_check_branch
      %593 = sbr.rel (%p590) target = $region104
    $region103: #{forward.1} parent=5 // pred_region
      %s594 = ssub.s32 %s27, 1
      %s595 = smul.u32 4, %s32
      %p596 = scmp.lt.s32.totalorder %s595, 7
      %s597 = scalar_select %p596, %s595, 7
      %s598 = smul.addr %s597, 2
      %s599 = smul.addr %s598, 8
      %s600 = scalar_lea.vmem %s0, %s599
      %p601 = pneg %p53
      %p602 = pneg %p50
      %p603 = pneg %p74
      %p604 = pneg %p71
      %p605 = pneg %p95
      %p606 = pneg %p92
      %p607 = pneg %p116
      %p608 = pneg %p113
      %p609 = pneg %p137
      %p610 = pneg %p134
      %p611 = pneg %p158
      %p612 = pneg %p155
      %p613 = pneg %p179
      %p614 = pneg %p176
      %p615 = pneg %p200
      %p616 = pneg %p197
      %p617 = pneg %p221
      %p618 = pneg %p218
      %p619 = pneg %p242
      %p620 = pneg %p239
      %p621 = pneg %p263
      %p622 = pneg %p260
      %p623 = pneg %p284
      %p624 = pneg %p281
      %p625 = pneg %p305
      %p626 = pneg %p302
      %p627 = pneg %p326
      %p628 = pneg %p323
      %p629 = pneg %p347
      %p630 = pneg %p344
      %p631 = pneg %p368
      %p632 = pneg %p365
      %p633 = pneg %p389
      %p634 = pneg %p386
      %p635 = pneg %p410
      %p636 = pneg %p407
      %p637 = pneg %p431
      %p638 = pneg %p428
      %p639 = pneg %p452
      %p640 = pneg %p449
      %p641 = pneg %p473
      %p642 = pneg %p470
      %p643 = pneg %p499
      %p644 = pneg %p496
      %s645 = smul.u32 4, %s32
      %p646 = scmp.lt.s32.totalorder %s645, 7
      %s647 = scalar_select %p646, %s645, 7
      %s648 = smul.addr %s647, 8
      %s649 = scalar_lea.vmem %s21, %s648
      %s650 = smul.u32 4, %s32
      %p651 = scmp.lt.s32.totalorder %s650, 7
      %s652 = scalar_select %p651, %s650, 7
      %s653 = smul.addr %s652, 2
      %s654 = smul.addr %s653, 8
      %s655 = scalar_lea.vmem %s0, %s654
      %s656 = smul.u32 4, %s32
      %s657 = smul.u32 4, %s32
      %p658 = scmp.lt.s32.totalorder %s657, 7
      %s659 = scalar_select %p658, %s657, 7
      %s660 = smul.addr %s659, 8
      %s661 = scalar_lea.vmem %s21, %s660
      %s662 = smul.u32 4, %s32
      %v664 = vld [vmem:[%s655] sm:$0xff]
      %v665 = vld [vmem:[%s655 + $0x8] sm:$0xff]
      %v666 = vld [vmem:[%s655 + $0x10] sm:$0xff]
      %v667 = vld [vmem:[%s655 + $0x18] sm:$0xff]
      %v668 = vld [vmem:[%s655 + $0x20] sm:$0xff]
      %v669 = vld [vmem:[%s655 + $0x28] sm:$0xff]
      %v670 = vld [vmem:[%s655 + $0x30] sm:$0xff]
      %v671 = vld [vmem:[%s655 + $0x38] sm:$0xff]
      %vm672 = vcmask 130048
      %v673 = vsel %vm672, %v664, 0.0
      %674 = vadd.xlane.f32.xlu0 %v673
      %v675 = vpop.xlane.xlu0 %674
      %v676 = vsel %vm672, %v665, 0.0
      %677 = vadd.xlane.f32.xlu0 %v676
      %v678 = vpop.xlane.xlu0 %677
      %v679 = vsel %vm672, %v666, 0.0
      %680 = vadd.xlane.f32.xlu0 %v679
      %v681 = vpop.xlane.xlu0 %680
      %v682 = vsel %vm672, %v667, 0.0
      %683 = vadd.xlane.f32.xlu0 %v682
      %v684 = vpop.xlane.xlu0 %683
      %v685 = vsel %vm672, %v668, 0.0
      %686 = vadd.xlane.f32.xlu0 %v685
      %v687 = vpop.xlane.xlu0 %686
      %v688 = vsel %vm672, %v669, 0.0
      %689 = vadd.xlane.f32.xlu0 %v688
      %v690 = vpop.xlane.xlu0 %689
      %v691 = vsel %vm672, %v670, 0.0
      %692 = vadd.xlane.f32.xlu0 %v691
      %v693 = vpop.xlane.xlu0 %692
      %v694 = vsel %vm672, %v671, 0.0
      %695 = vadd.xlane.f32.xlu0 %v694
      %v696 = vpop.xlane.xlu0 %695
      %v697 = vrcp.pop 16.0
      %v698 = vmul.f32 %v675, %v697
      %v699 = vmul.f32 %v678, %v697
      %v700 = vmul.f32 %v681, %v697
      %v701 = vmul.f32 %v684, %v697
      %v702 = vmul.f32 %v687, %v697
      %v703 = vmul.f32 %v690, %v697
      %v704 = vmul.f32 %v693, %v697
      %v705 = vmul.f32 %v696, %v697
      %v706 = vsub.f32 %v664, %v698
      %v707 = vsub.f32 %v665, %v699
      %v708 = vsub.f32 %v666, %v700
      %v709 = vsub.f32 %v667, %v701
      %v710 = vsub.f32 %v668, %v702
      %v711 = vsub.f32 %v669, %v703
      %v712 = vsub.f32 %v670, %v704
      %v713 = vsub.f32 %v671, %v705
      %v714 = vmul.f32 %v706, %v706
      %v715 = vmul.f32 %v707, %v707
      %v716 = vmul.f32 %v708, %v708
      %v717 = vmul.f32 %v709, %v709
      %v718 = vmul.f32 %v710, %v710
      %v719 = vmul.f32 %v711, %v711
      %v720 = vmul.f32 %v712, %v712
      %v721 = vmul.f32 %v713, %v713
      %v722 = vsel %vm672, %v714, 0.0
      %723 = vadd.xlane.f32.xlu0 %v722
      %v724 = vpop.xlane.xlu0 %723
      %v725 = vsel %vm672, %v715, 0.0
      %726 = vadd.xlane.f32.xlu0 %v725
      %v727 = vpop.xlane.xlu0 %726
      %v728 = vsel %vm672, %v716, 0.0
      %729 = vadd.xlane.f32.xlu0 %v728
      %v730 = vpop.xlane.xlu0 %729
      %v731 = vsel %vm672, %v717, 0.0
      %732 = vadd.xlane.f32.xlu0 %v731
      %v733 = vpop.xlane.xlu0 %732
      %v734 = vsel %vm672, %v718, 0.0
      %735 = vadd.xlane.f32.xlu0 %v734
      %v736 = vpop.xlane.xlu0 %735
      %v737 = vsel %vm672, %v719, 0.0
      %738 = vadd.xlane.f32.xlu0 %v737
      %v739 = vpop.xlane.xlu0 %738
      %v740 = vsel %vm672, %v720, 0.0
      %741 = vadd.xlane.f32.xlu0 %v740
      %v742 = vpop.xlane.xlu0 %741
      %v743 = vsel %vm672, %v721, 0.0
      %744 = vadd.xlane.f32.xlu0 %v743
      %v745 = vpop.xlane.xlu0 %744
      %v746 = vmul.f32 %v724, %v697
      %v747 = vmul.f32 %v727, %v697
      %v748 = vmul.f32 %v730, %v697
      %v749 = vmul.f32 %v733, %v697
      %v750 = vmul.f32 %v736, %v697
      %v751 = vmul.f32 %v739, %v697
      %v752 = vmul.f32 %v742, %v697
      %v753 = vmul.f32 %v745, %v697
      %v754 = vadd.f32 %v746, 1e-05
      %v755 = vadd.f32 %v747, 1e-05
      %v756 = vadd.f32 %v748, 1e-05
      %v757 = vadd.f32 %v749, 1e-05
      %v758 = vadd.f32 %v750, 1e-05
      %v759 = vadd.f32 %v751, 1e-05
      %v760 = vadd.f32 %v752, 1e-05
      %v761 = vadd.f32 %v753, 1e-05
      %v762 = vrsqrt.pop %v754
      %v763 = vrsqrt.pop %v755
      %v764 = vrsqrt.pop %v756
      %v765 = vrsqrt.pop %v757
      %v766 = vrsqrt.pop %v758
      %v767 = vrsqrt.pop %v759
      %v768 = vrsqrt.pop %v760
      %v769 = vrsqrt.pop %v761
      %v770 = vmul.f32 %v706, %v762
      %v771 = vmul.f32 %v707, %v763
      %v772 = vmul.f32 %v708, %v764
      %v773 = vmul.f32 %v709, %v765
      %v774 = vmul.f32 %v710, %v766
      %v775 = vmul.f32 %v711, %v767
      %v776 = vmul.f32 %v712, %v768
      %v777 = vmul.f32 %v713, %v769
      %v778 = vlaneseq
      %v779 = vshrl.u32 %v778, 7
      %v780 = vadd.s32 %v779, 8
      %vm781 = vcmp.lt.s32.totalorder %v779, 9
      %vm782 = vcmp.lt.s32.totalorder %v780, 9
      %v783 = vsel %vm781, 1, 0
      %v784 = vsel %vm782, 1, 0
      %vm785 = vcmp.eq.s32.totalorder %v783, 1
      %vm786 = vcmp.eq.s32.totalorder %v784, 1
      %v787 = vsel %vm785, %v770, %v664
      %v788 = vsel %vm786, %v771, %v665
      %v789 = vsel %vm785, %v772, %v666
      %v790 = vsel %vm786, %v773, %v667
      %v791 = vsel %vm785, %v774, %v668
      %v792 = vsel %vm786, %v775, %v669
      %v793 = vsel %vm785, %v776, %v670
      %v794 = vsel %vm786, %v777, %v671
      %v795 = vld [vmem:[%s1] sm:$0xf]
      %v796 = vld [vmem:[%s1 + $0x4] sm:$0xf]
      %v797 = vpack.c.bf16 %v788, %v787
      %v798 = vpack.c.bf16 %v790, %v789
      %v799 = vpack.c.bf16 %v792, %v791
      %v800 = vpack.c.bf16 %v794, %v793
      %v801 = vld [vmem:[%s2] sm:$0x1]
      %v803 = vlaneseq
      %v804 = vshrl.u32 %v803, 7
      %v805 = vsub.s32 0, %v804
      %v806 = vrot.slane %v801, %v805
      %v810 = vunpack.c.l.b16 %v795
      %v811 = vunpack.c.l.b16 %v796
      %v812 = vpack.c.b16 %v811, %v810
      %v815 = vsel %vm672, %v797, 0
      %v818 = vsel %vm672, %v798, 0
      %v821 = vsel %vm672, %v799, 0
      %v824 = vsel %vm672, %v800, 0
      %826 = vmatprep.subr.bf16.mxu0 0
      %827 = vmatpush1.bf16.msra.mxu0 %v812
      %828 = vmatprep.subr.bf16.mxu0 0
      %829 = vmatpush1.bf16.msra.mxu0 0
      %830 = vmatprep.subr.bf16.mxu0 0
      %831 = vmatpush1.bf16.msra.mxu0 0
      %832 = vmatprep.subr.bf16.mxu0 0
      %833 = vmatpush1.bf16.msra.mxu0 0
      %834 = vmatprep.subr.bf16.mxu0 0
      %835 = vmatpush1.bf16.msra.mxu0 0
      %836 = vmatprep.subr.bf16.mxu0 0
      %837 = vmatpush1.bf16.msra.mxu0 0
      %838 = vmatprep.subr.bf16.mxu0 0
      %839 = vmatpush1.bf16.msra.mxu0 0
      %840 = vmatprep.subr.bf16.mxu0 0
      %841 = vmatpush1.bf16.msra.mxu0 0
      %842 = vmatprep.subr.bf16.mxu0 0
      %843 = vmatpush1.bf16.msra.mxu0 0
      %844 = vmatprep.subr.bf16.mxu0 0
      %845 = vmatpush1.bf16.msra.mxu0 0
      %846 = vmatprep.subr.bf16.mxu0 0
      %847 = vmatpush1.bf16.msra.mxu0 0
      %848 = vmatprep.subr.bf16.mxu0 0
      %849 = vmatpush1.bf16.msra.mxu0 0
      %850 = vmatprep.subr.bf16.mxu0 0
      %851 = vmatpush1.bf16.msra.mxu0 0
      %852 = vmatprep.subr.bf16.mxu0 0
      %853 = vmatpush1.bf16.msra.mxu0 0
      %854 = vmatprep.subr.bf16.mxu0 0
      %855 = vmatpush1.bf16.msra.mxu0 0
      %856 = vmatprep.subr.bf16.mxu0 0
      %857 = vmatpush1.bf16.msra.mxu0 0
      %858 = vmatprep.mubr.bf16.mxu0 0
      %859 = vmatmul.mubr.bf16.gmra.mrb[0].mxu0 %v815
      %v860 = vpop.f32.mrb[0].mxu0
      %v861 = vadd.f32 %v806, %v860
      %v862 = vpop.f32.mrb[0].mxu0
      %v863 = vpop.f32.mrb[0].mxu0
      %v864 = vadd.f32 %v806, %v863
      %v865 = vpop.f32.mrb[0].mxu0
      %866 = vmatprep.mubr.bf16.mxu0 0
      %867 = vmatmul.mubr.bf16.gmra.mrb[0].mxu0 %v818
      %v868 = vpop.f32.mrb[0].mxu0
      %v869 = vadd.f32 %v806, %v868
      %v870 = vpop.f32.mrb[0].mxu0
      %v871 = vpop.f32.mrb[0].mxu0
      %v872 = vadd.f32 %v806, %v871
      %v873 = vpop.f32.mrb[0].mxu0
      %874 = vmatprep.mubr.bf16.mxu0 0
      %875 = vmatmul.mubr.bf16.gmra.mrb[0].mxu0 %v821
      %v876 = vpop.f32.mrb[0].mxu0
      %v877 = vadd.f32 %v806, %v876
      %v878 = vpop.f32.mrb[0].mxu0
      %v879 = vpop.f32.mrb[0].mxu0
      %v880 = vadd.f32 %v806, %v879
      %v881 = vpop.f32.mrb[0].mxu0
      %882 = vmatprep.mubr.bf16.mxu0 0
      %883 = vmatmul.mubr.bf16.gmra.mrb[0].mxu0 %v824
      %v884 = vpop.f32.mrb[0].mxu0
      %v885 = vadd.f32 %v806, %v884
      %v886 = vpop.f32.mrb[0].mxu0
      %v887 = vpop.f32.mrb[0].mxu0
      %v888 = vadd.f32 %v806, %v887
      %v889 = vpop.f32.mrb[0].mxu0
      %890 = vdwg.mxu0
      %v891 = vlaneseq
      %v892 = vand.u32 %v891, 127
      %vm893 = vcmp.lt.s32.totalorder %v892, 13
      %v894 = vsel %vm893, 0.0, -1e+30
      %v895 = vld [vmem:[%s3] sm:$0xf]
      %v896 = vld [vmem:[%s3 + $0x4] sm:$0xf]
      %v897 = vld [vmem:[%s3 + $0x8] sm:$0xf]
      %v898 = vld [vmem:[%s3 + $0xc] sm:$0xf]
      %v899 = vpack.c.bf16 %v864, %v861
      %v900 = vpack.c.bf16 %v872, %v869
      %v901 = vpack.c.bf16 %v880, %v877
      %v902 = vpack.c.bf16 %v888, %v885
      %v903 = vld [vmem:[%s4] sm:$0x1]
      %v905 = vlaneseq
      %v906 = vshrl.u32 %v905, 7
      %v907 = vsub.s32 0, %v906
      %v908 = vrot.slane %v903, %v907
      %v914 = vunpack.c.l.b16 %v895
      %v915 = vunpack.c.l.b16 %v896
      %v916 = vunpack.c.l.b16 %v897
      %v917 = vunpack.c.l.b16 %v898
      %v918 = vpack.c.b16 %v915, %v914
      %v919 = vpack.c.b16 %v917, %v916
      %vm922 = vcmask 261120
      %v924 = vsel %vm922, %v899, 0
      %v927 = vsel %vm922, %v900, 0
      %v930 = vsel %vm922, %v901, 0
      %v933 = vsel %vm922, %v902, 0
      %935 = vmatprep.subr.bf16.mxu0 0
      %936 = vmatpush1.bf16.msra.mxu0 %v918
      %937 = vmatprep.subr.bf16.mxu0 0
      %938 = vmatpush1.bf16.msra.mxu0 %v919
      %939 = vmatprep.subr.bf16.mxu0 0
      %940 = vmatpush1.bf16.msra.mxu0 0
      %941 = vmatprep.subr.bf16.mxu0 0
      %942 = vmatpush1.bf16.msra.mxu0 0
      %943 = vmatprep.subr.bf16.mxu0 0
      %944 = vmatpush1.bf16.msra.mxu0 0
      %945 = vmatprep.subr.bf16.mxu0 0
      %946 = vmatpush1.bf16.msra.mxu0 0
      %947 = vmatprep.subr.bf16.mxu0 0
      %948 = vmatpush1.bf16.msra.mxu0 0
      %949 = vmatprep.subr.bf16.mxu0 0
      %950 = vmatpush1.bf16.msra.mxu0 0
      %951 = vmatprep.subr.bf16.mxu0 0
      %952 = vmatpush1.bf16.msra.mxu0 0
      %953 = vmatprep.subr.bf16.mxu0 0
      %954 = vmatpush1.bf16.msra.mxu0 0
      %955 = vmatprep.subr.bf16.mxu0 0
      %956 = vmatpush1.bf16.msra.mxu0 0
      %957 = vmatprep.subr.bf16.mxu0 0
      %958 = vmatpush1.bf16.msra.mxu0 0
      %959 = vmatprep.subr.bf16.mxu0 0
      %960 = vmatpush1.bf16.msra.mxu0 0
      %961 = vmatprep.subr.bf16.mxu0 0
      %962 = vmatpush1.bf16.msra.mxu0 0
      %963 = vmatprep.subr.bf16.mxu0 0
      %964 = vmatpush1.bf16.msra.mxu0 0
      %965 = vmatprep.subr.bf16.mxu0 0
      %966 = vmatpush1.bf16.msra.mxu0 0
      %967 = vmatprep.mubr.bf16.mxu0 0
      %968 = vmatmul.mubr.bf16.gmra.mrb[0].mxu0 %v924
      %v969 = vpop.f32.mrb[0].mxu0
      %v970 = vadd.f32 %v908, %v969
      %v971 = vpop.f32.mrb[0].mxu0
      %v972 = vpop.f32.mrb[0].mxu0
      %v973 = vadd.f32 %v908, %v972
      %v974 = vpop.f32.mrb[0].mxu0
      %975 = vmatprep.mubr.bf16.mxu0 0
      %976 = vmatmul.mubr.bf16.gmra.mrb[0].mxu0 %v927
      %v977 = vpop.f32.mrb[0].mxu0
      %v978 = vadd.f32 %v908, %v977
      %v979 = vpop.f32.mrb[0].mxu0
      %v980 = vpop.f32.mrb[0].mxu0
      %v981 = vadd.f32 %v908, %v980
      %v982 = vpop.f32.mrb[0].mxu0
      %983 = vmatprep.mubr.bf16.mxu0 0
      %984 = vmatmul.mubr.bf16.gmra.mrb[0].mxu0 %v930
      %v985 = vpop.f32.mrb[0].mxu0
      %v986 = vadd.f32 %v908, %v985
      %v987 = vpop.f32.mrb[0].mxu0
      %v988 = vpop.f32.mrb[0].mxu0
      %v989 = vadd.f32 %v908, %v988
      %v990 = vpop.f32.mrb[0].mxu0
      %991 = vmatprep.mubr.bf16.mxu0 0
      %992 = vmatmul.mubr.bf16.gmra.mrb[0].mxu0 %v933
      %v993 = vpop.f32.mrb[0].mxu0
      %v994 = vadd.f32 %v908, %v993
      %v995 = vpop.f32.mrb[0].mxu0
      %v996 = vpop.f32.mrb[0].mxu0
      %v997 = vadd.f32 %v908, %v996
      %v998 = vpop.f32.mrb[0].mxu0
      %999 = vdwg.mxu0
      %v1000 = vpack.c.bf16 %v973, %v970
      %v1001 = vpack.c.bf16 %v981, %v978
      %v1002 = vpack.c.bf16 %v989, %v986
      %v1003 = vpack.c.bf16 %v997, %v994
      %v1004 = vld [vmem:[%s5] sm:$0xff]
      %v1005 = vld [vmem:[%s5 + $0x8] sm:$0xff]
      %v1006 = vld [vmem:[%s5 + $0x10] sm:$0xff]
      %v1007 = vld [vmem:[%s5 + $0x18] sm:$0xff]
      %1009 = vrot.lane.b32.xlu0 %v1000, 96
      %v1010 = vpop.permute.xlu0 %1009
      %vm1011 = vcmask 64512
      %v1013 = vsel %vm1011, %v1000, 0
      %v1016 = vsel %vm1011, %v1010, 0
      %1018 = vmatprep.subr.bf16.mxu0 0
      %1019 = vmatpush1.bf16.xpose.msra.mxu0 %v1016
      %1020 = vmatprep.subr.bf16.mxu0 0
      %1021 = vmatpush1.bf16.xpose.msra.mxu0 0
      %1022 = vmatprep.subr.bf16.mxu0 0
      %1023 = vmatpush1.bf16.xpose.msra.mxu0 0
      %1024 = vmatprep.subr.bf16.mxu0 0
      %1025 = vmatpush1.bf16.xpose.msra.mxu0 0
      %1026 = vmatprep.subr.bf16.mxu0 0
      %1027 = vmatpush1.bf16.xpose.msra.mxu0 0
      %1028 = vmatprep.subr.bf16.mxu0 0
      %1029 = vmatpush1.bf16.xpose.msra.mxu0 0
      %1030 = vmatprep.subr.bf16.mxu0 0
      %1031 = vmatpush1.bf16.xpose.msra.mxu0 0
      %1032 = vmatprep.subr.bf16.mxu0 0
      %1033 = vmatpush1.bf16.xpose.msra.mxu0 0
      %1034 = vmatprep.subr.bf16.mxu0 0
      %1035 = vmatpush1.bf16.xpose.msra.mxu0 0
      %1036 = vmatprep.subr.bf16.mxu0 0
      %1037 = vmatpush1.bf16.xpose.msra.mxu0 0
      %1038 = vmatprep.subr.bf16.mxu0 0
      %1039 = vmatpush1.bf16.xpose.msra.mxu0 0
      %1040 = vmatprep.subr.bf16.mxu0 0
      %1041 = vmatpush1.bf16.xpose.msra.mxu0 0
      %1042 = vmatprep.subr.bf16.mxu0 0
      %1043 = vmatpush1.bf16.xpose.msra.mxu0 0
      %1044 = vmatprep.subr.bf16.mxu0 0
      %1045 = vmatpush1.bf16.xpose.msra.mxu0 0
      %1046 = vmatprep.subr.bf16.mxu0 0
      %1047 = vmatpush1.bf16.xpose.msra.mxu0 0
      %1048 = vmatprep.subr.bf16.mxu0 0
      %1049 = vmatpush1.bf16.xpose.msra.mxu0 0
      %1050 = vmatprep.mubr.bf16.mxu0 0
      %1051 = vmatmul.mubr.bf16.gmra.mrb[0].mxu0 %v1013
      %v1052 = vpop.f32.mrb[0].mxu0
      %v1053 = vadd.f32 0.0, %v1052
      %v1054 = vpop.f32.mrb[0].mxu0
      %v1055 = vpop.f32.mrb[0].mxu0
      %v1056 = vadd.f32 0.0, %v1055
      %v1057 = vpop.f32.mrb[0].mxu0
      %1058 = vdwg.mxu0
      %1060 = vrot.lane.b32.xlu0 %v1001, 96
      %v1061 = vpop.permute.xlu0 %1060
      %v1063 = vsel %vm1011, %v1001, 0
      %v1066 = vsel %vm1011, %v1061, 0
      %1068 = vmatprep.subr.bf16.mxu0 0
      %1069 = vmatpush1.bf16.xpose.msra.mxu0 %v1066
      %1070 = vmatprep.subr.bf16.mxu0 0
      %1071 = vmatpush1.bf16.xpose.msra.mxu0 0
      %1072 = vmatprep.subr.bf16.mxu0 0
      %1073 = vmatpush1.bf16.xpose.msra.mxu0 0
      %1074 = vmatprep.subr.bf16.mxu0 0
      %1075 = vmatpush1.bf16.xpose.msra.mxu0 0
      %1076 = vmatprep.subr.bf16.mxu0 0
      %1077 = vmatpush1.bf16.xpose.msra.mxu0 0
      %1078 = vmatprep.subr.bf16.mxu0 0
      %1079 = vmatpush1.bf16.xpose.msra.mxu0 0
      %1080 = vmatprep.subr.bf16.mxu0 0
      %1081 = vmatpush1.bf16.xpose.msra.mxu0 0
      %1082 = vmatprep.subr.bf16.mxu0 0
      %1083 = vmatpush1.bf16.xpose.msra.mxu0 0
      %1084 = vmatprep.subr.bf16.mxu0 0
      %1085 = vmatpush1.bf16.xpose.msra.mxu0 0
      %1086 = vmatprep.subr.bf16.mxu0 0
      %1087 = vmatpush1.bf16.xpose.msra.mxu0 0
      %1088 = vmatprep.subr.bf16.mxu0 0
      %1089 = vmatpush1.bf16.xpose.msra.mxu0 0
      %1090 = vmatprep.subr.bf16.mxu0 0
      %1091 = vmatpush1.bf16.xpose.msra.mxu0 0
      %1092 = vmatprep.subr.bf16.mxu0 0
      %1093 = vmatpush1.bf16.xpose.msra.mxu0 0
      %1094 = vmatprep.subr.bf16.mxu0 0
      %1095 = vmatpush1.bf16.xpose.msra.mxu0 0
      %1096 = vmatprep.subr.bf16.mxu0 0
      %1097 = vmatpush1.bf16.xpose.msra.mxu0 0
      %1098 = vmatprep.subr.bf16.mxu0 0
      %1099 = vmatpush1.bf16.xpose.msra.mxu0 0
      %1100 = vmatprep.mubr.bf16.mxu0 0
      %1101 = vmatmul.mubr.bf16.gmra.mrb[0].mxu0 %v1063
      %v1102 = vpop.f32.mrb[0].mxu0
      %v1103 = vadd.f32 0.0, %v1102
      %v1104 = vpop.f32.mrb[0].mxu0
      %v1105 = vpop.f32.mrb[0].mxu0
      %v1106 = vadd.f32 0.0, %v1105
      %v1107 = vpop.f32.mrb[0].mxu0
      %1108 = vdwg.mxu0
      %1110 = vrot.lane.b32.xlu0 %v1002, 96
      %v1111 = vpop.permute.xlu0 %1110
      %v1113 = vsel %vm1011, %v1002, 0
      %v1116 = vsel %vm1011, %v1111, 0
      %1118 = vmatprep.subr.bf16.mxu0 0
      %1119 = vmatpush1.bf16.xpose.msra.mxu0 %v1116
      %1120 = vmatprep.subr.bf16.mxu0 0
      %1121 = vmatpush1.bf16.xpose.msra.mxu0 0
      %1122 = vmatprep.subr.bf16.mxu0 0
      %1123 = vmatpush1.bf16.xpose.msra.mxu0 0
      %1124 = vmatprep.subr.bf16.mxu0 0
      %1125 = vmatpush1.bf16.xpose.msra.mxu0 0
      %1126 = vmatprep.subr.bf16.mxu0 0
      %1127 = vmatpush1.bf16.xpose.msra.mxu0 0
      %1128 = vmatprep.subr.bf16.mxu0 0
      %1129 = vmatpush1.bf16.xpose.msra.mxu0 0
      %1130 = vmatprep.subr.bf16.mxu0 0
      %1131 = vmatpush1.bf16.xpose.msra.mxu0 0
      %1132 = vmatprep.subr.bf16.mxu0 0
      %1133 = vmatpush1.bf16.xpose.msra.mxu0 0
      %1134 = vmatprep.subr.bf16.mxu0 0
      %1135 = vmatpush1.bf16.xpose.msra.mxu0 0
      %1136 = vmatprep.subr.bf16.mxu0 0
      %1137 = vmatpush1.bf16.xpose.msra.mxu0 0
      %1138 = vmatprep.subr.bf16.mxu0 0
      %1139 = vmatpush1.bf16.xpose.msra.mxu0 0
      %1140 = vmatprep.subr.bf16.mxu0 0
      %1141 = vmatpush1.bf16.xpose.msra.mxu0 0
      %1142 = vmatprep.subr.bf16.mxu0 0
      %1143 = vmatpush1.bf16.xpose.msra.mxu0 0
      %1144 = vmatprep.subr.bf16.mxu0 0
      %1145 = vmatpush1.bf16.xpose.msra.mxu0 0
      %1146 = vmatprep.subr.bf16.mxu0 0
      %1147 = vmatpush1.bf16.xpose.msra.mxu0 0
      %1148 = vmatprep.subr.bf16.mxu0 0
      %1149 = vmatpush1.bf16.xpose.msra.mxu0 0
      %1150 = vmatprep.mubr.bf16.mxu0 0
      %1151 = vmatmul.mubr.bf16.gmra.mrb[0].mxu0 %v1113
      %v1152 = vpop.f32.mrb[0].mxu0
      %v1153 = vadd.f32 0.0, %v1152
      %v1154 = vpop.f32.mrb[0].mxu0
      %v1155 = vpop.f32.mrb[0].mxu0
      %v1156 = vadd.f32 0.0, %v1155
      %v1157 = vpop.f32.mrb[0].mxu0
      %1158 = vdwg.mxu0
      %1160 = vrot.lane.b32.xlu0 %v1003, 96
      %v1161 = vpop.permute.xlu0 %1160
      %v1163 = vsel %vm1011, %v1003, 0
      %v1166 = vsel %vm1011, %v1161, 0
      %1168 = vmatprep.subr.bf16.mxu0 0
      %1169 = vmatpush1.bf16.xpose.msra.mxu0 %v1166
      %1170 = vmatprep.subr.bf16.mxu0 0
      %1171 = vmatpush1.bf16.xpose.msra.mxu0 0
      %1172 = vmatprep.subr.bf16.mxu0 0
      %1173 = vmatpush1.bf16.xpose.msra.mxu0 0
      %1174 = vmatprep.subr.bf16.mxu0 0
      %1175 = vmatpush1.bf16.xpose.msra.mxu0 0
      %1176 = vmatprep.subr.bf16.mxu0 0
      %1177 = vmatpush1.bf16.xpose.msra.mxu0 0
      %1178 = vmatprep.subr.bf16.mxu0 0
      %1179 = vmatpush1.bf16.xpose.msra.mxu0 0
      %1180 = vmatprep.subr.bf16.mxu0 0
      %1181 = vmatpush1.bf16.xpose.msra.mxu0 0
      %1182 = vmatprep.subr.bf16.mxu0 0
      %1183 = vmatpush1.bf16.xpose.msra.mxu0 0
      %1184 = vmatprep.subr.bf16.mxu0 0
      %1185 = vmatpush1.bf16.xpose.msra.mxu0 0
      %1186 = vmatprep.subr.bf16.mxu0 0
      %1187 = vmatpush1.bf16.xpose.msra.mxu0 0
      %1188 = vmatprep.subr.bf16.mxu0 0
      %1189 = vmatpush1.bf16.xpose.msra.mxu0 0
      %1190 = vmatprep.subr.bf16.mxu0 0
      %1191 = vmatpush1.bf16.xpose.msra.mxu0 0
      %1192 = vmatprep.subr.bf16.mxu0 0
      %1193 = vmatpush1.bf16.xpose.msra.mxu0 0
      %1194 = vmatprep.subr.bf16.mxu0 0
      %1195 = vmatpush1.bf16.xpose.msra.mxu0 0
      %1196 = vmatprep.subr.bf16.mxu0 0
      %1197 = vmatpush1.bf16.xpose.msra.mxu0 0
      %1198 = vmatprep.subr.bf16.mxu0 0
      %1199 = vmatpush1.bf16.xpose.msra.mxu0 0
      %1200 = vmatprep.mubr.bf16.mxu0 0
      %1201 = vmatmul.mubr.bf16.gmra.mrb[0].mxu0 %v1163
      %v1202 = vpop.f32.mrb[0].mxu0
      %v1203 = vadd.f32 0.0, %v1202
      %v1204 = vpop.f32.mrb[0].mxu0
      %v1205 = vpop.f32.mrb[0].mxu0
      %v1206 = vadd.f32 0.0, %v1205
      %v1207 = vpop.f32.mrb[0].mxu0
      %1208 = vdwg.mxu0
      %v1209 = vmul.f32 %v1053, 0.35355338
      %v1210 = vmul.f32 %v1056, 0.35355338
      %v1211 = vmul.f32 %v1103, 0.35355338
      %v1212 = vmul.f32 %v1106, 0.35355338
      %v1213 = vmul.f32 %v1153, 0.35355338
      %v1214 = vmul.f32 %v1156, 0.35355338
      %v1215 = vmul.f32 %v1203, 0.35355338
      %v1216 = vmul.f32 %v1206, 0.35355338
      %v1217 = vadd.f32 %v1209, %v894
      %v1218 = vadd.f32 %v1210, %v894
      %v1219 = vadd.f32 %v1211, %v894
      %v1220 = vadd.f32 %v1212, %v894
      %v1221 = vadd.f32 %v1213, %v894
      %v1222 = vadd.f32 %v1214, %v894
      %v1223 = vadd.f32 %v1215, %v894
      %v1224 = vadd.f32 %v1216, %v894
      %v1225 = vsel %vm672, %v1217, -inf
      %1226 = vmax.xlane.f32.xlu0 %v1225
      %v1227 = vpop.xlane.xlu0 %1226
      %v1228 = vsel %vm672, %v1218, -inf
      %1229 = vmax.xlane.f32.xlu0 %v1228
      %v1230 = vpop.xlane.xlu0 %1229
      %v1231 = vsel %vm672, %v1219, -inf
      %1232 = vmax.xlane.f32.xlu0 %v1231
      %v1233 = vpop.xlane.xlu0 %1232
      %v1234 = vsel %vm672, %v1220, -inf
      %1235 = vmax.xlane.f32.xlu0 %v1234
      %v1236 = vpop.xlane.xlu0 %1235
      %v1237 = vsel %vm672, %v1221, -inf
      %1238 = vmax.xlane.f32.xlu0 %v1237
      %v1239 = vpop.xlane.xlu0 %1238
      %v1240 = vsel %vm672, %v1222, -inf
      %1241 = vmax.xlane.f32.xlu0 %v1240
      %v1242 = vpop.xlane.xlu0 %1241
      %v1243 = vsel %vm672, %v1223, -inf
      %1244 = vmax.xlane.f32.xlu0 %v1243
      %v1245 = vpop.xlane.xlu0 %1244
      %v1246 = vsel %vm672, %v1224, -inf
      %1247 = vmax.xlane.f32.xlu0 %v1246
      %v1248 = vpop.xlane.xlu0 %1247
      %v1249 = vsub.f32 %v1217, %v1227
      %v1250 = vsub.f32 %v1218, %v1230
      %v1251 = vsub.f32 %v1219, %v1233
      %v1252 = vsub.f32 %v1220, %v1236
      %v1253 = vsub.f32 %v1221, %v1239
      %v1254 = vsub.f32 %v1222, %v1242
      %v1255 = vsub.f32 %v1223, %v1245
      %v1256 = vsub.f32 %v1224, %v1248
      %v1257 = vmul.f32 %v1249, 1.442695
      %v1258 = vpow.pop %v1257
      %v1259 = vmul.f32 %v1250, 1.442695
      %v1260 = vpow.pop %v1259
      %v1261 = vmul.f32 %v1251, 1.442695
      %v1262 = vpow.pop %v1261
      %v1263 = vmul.f32 %v1252, 1.442695
      %v1264 = vpow.pop %v1263
      %v1265 = vmul.f32 %v1253, 1.442695
      %v1266 = vpow.pop %v1265
      %v1267 = vmul.f32 %v1254, 1.442695
      %v1268 = vpow.pop %v1267
      %v1269 = vmul.f32 %v1255, 1.442695
      %v1270 = vpow.pop %v1269
      %v1271 = vmul.f32 %v1256, 1.442695
      %v1272 = vpow.pop %v1271
      %v1273 = vsel %vm672, %v1258, 0.0
      %1274 = vadd.xlane.f32.xlu0 %v1273
      %v1275 = vpop.xlane.xlu0 %1274
      %v1276 = vsel %vm672, %v1260, 0.0
      %1277 = vadd.xlane.f32.xlu0 %v1276
      %v1278 = vpop.xlane.xlu0 %1277
      %v1279 = vsel %vm672, %v1262, 0.0
      %1280 = vadd.xlane.f32.xlu0 %v1279
      %v1281 = vpop.xlane.xlu0 %1280
      %v1282 = vsel %vm672, %v1264, 0.0
      %1283 = vadd.xlane.f32.xlu0 %v1282
      %v1284 = vpop.xlane.xlu0 %1283
      %v1285 = vsel %vm672, %v1266, 0.0
      %1286 = vadd.xlane.f32.xlu0 %v1285
      %v1287 = vpop.xlane.xlu0 %1286
      %v1288 = vsel %vm672, %v1268, 0.0
      %1289 = vadd.xlane.f32.xlu0 %v1288
      %v1290 = vpop.xlane.xlu0 %1289
      %v1291 = vsel %vm672, %v1270, 0.0
      %1292 = vadd.xlane.f32.xlu0 %v1291
      %v1293 = vpop.xlane.xlu0 %1292
      %v1294 = vsel %vm672, %v1272, 0.0
      %1295 = vadd.xlane.f32.xlu0 %v1294
      %v1296 = vpop.xlane.xlu0 %1295
      %v1297 = vrcp.pop %v1275
      %v1298 = vrcp.pop %v1278
      %v1299 = vrcp.pop %v1281
      %v1300 = vrcp.pop %v1284
      %v1301 = vrcp.pop %v1287
      %v1302 = vrcp.pop %v1290
      %v1303 = vrcp.pop %v1293
      %v1304 = vrcp.pop %v1296
      %v1305 = vmul.f32 %v1258, %v1297
      %v1306 = vmul.f32 %v1260, %v1298
      %v1307 = vmul.f32 %v1262, %v1299
      %v1308 = vmul.f32 %v1264, %v1300
      %v1309 = vmul.f32 %v1266, %v1301
      %v1310 = vmul.f32 %v1268, %v1302
      %v1311 = vmul.f32 %v1270, %v1303
      %v1312 = vmul.f32 %v1272, %v1304
      %v1313 = vpack.c.bf16 %v1306, %v1305
      %v1314 = vpack.c.bf16 %v1308, %v1307
      %v1315 = vpack.c.bf16 %v1310, %v1309
      %v1316 = vpack.c.bf16 %v1312, %v1311
      %1317 = vrot.lane.b32.xlu0 %v1000, 64
      %v1318 = vpop.permute.xlu0 %1317
      %v1321 = vsel %vm672, %v1313, 0
      %1323 = vmatprep.subr.bf16.mxu0 0
      %1324 = vmatpush1.bf16.msra.mxu0 %v1318
      %1325 = vmatprep.subr.bf16.mxu0 0
      %1326 = vmatpush1.bf16.msra.mxu0 0
      %1327 = vmatprep.subr.bf16.mxu0 0
      %1328 = vmatpush1.bf16.msra.mxu0 0
      %1329 = vmatprep.subr.bf16.mxu0 0
      %1330 = vmatpush1.bf16.msra.mxu0 0
      %1331 = vmatprep.subr.bf16.mxu0 0
      %1332 = vmatpush1.bf16.msra.mxu0 0
      %1333 = vmatprep.subr.bf16.mxu0 0
      %1334 = vmatpush1.bf16.msra.mxu0 0
      %1335 = vmatprep.subr.bf16.mxu0 0
      %1336 = vmatpush1.bf16.msra.mxu0 0
      %1337 = vmatprep.subr.bf16.mxu0 0
      %1338 = vmatpush1.bf16.msra.mxu0 0
      %1339 = vmatprep.subr.bf16.mxu0 0
      %1340 = vmatpush1.bf16.msra.mxu0 0
      %1341 = vmatprep.subr.bf16.mxu0 0
      %1342 = vmatpush1.bf16.msra.mxu0 0
      %1343 = vmatprep.subr.bf16.mxu0 0
      %1344 = vmatpush1.bf16.msra.mxu0 0
      %1345 = vmatprep.subr.bf16.mxu0 0
      %1346 = vmatpush1.bf16.msra.mxu0 0
      %1347 = vmatprep.subr.bf16.mxu0 0
      %1348 = vmatpush1.bf16.msra.mxu0 0
      %1349 = vmatprep.subr.bf16.mxu0 0
      %1350 = vmatpush1.bf16.msra.mxu0 0
      %1351 = vmatprep.subr.bf16.mxu0 0
      %1352 = vmatpush1.bf16.msra.mxu0 0
      %1353 = vmatprep.subr.bf16.mxu0 0
      %1354 = vmatpush1.bf16.msra.mxu0 0
      %1355 = vmatprep.mubr.bf16.mxu0 0
      %1356 = vmatmul.mubr.bf16.gmra.mrb[0].mxu0 %v1321
      %v1357 = vpop.f32.mrb[0].mxu0
      %v1358 = vadd.f32 0.0, %v1357
      %v1359 = vpop.f32.mrb[0].mxu0
      %v1360 = vpop.f32.mrb[0].mxu0
      %v1361 = vadd.f32 0.0, %v1360
      %v1362 = vpop.f32.mrb[0].mxu0
      %1363 = vdwg.mxu0
      %1364 = vrot.lane.b32.xlu0 %v1001, 64
      %v1365 = vpop.permute.xlu0 %1364
      %v1368 = vsel %vm672, %v1314, 0
      %1370 = vmatprep.subr.bf16.mxu0 0
      %1371 = vmatpush1.bf16.msra.mxu0 %v1365
      %1372 = vmatprep.subr.bf16.mxu0 0
      %1373 = vmatpush1.bf16.msra.mxu0 0
      %1374 = vmatprep.subr.bf16.mxu0 0
      %1375 = vmatpush1.bf16.msra.mxu0 0
      %1376 = vmatprep.subr.bf16.mxu0 0
      %1377 = vmatpush1.bf16.msra.mxu0 0
      %1378 = vmatprep.subr.bf16.mxu0 0
      %1379 = vmatpush1.bf16.msra.mxu0 0
      %1380 = vmatprep.subr.bf16.mxu0 0
      %1381 = vmatpush1.bf16.msra.mxu0 0
      %1382 = vmatprep.subr.bf16.mxu0 0
      %1383 = vmatpush1.bf16.msra.mxu0 0
      %1384 = vmatprep.subr.bf16.mxu0 0
      %1385 = vmatpush1.bf16.msra.mxu0 0
      %1386 = vmatprep.subr.bf16.mxu0 0
      %1387 = vmatpush1.bf16.msra.mxu0 0
      %1388 = vmatprep.subr.bf16.mxu0 0
      %1389 = vmatpush1.bf16.msra.mxu0 0
      %1390 = vmatprep.subr.bf16.mxu0 0
      %1391 = vmatpush1.bf16.msra.mxu0 0
      %1392 = vmatprep.subr.bf16.mxu0 0
      %1393 = vmatpush1.bf16.msra.mxu0 0
      %1394 = vmatprep.subr.bf16.mxu0 0
      %1395 = vmatpush1.bf16.msra.mxu0 0
      %1396 = vmatprep.subr.bf16.mxu0 0
      %1397 = vmatpush1.bf16.msra.mxu0 0
      %1398 = vmatprep.subr.bf16.mxu0 0
      %1399 = vmatpush1.bf16.msra.mxu0 0
      %1400 = vmatprep.subr.bf16.mxu0 0
      %1401 = vmatpush1.bf16.msra.mxu0 0
      %1402 = vmatprep.mubr.bf16.mxu0 0
      %1403 = vmatmul.mubr.bf16.gmra.mrb[0].mxu0 %v1368
      %v1404 = vpop.f32.mrb[0].mxu0
      %v1405 = vadd.f32 0.0, %v1404
      %v1406 = vpop.f32.mrb[0].mxu0
      %v1407 = vpop.f32.mrb[0].mxu0
      %v1408 = vadd.f32 0.0, %v1407
      %v1409 = vpop.f32.mrb[0].mxu0
      %1410 = vdwg.mxu0
      %1411 = vrot.lane.b32.xlu0 %v1002, 64
      %v1412 = vpop.permute.xlu0 %1411
      %v1415 = vsel %vm672, %v1315, 0
      %1417 = vmatprep.subr.bf16.mxu0 0
      %1418 = vmatpush1.bf16.msra.mxu0 %v1412
      %1419 = vmatprep.subr.bf16.mxu0 0
      %1420 = vmatpush1.bf16.msra.mxu0 0
      %1421 = vmatprep.subr.bf16.mxu0 0
      %1422 = vmatpush1.bf16.msra.mxu0 0
      %1423 = vmatprep.subr.bf16.mxu0 0
      %1424 = vmatpush1.bf16.msra.mxu0 0
      %1425 = vmatprep.subr.bf16.mxu0 0
      %1426 = vmatpush1.bf16.msra.mxu0 0
      %1427 = vmatprep.subr.bf16.mxu0 0
      %1428 = vmatpush1.bf16.msra.mxu0 0
      %1429 = vmatprep.subr.bf16.mxu0 0
      %1430 = vmatpush1.bf16.msra.mxu0 0
      %1431 = vmatprep.subr.bf16.mxu0 0
      %1432 = vmatpush1.bf16.msra.mxu0 0
      %1433 = vmatprep.subr.bf16.mxu0 0
      %1434 = vmatpush1.bf16.msra.mxu0 0
      %1435 = vmatprep.subr.bf16.mxu0 0
      %1436 = vmatpush1.bf16.msra.mxu0 0
      %1437 = vmatprep.subr.bf16.mxu0 0
      %1438 = vmatpush1.bf16.msra.mxu0 0
      %1439 = vmatprep.subr.bf16.mxu0 0
      %1440 = vmatpush1.bf16.msra.mxu0 0
      %1441 = vmatprep.subr.bf16.mxu0 0
      %1442 = vmatpush1.bf16.msra.mxu0 0
      %1443 = vmatprep.subr.bf16.mxu0 0
      %1444 = vmatpush1.bf16.msra.mxu0 0
      %1445 = vmatprep.subr.bf16.mxu0 0
      %1446 = vmatpush1.bf16.msra.mxu0 0
      %1447 = vmatprep.subr.bf16.mxu0 0
      %1448 = vmatpush1.bf16.msra.mxu0 0
      %1449 = vmatprep.mubr.bf16.mxu0 0
      %1450 = vmatmul.mubr.bf16.gmra.mrb[0].mxu0 %v1415
      %v1451 = vpop.f32.mrb[0].mxu0
      %v1452 = vadd.f32 0.0, %v1451
      %v1453 = vpop.f32.mrb[0].mxu0
      %v1454 = vpop.f32.mrb[0].mxu0
      %v1455 = vadd.f32 0.0, %v1454
      %v1456 = vpop.f32.mrb[0].mxu0
      %1457 = vdwg.mxu0
      %1458 = vrot.lane.b32.xlu0 %v1003, 64
      %v1459 = vpop.permute.xlu0 %1458
      %v1462 = vsel %vm672, %v1316, 0
      %1464 = vmatprep.subr.bf16.mxu0 0
      %1465 = vmatpush1.bf16.msra.mxu0 %v1459
      %1466 = vmatprep.subr.bf16.mxu0 0
      %1467 = vmatpush1.bf16.msra.mxu0 0
      %1468 = vmatprep.subr.bf16.mxu0 0
      %1469 = vmatpush1.bf16.msra.mxu0 0
      %1470 = vmatprep.subr.bf16.mxu0 0
      %1471 = vmatpush1.bf16.msra.mxu0 0
      %1472 = vmatprep.subr.bf16.mxu0 0
      %1473 = vmatpush1.bf16.msra.mxu0 0
      %1474 = vmatprep.subr.bf16.mxu0 0
      %1475 = vmatpush1.bf16.msra.mxu0 0
      %1476 = vmatprep.subr.bf16.mxu0 0
      %1477 = vmatpush1.bf16.msra.mxu0 0
      %1478 = vmatprep.subr.bf16.mxu0 0
      %1479 = vmatpush1.bf16.msra.mxu0 0
      %1480 = vmatprep.subr.bf16.mxu0 0
      %1481 = vmatpush1.bf16.msra.mxu0 0
      %1482 = vmatprep.subr.bf16.mxu0 0
      %1483 = vmatpush1.bf16.msra.mxu0 0
      %1484 = vmatprep.subr.bf16.mxu0 0
      %1485 = vmatpush1.bf16.msra.mxu0 0
      %1486 = vmatprep.subr.bf16.mxu0 0
      %1487 = vmatpush1.bf16.msra.mxu0 0
      %1488 = vmatprep.subr.bf16.mxu0 0
      %1489 = vmatpush1.bf16.msra.mxu0 0
      %1490 = vmatprep.subr.bf16.mxu0 0
      %1491 = vmatpush1.bf16.msra.mxu0 0
      %1492 = vmatprep.subr.bf16.mxu0 0
      %1493 = vmatpush1.bf16.msra.mxu0 0
      %1494 = vmatprep.subr.bf16.mxu0 0
      %1495 = vmatpush1.bf16.msra.mxu0 0
      %1496 = vmatprep.mubr.bf16.mxu0 0
      %1497 = vmatmul.mubr.bf16.gmra.mrb[0].mxu0 %v1462
      %v1498 = vpop.f32.mrb[0].mxu0
      %v1499 = vadd.f32 0.0, %v1498
      %v1500 = vpop.f32.mrb[0].mxu0
      %v1501 = vpop.f32.mrb[0].mxu0
      %v1502 = vadd.f32 0.0, %v1501
      %v1503 = vpop.f32.mrb[0].mxu0
      %1504 = vdwg.mxu0
      %v1505 = vpack.c.bf16 %v1361, %v1358
      %v1506 = vpack.c.bf16 %v1408, %v1405
      %v1507 = vpack.c.bf16 %v1455, %v1452
      %v1508 = vpack.c.bf16 %v1502, %v1499
      %v1509 = vpack.c.bf16 %v1004, %v1004
      %1510 = vrot.lane.b32.xlu0 %v1000, 120
      %v1511 = vpop.permute.xlu0 %1510
      %1512 = vrot.lane.b32.xlu0 %v1000, 88
      %v1513 = vpop.permute.xlu0 %1512
      %v1515 = vsel %vm1011, %v1511, 0
      %v1518 = vsel %vm1011, %v1513, 0
      %1520 = vmatprep.subr.bf16.mxu0 0
      %1521 = vmatpush1.bf16.xpose.msra.mxu0 %v1518
      %1522 = vmatprep.subr.bf16.mxu0 0
      %1523 = vmatpush1.bf16.xpose.msra.mxu0 0
      %1524 = vmatprep.subr.bf16.mxu0 0
      %1525 = vmatpush1.bf16.xpose.msra.mxu0 0
      %1526 = vmatprep.subr.bf16.mxu0 0
      %1527 = vmatpush1.bf16.xpose.msra.mxu0 0
      %1528 = vmatprep.subr.bf16.mxu0 0
      %1529 = vmatpush1.bf16.xpose.msra.mxu0 0
      %1530 = vmatprep.subr.bf16.mxu0 0
      %1531 = vmatpush1.bf16.xpose.msra.mxu0 0
      %1532 = vmatprep.subr.bf16.mxu0 0
      %1533 = vmatpush1.bf16.xpose.msra.mxu0 0
      %1534 = vmatprep.subr.bf16.mxu0 0
      %1535 = vmatpush1.bf16.xpose.msra.mxu0 0
      %1536 = vmatprep.subr.bf16.mxu0 0
      %1537 = vmatpush1.bf16.xpose.msra.mxu0 0
      %1538 = vmatprep.subr.bf16.mxu0 0
      %1539 = vmatpush1.bf16.xpose.msra.mxu0 0
      %1540 = vmatprep.subr.bf16.mxu0 0
      %1541 = vmatpush1.bf16.xpose.msra.mxu0 0
      %1542 = vmatprep.subr.bf16.mxu0 0
      %1543 = vmatpush1.bf16.xpose.msra.mxu0 0
      %1544 = vmatprep.subr.bf16.mxu0 0
      %1545 = vmatpush1.bf16.xpose.msra.mxu0 0
      %1546 = vmatprep.subr.bf16.mxu0 0
      %1547 = vmatpush1.bf16.xpose.msra.mxu0 0
      %1548 = vmatprep.subr.bf16.mxu0 0
      %1549 = vmatpush1.bf16.xpose.msra.mxu0 0
      %1550 = vmatprep.subr.bf16.mxu0 0
      %1551 = vmatpush1.bf16.xpose.msra.mxu0 0
      %1552 = vmatprep.mubr.bf16.mxu0 0
      %1553 = vmatmul.mubr.bf16.gmra.mrb[0].mxu0 %v1515
      %v1554 = vpop.f32.mrb[0].mxu0
      %v1555 = vadd.f32 0.0, %v1554
      %v1556 = vpop.f32.mrb[0].mxu0
      %v1557 = vpop.f32.mrb[0].mxu0
      %v1558 = vadd.f32 0.0, %v1557
      %v1559 = vpop.f32.mrb[0].mxu0
      %1560 = vdwg.mxu0
      %1561 = vrot.lane.b32.xlu0 %v1001, 120
      %v1562 = vpop.permute.xlu0 %1561
      %1563 = vrot.lane.b32.xlu0 %v1001, 88
      %v1564 = vpop.permute.xlu0 %1563
      %v1566 = vsel %vm1011, %v1562, 0
      %v1569 = vsel %vm1011, %v1564, 0
      %1571 = vmatprep.subr.bf16.mxu0 0
      %1572 = vmatpush1.bf16.xpose.msra.mxu0 %v1569
      %1573 = vmatprep.subr.bf16.mxu0 0
      %1574 = vmatpush1.bf16.xpose.msra.mxu0 0
      %1575 = vmatprep.subr.bf16.mxu0 0
      %1576 = vmatpush1.bf16.xpose.msra.mxu0 0
      %1577 = vmatprep.subr.bf16.mxu0 0
      %1578 = vmatpush1.bf16.xpose.msra.mxu0 0
      %1579 = vmatprep.subr.bf16.mxu0 0
      %1580 = vmatpush1.bf16.xpose.msra.mxu0 0
      %1581 = vmatprep.subr.bf16.mxu0 0
      %1582 = vmatpush1.bf16.xpose.msra.mxu0 0
      %1583 = vmatprep.subr.bf16.mxu0 0
      %1584 = vmatpush1.bf16.xpose.msra.mxu0 0
      %1585 = vmatprep.subr.bf16.mxu0 0
      %1586 = vmatpush1.bf16.xpose.msra.mxu0 0
      %1587 = vmatprep.subr.bf16.mxu0 0
      %1588 = vmatpush1.bf16.xpose.msra.mxu0 0
      %1589 = vmatprep.subr.bf16.mxu0 0
      %1590 = vmatpush1.bf16.xpose.msra.mxu0 0
      %1591 = vmatprep.subr.bf16.mxu0 0
      %1592 = vmatpush1.bf16.xpose.msra.mxu0 0
      %1593 = vmatprep.subr.bf16.mxu0 0
      %1594 = vmatpush1.bf16.xpose.msra.mxu0 0
      %1595 = vmatprep.subr.bf16.mxu0 0
      %1596 = vmatpush1.bf16.xpose.msra.mxu0 0
      %1597 = vmatprep.subr.bf16.mxu0 0
      %1598 = vmatpush1.bf16.xpose.msra.mxu0 0
      %1599 = vmatprep.subr.bf16.mxu0 0
      %1600 = vmatpush1.bf16.xpose.msra.mxu0 0
      %1601 = vmatprep.subr.bf16.mxu0 0
      %1602 = vmatpush1.bf16.xpose.msra.mxu0 0
      %1603 = vmatprep.mubr.bf16.mxu0 0
      %1604 = vmatmul.mubr.bf16.gmra.mrb[0].mxu0 %v1566
      %v1605 = vpop.f32.mrb[0].mxu0
      %v1606 = vadd.f32 0.0, %v1605
      %v1607 = vpop.f32.mrb[0].mxu0
      %v1608 = vpop.f32.mrb[0].mxu0
      %v1609 = vadd.f32 0.0, %v1608
      %v1610 = vpop.f32.mrb[0].mxu0
      %1611 = vdwg.mxu0
      %1612 = vrot.lane.b32.xlu0 %v1002, 120
      %v1613 = vpop.permute.xlu0 %1612
      %1614 = vrot.lane.b32.xlu0 %v1002, 88
      %v1615 = vpop.permute.xlu0 %1614
      %v1617 = vsel %vm1011, %v1613, 0
      %v1620 = vsel %vm1011, %v1615, 0
      %1622 = vmatprep.subr.bf16.mxu0 0
      %1623 = vmatpush1.bf16.xpose.msra.mxu0 %v1620
      %1624 = vmatprep.subr.bf16.mxu0 0
      %1625 = vmatpush1.bf16.xpose.msra.mxu0 0
      %1626 = vmatprep.subr.bf16.mxu0 0
      %1627 = vmatpush1.bf16.xpose.msra.mxu0 0
      %1628 = vmatprep.subr.bf16.mxu0 0
      %1629 = vmatpush1.bf16.xpose.msra.mxu0 0
      %1630 = vmatprep.subr.bf16.mxu0 0
      %1631 = vmatpush1.bf16.xpose.msra.mxu0 0
      %1632 = vmatprep.subr.bf16.mxu0 0
      %1633 = vmatpush1.bf16.xpose.msra.mxu0 0
      %1634 = vmatprep.subr.bf16.mxu0 0
      %1635 = vmatpush1.bf16.xpose.msra.mxu0 0
      %1636 = vmatprep.subr.bf16.mxu0 0
      %1637 = vmatpush1.bf16.xpose.msra.mxu0 0
      %1638 = vmatprep.subr.bf16.mxu0 0
      %1639 = vmatpush1.bf16.xpose.msra.mxu0 0
      %1640 = vmatprep.subr.bf16.mxu0 0
      %1641 = vmatpush1.bf16.xpose.msra.mxu0 0
      %1642 = vmatprep.subr.bf16.mxu0 0
      %1643 = vmatpush1.bf16.xpose.msra.mxu0 0
      %1644 = vmatprep.subr.bf16.mxu0 0
      %1645 = vmatpush1.bf16.xpose.msra.mxu0 0
      %1646 = vmatprep.subr.bf16.mxu0 0
      %1647 = vmatpush1.bf16.xpose.msra.mxu0 0
      %1648 = vmatprep.subr.bf16.mxu0 0
      %1649 = vmatpush1.bf16.xpose.msra.mxu0 0
      %1650 = vmatprep.subr.bf16.mxu0 0
      %1651 = vmatpush1.bf16.xpose.msra.mxu0 0
      %1652 = vmatprep.subr.bf16.mxu0 0
      %1653 = vmatpush1.bf16.xpose.msra.mxu0 0
      %1654 = vmatprep.mubr.bf16.mxu0 0
      %1655 = vmatmul.mubr.bf16.gmra.mrb[0].mxu0 %v1617
      %v1656 = vpop.f32.mrb[0].mxu0
      %v1657 = vadd.f32 0.0, %v1656
      %v1658 = vpop.f32.mrb[0].mxu0
      %v1659 = vpop.f32.mrb[0].mxu0
      %v1660 = vadd.f32 0.0, %v1659
      %v1661 = vpop.f32.mrb[0].mxu0
      %1662 = vdwg.mxu0
      %1663 = vrot.lane.b32.xlu0 %v1003, 120
      %v1664 = vpop.permute.xlu0 %1663
      %1665 = vrot.lane.b32.xlu0 %v1003, 88
      %v1666 = vpop.permute.xlu0 %1665
      %v1668 = vsel %vm1011, %v1664, 0
      %v1671 = vsel %vm1011, %v1666, 0
      %1673 = vmatprep.subr.bf16.mxu0 0
      %1674 = vmatpush1.bf16.xpose.msra.mxu0 %v1671
      %1675 = vmatprep.subr.bf16.mxu0 0
      %1676 = vmatpush1.bf16.xpose.msra.mxu0 0
      %1677 = vmatprep.subr.bf16.mxu0 0
      %1678 = vmatpush1.bf16.xpose.msra.mxu0 0
      %1679 = vmatprep.subr.bf16.mxu0 0
      %1680 = vmatpush1.bf16.xpose.msra.mxu0 0
      %1681 = vmatprep.subr.bf16.mxu0 0
      %1682 = vmatpush1.bf16.xpose.msra.mxu0 0
      %1683 = vmatprep.subr.bf16.mxu0 0
      %1684 = vmatpush1.bf16.xpose.msra.mxu0 0
      %1685 = vmatprep.subr.bf16.mxu0 0
      %1686 = vmatpush1.bf16.xpose.msra.mxu0 0
      %1687 = vmatprep.subr.bf16.mxu0 0
      %1688 = vmatpush1.bf16.xpose.msra.mxu0 0
      %1689 = vmatprep.subr.bf16.mxu0 0
      %1690 = vmatpush1.bf16.xpose.msra.mxu0 0
      %1691 = vmatprep.subr.bf16.mxu0 0
      %1692 = vmatpush1.bf16.xpose.msra.mxu0 0
      %1693 = vmatprep.subr.bf16.mxu0 0
      %1694 = vmatpush1.bf16.xpose.msra.mxu0 0
      %1695 = vmatprep.subr.bf16.mxu0 0
      %1696 = vmatpush1.bf16.xpose.msra.mxu0 0
      %1697 = vmatprep.subr.bf16.mxu0 0
      %1698 = vmatpush1.bf16.xpose.msra.mxu0 0
      %1699 = vmatprep.subr.bf16.mxu0 0
      %1700 = vmatpush1.bf16.xpose.msra.mxu0 0
      %1701 = vmatprep.subr.bf16.mxu0 0
      %1702 = vmatpush1.bf16.xpose.msra.mxu0 0
      %1703 = vmatprep.subr.bf16.mxu0 0
      %1704 = vmatpush1.bf16.xpose.msra.mxu0 0
      %1705 = vmatprep.mubr.bf16.mxu0 0
      %1706 = vmatmul.mubr.bf16.gmra.mrb[0].mxu0 %v1668
      %v1707 = vpop.f32.mrb[0].mxu0
      %v1708 = vadd.f32 0.0, %v1707
      %v1709 = vpop.f32.mrb[0].mxu0
      %v1710 = vpop.f32.mrb[0].mxu0
      %v1711 = vadd.f32 0.0, %v1710
      %v1712 = vpop.f32.mrb[0].mxu0
      %1713 = vdwg.mxu0
      %v1714 = vmul.f32 %v1555, 0.35355338
      %v1715 = vmul.f32 %v1558, 0.35355338
      %v1716 = vmul.f32 %v1606, 0.35355338
      %v1717 = vmul.f32 %v1609, 0.35355338
      %v1718 = vmul.f32 %v1657, 0.35355338
      %v1719 = vmul.f32 %v1660, 0.35355338
      %v1720 = vmul.f32 %v1708, 0.35355338
      %v1721 = vmul.f32 %v1711, 0.35355338
      %v1722 = vadd.f32 %v1714, %v894
      %v1723 = vadd.f32 %v1715, %v894
      %v1724 = vadd.f32 %v1716, %v894
      %v1725 = vadd.f32 %v1717, %v894
      %v1726 = vadd.f32 %v1718, %v894
      %v1727 = vadd.f32 %v1719, %v894
      %v1728 = vadd.f32 %v1720, %v894
      %v1729 = vadd.f32 %v1721, %v894
      %v1730 = vsel %vm672, %v1722, -inf
      %1731 = vmax.xlane.f32.xlu0 %v1730
      %v1732 = vpop.xlane.xlu0 %1731
      %v1733 = vsel %vm672, %v1723, -inf
      %1734 = vmax.xlane.f32.xlu0 %v1733
      %v1735 = vpop.xlane.xlu0 %1734
      %v1736 = vsel %vm672, %v1724, -inf
      %1737 = vmax.xlane.f32.xlu0 %v1736
      %v1738 = vpop.xlane.xlu0 %1737
      %v1739 = vsel %vm672, %v1725, -inf
      %1740 = vmax.xlane.f32.xlu0 %v1739
      %v1741 = vpop.xlane.xlu0 %1740
      %v1742 = vsel %vm672, %v1726, -inf
      %1743 = vmax.xlane.f32.xlu0 %v1742
      %v1744 = vpop.xlane.xlu0 %1743
      %v1745 = vsel %vm672, %v1727, -inf
      %1746 = vmax.xlane.f32.xlu0 %v1745
      %v1747 = vpop.xlane.xlu0 %1746
      %v1748 = vsel %vm672, %v1728, -inf
      %1749 = vmax.xlane.f32.xlu0 %v1748
      %v1750 = vpop.xlane.xlu0 %1749
      %v1751 = vsel %vm672, %v1729, -inf
      %1752 = vmax.xlane.f32.xlu0 %v1751
      %v1753 = vpop.xlane.xlu0 %1752
      %v1754 = vsub.f32 %v1722, %v1732
      %v1755 = vsub.f32 %v1723, %v1735
      %v1756 = vsub.f32 %v1724, %v1738
      %v1757 = vsub.f32 %v1725, %v1741
      %v1758 = vsub.f32 %v1726, %v1744
      %v1759 = vsub.f32 %v1727, %v1747
      %v1760 = vsub.f32 %v1728, %v1750
      %v1761 = vsub.f32 %v1729, %v1753
      %v1762 = vmul.f32 %v1754, 1.442695
      %v1763 = vpow.pop %v1762
      %v1764 = vmul.f32 %v1755, 1.442695
      %v1765 = vpow.pop %v1764
      %v1766 = vmul.f32 %v1756, 1.442695
      %v1767 = vpow.pop %v1766
      %v1768 = vmul.f32 %v1757, 1.442695
      %v1769 = vpow.pop %v1768
      %v1770 = vmul.f32 %v1758, 1.442695
      %v1771 = vpow.pop %v1770
      %v1772 = vmul.f32 %v1759, 1.442695
      %v1773 = vpow.pop %v1772
      %v1774 = vmul.f32 %v1760, 1.442695
      %v1775 = vpow.pop %v1774
      %v1776 = vmul.f32 %v1761, 1.442695
      %v1777 = vpow.pop %v1776
      %v1778 = vsel %vm672, %v1763, 0.0
      %1779 = vadd.xlane.f32.xlu0 %v1778
      %v1780 = vpop.xlane.xlu0 %1779
      %v1781 = vsel %vm672, %v1765, 0.0
      %1782 = vadd.xlane.f32.xlu0 %v1781
      %v1783 = vpop.xlane.xlu0 %1782
      %v1784 = vsel %vm672, %v1767, 0.0
      %1785 = vadd.xlane.f32.xlu0 %v1784
      %v1786 = vpop.xlane.xlu0 %1785
      %v1787 = vsel %vm672, %v1769, 0.0
      %1788 = vadd.xlane.f32.xlu0 %v1787
      %v1789 = vpop.xlane.xlu0 %1788
      %v1790 = vsel %vm672, %v1771, 0.0
      %1791 = vadd.xlane.f32.xlu0 %v1790
      %v1792 = vpop.xlane.xlu0 %1791
      %v1793 = vsel %vm672, %v1773, 0.0
      %1794 = vadd.xlane.f32.xlu0 %v1793
      %v1795 = vpop.xlane.xlu0 %1794
      %v1796 = vsel %vm672, %v1775, 0.0
      %1797 = vadd.xlane.f32.xlu0 %v1796
      %v1798 = vpop.xlane.xlu0 %1797
      %v1799 = vsel %vm672, %v1777, 0.0
      %1800 = vadd.xlane.f32.xlu0 %v1799
      %v1801 = vpop.xlane.xlu0 %1800
      %v1802 = vrcp.pop %v1780
      %v1803 = vrcp.pop %v1783
      %v1804 = vrcp.pop %v1786
      %v1805 = vrcp.pop %v1789
      %v1806 = vrcp.pop %v1792
      %v1807 = vrcp.pop %v1795
      %v1808 = vrcp.pop %v1798
      %v1809 = vrcp.pop %v1801
      %v1810 = vmul.f32 %v1763, %v1802
      %v1811 = vmul.f32 %v1765, %v1803
      %v1812 = vmul.f32 %v1767, %v1804
      %v1813 = vmul.f32 %v1769, %v1805
      %v1814 = vmul.f32 %v1771, %v1806
      %v1815 = vmul.f32 %v1773, %v1807
      %v1816 = vmul.f32 %v1775, %v1808
      %v1817 = vmul.f32 %v1777, %v1809
      %v1818 = vpack.c.bf16 %v1811, %v1810
      %v1819 = vpack.c.bf16 %v1813, %v1812
      %v1820 = vpack.c.bf16 %v1815, %v1814
      %v1821 = vpack.c.bf16 %v1817, %v1816
      %1822 = vrot.lane.b32.xlu0 %v1000, 56
      %v1823 = vpop.permute.xlu0 %1822
      %v1826 = vsel %vm672, %v1818, 0
      %1828 = vmatprep.subr.bf16.mxu0 0
      %1829 = vmatpush1.bf16.msra.mxu0 %v1823
      %1830 = vmatprep.subr.bf16.mxu0 0
      %1831 = vmatpush1.bf16.msra.mxu0 0
      %1832 = vmatprep.subr.bf16.mxu0 0
      %1833 = vmatpush1.bf16.msra.mxu0 0
      %1834 = vmatprep.subr.bf16.mxu0 0
      %1835 = vmatpush1.bf16.msra.mxu0 0
      %1836 = vmatprep.subr.bf16.mxu0 0
      %1837 = vmatpush1.bf16.msra.mxu0 0
      %1838 = vmatprep.subr.bf16.mxu0 0
      %1839 = vmatpush1.bf16.msra.mxu0 0
      %1840 = vmatprep.subr.bf16.mxu0 0
      %1841 = vmatpush1.bf16.msra.mxu0 0
      %1842 = vmatprep.subr.bf16.mxu0 0
      %1843 = vmatpush1.bf16.msra.mxu0 0
      %1844 = vmatprep.subr.bf16.mxu0 0
      %1845 = vmatpush1.bf16.msra.mxu0 0
      %1846 = vmatprep.subr.bf16.mxu0 0
      %1847 = vmatpush1.bf16.msra.mxu0 0
      %1848 = vmatprep.subr.bf16.mxu0 0
      %1849 = vmatpush1.bf16.msra.mxu0 0
      %1850 = vmatprep.subr.bf16.mxu0 0
      %1851 = vmatpush1.bf16.msra.mxu0 0
      %1852 = vmatprep.subr.bf16.mxu0 0
      %1853 = vmatpush1.bf16.msra.mxu0 0
      %1854 = vmatprep.subr.bf16.mxu0 0
      %1855 = vmatpush1.bf16.msra.mxu0 0
      %1856 = vmatprep.subr.bf16.mxu0 0
      %1857 = vmatpush1.bf16.msra.mxu0 0
      %1858 = vmatprep.subr.bf16.mxu0 0
      %1859 = vmatpush1.bf16.msra.mxu0 0
      %1860 = vmatprep.mubr.bf16.mxu0 0
      %1861 = vmatmul.mubr.bf16.gmra.mrb[0].mxu0 %v1826
      %v1862 = vpop.f32.mrb[0].mxu0
      %v1863 = vadd.f32 0.0, %v1862
      %v1864 = vpop.f32.mrb[0].mxu0
      %v1865 = vpop.f32.mrb[0].mxu0
      %v1866 = vadd.f32 0.0, %v1865
      %v1867 = vpop.f32.mrb[0].mxu0
      %1868 = vdwg.mxu0
      %1869 = vrot.lane.b32.xlu0 %v1001, 56
      %v1870 = vpop.permute.xlu0 %1869
      %v1873 = vsel %vm672, %v1819, 0
      %1875 = vmatprep.subr.bf16.mxu0 0
      %1876 = vmatpush1.bf16.msra.mxu0 %v1870
      %1877 = vmatprep.subr.bf16.mxu0 0
      %1878 = vmatpush1.bf16.msra.mxu0 0
      %1879 = vmatprep.subr.bf16.mxu0 0
      %1880 = vmatpush1.bf16.msra.mxu0 0
      %1881 = vmatprep.subr.bf16.mxu0 0
      %1882 = vmatpush1.bf16.msra.mxu0 0
      %1883 = vmatprep.subr.bf16.mxu0 0
      %1884 = vmatpush1.bf16.msra.mxu0 0
      %1885 = vmatprep.subr.bf16.mxu0 0
      %1886 = vmatpush1.bf16.msra.mxu0 0
      %1887 = vmatprep.subr.bf16.mxu0 0
      %1888 = vmatpush1.bf16.msra.mxu0 0
      %1889 = vmatprep.subr.bf16.mxu0 0
      %1890 = vmatpush1.bf16.msra.mxu0 0
      %1891 = vmatprep.subr.bf16.mxu0 0
      %1892 = vmatpush1.bf16.msra.mxu0 0
      %1893 = vmatprep.subr.bf16.mxu0 0
      %1894 = vmatpush1.bf16.msra.mxu0 0
      %1895 = vmatprep.subr.bf16.mxu0 0
      %1896 = vmatpush1.bf16.msra.mxu0 0
      %1897 = vmatprep.subr.bf16.mxu0 0
      %1898 = vmatpush1.bf16.msra.mxu0 0
      %1899 = vmatprep.subr.bf16.mxu0 0
      %1900 = vmatpush1.bf16.msra.mxu0 0
      %1901 = vmatprep.subr.bf16.mxu0 0
      %1902 = vmatpush1.bf16.msra.mxu0 0
      %1903 = vmatprep.subr.bf16.mxu0 0
      %1904 = vmatpush1.bf16.msra.mxu0 0
      %1905 = vmatprep.subr.bf16.mxu0 0
      %1906 = vmatpush1.bf16.msra.mxu0 0
      %1907 = vmatprep.mubr.bf16.mxu0 0
      %1908 = vmatmul.mubr.bf16.gmra.mrb[0].mxu0 %v1873
      %v1909 = vpop.f32.mrb[0].mxu0
      %v1910 = vadd.f32 0.0, %v1909
      %v1911 = vpop.f32.mrb[0].mxu0
      %v1912 = vpop.f32.mrb[0].mxu0
      %v1913 = vadd.f32 0.0, %v1912
      %v1914 = vpop.f32.mrb[0].mxu0
      %1915 = vdwg.mxu0
      %1916 = vrot.lane.b32.xlu0 %v1002, 56
      %v1917 = vpop.permute.xlu0 %1916
      %v1920 = vsel %vm672, %v1820, 0
      %1922 = vmatprep.subr.bf16.mxu0 0
      %1923 = vmatpush1.bf16.msra.mxu0 %v1917
      %1924 = vmatprep.subr.bf16.mxu0 0
      %1925 = vmatpush1.bf16.msra.mxu0 0
      %1926 = vmatprep.subr.bf16.mxu0 0
      %1927 = vmatpush1.bf16.msra.mxu0 0
      %1928 = vmatprep.subr.bf16.mxu0 0
      %1929 = vmatpush1.bf16.msra.mxu0 0
      %1930 = vmatprep.subr.bf16.mxu0 0
      %1931 = vmatpush1.bf16.msra.mxu0 0
      %1932 = vmatprep.subr.bf16.mxu0 0
      %1933 = vmatpush1.bf16.msra.mxu0 0
      %1934 = vmatprep.subr.bf16.mxu0 0
      %1935 = vmatpush1.bf16.msra.mxu0 0
      %1936 = vmatprep.subr.bf16.mxu0 0
      %1937 = vmatpush1.bf16.msra.mxu0 0
      %1938 = vmatprep.subr.bf16.mxu0 0
      %1939 = vmatpush1.bf16.msra.mxu0 0
      %1940 = vmatprep.subr.bf16.mxu0 0
      %1941 = vmatpush1.bf16.msra.mxu0 0
      %1942 = vmatprep.subr.bf16.mxu0 0
      %1943 = vmatpush1.bf16.msra.mxu0 0
      %1944 = vmatprep.subr.bf16.mxu0 0
      %1945 = vmatpush1.bf16.msra.mxu0 0
      %1946 = vmatprep.subr.bf16.mxu0 0
      %1947 = vmatpush1.bf16.msra.mxu0 0
      %1948 = vmatprep.subr.bf16.mxu0 0
      %1949 = vmatpush1.bf16.msra.mxu0 0
      %1950 = vmatprep.subr.bf16.mxu0 0
      %1951 = vmatpush1.bf16.msra.mxu0 0
      %1952 = vmatprep.subr.bf16.mxu0 0
      %1953 = vmatpush1.bf16.msra.mxu0 0
      %1954 = vmatprep.mubr.bf16.mxu0 0
      %1955 = vmatmul.mubr.bf16.gmra.mrb[0].mxu0 %v1920
      %v1956 = vpop.f32.mrb[0].mxu0
      %v1957 = vadd.f32 0.0, %v1956
      %v1958 = vpop.f32.mrb[0].mxu0
      %v1959 = vpop.f32.mrb[0].mxu0
      %v1960 = vadd.f32 0.0, %v1959
      %v1961 = vpop.f32.mrb[0].mxu0
      %1962 = vdwg.mxu0
      %1963 = vrot.lane.b32.xlu0 %v1003, 56
      %v1964 = vpop.permute.xlu0 %1963
      %v1967 = vsel %vm672, %v1821, 0
      %1969 = vmatprep.subr.bf16.mxu0 0
      %1970 = vmatpush1.bf16.msra.mxu0 %v1964
      %1971 = vmatprep.subr.bf16.mxu0 0
      %1972 = vmatpush1.bf16.msra.mxu0 0
      %1973 = vmatprep.subr.bf16.mxu0 0
      %1974 = vmatpush1.bf16.msra.mxu0 0
      %1975 = vmatprep.subr.bf16.mxu0 0
      %1976 = vmatpush1.bf16.msra.mxu0 0
      %1977 = vmatprep.subr.bf16.mxu0 0
      %1978 = vmatpush1.bf16.msra.mxu0 0
      %1979 = vmatprep.subr.bf16.mxu0 0
      %1980 = vmatpush1.bf16.msra.mxu0 0
      %1981 = vmatprep.subr.bf16.mxu0 0
      %1982 = vmatpush1.bf16.msra.mxu0 0
      %1983 = vmatprep.subr.bf16.mxu0 0
      %1984 = vmatpush1.bf16.msra.mxu0 0
      %1985 = vmatprep.subr.bf16.mxu0 0
      %1986 = vmatpush1.bf16.msra.mxu0 0
      %1987 = vmatprep.subr.bf16.mxu0 0
      %1988 = vmatpush1.bf16.msra.mxu0 0
      %1989 = vmatprep.subr.bf16.mxu0 0
      %1990 = vmatpush1.bf16.msra.mxu0 0
      %1991 = vmatprep.subr.bf16.mxu0 0
      %1992 = vmatpush1.bf16.msra.mxu0 0
      %1993 = vmatprep.subr.bf16.mxu0 0
      %1994 = vmatpush1.bf16.msra.mxu0 0
      %1995 = vmatprep.subr.bf16.mxu0 0
      %1996 = vmatpush1.bf16.msra.mxu0 0
      %1997 = vmatprep.subr.bf16.mxu0 0
      %1998 = vmatpush1.bf16.msra.mxu0 0
      %1999 = vmatprep.subr.bf16.mxu0 0
      %2000 = vmatpush1.bf16.msra.mxu0 0
      %2001 = vmatprep.mubr.bf16.mxu0 0
      %2002 = vmatmul.mubr.bf16.gmra.mrb[0].mxu0 %v1967
      %v2003 = vpop.f32.mrb[0].mxu0
      %v2004 = vadd.f32 0.0, %v2003
      %v2005 = vpop.f32.mrb[0].mxu0
      %v2006 = vpop.f32.mrb[0].mxu0
      %v2007 = vadd.f32 0.0, %v2006
      %v2008 = vpop.f32.mrb[0].mxu0
      %2009 = vdwg.mxu0
      %v2010 = vpack.c.bf16 %v1866, %v1863
      %v2011 = vpack.c.bf16 %v1913, %v1910
      %v2012 = vpack.c.bf16 %v1960, %v1957
      %v2013 = vpack.c.bf16 %v2007, %v2004
      %v2014 = vpack.c.bf16 %v1005, %v1005
      %v2016 = vsel %vm1011, %v2010, 0
      %v2019 = vsel %vm1011, %v2011, 0
      %v2022 = vsel %vm1011, %v2012, 0
      %v2025 = vsel %vm1011, %v2013, 0
      %vm2027 = vcmask 1043456
      %v2029 = vsel %vm2027, %v2014, 0
      %2031 = vmatprep.subr.bf16.mxu0 0
      %2032 = vmatpush1.bf16.msra.mxu0 %v2029
      %2033 = vmatprep.subr.bf16.mxu0 0
      %2034 = vmatpush1.bf16.msra.mxu0 0
      %2035 = vmatprep.subr.bf16.mxu0 0
      %2036 = vmatpush1.bf16.msra.mxu0 0
      %2037 = vmatprep.subr.bf16.mxu0 0
      %2038 = vmatpush1.bf16.msra.mxu0 0
      %2039 = vmatprep.subr.bf16.mxu0 0
      %2040 = vmatpush1.bf16.msra.mxu0 0
      %2041 = vmatprep.subr.bf16.mxu0 0
      %2042 = vmatpush1.bf16.msra.mxu0 0
      %2043 = vmatprep.subr.bf16.mxu0 0
      %2044 = vmatpush1.bf16.msra.mxu0 0
      %2045 = vmatprep.subr.bf16.mxu0 0
      %2046 = vmatpush1.bf16.msra.mxu0 0
      %2047 = vmatprep.subr.bf16.mxu0 0
      %2048 = vmatpush1.bf16.msra.mxu0 0
      %2049 = vmatprep.subr.bf16.mxu0 0
      %2050 = vmatpush1.bf16.msra.mxu0 0
      %2051 = vmatprep.subr.bf16.mxu0 0
      %2052 = vmatpush1.bf16.msra.mxu0 0
      %2053 = vmatprep.subr.bf16.mxu0 0
      %2054 = vmatpush1.bf16.msra.mxu0 0
      %2055 = vmatprep.subr.bf16.mxu0 0
      %2056 = vmatpush1.bf16.msra.mxu0 0
      %2057 = vmatprep.subr.bf16.mxu0 0
      %2058 = vmatpush1.bf16.msra.mxu0 0
      %2059 = vmatprep.subr.bf16.mxu0 0
      %2060 = vmatpush1.bf16.msra.mxu0 0
      %2061 = vmatprep.subr.bf16.mxu0 0
      %2062 = vmatpush1.bf16.msra.mxu0 0
      %2063 = vmatprep.mubr.bf16.mxu0 0
      %2064 = vmatmul.mubr.bf16.gmra.mrb[0].mxu0 %v2016
      %v2065 = vpop.f32.mrb[0].mxu0
      %v2066 = vadd.f32 0.0, %v2065
      %v2067 = vpop.f32.mrb[0].mxu0
      %v2068 = vpop.f32.mrb[0].mxu0
      %v2069 = vadd.f32 0.0, %v2068
      %v2070 = vpop.f32.mrb[0].mxu0
      %2071 = vmatprep.mubr.bf16.mxu0 0
      %2072 = vmatmul.mubr.bf16.gmra.mrb[0].mxu0 %v2019
      %v2073 = vpop.f32.mrb[0].mxu0
      %v2074 = vadd.f32 0.0, %v2073
      %v2075 = vpop.f32.mrb[0].mxu0
      %v2076 = vpop.f32.mrb[0].mxu0
      %v2077 = vadd.f32 0.0, %v2076
      %v2078 = vpop.f32.mrb[0].mxu0
      %2079 = vmatprep.mubr.bf16.mxu0 0
      %2080 = vmatmul.mubr.bf16.gmra.mrb[0].mxu0 %v2022
      %v2081 = vpop.f32.mrb[0].mxu0
      %v2082 = vadd.f32 0.0, %v2081
      %v2083 = vpop.f32.mrb[0].mxu0
      %v2084 = vpop.f32.mrb[0].mxu0
      %v2085 = vadd.f32 0.0, %v2084
      %v2086 = vpop.f32.mrb[0].mxu0
      %2087 = vmatprep.mubr.bf16.mxu0 0
      %2088 = vmatmul.mubr.bf16.gmra.mrb[0].mxu0 %v2025
      %v2089 = vpop.f32.mrb[0].mxu0
      %v2090 = vadd.f32 0.0, %v2089
      %v2091 = vpop.f32.mrb[0].mxu0
      %v2092 = vpop.f32.mrb[0].mxu0
      %v2093 = vadd.f32 0.0, %v2092
      %v2094 = vpop.f32.mrb[0].mxu0
      %2095 = vdwg.mxu0
      %v2097 = vsel %vm1011, %v1505, 0
      %v2100 = vsel %vm1011, %v1506, 0
      %v2103 = vsel %vm1011, %v1507, 0
      %v2106 = vsel %vm1011, %v1508, 0
      %v2109 = vsel %vm2027, %v1509, 0
      %2111 = vmatprep.subr.bf16.mxu0 0
      %2112 = vmatpush1.bf16.msra.mxu0 %v2109
      %2113 = vmatprep.subr.bf16.mxu0 0
      %2114 = vmatpush1.bf16.msra.mxu0 0
      %2115 = vmatprep.subr.bf16.mxu0 0
      %2116 = vmatpush1.bf16.msra.mxu0 0
      %2117 = vmatprep.subr.bf16.mxu0 0
      %2118 = vmatpush1.bf16.msra.mxu0 0
      %2119 = vmatprep.subr.bf16.mxu0 0
      %2120 = vmatpush1.bf16.msra.mxu0 0
      %2121 = vmatprep.subr.bf16.mxu0 0
      %2122 = vmatpush1.bf16.msra.mxu0 0
      %2123 = vmatprep.subr.bf16.mxu0 0
      %2124 = vmatpush1.bf16.msra.mxu0 0
      %2125 = vmatprep.subr.bf16.mxu0 0
      %2126 = vmatpush1.bf16.msra.mxu0 0
      %2127 = vmatprep.subr.bf16.mxu0 0
      %2128 = vmatpush1.bf16.msra.mxu0 0
      %2129 = vmatprep.subr.bf16.mxu0 0
      %2130 = vmatpush1.bf16.msra.mxu0 0
      %2131 = vmatprep.subr.bf16.mxu0 0
      %2132 = vmatpush1.bf16.msra.mxu0 0
      %2133 = vmatprep.subr.bf16.mxu0 0
      %2134 = vmatpush1.bf16.msra.mxu0 0
      %2135 = vmatprep.subr.bf16.mxu0 0
      %2136 = vmatpush1.bf16.msra.mxu0 0
      %2137 = vmatprep.subr.bf16.mxu0 0
      %2138 = vmatpush1.bf16.msra.mxu0 0
      %2139 = vmatprep.subr.bf16.mxu0 0
      %2140 = vmatpush1.bf16.msra.mxu0 0
      %2141 = vmatprep.subr.bf16.mxu0 0
      %2142 = vmatpush1.bf16.msra.mxu0 0
      %2143 = vmatprep.mubr.bf16.mxu0 0
      %2144 = vmatmul.mubr.bf16.gmra.mrb[0].mxu0 %v2097
      %v2145 = vpop.f32.mrb[0].mxu0
      %v2146 = vadd.f32 %v2066, %v2145
      %v2147 = vpop.f32.mrb[0].mxu0
      %v2148 = vpop.f32.mrb[0].mxu0
      %v2149 = vadd.f32 %v2069, %v2148
      %v2150 = vpop.f32.mrb[0].mxu0
      %2151 = vmatprep.mubr.bf16.mxu0 0
      %2152 = vmatmul.mubr.bf16.gmra.mrb[0].mxu0 %v2100
      %v2153 = vpop.f32.mrb[0].mxu0
      %v2154 = vadd.f32 %v2074, %v2153
      %v2155 = vpop.f32.mrb[0].mxu0
      %v2156 = vpop.f32.mrb[0].mxu0
      %v2157 = vadd.f32 %v2077, %v2156
      %v2158 = vpop.f32.mrb[0].mxu0
      %2159 = vmatprep.mubr.bf16.mxu0 0
      %2160 = vmatmul.mubr.bf16.gmra.mrb[0].mxu0 %v2103
      %v2161 = vpop.f32.mrb[0].mxu0
      %v2162 = vadd.f32 %v2082, %v2161
      %v2163 = vpop.f32.mrb[0].mxu0
      %v2164 = vpop.f32.mrb[0].mxu0
      %v2165 = vadd.f32 %v2085, %v2164
      %v2166 = vpop.f32.mrb[0].mxu0
      %2167 = vmatprep.mubr.bf16.mxu0 0
      %2168 = vmatmul.mubr.bf16.gmra.mrb[0].mxu0 %v2106
      %v2169 = vpop.f32.mrb[0].mxu0
      %v2170 = vadd.f32 %v2090, %v2169
      %v2171 = vpop.f32.mrb[0].mxu0
      %v2172 = vpop.f32.mrb[0].mxu0
      %v2173 = vadd.f32 %v2093, %v2172
      %v2174 = vpop.f32.mrb[0].mxu0
      %2175 = vdwg.mxu0
      %2176 = vrot.lane.b32.xlu0 %v1000, 112
      %v2177 = vpop.permute.xlu0 %2176
      %2178 = vrot.lane.b32.xlu0 %v1000, 80
      %v2179 = vpop.permute.xlu0 %2178
      %v2181 = vsel %vm1011, %v2177, 0
      %v2184 = vsel %vm1011, %v2179, 0
      %2186 = vmatprep.subr.bf16.mxu0 0
      %2187 = vmatpush1.bf16.xpose.msra.mxu0 %v2184
      %2188 = vmatprep.subr.bf16.mxu0 0
      %2189 = vmatpush1.bf16.xpose.msra.mxu0 0
      %2190 = vmatprep.subr.bf16.mxu0 0
      %2191 = vmatpush1.bf16.xpose.msra.mxu0 0
      %2192 = vmatprep.subr.bf16.mxu0 0
      %2193 = vmatpush1.bf16.xpose.msra.mxu0 0
      %2194 = vmatprep.subr.bf16.mxu0 0
      %2195 = vmatpush1.bf16.xpose.msra.mxu0 0
      %2196 = vmatprep.subr.bf16.mxu0 0
      %2197 = vmatpush1.bf16.xpose.msra.mxu0 0
      %2198 = vmatprep.subr.bf16.mxu0 0
      %2199 = vmatpush1.bf16.xpose.msra.mxu0 0
      %2200 = vmatprep.subr.bf16.mxu0 0
      %2201 = vmatpush1.bf16.xpose.msra.mxu0 0
      %2202 = vmatprep.subr.bf16.mxu0 0
      %2203 = vmatpush1.bf16.xpose.msra.mxu0 0
      %2204 = vmatprep.subr.bf16.mxu0 0
      %2205 = vmatpush1.bf16.xpose.msra.mxu0 0
      %2206 = vmatprep.subr.bf16.mxu0 0
      %2207 = vmatpush1.bf16.xpose.msra.mxu0 0
      %2208 = vmatprep.subr.bf16.mxu0 0
      %2209 = vmatpush1.bf16.xpose.msra.mxu0 0
      %2210 = vmatprep.subr.bf16.mxu0 0
      %2211 = vmatpush1.bf16.xpose.msra.mxu0 0
      %2212 = vmatprep.subr.bf16.mxu0 0
      %2213 = vmatpush1.bf16.xpose.msra.mxu0 0
      %2214 = vmatprep.subr.bf16.mxu0 0
      %2215 = vmatpush1.bf16.xpose.msra.mxu0 0
      %2216 = vmatprep.subr.bf16.mxu0 0
      %2217 = vmatpush1.bf16.xpose.msra.mxu0 0
      %2218 = vmatprep.mubr.bf16.mxu0 0
      %2219 = vmatmul.mubr.bf16.gmra.mrb[0].mxu0 %v2181
      %v2220 = vpop.f32.mrb[0].mxu0
      %v2221 = vadd.f32 0.0, %v2220
      %v2222 = vpop.f32.mrb[0].mxu0
      %v2223 = vpop.f32.mrb[0].mxu0
      %v2224 = vadd.f32 0.0, %v2223
      %v2225 = vpop.f32.mrb[0].mxu0
      %2226 = vdwg.mxu0
      %2227 = vrot.lane.b32.xlu0 %v1001, 112
      %v2228 = vpop.permute.xlu0 %2227
      %2229 = vrot.lane.b32.xlu0 %v1001, 80
      %v2230 = vpop.permute.xlu0 %2229
      %v2232 = vsel %vm1011, %v2228, 0
      %v2235 = vsel %vm1011, %v2230, 0
      %2237 = vmatprep.subr.bf16.mxu0 0
      %2238 = vmatpush1.bf16.xpose.msra.mxu0 %v2235
      %2239 = vmatprep.subr.bf16.mxu0 0
      %2240 = vmatpush1.bf16.xpose.msra.mxu0 0
      %2241 = vmatprep.subr.bf16.mxu0 0
      %2242 = vmatpush1.bf16.xpose.msra.mxu0 0
      %2243 = vmatprep.subr.bf16.mxu0 0
      %2244 = vmatpush1.bf16.xpose.msra.mxu0 0
      %2245 = vmatprep.subr.bf16.mxu0 0
      %2246 = vmatpush1.bf16.xpose.msra.mxu0 0
      %2247 = vmatprep.subr.bf16.mxu0 0
      %2248 = vmatpush1.bf16.xpose.msra.mxu0 0
      %2249 = vmatprep.subr.bf16.mxu0 0
      %2250 = vmatpush1.bf16.xpose.msra.mxu0 0
      %2251 = vmatprep.subr.bf16.mxu0 0
      %2252 = vmatpush1.bf16.xpose.msra.mxu0 0
      %2253 = vmatprep.subr.bf16.mxu0 0
      %2254 = vmatpush1.bf16.xpose.msra.mxu0 0
      %2255 = vmatprep.subr.bf16.mxu0 0
      %2256 = vmatpush1.bf16.xpose.msra.mxu0 0
      %2257 = vmatprep.subr.bf16.mxu0 0
      %2258 = vmatpush1.bf16.xpose.msra.mxu0 0
      %2259 = vmatprep.subr.bf16.mxu0 0
      %2260 = vmatpush1.bf16.xpose.msra.mxu0 0
      %2261 = vmatprep.subr.bf16.mxu0 0
      %2262 = vmatpush1.bf16.xpose.msra.mxu0 0
      %2263 = vmatprep.subr.bf16.mxu0 0
      %2264 = vmatpush1.bf16.xpose.msra.mxu0 0
      %2265 = vmatprep.subr.bf16.mxu0 0
      %2266 = vmatpush1.bf16.xpose.msra.mxu0 0
      %2267 = vmatprep.subr.bf16.mxu0 0
      %2268 = vmatpush1.bf16.xpose.msra.mxu0 0
      %2269 = vmatprep.mubr.bf16.mxu0 0
      %2270 = vmatmul.mubr.bf16.gmra.mrb[0].mxu0 %v2232
      %v2271 = vpop.f32.mrb[0].mxu0
      %v2272 = vadd.f32 0.0, %v2271
      %v2273 = vpop.f32.mrb[0].mxu0
      %v2274 = vpop.f32.mrb[0].mxu0
      %v2275 = vadd.f32 0.0, %v2274
      %v2276 = vpop.f32.mrb[0].mxu0
      %2277 = vdwg.mxu0
      %2278 = vrot.lane.b32.xlu0 %v1002, 112
      %v2279 = vpop.permute.xlu0 %2278
      %2280 = vrot.lane.b32.xlu0 %v1002, 80
      %v2281 = vpop.permute.xlu0 %2280
      %v2283 = vsel %vm1011, %v2279, 0
      %v2286 = vsel %vm1011, %v2281, 0
      %2288 = vmatprep.subr.bf16.mxu0 0
      %2289 = vmatpush1.bf16.xpose.msra.mxu0 %v2286
      %2290 = vmatprep.subr.bf16.mxu0 0
      %2291 = vmatpush1.bf16.xpose.msra.mxu0 0
      %2292 = vmatprep.subr.bf16.mxu0 0
      %2293 = vmatpush1.bf16.xpose.msra.mxu0 0
      %2294 = vmatprep.subr.bf16.mxu0 0
      %2295 = vmatpush1.bf16.xpose.msra.mxu0 0
      %2296 = vmatprep.subr.bf16.mxu0 0
      %2297 = vmatpush1.bf16.xpose.msra.mxu0 0
      %2298 = vmatprep.subr.bf16.mxu0 0
      %2299 = vmatpush1.bf16.xpose.msra.mxu0 0
      %2300 = vmatprep.subr.bf16.mxu0 0
      %2301 = vmatpush1.bf16.xpose.msra.mxu0 0
      %2302 = vmatprep.subr.bf16.mxu0 0
      %2303 = vmatpush1.bf16.xpose.msra.mxu0 0
      %2304 = vmatprep.subr.bf16.mxu0 0
      %2305 = vmatpush1.bf16.xpose.msra.mxu0 0
      %2306 = vmatprep.subr.bf16.mxu0 0
      %2307 = vmatpush1.bf16.xpose.msra.mxu0 0
      %2308 = vmatprep.subr.bf16.mxu0 0
      %2309 = vmatpush1.bf16.xpose.msra.mxu0 0
      %2310 = vmatprep.subr.bf16.mxu0 0
      %2311 = vmatpush1.bf16.xpose.msra.mxu0 0
      %2312 = vmatprep.subr.bf16.mxu0 0
      %2313 = vmatpush1.bf16.xpose.msra.mxu0 0
      %2314 = vmatprep.subr.bf16.mxu0 0
      %2315 = vmatpush1.bf16.xpose.msra.mxu0 0
      %2316 = vmatprep.subr.bf16.mxu0 0
      %2317 = vmatpush1.bf16.xpose.msra.mxu0 0
      %2318 = vmatprep.subr.bf16.mxu0 0
      %2319 = vmatpush1.bf16.xpose.msra.mxu0 0
      %2320 = vmatprep.mubr.bf16.mxu0 0
      %2321 = vmatmul.mubr.bf16.gmra.mrb[0].mxu0 %v2283
      %v2322 = vpop.f32.mrb[0].mxu0
      %v2323 = vadd.f32 0.0, %v2322
      %v2324 = vpop.f32.mrb[0].mxu0
      %v2325 = vpop.f32.mrb[0].mxu0
      %v2326 = vadd.f32 0.0, %v2325
      %v2327 = vpop.f32.mrb[0].mxu0
      %2328 = vdwg.mxu0
      %2329 = vrot.lane.b32.xlu0 %v1003, 112
      %v2330 = vpop.permute.xlu0 %2329
      %2331 = vrot.lane.b32.xlu0 %v1003, 80
      %v2332 = vpop.permute.xlu0 %2331
      %v2334 = vsel %vm1011, %v2330, 0
      %v2337 = vsel %vm1011, %v2332, 0
      %2339 = vmatprep.subr.bf16.mxu0 0
      %2340 = vmatpush1.bf16.xpose.msra.mxu0 %v2337
      %2341 = vmatprep.subr.bf16.mxu0 0
      %2342 = vmatpush1.bf16.xpose.msra.mxu0 0
      %2343 = vmatprep.subr.bf16.mxu0 0
      %2344 = vmatpush1.bf16.xpose.msra.mxu0 0
      %2345 = vmatprep.subr.bf16.mxu0 0
      %2346 = vmatpush1.bf16.xpose.msra.mxu0 0
      %2347 = vmatprep.subr.bf16.mxu0 0
      %2348 = vmatpush1.bf16.xpose.msra.mxu0 0
      %2349 = vmatprep.subr.bf16.mxu0 0
      %2350 = vmatpush1.bf16.xpose.msra.mxu0 0
      %2351 = vmatprep.subr.bf16.mxu0 0
      %2352 = vmatpush1.bf16.xpose.msra.mxu0 0
      %2353 = vmatprep.subr.bf16.mxu0 0
      %2354 = vmatpush1.bf16.xpose.msra.mxu0 0
      %2355 = vmatprep.subr.bf16.mxu0 0
      %2356 = vmatpush1.bf16.xpose.msra.mxu0 0
      %2357 = vmatprep.subr.bf16.mxu0 0
      %2358 = vmatpush1.bf16.xpose.msra.mxu0 0
      %2359 = vmatprep.subr.bf16.mxu0 0
      %2360 = vmatpush1.bf16.xpose.msra.mxu0 0
      %2361 = vmatprep.subr.bf16.mxu0 0
      %2362 = vmatpush1.bf16.xpose.msra.mxu0 0
      %2363 = vmatprep.subr.bf16.mxu0 0
      %2364 = vmatpush1.bf16.xpose.msra.mxu0 0
      %2365 = vmatprep.subr.bf16.mxu0 0
      %2366 = vmatpush1.bf16.xpose.msra.mxu0 0
      %2367 = vmatprep.subr.bf16.mxu0 0
      %2368 = vmatpush1.bf16.xpose.msra.mxu0 0
      %2369 = vmatprep.subr.bf16.mxu0 0
      %2370 = vmatpush1.bf16.xpose.msra.mxu0 0
      %2371 = vmatprep.mubr.bf16.mxu0 0
      %2372 = vmatmul.mubr.bf16.gmra.mrb[0].mxu0 %v2334
      %v2373 = vpop.f32.mrb[0].mxu0
      %v2374 = vadd.f32 0.0, %v2373
      %v2375 = vpop.f32.mrb[0].mxu0
      %v2376 = vpop.f32.mrb[0].mxu0
      %v2377 = vadd.f32 0.0, %v2376
      %v2378 = vpop.f32.mrb[0].mxu0
      %2379 = vdwg.mxu0
      %v2380 = vmul.f32 %v2221, 0.35355338
      %v2381 = vmul.f32 %v2224, 0.35355338
      %v2382 = vmul.f32 %v2272, 0.35355338
      %v2383 = vmul.f32 %v2275, 0.35355338
      %v2384 = vmul.f32 %v2323, 0.35355338
      %v2385 = vmul.f32 %v2326, 0.35355338
      %v2386 = vmul.f32 %v2374, 0.35355338
      %v2387 = vmul.f32 %v2377, 0.35355338
      %v2388 = vadd.f32 %v2380, %v894
      %v2389 = vadd.f32 %v2381, %v894
      %v2390 = vadd.f32 %v2382, %v894
      %v2391 = vadd.f32 %v2383, %v894
      %v2392 = vadd.f32 %v2384, %v894
      %v2393 = vadd.f32 %v2385, %v894
      %v2394 = vadd.f32 %v2386, %v894
      %v2395 = vadd.f32 %v2387, %v894
      %v2396 = vsel %vm672, %v2388, -inf
      %2397 = vmax.xlane.f32.xlu0 %v2396
      %v2398 = vpop.xlane.xlu0 %2397
      %v2399 = vsel %vm672, %v2389, -inf
      %2400 = vmax.xlane.f32.xlu0 %v2399
      %v2401 = vpop.xlane.xlu0 %2400
      %v2402 = vsel %vm672, %v2390, -inf
      %2403 = vmax.xlane.f32.xlu0 %v2402
      %v2404 = vpop.xlane.xlu0 %2403
      %v2405 = vsel %vm672, %v2391, -inf
      %2406 = vmax.xlane.f32.xlu0 %v2405
      %v2407 = vpop.xlane.xlu0 %2406
      %v2408 = vsel %vm672, %v2392, -inf
      %2409 = vmax.xlane.f32.xlu0 %v2408
      %v2410 = vpop.xlane.xlu0 %2409
      %v2411 = vsel %vm672, %v2393, -inf
      %2412 = vmax.xlane.f32.xlu0 %v2411
      %v2413 = vpop.xlane.xlu0 %2412
      %v2414 = vsel %vm672, %v2394, -inf
      %2415 = vmax.xlane.f32.xlu0 %v2414
      %v2416 = vpop.xlane.xlu0 %2415
      %v2417 = vsel %vm672, %v2395, -inf
      %2418 = vmax.xlane.f32.xlu0 %v2417
      %v2419 = vpop.xlane.xlu0 %2418
      %v2420 = vsub.f32 %v2388, %v2398
      %v2421 = vsub.f32 %v2389, %v2401
      %v2422 = vsub.f32 %v2390, %v2404
      %v2423 = vsub.f32 %v2391, %v2407
      %v2424 = vsub.f32 %v2392, %v2410
      %v2425 = vsub.f32 %v2393, %v2413
      %v2426 = vsub.f32 %v2394, %v2416
      %v2427 = vsub.f32 %v2395, %v2419
      %v2428 = vmul.f32 %v2420, 1.442695
      %v2429 = vpow.pop %v2428
      %v2430 = vmul.f32 %v2421, 1.442695
      %v2431 = vpow.pop %v2430
      %v2432 = vmul.f32 %v2422, 1.442695
      %v2433 = vpow.pop %v2432
      %v2434 = vmul.f32 %v2423, 1.442695
      %v2435 = vpow.pop %v2434
      %v2436 = vmul.f32 %v2424, 1.442695
      %v2437 = vpow.pop %v2436
      %v2438 = vmul.f32 %v2425, 1.442695
      %v2439 = vpow.pop %v2438
      %v2440 = vmul.f32 %v2426, 1.442695
      %v2441 = vpow.pop %v2440
      %v2442 = vmul.f32 %v2427, 1.442695
      %v2443 = vpow.pop %v2442
      %v2444 = vsel %vm672, %v2429, 0.0
      %2445 = vadd.xlane.f32.xlu0 %v2444
      %v2446 = vpop.xlane.xlu0 %2445
      %v2447 = vsel %vm672, %v2431, 0.0
      %2448 = vadd.xlane.f32.xlu0 %v2447
      %v2449 = vpop.xlane.xlu0 %2448
      %v2450 = vsel %vm672, %v2433, 0.0
      %2451 = vadd.xlane.f32.xlu0 %v2450
      %v2452 = vpop.xlane.xlu0 %2451
      %v2453 = vsel %vm672, %v2435, 0.0
      %2454 = vadd.xlane.f32.xlu0 %v2453
      %v2455 = vpop.xlane.xlu0 %2454
      %v2456 = vsel %vm672, %v2437, 0.0
      %2457 = vadd.xlane.f32.xlu0 %v2456
      %v2458 = vpop.xlane.xlu0 %2457
      %v2459 = vsel %vm672, %v2439, 0.0
      %2460 = vadd.xlane.f32.xlu0 %v2459
      %v2461 = vpop.xlane.xlu0 %2460
      %v2462 = vsel %vm672, %v2441, 0.0
      %2463 = vadd.xlane.f32.xlu0 %v2462
      %v2464 = vpop.xlane.xlu0 %2463
      %v2465 = vsel %vm672, %v2443, 0.0
      %2466 = vadd.xlane.f32.xlu0 %v2465
      %v2467 = vpop.xlane.xlu0 %2466
      %v2468 = vrcp.pop %v2446
      %v2469 = vrcp.pop %v2449
      %v2470 = vrcp.pop %v2452
      %v2471 = vrcp.pop %v2455
      %v2472 = vrcp.pop %v2458
      %v2473 = vrcp.pop %v2461
      %v2474 = vrcp.pop %v2464
      %v2475 = vrcp.pop %v2467
      %v2476 = vmul.f32 %v2429, %v2468
      %v2477 = vmul.f32 %v2431, %v2469
      %v2478 = vmul.f32 %v2433, %v2470
      %v2479 = vmul.f32 %v2435, %v2471
      %v2480 = vmul.f32 %v2437, %v2472
      %v2481 = vmul.f32 %v2439, %v2473
      %v2482 = vmul.f32 %v2441, %v2474
      %v2483 = vmul.f32 %v2443, %v2475
      %v2484 = vpack.c.bf16 %v2477, %v2476
      %v2485 = vpack.c.bf16 %v2479, %v2478
      %v2486 = vpack.c.bf16 %v2481, %v2480
      %v2487 = vpack.c.bf16 %v2483, %v2482
      %2488 = vrot.lane.b32.xlu0 %v1000, 48
      %v2489 = vpop.permute.xlu0 %2488
      %v2492 = vsel %vm672, %v2484, 0
      %2494 = vmatprep.subr.bf16.mxu0 0
      %2495 = vmatpush1.bf16.msra.mxu0 %v2489
      %2496 = vmatprep.subr.bf16.mxu0 0
      %2497 = vmatpush1.bf16.msra.mxu0 0
      %2498 = vmatprep.subr.bf16.mxu0 0
      %2499 = vmatpush1.bf16.msra.mxu0 0
      %2500 = vmatprep.subr.bf16.mxu0 0
      %2501 = vmatpush1.bf16.msra.mxu0 0
      %2502 = vmatprep.subr.bf16.mxu0 0
      %2503 = vmatpush1.bf16.msra.mxu0 0
      %2504 = vmatprep.subr.bf16.mxu0 0
      %2505 = vmatpush1.bf16.msra.mxu0 0
      %2506 = vmatprep.subr.bf16.mxu0 0
      %2507 = vmatpush1.bf16.msra.mxu0 0
      %2508 = vmatprep.subr.bf16.mxu0 0
      %2509 = vmatpush1.bf16.msra.mxu0 0
      %2510 = vmatprep.subr.bf16.mxu0 0
      %2511 = vmatpush1.bf16.msra.mxu0 0
      %2512 = vmatprep.subr.bf16.mxu0 0
      %2513 = vmatpush1.bf16.msra.mxu0 0
      %2514 = vmatprep.subr.bf16.mxu0 0
      %2515 = vmatpush1.bf16.msra.mxu0 0
      %2516 = vmatprep.subr.bf16.mxu0 0
      %2517 = vmatpush1.bf16.msra.mxu0 0
      %2518 = vmatprep.subr.bf16.mxu0 0
      %2519 = vmatpush1.bf16.msra.mxu0 0
      %2520 = vmatprep.subr.bf16.mxu0 0
      %2521 = vmatpush1.bf16.msra.mxu0 0
      %2522 = vmatprep.subr.bf16.mxu0 0
      %2523 = vmatpush1.bf16.msra.mxu0 0
      %2524 = vmatprep.subr.bf16.mxu0 0
      %2525 = vmatpush1.bf16.msra.mxu0 0
      %2526 = vmatprep.mubr.bf16.mxu0 0
      %2527 = vmatmul.mubr.bf16.gmra.mrb[0].mxu0 %v2492
      %v2528 = vpop.f32.mrb[0].mxu0
      %v2529 = vadd.f32 0.0, %v2528
      %v2530 = vpop.f32.mrb[0].mxu0
      %v2531 = vpop.f32.mrb[0].mxu0
      %v2532 = vadd.f32 0.0, %v2531
      %v2533 = vpop.f32.mrb[0].mxu0
      %2534 = vdwg.mxu0
      %2535 = vrot.lane.b32.xlu0 %v1001, 48
      %v2536 = vpop.permute.xlu0 %2535
      %v2539 = vsel %vm672, %v2485, 0
      %2541 = vmatprep.subr.bf16.mxu0 0
      %2542 = vmatpush1.bf16.msra.mxu0 %v2536
      %2543 = vmatprep.subr.bf16.mxu0 0
      %2544 = vmatpush1.bf16.msra.mxu0 0
      %2545 = vmatprep.subr.bf16.mxu0 0
      %2546 = vmatpush1.bf16.msra.mxu0 0
      %2547 = vmatprep.subr.bf16.mxu0 0
      %2548 = vmatpush1.bf16.msra.mxu0 0
      %2549 = vmatprep.subr.bf16.mxu0 0
      %2550 = vmatpush1.bf16.msra.mxu0 0
      %2551 = vmatprep.subr.bf16.mxu0 0
      %2552 = vmatpush1.bf16.msra.mxu0 0
      %2553 = vmatprep.subr.bf16.mxu0 0
      %2554 = vmatpush1.bf16.msra.mxu0 0
      %2555 = vmatprep.subr.bf16.mxu0 0
      %2556 = vmatpush1.bf16.msra.mxu0 0
      %2557 = vmatprep.subr.bf16.mxu0 0
      %2558 = vmatpush1.bf16.msra.mxu0 0
      %2559 = vmatprep.subr.bf16.mxu0 0
      %2560 = vmatpush1.bf16.msra.mxu0 0
      %2561 = vmatprep.subr.bf16.mxu0 0
      %2562 = vmatpush1.bf16.msra.mxu0 0
      %2563 = vmatprep.subr.bf16.mxu0 0
      %2564 = vmatpush1.bf16.msra.mxu0 0
      %2565 = vmatprep.subr.bf16.mxu0 0
      %2566 = vmatpush1.bf16.msra.mxu0 0
      %2567 = vmatprep.subr.bf16.mxu0 0
      %2568 = vmatpush1.bf16.msra.mxu0 0
      %2569 = vmatprep.subr.bf16.mxu0 0
      %2570 = vmatpush1.bf16.msra.mxu0 0
      %2571 = vmatprep.subr.bf16.mxu0 0
      %2572 = vmatpush1.bf16.msra.mxu0 0
      %2573 = vmatprep.mubr.bf16.mxu0 0
      %2574 = vmatmul.mubr.bf16.gmra.mrb[0].mxu0 %v2539
      %v2575 = vpop.f32.mrb[0].mxu0
      %v2576 = vadd.f32 0.0, %v2575
      %v2577 = vpop.f32.mrb[0].mxu0
      %v2578 = vpop.f32.mrb[0].mxu0
      %v2579 = vadd.f32 0.0, %v2578
      %v2580 = vpop.f32.mrb[0].mxu0
      %2581 = vdwg.mxu0
      %2582 = vrot.lane.b32.xlu0 %v1002, 48
      %v2583 = vpop.permute.xlu0 %2582
      %v2586 = vsel %vm672, %v2486, 0
      %2588 = vmatprep.subr.bf16.mxu0 0
      %2589 = vmatpush1.bf16.msra.mxu0 %v2583
      %2590 = vmatprep.subr.bf16.mxu0 0
      %2591 = vmatpush1.bf16.msra.mxu0 0
      %2592 = vmatprep.subr.bf16.mxu0 0
      %2593 = vmatpush1.bf16.msra.mxu0 0
      %2594 = vmatprep.subr.bf16.mxu0 0
      %2595 = vmatpush1.bf16.msra.mxu0 0
      %2596 = vmatprep.subr.bf16.mxu0 0
      %2597 = vmatpush1.bf16.msra.mxu0 0
      %2598 = vmatprep.subr.bf16.mxu0 0
      %2599 = vmatpush1.bf16.msra.mxu0 0
      %2600 = vmatprep.subr.bf16.mxu0 0
      %2601 = vmatpush1.bf16.msra.mxu0 0
      %2602 = vmatprep.subr.bf16.mxu0 0
      %2603 = vmatpush1.bf16.msra.mxu0 0
      %2604 = vmatprep.subr.bf16.mxu0 0
      %2605 = vmatpush1.bf16.msra.mxu0 0
      %2606 = vmatprep.subr.bf16.mxu0 0
      %2607 = vmatpush1.bf16.msra.mxu0 0
      %2608 = vmatprep.subr.bf16.mxu0 0
      %2609 = vmatpush1.bf16.msra.mxu0 0
      %2610 = vmatprep.subr.bf16.mxu0 0
      %2611 = vmatpush1.bf16.msra.mxu0 0
      %2612 = vmatprep.subr.bf16.mxu0 0
      %2613 = vmatpush1.bf16.msra.mxu0 0
      %2614 = vmatprep.subr.bf16.mxu0 0
      %2615 = vmatpush1.bf16.msra.mxu0 0
      %2616 = vmatprep.subr.bf16.mxu0 0
      %2617 = vmatpush1.bf16.msra.mxu0 0
      %2618 = vmatprep.subr.bf16.mxu0 0
      %2619 = vmatpush1.bf16.msra.mxu0 0
      %2620 = vmatprep.mubr.bf16.mxu0 0
      %2621 = vmatmul.mubr.bf16.gmra.mrb[0].mxu0 %v2586
      %v2622 = vpop.f32.mrb[0].mxu0
      %v2623 = vadd.f32 0.0, %v2622
      %v2624 = vpop.f32.mrb[0].mxu0
      %v2625 = vpop.f32.mrb[0].mxu0
      %v2626 = vadd.f32 0.0, %v2625
      %v2627 = vpop.f32.mrb[0].mxu0
      %2628 = vdwg.mxu0
      %2629 = vrot.lane.b32.xlu0 %v1003, 48
      %v2630 = vpop.permute.xlu0 %2629
      %v2633 = vsel %vm672, %v2487, 0
      %2635 = vmatprep.subr.bf16.mxu0 0
      %2636 = vmatpush1.bf16.msra.mxu0 %v2630
      %2637 = vmatprep.subr.bf16.mxu0 0
      %2638 = vmatpush1.bf16.msra.mxu0 0
      %2639 = vmatprep.subr.bf16.mxu0 0
      %2640 = vmatpush1.bf16.msra.mxu0 0
      %2641 = vmatprep.subr.bf16.mxu0 0
      %2642 = vmatpush1.bf16.msra.mxu0 0
      %2643 = vmatprep.subr.bf16.mxu0 0
      %2644 = vmatpush1.bf16.msra.mxu0 0
      %2645 = vmatprep.subr.bf16.mxu0 0
      %2646 = vmatpush1.bf16.msra.mxu0 0
      %2647 = vmatprep.subr.bf16.mxu0 0
      %2648 = vmatpush1.bf16.msra.mxu0 0
      %2649 = vmatprep.subr.bf16.mxu0 0
      %2650 = vmatpush1.bf16.msra.mxu0 0
      %2651 = vmatprep.subr.bf16.mxu0 0
      %2652 = vmatpush1.bf16.msra.mxu0 0
      %2653 = vmatprep.subr.bf16.mxu0 0
      %2654 = vmatpush1.bf16.msra.mxu0 0
      %2655 = vmatprep.subr.bf16.mxu0 0
      %2656 = vmatpush1.bf16.msra.mxu0 0
      %2657 = vmatprep.subr.bf16.mxu0 0
      %2658 = vmatpush1.bf16.msra.mxu0 0
      %2659 = vmatprep.subr.bf16.mxu0 0
      %2660 = vmatpush1.bf16.msra.mxu0 0
      %2661 = vmatprep.subr.bf16.mxu0 0
      %2662 = vmatpush1.bf16.msra.mxu0 0
      %2663 = vmatprep.subr.bf16.mxu0 0
      %2664 = vmatpush1.bf16.msra.mxu0 0
      %2665 = vmatprep.subr.bf16.mxu0 0
      %2666 = vmatpush1.bf16.msra.mxu0 0
      %2667 = vmatprep.mubr.bf16.mxu0 0
      %2668 = vmatmul.mubr.bf16.gmra.mrb[0].mxu0 %v2633
      %v2669 = vpop.f32.mrb[0].mxu0
      %v2670 = vadd.f32 0.0, %v2669
      %v2671 = vpop.f32.mrb[0].mxu0
      %v2672 = vpop.f32.mrb[0].mxu0
      %v2673 = vadd.f32 0.0, %v2672
      %v2674 = vpop.f32.mrb[0].mxu0
      %2675 = vdwg.mxu0
      %v2676 = vpack.c.bf16 %v2532, %v2529
      %v2677 = vpack.c.bf16 %v2579, %v2576
      %v2678 = vpack.c.bf16 %v2626, %v2623
      %v2679 = vpack.c.bf16 %v2673, %v2670
      %v2680 = vpack.c.bf16 %v1006, %v1006
      %v2682 = vsel %vm1011, %v2676, 0
      %v2685 = vsel %vm1011, %v2677, 0
      %v2688 = vsel %vm1011, %v2678, 0
      %v2691 = vsel %vm1011, %v2679, 0
      %v2694 = vsel %vm2027, %v2680, 0
      %2696 = vmatprep.subr.bf16.mxu0 0
      %2697 = vmatpush1.bf16.msra.mxu0 %v2694
      %2698 = vmatprep.subr.bf16.mxu0 0
      %2699 = vmatpush1.bf16.msra.mxu0 0
      %2700 = vmatprep.subr.bf16.mxu0 0
      %2701 = vmatpush1.bf16.msra.mxu0 0
      %2702 = vmatprep.subr.bf16.mxu0 0
      %2703 = vmatpush1.bf16.msra.mxu0 0
      %2704 = vmatprep.subr.bf16.mxu0 0
      %2705 = vmatpush1.bf16.msra.mxu0 0
      %2706 = vmatprep.subr.bf16.mxu0 0
      %2707 = vmatpush1.bf16.msra.mxu0 0
      %2708 = vmatprep.subr.bf16.mxu0 0
      %2709 = vmatpush1.bf16.msra.mxu0 0
      %2710 = vmatprep.subr.bf16.mxu0 0
      %2711 = vmatpush1.bf16.msra.mxu0 0
      %2712 = vmatprep.subr.bf16.mxu0 0
      %2713 = vmatpush1.bf16.msra.mxu0 0
      %2714 = vmatprep.subr.bf16.mxu0 0
      %2715 = vmatpush1.bf16.msra.mxu0 0
      %2716 = vmatprep.subr.bf16.mxu0 0
      %2717 = vmatpush1.bf16.msra.mxu0 0
      %2718 = vmatprep.subr.bf16.mxu0 0
      %2719 = vmatpush1.bf16.msra.mxu0 0
      %2720 = vmatprep.subr.bf16.mxu0 0
      %2721 = vmatpush1.bf16.msra.mxu0 0
      %2722 = vmatprep.subr.bf16.mxu0 0
      %2723 = vmatpush1.bf16.msra.mxu0 0
      %2724 = vmatprep.subr.bf16.mxu0 0
      %2725 = vmatpush1.bf16.msra.mxu0 0
      %2726 = vmatprep.subr.bf16.mxu0 0
      %2727 = vmatpush1.bf16.msra.mxu0 0
      %2728 = vmatprep.mubr.bf16.mxu0 0
      %2729 = vmatmul.mubr.bf16.gmra.mrb[0].mxu0 %v2682
      %v2730 = vpop.f32.mrb[0].mxu0
      %v2731 = vadd.f32 0.0, %v2730
      %v2732 = vpop.f32.mrb[0].mxu0
      %v2733 = vpop.f32.mrb[0].mxu0
      %v2734 = vadd.f32 0.0, %v2733
      %v2735 = vpop.f32.mrb[0].mxu0
      %2736 = vmatprep.mubr.bf16.mxu0 0
      %2737 = vmatmul.mubr.bf16.gmra.mrb[0].mxu0 %v2685
      %v2738 = vpop.f32.mrb[0].mxu0
      %v2739 = vadd.f32 0.0, %v2738
      %v2740 = vpop.f32.mrb[0].mxu0
      %v2741 = vpop.f32.mrb[0].mxu0
      %v2742 = vadd.f32 0.0, %v2741
      %v2743 = vpop.f32.mrb[0].mxu0
      %2744 = vmatprep.mubr.bf16.mxu0 0
      %2745 = vmatmul.mubr.bf16.gmra.mrb[0].mxu0 %v2688
      %v2746 = vpop.f32.mrb[0].mxu0
      %v2747 = vadd.f32 0.0, %v2746
      %v2748 = vpop.f32.mrb[0].mxu0
      %v2749 = vpop.f32.mrb[0].mxu0
      %v2750 = vadd.f32 0.0, %v2749
      %v2751 = vpop.f32.mrb[0].mxu0
      %2752 = vmatprep.mubr.bf16.mxu0 0
      %2753 = vmatmul.mubr.bf16.gmra.mrb[0].mxu0 %v2691
      %v2754 = vpop.f32.mrb[0].mxu0
      %v2755 = vadd.f32 0.0, %v2754
      %v2756 = vpop.f32.mrb[0].mxu0
      %v2757 = vpop.f32.mrb[0].mxu0
      %v2758 = vadd.f32 0.0, %v2757
      %v2759 = vpop.f32.mrb[0].mxu0
      %2760 = vdwg.mxu0
      %v2761 = vadd.f32 %v2146, %v2731
      %v2762 = vadd.f32 %v2149, %v2734
      %v2763 = vadd.f32 %v2154, %v2739
      %v2764 = vadd.f32 %v2157, %v2742
      %v2765 = vadd.f32 %v2162, %v2747
      %v2766 = vadd.f32 %v2165, %v2750
      %v2767 = vadd.f32 %v2170, %v2755
      %v2768 = vadd.f32 %v2173, %v2758
      %2769 = vrot.lane.b32.xlu0 %v1000, 104
      %v2770 = vpop.permute.xlu0 %2769
      %2771 = vrot.lane.b32.xlu0 %v1000, 72
      %v2772 = vpop.permute.xlu0 %2771
      %v2774 = vsel %vm1011, %v2770, 0
      %v2777 = vsel %vm1011, %v2772, 0
      %2779 = vmatprep.subr.bf16.mxu0 0
      %2780 = vmatpush1.bf16.xpose.msra.mxu0 %v2777
      %2781 = vmatprep.subr.bf16.mxu0 0
      %2782 = vmatpush1.bf16.xpose.msra.mxu0 0
      %2783 = vmatprep.subr.bf16.mxu0 0
      %2784 = vmatpush1.bf16.xpose.msra.mxu0 0
      %2785 = vmatprep.subr.bf16.mxu0 0
      %2786 = vmatpush1.bf16.xpose.msra.mxu0 0
      %2787 = vmatprep.subr.bf16.mxu0 0
      %2788 = vmatpush1.bf16.xpose.msra.mxu0 0
      %2789 = vmatprep.subr.bf16.mxu0 0
      %2790 = vmatpush1.bf16.xpose.msra.mxu0 0
      %2791 = vmatprep.subr.bf16.mxu0 0
      %2792 = vmatpush1.bf16.xpose.msra.mxu0 0
      %2793 = vmatprep.subr.bf16.mxu0 0
      %2794 = vmatpush1.bf16.xpose.msra.mxu0 0
      %2795 = vmatprep.subr.bf16.mxu0 0
      %2796 = vmatpush1.bf16.xpose.msra.mxu0 0
      %2797 = vmatprep.subr.bf16.mxu0 0
      %2798 = vmatpush1.bf16.xpose.msra.mxu0 0
      %2799 = vmatprep.subr.bf16.mxu0 0
      %2800 = vmatpush1.bf16.xpose.msra.mxu0 0
      %2801 = vmatprep.subr.bf16.mxu0 0
      %2802 = vmatpush1.bf16.xpose.msra.mxu0 0
      %2803 = vmatprep.subr.bf16.mxu0 0
      %2804 = vmatpush1.bf16.xpose.msra.mxu0 0
      %2805 = vmatprep.subr.bf16.mxu0 0
      %2806 = vmatpush1.bf16.xpose.msra.mxu0 0
      %2807 = vmatprep.subr.bf16.mxu0 0
      %2808 = vmatpush1.bf16.xpose.msra.mxu0 0
      %2809 = vmatprep.subr.bf16.mxu0 0
      %2810 = vmatpush1.bf16.xpose.msra.mxu0 0
      %2811 = vmatprep.mubr.bf16.mxu0 0
      %2812 = vmatmul.mubr.bf16.gmra.mrb[0].mxu0 %v2774
      %v2813 = vpop.f32.mrb[0].mxu0
      %v2814 = vadd.f32 0.0, %v2813
      %v2815 = vpop.f32.mrb[0].mxu0
      %v2816 = vpop.f32.mrb[0].mxu0
      %v2817 = vadd.f32 0.0, %v2816
      %v2818 = vpop.f32.mrb[0].mxu0
      %2819 = vdwg.mxu0
      %2820 = vrot.lane.b32.xlu0 %v1001, 104
      %v2821 = vpop.permute.xlu0 %2820
      %2822 = vrot.lane.b32.xlu0 %v1001, 72
      %v2823 = vpop.permute.xlu0 %2822
      %v2825 = vsel %vm1011, %v2821, 0
      %v2828 = vsel %vm1011, %v2823, 0
      %2830 = vmatprep.subr.bf16.mxu0 0
      %2831 = vmatpush1.bf16.xpose.msra.mxu0 %v2828
      %2832 = vmatprep.subr.bf16.mxu0 0
      %2833 = vmatpush1.bf16.xpose.msra.mxu0 0
      %2834 = vmatprep.subr.bf16.mxu0 0
      %2835 = vmatpush1.bf16.xpose.msra.mxu0 0
      %2836 = vmatprep.subr.bf16.mxu0 0
      %2837 = vmatpush1.bf16.xpose.msra.mxu0 0
      %2838 = vmatprep.subr.bf16.mxu0 0
      %2839 = vmatpush1.bf16.xpose.msra.mxu0 0
      %2840 = vmatprep.subr.bf16.mxu0 0
      %2841 = vmatpush1.bf16.xpose.msra.mxu0 0
      %2842 = vmatprep.subr.bf16.mxu0 0
      %2843 = vmatpush1.bf16.xpose.msra.mxu0 0
      %2844 = vmatprep.subr.bf16.mxu0 0
      %2845 = vmatpush1.bf16.xpose.msra.mxu0 0
      %2846 = vmatprep.subr.bf16.mxu0 0
      %2847 = vmatpush1.bf16.xpose.msra.mxu0 0
      %2848 = vmatprep.subr.bf16.mxu0 0
      %2849 = vmatpush1.bf16.xpose.msra.mxu0 0
      %2850 = vmatprep.subr.bf16.mxu0 0
      %2851 = vmatpush1.bf16.xpose.msra.mxu0 0
      %2852 = vmatprep.subr.bf16.mxu0 0
      %2853 = vmatpush1.bf16.xpose.msra.mxu0 0
      %2854 = vmatprep.subr.bf16.mxu0 0
      %2855 = vmatpush1.bf16.xpose.msra.mxu0 0
      %2856 = vmatprep.subr.bf16.mxu0 0
      %2857 = vmatpush1.bf16.xpose.msra.mxu0 0
      %2858 = vmatprep.subr.bf16.mxu0 0
      %2859 = vmatpush1.bf16.xpose.msra.mxu0 0
      %2860 = vmatprep.subr.bf16.mxu0 0
      %2861 = vmatpush1.bf16.xpose.msra.mxu0 0
      %2862 = vmatprep.mubr.bf16.mxu0 0
      %2863 = vmatmul.mubr.bf16.gmra.mrb[0].mxu0 %v2825
      %v2864 = vpop.f32.mrb[0].mxu0
      %v2865 = vadd.f32 0.0, %v2864
      %v2866 = vpop.f32.mrb[0].mxu0
      %v2867 = vpop.f32.mrb[0].mxu0
      %v2868 = vadd.f32 0.0, %v2867
      %v2869 = vpop.f32.mrb[0].mxu0
      %2870 = vdwg.mxu0
      %2871 = vrot.lane.b32.xlu0 %v1002, 104
      %v2872 = vpop.permute.xlu0 %2871
      %2873 = vrot.lane.b32.xlu0 %v1002, 72
      %v2874 = vpop.permute.xlu0 %2873
      %v2876 = vsel %vm1011, %v2872, 0
      %v2879 = vsel %vm1011, %v2874, 0
      %2881 = vmatprep.subr.bf16.mxu0 0
      %2882 = vmatpush1.bf16.xpose.msra.mxu0 %v2879
      %2883 = vmatprep.subr.bf16.mxu0 0
      %2884 = vmatpush1.bf16.xpose.msra.mxu0 0
      %2885 = vmatprep.subr.bf16.mxu0 0
      %2886 = vmatpush1.bf16.xpose.msra.mxu0 0
      %2887 = vmatprep.subr.bf16.mxu0 0
      %2888 = vmatpush1.bf16.xpose.msra.mxu0 0
      %2889 = vmatprep.subr.bf16.mxu0 0
      %2890 = vmatpush1.bf16.xpose.msra.mxu0 0
      %2891 = vmatprep.subr.bf16.mxu0 0
      %2892 = vmatpush1.bf16.xpose.msra.mxu0 0
      %2893 = vmatprep.subr.bf16.mxu0 0
      %2894 = vmatpush1.bf16.xpose.msra.mxu0 0
      %2895 = vmatprep.subr.bf16.mxu0 0
      %2896 = vmatpush1.bf16.xpose.msra.mxu0 0
      %2897 = vmatprep.subr.bf16.mxu0 0
      %2898 = vmatpush1.bf16.xpose.msra.mxu0 0
      %2899 = vmatprep.subr.bf16.mxu0 0
      %2900 = vmatpush1.bf16.xpose.msra.mxu0 0
      %2901 = vmatprep.subr.bf16.mxu0 0
      %2902 = vmatpush1.bf16.xpose.msra.mxu0 0
      %2903 = vmatprep.subr.bf16.mxu0 0
      %2904 = vmatpush1.bf16.xpose.msra.mxu0 0
      %2905 = vmatprep.subr.bf16.mxu0 0
      %2906 = vmatpush1.bf16.xpose.msra.mxu0 0
      %2907 = vmatprep.subr.bf16.mxu0 0
      %2908 = vmatpush1.bf16.xpose.msra.mxu0 0
      %2909 = vmatprep.subr.bf16.mxu0 0
      %2910 = vmatpush1.bf16.xpose.msra.mxu0 0
      %2911 = vmatprep.subr.bf16.mxu0 0
      %2912 = vmatpush1.bf16.xpose.msra.mxu0 0
      %2913 = vmatprep.mubr.bf16.mxu0 0
      %2914 = vmatmul.mubr.bf16.gmra.mrb[0].mxu0 %v2876
      %v2915 = vpop.f32.mrb[0].mxu0
      %v2916 = vadd.f32 0.0, %v2915
      %v2917 = vpop.f32.mrb[0].mxu0
      %v2918 = vpop.f32.mrb[0].mxu0
      %v2919 = vadd.f32 0.0, %v2918
      %v2920 = vpop.f32.mrb[0].mxu0
      %2921 = vdwg.mxu0
      %2922 = vrot.lane.b32.xlu0 %v1003, 104
      %v2923 = vpop.permute.xlu0 %2922
      %2924 = vrot.lane.b32.xlu0 %v1003, 72
      %v2925 = vpop.permute.xlu0 %2924
      %v2927 = vsel %vm1011, %v2923, 0
      %v2930 = vsel %vm1011, %v2925, 0
      %2932 = vmatprep.subr.bf16.mxu0 0
      %2933 = vmatpush1.bf16.xpose.msra.mxu0 %v2930
      %2934 = vmatprep.subr.bf16.mxu0 0
      %2935 = vmatpush1.bf16.xpose.msra.mxu0 0
      %2936 = vmatprep.subr.bf16.mxu0 0
      %2937 = vmatpush1.bf16.xpose.msra.mxu0 0
      %2938 = vmatprep.subr.bf16.mxu0 0
      %2939 = vmatpush1.bf16.xpose.msra.mxu0 0
      %2940 = vmatprep.subr.bf16.mxu0 0
      %2941 = vmatpush1.bf16.xpose.msra.mxu0 0
      %2942 = vmatprep.subr.bf16.mxu0 0
      %2943 = vmatpush1.bf16.xpose.msra.mxu0 0
      %2944 = vmatprep.subr.bf16.mxu0 0
      %2945 = vmatpush1.bf16.xpose.msra.mxu0 0
      %2946 = vmatprep.subr.bf16.mxu0 0
      %2947 = vmatpush1.bf16.xpose.msra.mxu0 0
      %2948 = vmatprep.subr.bf16.mxu0 0
      %2949 = vmatpush1.bf16.xpose.msra.mxu0 0
      %2950 = vmatprep.subr.bf16.mxu0 0
      %2951 = vmatpush1.bf16.xpose.msra.mxu0 0
      %2952 = vmatprep.subr.bf16.mxu0 0
      %2953 = vmatpush1.bf16.xpose.msra.mxu0 0
      %2954 = vmatprep.subr.bf16.mxu0 0
      %2955 = vmatpush1.bf16.xpose.msra.mxu0 0
      %2956 = vmatprep.subr.bf16.mxu0 0
      %2957 = vmatpush1.bf16.xpose.msra.mxu0 0
      %2958 = vmatprep.subr.bf16.mxu0 0
      %2959 = vmatpush1.bf16.xpose.msra.mxu0 0
      %2960 = vmatprep.subr.bf16.mxu0 0
      %2961 = vmatpush1.bf16.xpose.msra.mxu0 0
      %2962 = vmatprep.subr.bf16.mxu0 0
      %2963 = vmatpush1.bf16.xpose.msra.mxu0 0
      %2964 = vmatprep.mubr.bf16.mxu0 0
      %2965 = vmatmul.mubr.bf16.gmra.mrb[0].mxu0 %v2927
      %v2966 = vpop.f32.mrb[0].mxu0
      %v2967 = vadd.f32 0.0, %v2966
      %v2968 = vpop.f32.mrb[0].mxu0
      %v2969 = vpop.f32.mrb[0].mxu0
      %v2970 = vadd.f32 0.0, %v2969
      %v2971 = vpop.f32.mrb[0].mxu0
      %2972 = vdwg.mxu0
      %v2973 = vmul.f32 %v2814, 0.35355338
      %v2974 = vmul.f32 %v2817, 0.35355338
      %v2975 = vmul.f32 %v2865, 0.35355338
      %v2976 = vmul.f32 %v2868, 0.35355338
      %v2977 = vmul.f32 %v2916, 0.35355338
      %v2978 = vmul.f32 %v2919, 0.35355338
      %v2979 = vmul.f32 %v2967, 0.35355338
      %v2980 = vmul.f32 %v2970, 0.35355338
      %v2981 = vadd.f32 %v2973, %v894
      %v2982 = vadd.f32 %v2974, %v894
      %v2983 = vadd.f32 %v2975, %v894
      %v2984 = vadd.f32 %v2976, %v894
      %v2985 = vadd.f32 %v2977, %v894
      %v2986 = vadd.f32 %v2978, %v894
      %v2987 = vadd.f32 %v2979, %v894
      %v2988 = vadd.f32 %v2980, %v894
      %v2989 = vsel %vm672, %v2981, -inf
      %2990 = vmax.xlane.f32.xlu0 %v2989
      %v2991 = vpop.xlane.xlu0 %2990
      %v2992 = vsel %vm672, %v2982, -inf
      %2993 = vmax.xlane.f32.xlu0 %v2992
      %v2994 = vpop.xlane.xlu0 %2993
      %v2995 = vsel %vm672, %v2983, -inf
      %2996 = vmax.xlane.f32.xlu0 %v2995
      %v2997 = vpop.xlane.xlu0 %2996
      %v2998 = vsel %vm672, %v2984, -inf
      %2999 = vmax.xlane.f32.xlu0 %v2998
      %v3000 = vpop.xlane.xlu0 %2999
      %v3001 = vsel %vm672, %v2985, -inf
      %3002 = vmax.xlane.f32.xlu0 %v3001
      %v3003 = vpop.xlane.xlu0 %3002
      %v3004 = vsel %vm672, %v2986, -inf
      %3005 = vmax.xlane.f32.xlu0 %v3004
      %v3006 = vpop.xlane.xlu0 %3005
      %v3007 = vsel %vm672, %v2987, -inf
      %3008 = vmax.xlane.f32.xlu0 %v3007
      %v3009 = vpop.xlane.xlu0 %3008
      %v3010 = vsel %vm672, %v2988, -inf
      %3011 = vmax.xlane.f32.xlu0 %v3010
      %v3012 = vpop.xlane.xlu0 %3011
      %v3013 = vsub.f32 %v2981, %v2991
      %v3014 = vsub.f32 %v2982, %v2994
      %v3015 = vsub.f32 %v2983, %v2997
      %v3016 = vsub.f32 %v2984, %v3000
      %v3017 = vsub.f32 %v2985, %v3003
      %v3018 = vsub.f32 %v2986, %v3006
      %v3019 = vsub.f32 %v2987, %v3009
      %v3020 = vsub.f32 %v2988, %v3012
      %v3021 = vmul.f32 %v3013, 1.442695
      %v3022 = vpow.pop %v3021
      %v3023 = vmul.f32 %v3014, 1.442695
      %v3024 = vpow.pop %v3023
      %v3025 = vmul.f32 %v3015, 1.442695
      %v3026 = vpow.pop %v3025
      %v3027 = vmul.f32 %v3016, 1.442695
      %v3028 = vpow.pop %v3027
      %v3029 = vmul.f32 %v3017, 1.442695
      %v3030 = vpow.pop %v3029
      %v3031 = vmul.f32 %v3018, 1.442695
      %v3032 = vpow.pop %v3031
      %v3033 = vmul.f32 %v3019, 1.442695
      %v3034 = vpow.pop %v3033
      %v3035 = vmul.f32 %v3020, 1.442695
      %v3036 = vpow.pop %v3035
      %v3037 = vsel %vm672, %v3022, 0.0
      %3038 = vadd.xlane.f32.xlu0 %v3037
      %v3039 = vpop.xlane.xlu0 %3038
      %v3040 = vsel %vm672, %v3024, 0.0
      %3041 = vadd.xlane.f32.xlu0 %v3040
      %v3042 = vpop.xlane.xlu0 %3041
      %v3043 = vsel %vm672, %v3026, 0.0
      %3044 = vadd.xlane.f32.xlu0 %v3043
      %v3045 = vpop.xlane.xlu0 %3044
      %v3046 = vsel %vm672, %v3028, 0.0
      %3047 = vadd.xlane.f32.xlu0 %v3046
      %v3048 = vpop.xlane.xlu0 %3047
      %v3049 = vsel %vm672, %v3030, 0.0
      %3050 = vadd.xlane.f32.xlu0 %v3049
      %v3051 = vpop.xlane.xlu0 %3050
      %v3052 = vsel %vm672, %v3032, 0.0
      %3053 = vadd.xlane.f32.xlu0 %v3052
      %v3054 = vpop.xlane.xlu0 %3053
      %v3055 = vsel %vm672, %v3034, 0.0
      %3056 = vadd.xlane.f32.xlu0 %v3055
      %v3057 = vpop.xlane.xlu0 %3056
      %v3058 = vsel %vm672, %v3036, 0.0
      %3059 = vadd.xlane.f32.xlu0 %v3058
      %v3060 = vpop.xlane.xlu0 %3059
      %v3061 = vrcp.pop %v3039
      %v3062 = vrcp.pop %v3042
      %v3063 = vrcp.pop %v3045
      %v3064 = vrcp.pop %v3048
      %v3065 = vrcp.pop %v3051
      %v3066 = vrcp.pop %v3054
      %v3067 = vrcp.pop %v3057
      %v3068 = vrcp.pop %v3060
      %v3069 = vmul.f32 %v3022, %v3061
      %v3070 = vmul.f32 %v3024, %v3062
      %v3071 = vmul.f32 %v3026, %v3063
      %v3072 = vmul.f32 %v3028, %v3064
      %v3073 = vmul.f32 %v3030, %v3065
      %v3074 = vmul.f32 %v3032, %v3066
      %v3075 = vmul.f32 %v3034, %v3067
      %v3076 = vmul.f32 %v3036, %v3068
      %v3077 = vpack.c.bf16 %v3070, %v3069
      %v3078 = vpack.c.bf16 %v3072, %v3071
      %v3079 = vpack.c.bf16 %v3074, %v3073
      %v3080 = vpack.c.bf16 %v3076, %v3075
      %3081 = vrot.lane.b32.xlu0 %v1000, 40
      %v3082 = vpop.permute.xlu0 %3081
      %v3085 = vsel %vm672, %v3077, 0
      %3087 = vmatprep.subr.bf16.mxu0 0
      %3088 = vmatpush1.bf16.msra.mxu0 %v3082
      %3089 = vmatprep.subr.bf16.mxu0 0
      %3090 = vmatpush1.bf16.msra.mxu0 0
      %3091 = vmatprep.subr.bf16.mxu0 0
      %3092 = vmatpush1.bf16.msra.mxu0 0
      %3093 = vmatprep.subr.bf16.mxu0 0
      %3094 = vmatpush1.bf16.msra.mxu0 0
      %3095 = vmatprep.subr.bf16.mxu0 0
      %3096 = vmatpush1.bf16.msra.mxu0 0
      %3097 = vmatprep.subr.bf16.mxu0 0
      %3098 = vmatpush1.bf16.msra.mxu0 0
      %3099 = vmatprep.subr.bf16.mxu0 0
      %3100 = vmatpush1.bf16.msra.mxu0 0
      %3101 = vmatprep.subr.bf16.mxu0 0
      %3102 = vmatpush1.bf16.msra.mxu0 0
      %3103 = vmatprep.subr.bf16.mxu0 0
      %3104 = vmatpush1.bf16.msra.mxu0 0
      %3105 = vmatprep.subr.bf16.mxu0 0
      %3106 = vmatpush1.bf16.msra.mxu0 0
      %3107 = vmatprep.subr.bf16.mxu0 0
      %3108 = vmatpush1.bf16.msra.mxu0 0
      %3109 = vmatprep.subr.bf16.mxu0 0
      %3110 = vmatpush1.bf16.msra.mxu0 0
      %3111 = vmatprep.subr.bf16.mxu0 0
      %3112 = vmatpush1.bf16.msra.mxu0 0
      %3113 = vmatprep.subr.bf16.mxu0 0
      %3114 = vmatpush1.bf16.msra.mxu0 0
      %3115 = vmatprep.subr.bf16.mxu0 0
      %3116 = vmatpush1.bf16.msra.mxu0 0
      %3117 = vmatprep.subr.bf16.mxu0 0
      %3118 = vmatpush1.bf16.msra.mxu0 0
      %3119 = vmatprep.mubr.bf16.mxu0 0
      %3120 = vmatmul.mubr.bf16.gmra.mrb[0].mxu0 %v3085
      %v3121 = vpop.f32.mrb[0].mxu0
      %v3122 = vadd.f32 0.0, %v3121
      %v3123 = vpop.f32.mrb[0].mxu0
      %v3124 = vpop.f32.mrb[0].mxu0
      %v3125 = vadd.f32 0.0, %v3124
      %v3126 = vpop.f32.mrb[0].mxu0
      %3127 = vdwg.mxu0
      %3128 = vrot.lane.b32.xlu0 %v1001, 40
      %v3129 = vpop.permute.xlu0 %3128
      %v3132 = vsel %vm672, %v3078, 0
      %3134 = vmatprep.subr.bf16.mxu0 0
      %3135 = vmatpush1.bf16.msra.mxu0 %v3129
      %3136 = vmatprep.subr.bf16.mxu0 0
      %3137 = vmatpush1.bf16.msra.mxu0 0
      %3138 = vmatprep.subr.bf16.mxu0 0
      %3139 = vmatpush1.bf16.msra.mxu0 0
      %3140 = vmatprep.subr.bf16.mxu0 0
      %3141 = vmatpush1.bf16.msra.mxu0 0
      %3142 = vmatprep.subr.bf16.mxu0 0
      %3143 = vmatpush1.bf16.msra.mxu0 0
      %3144 = vmatprep.subr.bf16.mxu0 0
      %3145 = vmatpush1.bf16.msra.mxu0 0
      %3146 = vmatprep.subr.bf16.mxu0 0
      %3147 = vmatpush1.bf16.msra.mxu0 0
      %3148 = vmatprep.subr.bf16.mxu0 0
      %3149 = vmatpush1.bf16.msra.mxu0 0
      %3150 = vmatprep.subr.bf16.mxu0 0
      %3151 = vmatpush1.bf16.msra.mxu0 0
      %3152 = vmatprep.subr.bf16.mxu0 0
      %3153 = vmatpush1.bf16.msra.mxu0 0
      %3154 = vmatprep.subr.bf16.mxu0 0
      %3155 = vmatpush1.bf16.msra.mxu0 0
      %3156 = vmatprep.subr.bf16.mxu0 0
      %3157 = vmatpush1.bf16.msra.mxu0 0
      %3158 = vmatprep.subr.bf16.mxu0 0
      %3159 = vmatpush1.bf16.msra.mxu0 0
      %3160 = vmatprep.subr.bf16.mxu0 0
      %3161 = vmatpush1.bf16.msra.mxu0 0
      %3162 = vmatprep.subr.bf16.mxu0 0
      %3163 = vmatpush1.bf16.msra.mxu0 0
      %3164 = vmatprep.subr.bf16.mxu0 0
      %3165 = vmatpush1.bf16.msra.mxu0 0
      %3166 = vmatprep.mubr.bf16.mxu0 0
      %3167 = vmatmul.mubr.bf16.gmra.mrb[0].mxu0 %v3132
      %v3168 = vpop.f32.mrb[0].mxu0
      %v3169 = vadd.f32 0.0, %v3168
      %v3170 = vpop.f32.mrb[0].mxu0
      %v3171 = vpop.f32.mrb[0].mxu0
      %v3172 = vadd.f32 0.0, %v3171
      %v3173 = vpop.f32.mrb[0].mxu0
      %3174 = vdwg.mxu0
      %3175 = vrot.lane.b32.xlu0 %v1002, 40
      %v3176 = vpop.permute.xlu0 %3175
      %v3179 = vsel %vm672, %v3079, 0
      %3181 = vmatprep.subr.bf16.mxu0 0
      %3182 = vmatpush1.bf16.msra.mxu0 %v3176
      %3183 = vmatprep.subr.bf16.mxu0 0
      %3184 = vmatpush1.bf16.msra.mxu0 0
      %3185 = vmatprep.subr.bf16.mxu0 0
      %3186 = vmatpush1.bf16.msra.mxu0 0
      %3187 = vmatprep.subr.bf16.mxu0 0
      %3188 = vmatpush1.bf16.msra.mxu0 0
      %3189 = vmatprep.subr.bf16.mxu0 0
      %3190 = vmatpush1.bf16.msra.mxu0 0
      %3191 = vmatprep.subr.bf16.mxu0 0
      %3192 = vmatpush1.bf16.msra.mxu0 0
      %3193 = vmatprep.subr.bf16.mxu0 0
      %3194 = vmatpush1.bf16.msra.mxu0 0
      %3195 = vmatprep.subr.bf16.mxu0 0
      %3196 = vmatpush1.bf16.msra.mxu0 0
      %3197 = vmatprep.subr.bf16.mxu0 0
      %3198 = vmatpush1.bf16.msra.mxu0 0
      %3199 = vmatprep.subr.bf16.mxu0 0
      %3200 = vmatpush1.bf16.msra.mxu0 0
      %3201 = vmatprep.subr.bf16.mxu0 0
      %3202 = vmatpush1.bf16.msra.mxu0 0
      %3203 = vmatprep.subr.bf16.mxu0 0
      %3204 = vmatpush1.bf16.msra.mxu0 0
      %3205 = vmatprep.subr.bf16.mxu0 0
      %3206 = vmatpush1.bf16.msra.mxu0 0
      %3207 = vmatprep.subr.bf16.mxu0 0
      %3208 = vmatpush1.bf16.msra.mxu0 0
      %3209 = vmatprep.subr.bf16.mxu0 0
      %3210 = vmatpush1.bf16.msra.mxu0 0
      %3211 = vmatprep.subr.bf16.mxu0 0
      %3212 = vmatpush1.bf16.msra.mxu0 0
      %3213 = vmatprep.mubr.bf16.mxu0 0
      %3214 = vmatmul.mubr.bf16.gmra.mrb[0].mxu0 %v3179
      %v3215 = vpop.f32.mrb[0].mxu0
      %v3216 = vadd.f32 0.0, %v3215
      %v3217 = vpop.f32.mrb[0].mxu0
      %v3218 = vpop.f32.mrb[0].mxu0
      %v3219 = vadd.f32 0.0, %v3218
      %v3220 = vpop.f32.mrb[0].mxu0
      %3221 = vdwg.mxu0
      %3222 = vrot.lane.b32.xlu0 %v1003, 40
      %v3223 = vpop.permute.xlu0 %3222
      %v3226 = vsel %vm672, %v3080, 0
      %3228 = vmatprep.subr.bf16.mxu0 0
      %3229 = vmatpush1.bf16.msra.mxu0 %v3223
      %3230 = vmatprep.subr.bf16.mxu0 0
      %3231 = vmatpush1.bf16.msra.mxu0 0
      %3232 = vmatprep.subr.bf16.mxu0 0
      %3233 = vmatpush1.bf16.msra.mxu0 0
      %3234 = vmatprep.subr.bf16.mxu0 0
      %3235 = vmatpush1.bf16.msra.mxu0 0
      %3236 = vmatprep.subr.bf16.mxu0 0
      %3237 = vmatpush1.bf16.msra.mxu0 0
      %3238 = vmatprep.subr.bf16.mxu0 0
      %3239 = vmatpush1.bf16.msra.mxu0 0
      %3240 = vmatprep.subr.bf16.mxu0 0
      %3241 = vmatpush1.bf16.msra.mxu0 0
      %3242 = vmatprep.subr.bf16.mxu0 0
      %3243 = vmatpush1.bf16.msra.mxu0 0
      %3244 = vmatprep.subr.bf16.mxu0 0
      %3245 = vmatpush1.bf16.msra.mxu0 0
      %3246 = vmatprep.subr.bf16.mxu0 0
      %3247 = vmatpush1.bf16.msra.mxu0 0
      %3248 = vmatprep.subr.bf16.mxu0 0
      %3249 = vmatpush1.bf16.msra.mxu0 0
      %3250 = vmatprep.subr.bf16.mxu0 0
      %3251 = vmatpush1.bf16.msra.mxu0 0
      %3252 = vmatprep.subr.bf16.mxu0 0
      %3253 = vmatpush1.bf16.msra.mxu0 0
      %3254 = vmatprep.subr.bf16.mxu0 0
      %3255 = vmatpush1.bf16.msra.mxu0 0
      %3256 = vmatprep.subr.bf16.mxu0 0
      %3257 = vmatpush1.bf16.msra.mxu0 0
      %3258 = vmatprep.subr.bf16.mxu0 0
      %3259 = vmatpush1.bf16.msra.mxu0 0
      %3260 = vmatprep.mubr.bf16.mxu0 0
      %3261 = vmatmul.mubr.bf16.gmra.mrb[0].mxu0 %v3226
      %v3262 = vpop.f32.mrb[0].mxu0
      %v3263 = vadd.f32 0.0, %v3262
      %v3264 = vpop.f32.mrb[0].mxu0
      %v3265 = vpop.f32.mrb[0].mxu0
      %v3266 = vadd.f32 0.0, %v3265
      %v3267 = vpop.f32.mrb[0].mxu0
      %3268 = vdwg.mxu0
      %v3269 = vpack.c.bf16 %v3125, %v3122
      %v3270 = vpack.c.bf16 %v3172, %v3169
      %v3271 = vpack.c.bf16 %v3219, %v3216
      %v3272 = vpack.c.bf16 %v3266, %v3263
      %v3273 = vpack.c.bf16 %v1007, %v1007
      %v3275 = vsel %vm1011, %v3269, 0
      %v3278 = vsel %vm1011, %v3270, 0
      %v3281 = vsel %vm1011, %v3271, 0
      %v3284 = vsel %vm1011, %v3272, 0
      %v3287 = vsel %vm2027, %v3273, 0
      %3289 = vmatprep.subr.bf16.mxu0 0
      %3290 = vmatpush1.bf16.msra.mxu0 %v3287
      %3291 = vmatprep.subr.bf16.mxu0 0
      %3292 = vmatpush1.bf16.msra.mxu0 0
      %3293 = vmatprep.subr.bf16.mxu0 0
      %3294 = vmatpush1.bf16.msra.mxu0 0
      %3295 = vmatprep.subr.bf16.mxu0 0
      %3296 = vmatpush1.bf16.msra.mxu0 0
      %3297 = vmatprep.subr.bf16.mxu0 0
      %3298 = vmatpush1.bf16.msra.mxu0 0
      %3299 = vmatprep.subr.bf16.mxu0 0
      %3300 = vmatpush1.bf16.msra.mxu0 0
      %3301 = vmatprep.subr.bf16.mxu0 0
      %3302 = vmatpush1.bf16.msra.mxu0 0
      %3303 = vmatprep.subr.bf16.mxu0 0
      %3304 = vmatpush1.bf16.msra.mxu0 0
      %3305 = vmatprep.subr.bf16.mxu0 0
      %3306 = vmatpush1.bf16.msra.mxu0 0
      %3307 = vmatprep.subr.bf16.mxu0 0
      %3308 = vmatpush1.bf16.msra.mxu0 0
      %3309 = vmatprep.subr.bf16.mxu0 0
      %3310 = vmatpush1.bf16.msra.mxu0 0
      %3311 = vmatprep.subr.bf16.mxu0 0
      %3312 = vmatpush1.bf16.msra.mxu0 0
      %3313 = vmatprep.subr.bf16.mxu0 0
      %3314 = vmatpush1.bf16.msra.mxu0 0
      %3315 = vmatprep.subr.bf16.mxu0 0
      %3316 = vmatpush1.bf16.msra.mxu0 0
      %3317 = vmatprep.subr.bf16.mxu0 0
      %3318 = vmatpush1.bf16.msra.mxu0 0
      %3319 = vmatprep.subr.bf16.mxu0 0
      %3320 = vmatpush1.bf16.msra.mxu0 0
      %3321 = vmatprep.mubr.bf16.mxu0 0
      %3322 = vmatmul.mubr.bf16.gmra.mrb[0].mxu0 %v3275
      %v3323 = vpop.f32.mrb[0].mxu0
      %v3324 = vadd.f32 0.0, %v3323
      %v3325 = vpop.f32.mrb[0].mxu0
      %v3326 = vpop.f32.mrb[0].mxu0
      %v3327 = vadd.f32 0.0, %v3326
      %v3328 = vpop.f32.mrb[0].mxu0
      %3329 = vmatprep.mubr.bf16.mxu0 0
      %3330 = vmatmul.mubr.bf16.gmra.mrb[0].mxu0 %v3278
      %v3331 = vpop.f32.mrb[0].mxu0
      %v3332 = vadd.f32 0.0, %v3331
      %v3333 = vpop.f32.mrb[0].mxu0
      %v3334 = vpop.f32.mrb[0].mxu0
      %v3335 = vadd.f32 0.0, %v3334
      %v3336 = vpop.f32.mrb[0].mxu0
      %3337 = vmatprep.mubr.bf16.mxu0 0
      %3338 = vmatmul.mubr.bf16.gmra.mrb[0].mxu0 %v3281
      %v3339 = vpop.f32.mrb[0].mxu0
      %v3340 = vadd.f32 0.0, %v3339
      %v3341 = vpop.f32.mrb[0].mxu0
      %v3342 = vpop.f32.mrb[0].mxu0
      %v3343 = vadd.f32 0.0, %v3342
      %v3344 = vpop.f32.mrb[0].mxu0
      %3345 = vmatprep.mubr.bf16.mxu0 0
      %3346 = vmatmul.mubr.bf16.gmra.mrb[0].mxu0 %v3284
      %v3347 = vpop.f32.mrb[0].mxu0
      %v3348 = vadd.f32 0.0, %v3347
      %v3349 = vpop.f32.mrb[0].mxu0
      %v3350 = vpop.f32.mrb[0].mxu0
      %v3351 = vadd.f32 0.0, %v3350
      %v3352 = vpop.f32.mrb[0].mxu0
      %3353 = vdwg.mxu0
      %v3354 = vadd.f32 %v2761, %v3324
      %v3355 = vadd.f32 %v2762, %v3327
      %v3356 = vadd.f32 %v2763, %v3332
      %v3357 = vadd.f32 %v2764, %v3335
      %v3358 = vadd.f32 %v2765, %v3340
      %v3359 = vadd.f32 %v2766, %v3343
      %v3360 = vadd.f32 %v2767, %v3348
      %v3361 = vadd.f32 %v2768, %v3351
      %v3362 = vld [vmem:[%s6] sm:$0x1]
      %v3364 = vlaneseq
      %v3365 = vshrl.u32 %v3364, 7
      %v3366 = vsub.s32 0, %v3365
      %v3367 = vrot.slane %v3362, %v3366
      %v3369 = vadd.f32 %v3354, %v3367
      %v3370 = vadd.f32 %v3355, %v3367
      %v3371 = vadd.f32 %v3356, %v3367
      %v3372 = vadd.f32 %v3357, %v3367
      %v3373 = vadd.f32 %v3358, %v3367
      %v3374 = vadd.f32 %v3359, %v3367
      %v3375 = vadd.f32 %v3360, %v3367
      %v3376 = vadd.f32 %v3361, %v3367
      %v3377 = vadd.f32 %v861, %v3369
      %v3378 = vadd.f32 %v864, %v3370
      %v3379 = vadd.f32 %v869, %v3371
      %v3380 = vadd.f32 %v872, %v3372
      %v3381 = vadd.f32 %v877, %v3373
      %v3382 = vadd.f32 %v880, %v3374
      %v3383 = vadd.f32 %v885, %v3375
      %v3384 = vadd.f32 %v888, %v3376
      %v3385 = vld [vmem:[%s7] sm:$0x1]
      %v3386 = vld [vmem:[%s8] sm:$0x1]
      %v3387 = vsel %vm922, %v3377, 0.0
      %3388 = vadd.xlane.f32.xlu0 %v3387
      %v3389 = vpop.xlane.xlu0 %3388
      %v3390 = vsel %vm922, %v3378, 0.0
      %3391 = vadd.xlane.f32.xlu0 %v3390
      %v3392 = vpop.xlane.xlu0 %3391
      %v3393 = vsel %vm922, %v3379, 0.0
      %3394 = vadd.xlane.f32.xlu0 %v3393
      %v3395 = vpop.xlane.xlu0 %3394
      %v3396 = vsel %vm922, %v3380, 0.0
      %3397 = vadd.xlane.f32.xlu0 %v3396
      %v3398 = vpop.xlane.xlu0 %3397
      %v3399 = vsel %vm922, %v3381, 0.0
      %3400 = vadd.xlane.f32.xlu0 %v3399
      %v3401 = vpop.xlane.xlu0 %3400
      %v3402 = vsel %vm922, %v3382, 0.0
      %3403 = vadd.xlane.f32.xlu0 %v3402
      %v3404 = vpop.xlane.xlu0 %3403
      %v3405 = vsel %vm922, %v3383, 0.0
      %3406 = vadd.xlane.f32.xlu0 %v3405
      %v3407 = vpop.xlane.xlu0 %3406
      %v3408 = vsel %vm922, %v3384, 0.0
      %3409 = vadd.xlane.f32.xlu0 %v3408
      %v3410 = vpop.xlane.xlu0 %3409
      %v3411 = vrcp.pop 32.0
      %v3412 = vmul.f32 %v3389, %v3411
      %v3413 = vmul.f32 %v3392, %v3411
      %v3414 = vmul.f32 %v3395, %v3411
      %v3415 = vmul.f32 %v3398, %v3411
      %v3416 = vmul.f32 %v3401, %v3411
      %v3417 = vmul.f32 %v3404, %v3411
      %v3418 = vmul.f32 %v3407, %v3411
      %v3419 = vmul.f32 %v3410, %v3411
      %v3420 = vsub.f32 %v3377, %v3412
      %v3421 = vsub.f32 %v3378, %v3413
      %v3422 = vsub.f32 %v3379, %v3414
      %v3423 = vsub.f32 %v3380, %v3415
      %v3424 = vsub.f32 %v3381, %v3416
      %v3425 = vsub.f32 %v3382, %v3417
      %v3426 = vsub.f32 %v3383, %v3418
      %v3427 = vsub.f32 %v3384, %v3419
      %v3428 = vmul.f32 %v3420, %v3420
      %v3429 = vmul.f32 %v3421, %v3421
      %v3430 = vmul.f32 %v3422, %v3422
      %v3431 = vmul.f32 %v3423, %v3423
      %v3432 = vmul.f32 %v3424, %v3424
      %v3433 = vmul.f32 %v3425, %v3425
      %v3434 = vmul.f32 %v3426, %v3426
      %v3435 = vmul.f32 %v3427, %v3427
      %v3436 = vsel %vm922, %v3428, 0.0
      %3437 = vadd.xlane.f32.xlu0 %v3436
      %v3438 = vpop.xlane.xlu0 %3437
      %v3439 = vsel %vm922, %v3429, 0.0
      %3440 = vadd.xlane.f32.xlu0 %v3439
      %v3441 = vpop.xlane.xlu0 %3440
      %v3442 = vsel %vm922, %v3430, 0.0
      %3443 = vadd.xlane.f32.xlu0 %v3442
      %v3444 = vpop.xlane.xlu0 %3443
      %v3445 = vsel %vm922, %v3431, 0.0
      %3446 = vadd.xlane.f32.xlu0 %v3445
      %v3447 = vpop.xlane.xlu0 %3446
      %v3448 = vsel %vm922, %v3432, 0.0
      %3449 = vadd.xlane.f32.xlu0 %v3448
      %v3450 = vpop.xlane.xlu0 %3449
      %v3451 = vsel %vm922, %v3433, 0.0
      %3452 = vadd.xlane.f32.xlu0 %v3451
      %v3453 = vpop.xlane.xlu0 %3452
      %v3454 = vsel %vm922, %v3434, 0.0
      %3455 = vadd.xlane.f32.xlu0 %v3454
      %v3456 = vpop.xlane.xlu0 %3455
      %v3457 = vsel %vm922, %v3435, 0.0
      %3458 = vadd.xlane.f32.xlu0 %v3457
      %v3459 = vpop.xlane.xlu0 %3458
      %v3460 = vmul.f32 %v3438, %v3411
      %v3461 = vmul.f32 %v3441, %v3411
      %v3462 = vmul.f32 %v3444, %v3411
      %v3463 = vmul.f32 %v3447, %v3411
      %v3464 = vmul.f32 %v3450, %v3411
      %v3465 = vmul.f32 %v3453, %v3411
      %v3466 = vmul.f32 %v3456, %v3411
      %v3467 = vmul.f32 %v3459, %v3411
      %v3468 = vadd.f32 %v3460, 1e-05
      %v3469 = vadd.f32 %v3461, 1e-05
      %v3470 = vadd.f32 %v3462, 1e-05
      %v3471 = vadd.f32 %v3463, 1e-05
      %v3472 = vadd.f32 %v3464, 1e-05
      %v3473 = vadd.f32 %v3465, 1e-05
      %v3474 = vadd.f32 %v3466, 1e-05
      %v3475 = vadd.f32 %v3467, 1e-05
      %v3476 = vrsqrt.pop %v3468
      %v3477 = vrsqrt.pop %v3469
      %v3478 = vrsqrt.pop %v3470
      %v3479 = vrsqrt.pop %v3471
      %v3480 = vrsqrt.pop %v3472
      %v3481 = vrsqrt.pop %v3473
      %v3482 = vrsqrt.pop %v3474
      %v3483 = vrsqrt.pop %v3475
      %v3484 = vmul.f32 %v3420, %v3476
      %v3485 = vmul.f32 %v3421, %v3477
      %v3486 = vmul.f32 %v3422, %v3478
      %v3487 = vmul.f32 %v3423, %v3479
      %v3488 = vmul.f32 %v3424, %v3480
      %v3489 = vmul.f32 %v3425, %v3481
      %v3490 = vmul.f32 %v3426, %v3482
      %v3491 = vmul.f32 %v3427, %v3483
      %v3493 = vlaneseq
      %v3494 = vshrl.u32 %v3493, 7
      %v3495 = vsub.s32 0, %v3494
      %v3496 = vrot.slane %v3385, %v3495
      %v3498 = vmul.f32 %v3484, %v3496
      %v3499 = vmul.f32 %v3485, %v3496
      %v3500 = vmul.f32 %v3486, %v3496
      %v3501 = vmul.f32 %v3487, %v3496
      %v3502 = vmul.f32 %v3488, %v3496
      %v3503 = vmul.f32 %v3489, %v3496
      %v3504 = vmul.f32 %v3490, %v3496
      %v3505 = vmul.f32 %v3491, %v3496
      %v3507 = vlaneseq
      %v3508 = vshrl.u32 %v3507, 7
      %v3509 = vsub.s32 0, %v3508
      %v3510 = vrot.slane %v3386, %v3509
      %v3512 = vadd.f32 %v3498, %v3510
      %v3513 = vadd.f32 %v3499, %v3510
      %v3514 = vadd.f32 %v3500, %v3510
      %v3515 = vadd.f32 %v3501, %v3510
      %v3516 = vadd.f32 %v3502, %v3510
      %v3517 = vadd.f32 %v3503, %v3510
      %v3518 = vadd.f32 %v3504, %v3510
      %v3519 = vadd.f32 %v3505, %v3510
      %v3520 = vld [vmem:[%s9] sm:$0xf]
      %v3521 = vld [vmem:[%s9 + $0x4] sm:$0xf]
      %v3522 = vld [vmem:[%s9 + $0x8] sm:$0xf]
      %v3523 = vld [vmem:[%s9 + $0xc] sm:$0xf]
      %v3524 = vpack.c.bf16 %v3513, %v3512
      %v3525 = vpack.c.bf16 %v3515, %v3514
      %v3526 = vpack.c.bf16 %v3517, %v3516
      %v3527 = vpack.c.bf16 %v3519, %v3518
      %v3528 = vld [vmem:[%s10] sm:$0x1]
      %v3530 = vlaneseq
      %v3531 = vshrl.u32 %v3530, 7
      %v3532 = vsub.s32 0, %v3531
      %v3533 = vrot.slane %v3528, %v3532
      %v3539 = vunpack.c.l.b16 %v3520
      %v3540 = vunpack.c.l.b16 %v3521
      %v3541 = vunpack.c.l.b16 %v3522
      %v3542 = vunpack.c.l.b16 %v3523
      %v3543 = vpack.c.b16 %v3540, %v3539
      %v3544 = vpack.c.b16 %v3542, %v3541
      %v3548 = vsel %vm922, %v3524, 0
      %v3551 = vsel %vm922, %v3525, 0
      %v3554 = vsel %vm922, %v3526, 0
      %v3557 = vsel %vm922, %v3527, 0
      %3559 = vmatprep.subr.bf16.mxu0 0
      %3560 = vmatpush1.bf16.msra.mxu0 %v3543
      %3561 = vmatprep.subr.bf16.mxu0 0
      %3562 = vmatpush1.bf16.msra.mxu0 %v3544
      %3563 = vmatprep.subr.bf16.mxu0 0
      %3564 = vmatpush1.bf16.msra.mxu0 0
      %3565 = vmatprep.subr.bf16.mxu0 0
      %3566 = vmatpush1.bf16.msra.mxu0 0
      %3567 = vmatprep.subr.bf16.mxu0 0
      %3568 = vmatpush1.bf16.msra.mxu0 0
      %3569 = vmatprep.subr.bf16.mxu0 0
      %3570 = vmatpush1.bf16.msra.mxu0 0
      %3571 = vmatprep.subr.bf16.mxu0 0
      %3572 = vmatpush1.bf16.msra.mxu0 0
      %3573 = vmatprep.subr.bf16.mxu0 0
      %3574 = vmatpush1.bf16.msra.mxu0 0
      %3575 = vmatprep.subr.bf16.mxu0 0
      %3576 = vmatpush1.bf16.msra.mxu0 0
      %3577 = vmatprep.subr.bf16.mxu0 0
      %3578 = vmatpush1.bf16.msra.mxu0 0
      %3579 = vmatprep.subr.bf16.mxu0 0
      %3580 = vmatpush1.bf16.msra.mxu0 0
      %3581 = vmatprep.subr.bf16.mxu0 0
      %3582 = vmatpush1.bf16.msra.mxu0 0
      %3583 = vmatprep.subr.bf16.mxu0 0
      %3584 = vmatpush1.bf16.msra.mxu0 0
      %3585 = vmatprep.subr.bf16.mxu0 0
      %3586 = vmatpush1.bf16.msra.mxu0 0
      %3587 = vmatprep.subr.bf16.mxu0 0
      %3588 = vmatpush1.bf16.msra.mxu0 0
      %3589 = vmatprep.subr.bf16.mxu0 0
      %3590 = vmatpush1.bf16.msra.mxu0 0
      %3591 = vmatprep.mubr.bf16.mxu0 0
      %3592 = vmatmul.mubr.bf16.gmra.mrb[0].mxu0 %v3548
      %v3593 = vpop.f32.mrb[0].mxu0
      %v3594 = vadd.f32 %v3533, %v3593
      %v3595 = vpop.f32.mrb[0].mxu0
      %v3596 = vpop.f32.mrb[0].mxu0
      %v3597 = vadd.f32 %v3533, %v3596
      %v3598 = vpop.f32.mrb[0].mxu0
      %3599 = vmatprep.mubr.bf16.mxu0 0
      %3600 = vmatmul.mubr.bf16.gmra.mrb[0].mxu0 %v3551
      %v3601 = vpop.f32.mrb[0].mxu0
      %v3602 = vadd.f32 %v3533, %v3601
      %v3603 = vpop.f32.mrb[0].mxu0
      %v3604 = vpop.f32.mrb[0].mxu0
      %v3605 = vadd.f32 %v3533, %v3604
      %v3606 = vpop.f32.mrb[0].mxu0
      %3607 = vmatprep.mubr.bf16.mxu0 0
      %3608 = vmatmul.mubr.bf16.gmra.mrb[0].mxu0 %v3554
      %v3609 = vpop.f32.mrb[0].mxu0
      %v3610 = vadd.f32 %v3533, %v3609
      %v3611 = vpop.f32.mrb[0].mxu0
      %v3612 = vpop.f32.mrb[0].mxu0
      %v3613 = vadd.f32 %v3533, %v3612
      %v3614 = vpop.f32.mrb[0].mxu0
      %3615 = vmatprep.mubr.bf16.mxu0 0
      %3616 = vmatmul.mubr.bf16.gmra.mrb[0].mxu0 %v3557
      %v3617 = vpop.f32.mrb[0].mxu0
      %v3618 = vadd.f32 %v3533, %v3617
      %v3619 = vpop.f32.mrb[0].mxu0
      %v3620 = vpop.f32.mrb[0].mxu0
      %v3621 = vadd.f32 %v3533, %v3620
      %v3622 = vpop.f32.mrb[0].mxu0
      %3623 = vdwg.mxu0
      %v3624 = vmax.f32 %v3594, 0.0
      %v3625 = vmax.f32 %v3597, 0.0
      %v3626 = vmax.f32 %v3602, 0.0
      %v3627 = vmax.f32 %v3605, 0.0
      %v3628 = vmax.f32 %v3610, 0.0
      %v3629 = vmax.f32 %v3613, 0.0
      %v3630 = vmax.f32 %v3618, 0.0
      %v3631 = vmax.f32 %v3621, 0.0
      %v3632 = vld [vmem:[%s11] sm:$0xf]
      %v3633 = vld [vmem:[%s11 + $0x4] sm:$0xf]
      %v3634 = vld [vmem:[%s11 + $0x8] sm:$0xf]
      %v3635 = vld [vmem:[%s11 + $0xc] sm:$0xf]
      %v3636 = vld [vmem:[%s11 + $0x10] sm:$0xf]
      %v3637 = vld [vmem:[%s11 + $0x14] sm:$0xf]
      %v3638 = vld [vmem:[%s11 + $0x18] sm:$0xf]
      %v3639 = vld [vmem:[%s11 + $0x1c] sm:$0xf]
      %v3640 = vpack.c.bf16 %v3625, %v3624
      %v3641 = vpack.c.bf16 %v3627, %v3626
      %v3642 = vpack.c.bf16 %v3629, %v3628
      %v3643 = vpack.c.bf16 %v3631, %v3630
      %v3644 = vld [vmem:[%s12] sm:$0x1]
      %v3646 = vlaneseq
      %v3647 = vshrl.u32 %v3646, 7
      %v3648 = vsub.s32 0, %v3647
      %v3649 = vrot.slane %v3644, %v3648
      %v3659 = vunpack.c.l.b16 %v3632
      %v3660 = vunpack.c.l.b16 %v3633
      %v3661 = vunpack.c.l.b16 %v3634
      %v3662 = vunpack.c.l.b16 %v3635
      %v3663 = vunpack.c.l.b16 %v3636
      %v3664 = vunpack.c.l.b16 %v3637
      %v3665 = vunpack.c.l.b16 %v3638
      %v3666 = vunpack.c.l.b16 %v3639
      %v3667 = vpack.c.b16 %v3660, %v3659
      %v3668 = vpack.c.b16 %v3662, %v3661
      %v3669 = vpack.c.b16 %v3664, %v3663
      %v3670 = vpack.c.b16 %v3666, %v3665
      %vm3675 = vcmask 523264
      %v3677 = vsel %vm3675, %v3640, 0
      %v3680 = vsel %vm3675, %v3641, 0
      %v3683 = vsel %vm3675, %v3642, 0
      %v3686 = vsel %vm3675, %v3643, 0
      %3688 = vmatprep.subr.bf16.mxu0 0
      %3689 = vmatpush1.bf16.msra.mxu0 %v3667
      %3690 = vmatprep.subr.bf16.mxu0 0
      %3691 = vmatpush1.bf16.msra.mxu0 %v3668
      %3692 = vmatprep.subr.bf16.mxu0 0
      %3693 = vmatpush1.bf16.msra.mxu0 %v3669
      %3694 = vmatprep.subr.bf16.mxu0 0
      %3695 = vmatpush1.bf16.msra.mxu0 %v3670
      %3696 = vmatprep.subr.bf16.mxu0 0
      %3697 = vmatpush1.bf16.msra.mxu0 0
      %3698 = vmatprep.subr.bf16.mxu0 0
      %3699 = vmatpush1.bf16.msra.mxu0 0
      %3700 = vmatprep.subr.bf16.mxu0 0
      %3701 = vmatpush1.bf16.msra.mxu0 0
      %3702 = vmatprep.subr.bf16.mxu0 0
      %3703 = vmatpush1.bf16.msra.mxu0 0
      %3704 = vmatprep.subr.bf16.mxu0 0
      %3705 = vmatpush1.bf16.msra.mxu0 0
      %3706 = vmatprep.subr.bf16.mxu0 0
      %3707 = vmatpush1.bf16.msra.mxu0 0
      %3708 = vmatprep.subr.bf16.mxu0 0
      %3709 = vmatpush1.bf16.msra.mxu0 0
      %3710 = vmatprep.subr.bf16.mxu0 0
      %3711 = vmatpush1.bf16.msra.mxu0 0
      %3712 = vmatprep.subr.bf16.mxu0 0
      %3713 = vmatpush1.bf16.msra.mxu0 0
      %3714 = vmatprep.subr.bf16.mxu0 0
      %3715 = vmatpush1.bf16.msra.mxu0 0
      %3716 = vmatprep.subr.bf16.mxu0 0
      %3717 = vmatpush1.bf16.msra.mxu0 0
      %3718 = vmatprep.subr.bf16.mxu0 0
      %3719 = vmatpush1.bf16.msra.mxu0 0
      %3720 = vmatprep.mubr.bf16.mxu0 0
      %3721 = vmatmul.mubr.bf16.gmra.mrb[0].mxu0 %v3677
      %v3722 = vpop.f32.mrb[0].mxu0
      %v3723 = vadd.f32 %v3649, %v3722
      %v3724 = vpop.f32.mrb[0].mxu0
      %v3725 = vpop.f32.mrb[0].mxu0
      %v3726 = vadd.f32 %v3649, %v3725
      %v3727 = vpop.f32.mrb[0].mxu0
      %3728 = vmatprep.mubr.bf16.mxu0 0
      %3729 = vmatmul.mubr.bf16.gmra.mrb[0].mxu0 %v3680
      %v3730 = vpop.f32.mrb[0].mxu0
      %v3731 = vadd.f32 %v3649, %v3730
      %v3732 = vpop.f32.mrb[0].mxu0
      %v3733 = vpop.f32.mrb[0].mxu0
      %v3734 = vadd.f32 %v3649, %v3733
      %v3735 = vpop.f32.mrb[0].mxu0
      %3736 = vmatprep.mubr.bf16.mxu0 0
      %3737 = vmatmul.mubr.bf16.gmra.mrb[0].mxu0 %v3683
      %v3738 = vpop.f32.mrb[0].mxu0
      %v3739 = vadd.f32 %v3649, %v3738
      %v3740 = vpop.f32.mrb[0].mxu0
      %v3741 = vpop.f32.mrb[0].mxu0
      %v3742 = vadd.f32 %v3649, %v3741
      %v3743 = vpop.f32.mrb[0].mxu0
      %3744 = vmatprep.mubr.bf16.mxu0 0
      %3745 = vmatmul.mubr.bf16.gmra.mrb[0].mxu0 %v3686
      %v3746 = vpop.f32.mrb[0].mxu0
      %v3747 = vadd.f32 %v3649, %v3746
      %v3748 = vpop.f32.mrb[0].mxu0
      %v3749 = vpop.f32.mrb[0].mxu0
      %v3750 = vadd.f32 %v3649, %v3749
      %v3751 = vpop.f32.mrb[0].mxu0
      %3752 = vdwg.mxu0
      %v3753 = vadd.f32 %v3512, %v3723
      %v3754 = vadd.f32 %v3513, %v3726
      %v3755 = vadd.f32 %v3514, %v3731
      %v3756 = vadd.f32 %v3515, %v3734
      %v3757 = vadd.f32 %v3516, %v3739
      %v3758 = vadd.f32 %v3517, %v3742
      %v3759 = vadd.f32 %v3518, %v3747
      %v3760 = vadd.f32 %v3519, %v3750
      %v3761 = vld [vmem:[%s13] sm:$0x1]
      %v3762 = vld [vmem:[%s14] sm:$0x1]
      %v3763 = vsel %vm922, %v3753, 0.0
      %3764 = vadd.xlane.f32.xlu0 %v3763
      %v3765 = vpop.xlane.xlu0 %3764
      %v3766 = vsel %vm922, %v3754, 0.0
      %3767 = vadd.xlane.f32.xlu0 %v3766
      %v3768 = vpop.xlane.xlu0 %3767
      %v3769 = vsel %vm922, %v3755, 0.0
      %3770 = vadd.xlane.f32.xlu0 %v3769
      %v3771 = vpop.xlane.xlu0 %3770
      %v3772 = vsel %vm922, %v3756, 0.0
      %3773 = vadd.xlane.f32.xlu0 %v3772
      %v3774 = vpop.xlane.xlu0 %3773
      %v3775 = vsel %vm922, %v3757, 0.0
      %3776 = vadd.xlane.f32.xlu0 %v3775
      %v3777 = vpop.xlane.xlu0 %3776
      %v3778 = vsel %vm922, %v3758, 0.0
      %3779 = vadd.xlane.f32.xlu0 %v3778
      %v3780 = vpop.xlane.xlu0 %3779
      %v3781 = vsel %vm922, %v3759, 0.0
      %3782 = vadd.xlane.f32.xlu0 %v3781
      %v3783 = vpop.xlane.xlu0 %3782
      %v3784 = vsel %vm922, %v3760, 0.0
      %3785 = vadd.xlane.f32.xlu0 %v3784
      %v3786 = vpop.xlane.xlu0 %3785
      %v3787 = vmul.f32 %v3765, %v3411
      %v3788 = vmul.f32 %v3768, %v3411
      %v3789 = vmul.f32 %v3771, %v3411
      %v3790 = vmul.f32 %v3774, %v3411
      %v3791 = vmul.f32 %v3777, %v3411
      %v3792 = vmul.f32 %v3780, %v3411
      %v3793 = vmul.f32 %v3783, %v3411
      %v3794 = vmul.f32 %v3786, %v3411
      %v3795 = vsub.f32 %v3753, %v3787
      %v3796 = vsub.f32 %v3754, %v3788
      %v3797 = vsub.f32 %v3755, %v3789
      %v3798 = vsub.f32 %v3756, %v3790
      %v3799 = vsub.f32 %v3757, %v3791
      %v3800 = vsub.f32 %v3758, %v3792
      %v3801 = vsub.f32 %v3759, %v3793
      %v3802 = vsub.f32 %v3760, %v3794
      %v3803 = vmul.f32 %v3795, %v3795
      %v3804 = vmul.f32 %v3796, %v3796
      %v3805 = vmul.f32 %v3797, %v3797
      %v3806 = vmul.f32 %v3798, %v3798
      %v3807 = vmul.f32 %v3799, %v3799
      %v3808 = vmul.f32 %v3800, %v3800
      %v3809 = vmul.f32 %v3801, %v3801
      %v3810 = vmul.f32 %v3802, %v3802
      %v3811 = vsel %vm922, %v3803, 0.0
      %3812 = vadd.xlane.f32.xlu0 %v3811
      %v3813 = vpop.xlane.xlu0 %3812
      %v3814 = vsel %vm922, %v3804, 0.0
      %3815 = vadd.xlane.f32.xlu0 %v3814
      %v3816 = vpop.xlane.xlu0 %3815
      %v3817 = vsel %vm922, %v3805, 0.0
      %3818 = vadd.xlane.f32.xlu0 %v3817
      %v3819 = vpop.xlane.xlu0 %3818
      %v3820 = vsel %vm922, %v3806, 0.0
      %3821 = vadd.xlane.f32.xlu0 %v3820
      %v3822 = vpop.xlane.xlu0 %3821
      %v3823 = vsel %vm922, %v3807, 0.0
      %3824 = vadd.xlane.f32.xlu0 %v3823
      %v3825 = vpop.xlane.xlu0 %3824
      %v3826 = vsel %vm922, %v3808, 0.0
      %3827 = vadd.xlane.f32.xlu0 %v3826
      %v3828 = vpop.xlane.xlu0 %3827
      %v3829 = vsel %vm922, %v3809, 0.0
      %3830 = vadd.xlane.f32.xlu0 %v3829
      %v3831 = vpop.xlane.xlu0 %3830
      %v3832 = vsel %vm922, %v3810, 0.0
      %3833 = vadd.xlane.f32.xlu0 %v3832
      %v3834 = vpop.xlane.xlu0 %3833
      %v3835 = vmul.f32 %v3813, %v3411
      %v3836 = vmul.f32 %v3816, %v3411
      %v3837 = vmul.f32 %v3819, %v3411
      %v3838 = vmul.f32 %v3822, %v3411
      %v3839 = vmul.f32 %v3825, %v3411
      %v3840 = vmul.f32 %v3828, %v3411
      %v3841 = vmul.f32 %v3831, %v3411
      %v3842 = vmul.f32 %v3834, %v3411
      %v3843 = vadd.f32 %v3835, 1e-05
      %v3844 = vadd.f32 %v3836, 1e-05
      %v3845 = vadd.f32 %v3837, 1e-05
      %v3846 = vadd.f32 %v3838, 1e-05
      %v3847 = vadd.f32 %v3839, 1e-05
      %v3848 = vadd.f32 %v3840, 1e-05
      %v3849 = vadd.f32 %v3841, 1e-05
      %v3850 = vadd.f32 %v3842, 1e-05
      %v3851 = vrsqrt.pop %v3843
      %v3852 = vrsqrt.pop %v3844
      %v3853 = vrsqrt.pop %v3845
      %v3854 = vrsqrt.pop %v3846
      %v3855 = vrsqrt.pop %v3847
      %v3856 = vrsqrt.pop %v3848
      %v3857 = vrsqrt.pop %v3849
      %v3858 = vrsqrt.pop %v3850
      %v3859 = vmul.f32 %v3795, %v3851
      %v3860 = vmul.f32 %v3796, %v3852
      %v3861 = vmul.f32 %v3797, %v3853
      %v3862 = vmul.f32 %v3798, %v3854
      %v3863 = vmul.f32 %v3799, %v3855
      %v3864 = vmul.f32 %v3800, %v3856
      %v3865 = vmul.f32 %v3801, %v3857
      %v3866 = vmul.f32 %v3802, %v3858
      %v3868 = vlaneseq
      %v3869 = vshrl.u32 %v3868, 7
      %v3870 = vsub.s32 0, %v3869
      %v3871 = vrot.slane %v3761, %v3870
      %v3873 = vmul.f32 %v3859, %v3871
      %v3874 = vmul.f32 %v3860, %v3871
      %v3875 = vmul.f32 %v3861, %v3871
      %v3876 = vmul.f32 %v3862, %v3871
      %v3877 = vmul.f32 %v3863, %v3871
      %v3878 = vmul.f32 %v3864, %v3871
      %v3879 = vmul.f32 %v3865, %v3871
      %v3880 = vmul.f32 %v3866, %v3871
      %v3882 = vlaneseq
      %v3883 = vshrl.u32 %v3882, 7
      %v3884 = vsub.s32 0, %v3883
      %v3885 = vrot.slane %v3762, %v3884
      %v3887 = vadd.f32 %v3873, %v3885
      %v3888 = vadd.f32 %v3874, %v3885
      %v3889 = vadd.f32 %v3875, %v3885
      %v3890 = vadd.f32 %v3876, %v3885
      %v3891 = vadd.f32 %v3877, %v3885
      %v3892 = vadd.f32 %v3878, %v3885
      %v3893 = vadd.f32 %v3879, %v3885
      %v3894 = vadd.f32 %v3880, %v3885
      %s3895 = scalar_lea.vmem %s3, 16
      %v3896 = vld [vmem:[%s3895] sm:$0xf]
      %v3897 = vld [vmem:[%s3895 + $0x4] sm:$0xf]
      %v3898 = vld [vmem:[%s3895 + $0x8] sm:$0xf]
      %v3899 = vld [vmem:[%s3895 + $0xc] sm:$0xf]
      %v3900 = vpack.c.bf16 %v3888, %v3887
      %v3901 = vpack.c.bf16 %v3890, %v3889
      %v3902 = vpack.c.bf16 %v3892, %v3891
      %v3903 = vpack.c.bf16 %v3894, %v3893
      %s3904 = scalar_lea.vmem %s4, 1
      %v3905 = vld [vmem:[%s3904] sm:$0x1]
      %v3907 = vlaneseq
      %v3908 = vshrl.u32 %v3907, 7
      %v3909 = vsub.s32 0, %v3908
      %v3910 = vrot.slane %v3905, %v3909
      %v3916 = vunpack.c.l.b16 %v3896
      %v3917 = vunpack.c.l.b16 %v3897
      %v3918 = vunpack.c.l.b16 %v3898
      %v3919 = vunpack.c.l.b16 %v3899
      %v3920 = vpack.c.b16 %v3917, %v3916
      %v3921 = vpack.c.b16 %v3919, %v3918
      %v3925 = vsel %vm922, %v3900, 0
      %v3928 = vsel %vm922, %v3901, 0
      %v3931 = vsel %vm922, %v3902, 0
      %v3934 = vsel %vm922, %v3903, 0
      %3936 = vmatprep.subr.bf16.mxu0 0
      %3937 = vmatpush1.bf16.msra.mxu0 %v3920
      %3938 = vmatprep.subr.bf16.mxu0 0
      %3939 = vmatpush1.bf16.msra.mxu0 %v3921
      %3940 = vmatprep.subr.bf16.mxu0 0
      %3941 = vmatpush1.bf16.msra.mxu0 0
      %3942 = vmatprep.subr.bf16.mxu0 0
      %3943 = vmatpush1.bf16.msra.mxu0 0
      %3944 = vmatprep.subr.bf16.mxu0 0
      %3945 = vmatpush1.bf16.msra.mxu0 0
      %3946 = vmatprep.subr.bf16.mxu0 0
      %3947 = vmatpush1.bf16.msra.mxu0 0
      %3948 = vmatprep.subr.bf16.mxu0 0
      %3949 = vmatpush1.bf16.msra.mxu0 0
      %3950 = vmatprep.subr.bf16.mxu0 0
      %3951 = vmatpush1.bf16.msra.mxu0 0
      %3952 = vmatprep.subr.bf16.mxu0 0
      %3953 = vmatpush1.bf16.msra.mxu0 0
      %3954 = vmatprep.subr.bf16.mxu0 0
      %3955 = vmatpush1.bf16.msra.mxu0 0
      %3956 = vmatprep.subr.bf16.mxu0 0
      %3957 = vmatpush1.bf16.msra.mxu0 0
      %3958 = vmatprep.subr.bf16.mxu0 0
      %3959 = vmatpush1.bf16.msra.mxu0 0
      %3960 = vmatprep.subr.bf16.mxu0 0
      %3961 = vmatpush1.bf16.msra.mxu0 0
      %3962 = vmatprep.subr.bf16.mxu0 0
      %3963 = vmatpush1.bf16.msra.mxu0 0
      %3964 = vmatprep.subr.bf16.mxu0 0
      %3965 = vmatpush1.bf16.msra.mxu0 0
      %3966 = vmatprep.subr.bf16.mxu0 0
      %3967 = vmatpush1.bf16.msra.mxu0 0
      %3968 = vmatprep.mubr.bf16.mxu0 0
      %3969 = vmatmul.mubr.bf16.gmra.mrb[0].mxu0 %v3925
      %v3970 = vpop.f32.mrb[0].mxu0
      %v3971 = vadd.f32 %v3910, %v3970
      %v3972 = vpop.f32.mrb[0].mxu0
      %v3973 = vpop.f32.mrb[0].mxu0
      %v3974 = vadd.f32 %v3910, %v3973
      %v3975 = vpop.f32.mrb[0].mxu0
      %3976 = vmatprep.mubr.bf16.mxu0 0
      %3977 = vmatmul.mubr.bf16.gmra.mrb[0].mxu0 %v3928
      %v3978 = vpop.f32.mrb[0].mxu0
      %v3979 = vadd.f32 %v3910, %v3978
      %v3980 = vpop.f32.mrb[0].mxu0
      %v3981 = vpop.f32.mrb[0].mxu0
      %v3982 = vadd.f32 %v3910, %v3981
      %v3983 = vpop.f32.mrb[0].mxu0
      %3984 = vmatprep.mubr.bf16.mxu0 0
      %3985 = vmatmul.mubr.bf16.gmra.mrb[0].mxu0 %v3931
      %v3986 = vpop.f32.mrb[0].mxu0
      %v3987 = vadd.f32 %v3910, %v3986
      %v3988 = vpop.f32.mrb[0].mxu0
      %v3989 = vpop.f32.mrb[0].mxu0
      %v3990 = vadd.f32 %v3910, %v3989
      %v3991 = vpop.f32.mrb[0].mxu0
      %3992 = vmatprep.mubr.bf16.mxu0 0
      %3993 = vmatmul.mubr.bf16.gmra.mrb[0].mxu0 %v3934
      %v3994 = vpop.f32.mrb[0].mxu0
      %v3995 = vadd.f32 %v3910, %v3994
      %v3996 = vpop.f32.mrb[0].mxu0
      %v3997 = vpop.f32.mrb[0].mxu0
      %v3998 = vadd.f32 %v3910, %v3997
      %v3999 = vpop.f32.mrb[0].mxu0
      %4000 = vdwg.mxu0
      %v4001 = vpack.c.bf16 %v3974, %v3971
      %v4002 = vpack.c.bf16 %v3982, %v3979
      %v4003 = vpack.c.bf16 %v3990, %v3987
      %v4004 = vpack.c.bf16 %v3998, %v3995
      %s4005 = scalar_lea.vmem %s5, 32
      %v4006 = vld [vmem:[%s4005] sm:$0xff]
      %v4007 = vld [vmem:[%s4005 + $0x8] sm:$0xff]
      %v4008 = vld [vmem:[%s4005 + $0x10] sm:$0xff]
      %v4009 = vld [vmem:[%s4005 + $0x18] sm:$0xff]
      %4011 = vrot.lane.b32.xlu0 %v4001, 96
      %v4012 = vpop.permute.xlu0 %4011
      %v4014 = vsel %vm1011, %v4001, 0
      %v4017 = vsel %vm1011, %v4012, 0
      %4019 = vmatprep.subr.bf16.mxu0 0
      %4020 = vmatpush1.bf16.xpose.msra.mxu0 %v4017
      %4021 = vmatprep.subr.bf16.mxu0 0
      %4022 = vmatpush1.bf16.xpose.msra.mxu0 0
      %4023 = vmatprep.subr.bf16.mxu0 0
      %4024 = vmatpush1.bf16.xpose.msra.mxu0 0
      %4025 = vmatprep.subr.bf16.mxu0 0
      %4026 = vmatpush1.bf16.xpose.msra.mxu0 0
      %4027 = vmatprep.subr.bf16.mxu0 0
      %4028 = vmatpush1.bf16.xpose.msra.mxu0 0
      %4029 = vmatprep.subr.bf16.mxu0 0
      %4030 = vmatpush1.bf16.xpose.msra.mxu0 0
      %4031 = vmatprep.subr.bf16.mxu0 0
      %4032 = vmatpush1.bf16.xpose.msra.mxu0 0
      %4033 = vmatprep.subr.bf16.mxu0 0
      %4034 = vmatpush1.bf16.xpose.msra.mxu0 0
      %4035 = vmatprep.subr.bf16.mxu0 0
      %4036 = vmatpush1.bf16.xpose.msra.mxu0 0
      %4037 = vmatprep.subr.bf16.mxu0 0
      %4038 = vmatpush1.bf16.xpose.msra.mxu0 0
      %4039 = vmatprep.subr.bf16.mxu0 0
      %4040 = vmatpush1.bf16.xpose.msra.mxu0 0
      %4041 = vmatprep.subr.bf16.mxu0 0
      %4042 = vmatpush1.bf16.xpose.msra.mxu0 0
      %4043 = vmatprep.subr.bf16.mxu0 0
      %4044 = vmatpush1.bf16.xpose.msra.mxu0 0
      %4045 = vmatprep.subr.bf16.mxu0 0
      %4046 = vmatpush1.bf16.xpose.msra.mxu0 0
      %4047 = vmatprep.subr.bf16.mxu0 0
      %4048 = vmatpush1.bf16.xpose.msra.mxu0 0
      %4049 = vmatprep.subr.bf16.mxu0 0
      %4050 = vmatpush1.bf16.xpose.msra.mxu0 0
      %4051 = vmatprep.mubr.bf16.mxu0 0
      %4052 = vmatmul.mubr.bf16.gmra.mrb[0].mxu0 %v4014
      %v4053 = vpop.f32.mrb[0].mxu0
      %v4054 = vadd.f32 0.0, %v4053
      %v4055 = vpop.f32.mrb[0].mxu0
      %v4056 = vpop.f32.mrb[0].mxu0
      %v4057 = vadd.f32 0.0, %v4056
      %v4058 = vpop.f32.mrb[0].mxu0
      %4059 = vdwg.mxu0
      %4061 = vrot.lane.b32.xlu0 %v4002, 96
      %v4062 = vpop.permute.xlu0 %4061
      %v4064 = vsel %vm1011, %v4002, 0
      %v4067 = vsel %vm1011, %v4062, 0
      %4069 = vmatprep.subr.bf16.mxu0 0
      %4070 = vmatpush1.bf16.xpose.msra.mxu0 %v4067
      %4071 = vmatprep.subr.bf16.mxu0 0
      %4072 = vmatpush1.bf16.xpose.msra.mxu0 0
      %4073 = vmatprep.subr.bf16.mxu0 0
      %4074 = vmatpush1.bf16.xpose.msra.mxu0 0
      %4075 = vmatprep.subr.bf16.mxu0 0
      %4076 = vmatpush1.bf16.xpose.msra.mxu0 0
      %4077 = vmatprep.subr.bf16.mxu0 0
      %4078 = vmatpush1.bf16.xpose.msra.mxu0 0
      %4079 = vmatprep.subr.bf16.mxu0 0
      %4080 = vmatpush1.bf16.xpose.msra.mxu0 0
      %4081 = vmatprep.subr.bf16.mxu0 0
      %4082 = vmatpush1.bf16.xpose.msra.mxu0 0
      %4083 = vmatprep.subr.bf16.mxu0 0
      %4084 = vmatpush1.bf16.xpose.msra.mxu0 0
      %4085 = vmatprep.subr.bf16.mxu0 0
      %4086 = vmatpush1.bf16.xpose.msra.mxu0 0
      %4087 = vmatprep.subr.bf16.mxu0 0
      %4088 = vmatpush1.bf16.xpose.msra.mxu0 0
      %4089 = vmatprep.subr.bf16.mxu0 0
      %4090 = vmatpush1.bf16.xpose.msra.mxu0 0
      %4091 = vmatprep.subr.bf16.mxu0 0
      %4092 = vmatpush1.bf16.xpose.msra.mxu0 0
      %4093 = vmatprep.subr.bf16.mxu0 0
      %4094 = vmatpush1.bf16.xpose.msra.mxu0 0
      %4095 = vmatprep.subr.bf16.mxu0 0
      %4096 = vmatpush1.bf16.xpose.msra.mxu0 0
      %4097 = vmatprep.subr.bf16.mxu0 0
      %4098 = vmatpush1.bf16.xpose.msra.mxu0 0
      %4099 = vmatprep.subr.bf16.mxu0 0
      %4100 = vmatpush1.bf16.xpose.msra.mxu0 0
      %4101 = vmatprep.mubr.bf16.mxu0 0
      %4102 = vmatmul.mubr.bf16.gmra.mrb[0].mxu0 %v4064
      %v4103 = vpop.f32.mrb[0].mxu0
      %v4104 = vadd.f32 0.0, %v4103
      %v4105 = vpop.f32.mrb[0].mxu0
      %v4106 = vpop.f32.mrb[0].mxu0
      %v4107 = vadd.f32 0.0, %v4106
      %v4108 = vpop.f32.mrb[0].mxu0
      %4109 = vdwg.mxu0
      %4111 = vrot.lane.b32.xlu0 %v4003, 96
      %v4112 = vpop.permute.xlu0 %4111
      %v4114 = vsel %vm1011, %v4003, 0
      %v4117 = vsel %vm1011, %v4112, 0
      %4119 = vmatprep.subr.bf16.mxu0 0
      %4120 = vmatpush1.bf16.xpose.msra.mxu0 %v4117
      %4121 = vmatprep.subr.bf16.mxu0 0
      %4122 = vmatpush1.bf16.xpose.msra.mxu0 0
      %4123 = vmatprep.subr.bf16.mxu0 0
      %4124 = vmatpush1.bf16.xpose.msra.mxu0 0
      %4125 = vmatprep.subr.bf16.mxu0 0
      %4126 = vmatpush1.bf16.xpose.msra.mxu0 0
      %4127 = vmatprep.subr.bf16.mxu0 0
      %4128 = vmatpush1.bf16.xpose.msra.mxu0 0
      %4129 = vmatprep.subr.bf16.mxu0 0
      %4130 = vmatpush1.bf16.xpose.msra.mxu0 0
      %4131 = vmatprep.subr.bf16.mxu0 0
      %4132 = vmatpush1.bf16.xpose.msra.mxu0 0
      %4133 = vmatprep.subr.bf16.mxu0 0
      %4134 = vmatpush1.bf16.xpose.msra.mxu0 0
      %4135 = vmatprep.subr.bf16.mxu0 0
      %4136 = vmatpush1.bf16.xpose.msra.mxu0 0
      %4137 = vmatprep.subr.bf16.mxu0 0
      %4138 = vmatpush1.bf16.xpose.msra.mxu0 0
      %4139 = vmatprep.subr.bf16.mxu0 0
      %4140 = vmatpush1.bf16.xpose.msra.mxu0 0
      %4141 = vmatprep.subr.bf16.mxu0 0
      %4142 = vmatpush1.bf16.xpose.msra.mxu0 0
      %4143 = vmatprep.subr.bf16.mxu0 0
      %4144 = vmatpush1.bf16.xpose.msra.mxu0 0
      %4145 = vmatprep.subr.bf16.mxu0 0
      %4146 = vmatpush1.bf16.xpose.msra.mxu0 0
      %4147 = vmatprep.subr.bf16.mxu0 0
      %4148 = vmatpush1.bf16.xpose.msra.mxu0 0
      %4149 = vmatprep.subr.bf16.mxu0 0
      %4150 = vmatpush1.bf16.xpose.msra.mxu0 0
      %4151 = vmatprep.mubr.bf16.mxu0 0
      %4152 = vmatmul.mubr.bf16.gmra.mrb[0].mxu0 %v4114
      %v4153 = vpop.f32.mrb[0].mxu0
      %v4154 = vadd.f32 0.0, %v4153
      %v4155 = vpop.f32.mrb[0].mxu0
      %v4156 = vpop.f32.mrb[0].mxu0
      %v4157 = vadd.f32 0.0, %v4156
      %v4158 = vpop.f32.mrb[0].mxu0
      %4159 = vdwg.mxu0
      %4161 = vrot.lane.b32.xlu0 %v4004, 96
      %v4162 = vpop.permute.xlu0 %4161
      %v4164 = vsel %vm1011, %v4004, 0
      %v4167 = vsel %vm1011, %v4162, 0
      %4169 = vmatprep.subr.bf16.mxu0 0
      %4170 = vmatpush1.bf16.xpose.msra.mxu0 %v4167
      %4171 = vmatprep.subr.bf16.mxu0 0
      %4172 = vmatpush1.bf16.xpose.msra.mxu0 0
      %4173 = vmatprep.subr.bf16.mxu0 0
      %4174 = vmatpush1.bf16.xpose.msra.mxu0 0
      %4175 = vmatprep.subr.bf16.mxu0 0
      %4176 = vmatpush1.bf16.xpose.msra.mxu0 0
      %4177 = vmatprep.subr.bf16.mxu0 0
      %4178 = vmatpush1.bf16.xpose.msra.mxu0 0
      %4179 = vmatprep.subr.bf16.mxu0 0
      %4180 = vmatpush1.bf16.xpose.msra.mxu0 0
      %4181 = vmatprep.subr.bf16.mxu0 0
      %4182 = vmatpush1.bf16.xpose.msra.mxu0 0
      %4183 = vmatprep.subr.bf16.mxu0 0
      %4184 = vmatpush1.bf16.xpose.msra.mxu0 0
      %4185 = vmatprep.subr.bf16.mxu0 0
      %4186 = vmatpush1.bf16.xpose.msra.mxu0 0
      %4187 = vmatprep.subr.bf16.mxu0 0
      %4188 = vmatpush1.bf16.xpose.msra.mxu0 0
      %4189 = vmatprep.subr.bf16.mxu0 0
      %4190 = vmatpush1.bf16.xpose.msra.mxu0 0
      %4191 = vmatprep.subr.bf16.mxu0 0
      %4192 = vmatpush1.bf16.xpose.msra.mxu0 0
      %4193 = vmatprep.subr.bf16.mxu0 0
      %4194 = vmatpush1.bf16.xpose.msra.mxu0 0
      %4195 = vmatprep.subr.bf16.mxu0 0
      %4196 = vmatpush1.bf16.xpose.msra.mxu0 0
      %4197 = vmatprep.subr.bf16.mxu0 0
      %4198 = vmatpush1.bf16.xpose.msra.mxu0 0
      %4199 = vmatprep.subr.bf16.mxu0 0
      %4200 = vmatpush1.bf16.xpose.msra.mxu0 0
      %4201 = vmatprep.mubr.bf16.mxu0 0
      %4202 = vmatmul.mubr.bf16.gmra.mrb[0].mxu0 %v4164
      %v4203 = vpop.f32.mrb[0].mxu0
      %v4204 = vadd.f32 0.0, %v4203
      %v4205 = vpop.f32.mrb[0].mxu0
      %v4206 = vpop.f32.mrb[0].mxu0
      %v4207 = vadd.f32 0.0, %v4206
      %v4208 = vpop.f32.mrb[0].mxu0
      %4209 = vdwg.mxu0
      %v4210 = vmul.f32 %v4054, 0.35355338
      %v4211 = vmul.f32 %v4057, 0.35355338
      %v4212 = vmul.f32 %v4104, 0.35355338
      %v4213 = vmul.f32 %v4107, 0.35355338
      %v4214 = vmul.f32 %v4154, 0.35355338
      %v4215 = vmul.f32 %v4157, 0.35355338
      %v4216 = vmul.f32 %v4204, 0.35355338
      %v4217 = vmul.f32 %v4207, 0.35355338
      %v4218 = vadd.f32 %v4210, %v894
      %v4219 = vadd.f32 %v4211, %v894
      %v4220 = vadd.f32 %v4212, %v894
      %v4221 = vadd.f32 %v4213, %v894
      %v4222 = vadd.f32 %v4214, %v894
      %v4223 = vadd.f32 %v4215, %v894
      %v4224 = vadd.f32 %v4216, %v894
      %v4225 = vadd.f32 %v4217, %v894
      %v4226 = vsel %vm672, %v4218, -inf
      %4227 = vmax.xlane.f32.xlu0 %v4226
      %v4228 = vpop.xlane.xlu0 %4227
      %v4229 = vsel %vm672, %v4219, -inf
      %4230 = vmax.xlane.f32.xlu0 %v4229
      %v4231 = vpop.xlane.xlu0 %4230
      %v4232 = vsel %vm672, %v4220, -inf
      %4233 = vmax.xlane.f32.xlu0 %v4232
      %v4234 = vpop.xlane.xlu0 %4233
      %v4235 = vsel %vm672, %v4221, -inf
      %4236 = vmax.xlane.f32.xlu0 %v4235
      %v4237 = vpop.xlane.xlu0 %4236
      %v4238 = vsel %vm672, %v4222, -inf
      %4239 = vmax.xlane.f32.xlu0 %v4238
      %v4240 = vpop.xlane.xlu0 %4239
      %v4241 = vsel %vm672, %v4223, -inf
      %4242 = vmax.xlane.f32.xlu0 %v4241
      %v4243 = vpop.xlane.xlu0 %4242
      %v4244 = vsel %vm672, %v4224, -inf
      %4245 = vmax.xlane.f32.xlu0 %v4244
      %v4246 = vpop.xlane.xlu0 %4245
      %v4247 = vsel %vm672, %v4225, -inf
      %4248 = vmax.xlane.f32.xlu0 %v4247
      %v4249 = vpop.xlane.xlu0 %4248
      %v4250 = vsub.f32 %v4218, %v4228
      %v4251 = vsub.f32 %v4219, %v4231
      %v4252 = vsub.f32 %v4220, %v4234
      %v4253 = vsub.f32 %v4221, %v4237
      %v4254 = vsub.f32 %v4222, %v4240
      %v4255 = vsub.f32 %v4223, %v4243
      %v4256 = vsub.f32 %v4224, %v4246
      %v4257 = vsub.f32 %v4225, %v4249
      %v4258 = vmul.f32 %v4250, 1.442695
      %v4259 = vpow.pop %v4258
      %v4260 = vmul.f32 %v4251, 1.442695
      %v4261 = vpow.pop %v4260
      %v4262 = vmul.f32 %v4252, 1.442695
      %v4263 = vpow.pop %v4262
      %v4264 = vmul.f32 %v4253, 1.442695
      %v4265 = vpow.pop %v4264
      %v4266 = vmul.f32 %v4254, 1.442695
      %v4267 = vpow.pop %v4266
      %v4268 = vmul.f32 %v4255, 1.442695
      %v4269 = vpow.pop %v4268
      %v4270 = vmul.f32 %v4256, 1.442695
      %v4271 = vpow.pop %v4270
      %v4272 = vmul.f32 %v4257, 1.442695
      %v4273 = vpow.pop %v4272
      %v4274 = vsel %vm672, %v4259, 0.0
      %4275 = vadd.xlane.f32.xlu0 %v4274
      %v4276 = vpop.xlane.xlu0 %4275
      %v4277 = vsel %vm672, %v4261, 0.0
      %4278 = vadd.xlane.f32.xlu0 %v4277
      %v4279 = vpop.xlane.xlu0 %4278
      %v4280 = vsel %vm672, %v4263, 0.0
      %4281 = vadd.xlane.f32.xlu0 %v4280
      %v4282 = vpop.xlane.xlu0 %4281
      %v4283 = vsel %vm672, %v4265, 0.0
      %4284 = vadd.xlane.f32.xlu0 %v4283
      %v4285 = vpop.xlane.xlu0 %4284
      %v4286 = vsel %vm672, %v4267, 0.0
      %4287 = vadd.xlane.f32.xlu0 %v4286
      %v4288 = vpop.xlane.xlu0 %4287
      %v4289 = vsel %vm672, %v4269, 0.0
      %4290 = vadd.xlane.f32.xlu0 %v4289
      %v4291 = vpop.xlane.xlu0 %4290
      %v4292 = vsel %vm672, %v4271, 0.0
      %4293 = vadd.xlane.f32.xlu0 %v4292
      %v4294 = vpop.xlane.xlu0 %4293
      %v4295 = vsel %vm672, %v4273, 0.0
      %4296 = vadd.xlane.f32.xlu0 %v4295
      %v4297 = vpop.xlane.xlu0 %4296
      %v4298 = vrcp.pop %v4276
      %v4299 = vrcp.pop %v4279
      %v4300 = vrcp.pop %v4282
      %v4301 = vrcp.pop %v4285
      %v4302 = vrcp.pop %v4288
      %v4303 = vrcp.pop %v4291
      %v4304 = vrcp.pop %v4294
      %v4305 = vrcp.pop %v4297
      %v4306 = vmul.f32 %v4259, %v4298
      %v4307 = vmul.f32 %v4261, %v4299
      %v4308 = vmul.f32 %v4263, %v4300
      %v4309 = vmul.f32 %v4265, %v4301
      %v4310 = vmul.f32 %v4267, %v4302
      %v4311 = vmul.f32 %v4269, %v4303
      %v4312 = vmul.f32 %v4271, %v4304
      %v4313 = vmul.f32 %v4273, %v4305
      %v4314 = vpack.c.bf16 %v4307, %v4306
      %v4315 = vpack.c.bf16 %v4309, %v4308
      %v4316 = vpack.c.bf16 %v4311, %v4310
      %v4317 = vpack.c.bf16 %v4313, %v4312
      %4318 = vrot.lane.b32.xlu0 %v4001, 64
      %v4319 = vpop.permute.xlu0 %4318
      %v4322 = vsel %vm672, %v4314, 0
      %4324 = vmatprep.subr.bf16.mxu0 0
      %4325 = vmatpush1.bf16.msra.mxu0 %v4319
      %4326 = vmatprep.subr.bf16.mxu0 0
      %4327 = vmatpush1.bf16.msra.mxu0 0
      %4328 = vmatprep.subr.bf16.mxu0 0
      %4329 = vmatpush1.bf16.msra.mxu0 0
      %4330 = vmatprep.subr.bf16.mxu0 0
      %4331 = vmatpush1.bf16.msra.mxu0 0
      %4332 = vmatprep.subr.bf16.mxu0 0
      %4333 = vmatpush1.bf16.msra.mxu0 0
      %4334 = vmatprep.subr.bf16.mxu0 0
      %4335 = vmatpush1.bf16.msra.mxu0 0
      %4336 = vmatprep.subr.bf16.mxu0 0
      %4337 = vmatpush1.bf16.msra.mxu0 0
      %4338 = vmatprep.subr.bf16.mxu0 0
      %4339 = vmatpush1.bf16.msra.mxu0 0
      %4340 = vmatprep.subr.bf16.mxu0 0
      %4341 = vmatpush1.bf16.msra.mxu0 0
      %4342 = vmatprep.subr.bf16.mxu0 0
      %4343 = vmatpush1.bf16.msra.mxu0 0
      %4344 = vmatprep.subr.bf16.mxu0 0
      %4345 = vmatpush1.bf16.msra.mxu0 0
      %4346 = vmatprep.subr.bf16.mxu0 0
      %4347 = vmatpush1.bf16.msra.mxu0 0
      %4348 = vmatprep.subr.bf16.mxu0 0
      %4349 = vmatpush1.bf16.msra.mxu0 0
      %4350 = vmatprep.subr.bf16.mxu0 0
      %4351 = vmatpush1.bf16.msra.mxu0 0
      %4352 = vmatprep.subr.bf16.mxu0 0
      %4353 = vmatpush1.bf16.msra.mxu0 0
      %4354 = vmatprep.subr.bf16.mxu0 0
      %4355 = vmatpush1.bf16.msra.mxu0 0
      %4356 = vmatprep.mubr.bf16.mxu0 0
      %4357 = vmatmul.mubr.bf16.gmra.mrb[0].mxu0 %v4322
      %v4358 = vpop.f32.mrb[0].mxu0
      %v4359 = vadd.f32 0.0, %v4358
      %v4360 = vpop.f32.mrb[0].mxu0
      %v4361 = vpop.f32.mrb[0].mxu0
      %v4362 = vadd.f32 0.0, %v4361
      %v4363 = vpop.f32.mrb[0].mxu0
      %4364 = vdwg.mxu0
      %4365 = vrot.lane.b32.xlu0 %v4002, 64
      %v4366 = vpop.permute.xlu0 %4365
      %v4369 = vsel %vm672, %v4315, 0
      %4371 = vmatprep.subr.bf16.mxu0 0
      %4372 = vmatpush1.bf16.msra.mxu0 %v4366
      %4373 = vmatprep.subr.bf16.mxu0 0
      %4374 = vmatpush1.bf16.msra.mxu0 0
      %4375 = vmatprep.subr.bf16.mxu0 0
      %4376 = vmatpush1.bf16.msra.mxu0 0
      %4377 = vmatprep.subr.bf16.mxu0 0
      %4378 = vmatpush1.bf16.msra.mxu0 0
      %4379 = vmatprep.subr.bf16.mxu0 0
      %4380 = vmatpush1.bf16.msra.mxu0 0
      %4381 = vmatprep.subr.bf16.mxu0 0
      %4382 = vmatpush1.bf16.msra.mxu0 0
      %4383 = vmatprep.subr.bf16.mxu0 0
      %4384 = vmatpush1.bf16.msra.mxu0 0
      %4385 = vmatprep.subr.bf16.mxu0 0
      %4386 = vmatpush1.bf16.msra.mxu0 0
      %4387 = vmatprep.subr.bf16.mxu0 0
      %4388 = vmatpush1.bf16.msra.mxu0 0
      %4389 = vmatprep.subr.bf16.mxu0 0
      %4390 = vmatpush1.bf16.msra.mxu0 0
      %4391 = vmatprep.subr.bf16.mxu0 0
      %4392 = vmatpush1.bf16.msra.mxu0 0
      %4393 = vmatprep.subr.bf16.mxu0 0
      %4394 = vmatpush1.bf16.msra.mxu0 0
      %4395 = vmatprep.subr.bf16.mxu0 0
      %4396 = vmatpush1.bf16.msra.mxu0 0
      %4397 = vmatprep.subr.bf16.mxu0 0
      %4398 = vmatpush1.bf16.msra.mxu0 0
      %4399 = vmatprep.subr.bf16.mxu0 0
      %4400 = vmatpush1.bf16.msra.mxu0 0
      %4401 = vmatprep.subr.bf16.mxu0 0
      %4402 = vmatpush1.bf16.msra.mxu0 0
      %4403 = vmatprep.mubr.bf16.mxu0 0
      %4404 = vmatmul.mubr.bf16.gmra.mrb[0].mxu0 %v4369
      %v4405 = vpop.f32.mrb[0].mxu0
      %v4406 = vadd.f32 0.0, %v4405
      %v4407 = vpop.f32.mrb[0].mxu0
      %v4408 = vpop.f32.mrb[0].mxu0
      %v4409 = vadd.f32 0.0, %v4408
      %v4410 = vpop.f32.mrb[0].mxu0
      %4411 = vdwg.mxu0
      %4412 = vrot.lane.b32.xlu0 %v4003, 64
      %v4413 = vpop.permute.xlu0 %4412
      %v4416 = vsel %vm672, %v4316, 0
      %4418 = vmatprep.subr.bf16.mxu0 0
      %4419 = vmatpush1.bf16.msra.mxu0 %v4413
      %4420 = vmatprep.subr.bf16.mxu0 0
      %4421 = vmatpush1.bf16.msra.mxu0 0
      %4422 = vmatprep.subr.bf16.mxu0 0
      %4423 = vmatpush1.bf16.msra.mxu0 0
      %4424 = vmatprep.subr.bf16.mxu0 0
      %4425 = vmatpush1.bf16.msra.mxu0 0
      %4426 = vmatprep.subr.bf16.mxu0 0
      %4427 = vmatpush1.bf16.msra.mxu0 0
      %4428 = vmatprep.subr.bf16.mxu0 0
      %4429 = vmatpush1.bf16.msra.mxu0 0
      %4430 = vmatprep.subr.bf16.mxu0 0
      %4431 = vmatpush1.bf16.msra.mxu0 0
      %4432 = vmatprep.subr.bf16.mxu0 0
      %4433 = vmatpush1.bf16.msra.mxu0 0
      %4434 = vmatprep.subr.bf16.mxu0 0
      %4435 = vmatpush1.bf16.msra.mxu0 0
      %4436 = vmatprep.subr.bf16.mxu0 0
      %4437 = vmatpush1.bf16.msra.mxu0 0
      %4438 = vmatprep.subr.bf16.mxu0 0
      %4439 = vmatpush1.bf16.msra.mxu0 0
      %4440 = vmatprep.subr.bf16.mxu0 0
      %4441 = vmatpush1.bf16.msra.mxu0 0
      %4442 = vmatprep.subr.bf16.mxu0 0
      %4443 = vmatpush1.bf16.msra.mxu0 0
      %4444 = vmatprep.subr.bf16.mxu0 0
      %4445 = vmatpush1.bf16.msra.mxu0 0
      %4446 = vmatprep.subr.bf16.mxu0 0
      %4447 = vmatpush1.bf16.msra.mxu0 0
      %4448 = vmatprep.subr.bf16.mxu0 0
      %4449 = vmatpush1.bf16.msra.mxu0 0
      %4450 = vmatprep.mubr.bf16.mxu0 0
      %4451 = vmatmul.mubr.bf16.gmra.mrb[0].mxu0 %v4416
      %v4452 = vpop.f32.mrb[0].mxu0
      %v4453 = vadd.f32 0.0, %v4452
      %v4454 = vpop.f32.mrb[0].mxu0
      %v4455 = vpop.f32.mrb[0].mxu0
      %v4456 = vadd.f32 0.0, %v4455
      %v4457 = vpop.f32.mrb[0].mxu0
      %4458 = vdwg.mxu0
      %4459 = vrot.lane.b32.xlu0 %v4004, 64
      %v4460 = vpop.permute.xlu0 %4459
      %v4463 = vsel %vm672, %v4317, 0
      %4465 = vmatprep.subr.bf16.mxu0 0
      %4466 = vmatpush1.bf16.msra.mxu0 %v4460
      %4467 = vmatprep.subr.bf16.mxu0 0
      %4468 = vmatpush1.bf16.msra.mxu0 0
      %4469 = vmatprep.subr.bf16.mxu0 0
      %4470 = vmatpush1.bf16.msra.mxu0 0
      %4471 = vmatprep.subr.bf16.mxu0 0
      %4472 = vmatpush1.bf16.msra.mxu0 0
      %4473 = vmatprep.subr.bf16.mxu0 0
      %4474 = vmatpush1.bf16.msra.mxu0 0
      %4475 = vmatprep.subr.bf16.mxu0 0
      %4476 = vmatpush1.bf16.msra.mxu0 0
      %4477 = vmatprep.subr.bf16.mxu0 0
      %4478 = vmatpush1.bf16.msra.mxu0 0
      %4479 = vmatprep.subr.bf16.mxu0 0
      %4480 = vmatpush1.bf16.msra.mxu0 0
      %4481 = vmatprep.subr.bf16.mxu0 0
      %4482 = vmatpush1.bf16.msra.mxu0 0
      %4483 = vmatprep.subr.bf16.mxu0 0
      %4484 = vmatpush1.bf16.msra.mxu0 0
      %4485 = vmatprep.subr.bf16.mxu0 0
      %4486 = vmatpush1.bf16.msra.mxu0 0
      %4487 = vmatprep.subr.bf16.mxu0 0
      %4488 = vmatpush1.bf16.msra.mxu0 0
      %4489 = vmatprep.subr.bf16.mxu0 0
      %4490 = vmatpush1.bf16.msra.mxu0 0
      %4491 = vmatprep.subr.bf16.mxu0 0
      %4492 = vmatpush1.bf16.msra.mxu0 0
      %4493 = vmatprep.subr.bf16.mxu0 0
      %4494 = vmatpush1.bf16.msra.mxu0 0
      %4495 = vmatprep.subr.bf16.mxu0 0
      %4496 = vmatpush1.bf16.msra.mxu0 0
      %4497 = vmatprep.mubr.bf16.mxu0 0
      %4498 = vmatmul.mubr.bf16.gmra.mrb[0].mxu0 %v4463
      %v4499 = vpop.f32.mrb[0].mxu0
      %v4500 = vadd.f32 0.0, %v4499
      %v4501 = vpop.f32.mrb[0].mxu0
      %v4502 = vpop.f32.mrb[0].mxu0
      %v4503 = vadd.f32 0.0, %v4502
      %v4504 = vpop.f32.mrb[0].mxu0
      %4505 = vdwg.mxu0
      %v4506 = vpack.c.bf16 %v4362, %v4359
      %v4507 = vpack.c.bf16 %v4409, %v4406
      %v4508 = vpack.c.bf16 %v4456, %v4453
      %v4509 = vpack.c.bf16 %v4503, %v4500
      %v4510 = vpack.c.bf16 %v4006, %v4006
      %4511 = vrot.lane.b32.xlu0 %v4001, 120
      %v4512 = vpop.permute.xlu0 %4511
      %4513 = vrot.lane.b32.xlu0 %v4001, 88
      %v4514 = vpop.permute.xlu0 %4513
      %v4516 = vsel %vm1011, %v4512, 0
      %v4519 = vsel %vm1011, %v4514, 0
      %4521 = vmatprep.subr.bf16.mxu0 0
      %4522 = vmatpush1.bf16.xpose.msra.mxu0 %v4519
      %4523 = vmatprep.subr.bf16.mxu0 0
      %4524 = vmatpush1.bf16.xpose.msra.mxu0 0
      %4525 = vmatprep.subr.bf16.mxu0 0
      %4526 = vmatpush1.bf16.xpose.msra.mxu0 0
      %4527 = vmatprep.subr.bf16.mxu0 0
      %4528 = vmatpush1.bf16.xpose.msra.mxu0 0
      %4529 = vmatprep.subr.bf16.mxu0 0
      %4530 = vmatpush1.bf16.xpose.msra.mxu0 0
      %4531 = vmatprep.subr.bf16.mxu0 0
      %4532 = vmatpush1.bf16.xpose.msra.mxu0 0
      %4533 = vmatprep.subr.bf16.mxu0 0
      %4534 = vmatpush1.bf16.xpose.msra.mxu0 0
      %4535 = vmatprep.subr.bf16.mxu0 0
      %4536 = vmatpush1.bf16.xpose.msra.mxu0 0
      %4537 = vmatprep.subr.bf16.mxu0 0
      %4538 = vmatpush1.bf16.xpose.msra.mxu0 0
      %4539 = vmatprep.subr.bf16.mxu0 0
      %4540 = vmatpush1.bf16.xpose.msra.mxu0 0
      %4541 = vmatprep.subr.bf16.mxu0 0
      %4542 = vmatpush1.bf16.xpose.msra.mxu0 0
      %4543 = vmatprep.subr.bf16.mxu0 0
      %4544 = vmatpush1.bf16.xpose.msra.mxu0 0
      %4545 = vmatprep.subr.bf16.mxu0 0
      %4546 = vmatpush1.bf16.xpose.msra.mxu0 0
      %4547 = vmatprep.subr.bf16.mxu0 0
      %4548 = vmatpush1.bf16.xpose.msra.mxu0 0
      %4549 = vmatprep.subr.bf16.mxu0 0
      %4550 = vmatpush1.bf16.xpose.msra.mxu0 0
      %4551 = vmatprep.subr.bf16.mxu0 0
      %4552 = vmatpush1.bf16.xpose.msra.mxu0 0
      %4553 = vmatprep.mubr.bf16.mxu0 0
      %4554 = vmatmul.mubr.bf16.gmra.mrb[0].mxu0 %v4516
      %v4555 = vpop.f32.mrb[0].mxu0
      %v4556 = vadd.f32 0.0, %v4555
      %v4557 = vpop.f32.mrb[0].mxu0
      %v4558 = vpop.f32.mrb[0].mxu0
      %v4559 = vadd.f32 0.0, %v4558
      %v4560 = vpop.f32.mrb[0].mxu0
      %4561 = vdwg.mxu0
      %4562 = vrot.lane.b32.xlu0 %v4002, 120
      %v4563 = vpop.permute.xlu0 %4562
      %4564 = vrot.lane.b32.xlu0 %v4002, 88
      %v4565 = vpop.permute.xlu0 %4564
      %v4567 = vsel %vm1011, %v4563, 0
      %v4570 = vsel %vm1011, %v4565, 0
      %4572 = vmatprep.subr.bf16.mxu0 0
      %4573 = vmatpush1.bf16.xpose.msra.mxu0 %v4570
      %4574 = vmatprep.subr.bf16.mxu0 0
      %4575 = vmatpush1.bf16.xpose.msra.mxu0 0
      %4576 = vmatprep.subr.bf16.mxu0 0
      %4577 = vmatpush1.bf16.xpose.msra.mxu0 0
      %4578 = vmatprep.subr.bf16.mxu0 0
      %4579 = vmatpush1.bf16.xpose.msra.mxu0 0
      %4580 = vmatprep.subr.bf16.mxu0 0
      %4581 = vmatpush1.bf16.xpose.msra.mxu0 0
      %4582 = vmatprep.subr.bf16.mxu0 0
      %4583 = vmatpush1.bf16.xpose.msra.mxu0 0
      %4584 = vmatprep.subr.bf16.mxu0 0
      %4585 = vmatpush1.bf16.xpose.msra.mxu0 0
      %4586 = vmatprep.subr.bf16.mxu0 0
      %4587 = vmatpush1.bf16.xpose.msra.mxu0 0
      %4588 = vmatprep.subr.bf16.mxu0 0
      %4589 = vmatpush1.bf16.xpose.msra.mxu0 0
      %4590 = vmatprep.subr.bf16.mxu0 0
      %4591 = vmatpush1.bf16.xpose.msra.mxu0 0
      %4592 = vmatprep.subr.bf16.mxu0 0
      %4593 = vmatpush1.bf16.xpose.msra.mxu0 0
      %4594 = vmatprep.subr.bf16.mxu0 0
      %4595 = vmatpush1.bf16.xpose.msra.mxu0 0
      %4596 = vmatprep.subr.bf16.mxu0 0
      %4597 = vmatpush1.bf16.xpose.msra.mxu0 0
      %4598 = vmatprep.subr.bf16.mxu0 0
      %4599 = vmatpush1.bf16.xpose.msra.mxu0 0
      %4600 = vmatprep.subr.bf16.mxu0 0
      %4601 = vmatpush1.bf16.xpose.msra.mxu0 0
      %4602 = vmatprep.subr.bf16.mxu0 0
      %4603 = vmatpush1.bf16.xpose.msra.mxu0 0
      %4604 = vmatprep.mubr.bf16.mxu0 0
      %4605 = vmatmul.mubr.bf16.gmra.mrb[0].mxu0 %v4567
      %v4606 = vpop.f32.mrb[0].mxu0
      %v4607 = vadd.f32 0.0, %v4606
      %v4608 = vpop.f32.mrb[0].mxu0
      %v4609 = vpop.f32.mrb[0].mxu0
      %v4610 = vadd.f32 0.0, %v4609
      %v4611 = vpop.f32.mrb[0].mxu0
      %4612 = vdwg.mxu0
      %4613 = vrot.lane.b32.xlu0 %v4003, 120
      %v4614 = vpop.permute.xlu0 %4613
      %4615 = vrot.lane.b32.xlu0 %v4003, 88
      %v4616 = vpop.permute.xlu0 %4615
      %v4618 = vsel %vm1011, %v4614, 0
      %v4621 = vsel %vm1011, %v4616, 0
      %4623 = vmatprep.subr.bf16.mxu0 0
      %4624 = vmatpush1.bf16.xpose.msra.mxu0 %v4621
      %4625 = vmatprep.subr.bf16.mxu0 0
      %4626 = vmatpush1.bf16.xpose.msra.mxu0 0
      %4627 = vmatprep.subr.bf16.mxu0 0
      %4628 = vmatpush1.bf16.xpose.msra.mxu0 0
      %4629 = vmatprep.subr.bf16.mxu0 0
      %4630 = vmatpush1.bf16.xpose.msra.mxu0 0
      %4631 = vmatprep.subr.bf16.mxu0 0
      %4632 = vmatpush1.bf16.xpose.msra.mxu0 0
      %4633 = vmatprep.subr.bf16.mxu0 0
      %4634 = vmatpush1.bf16.xpose.msra.mxu0 0
      %4635 = vmatprep.subr.bf16.mxu0 0
      %4636 = vmatpush1.bf16.xpose.msra.mxu0 0
      %4637 = vmatprep.subr.bf16.mxu0 0
      %4638 = vmatpush1.bf16.xpose.msra.mxu0 0
      %4639 = vmatprep.subr.bf16.mxu0 0
      %4640 = vmatpush1.bf16.xpose.msra.mxu0 0
      %4641 = vmatprep.subr.bf16.mxu0 0
      %4642 = vmatpush1.bf16.xpose.msra.mxu0 0
      %4643 = vmatprep.subr.bf16.mxu0 0
      %4644 = vmatpush1.bf16.xpose.msra.mxu0 0
      %4645 = vmatprep.subr.bf16.mxu0 0
      %4646 = vmatpush1.bf16.xpose.msra.mxu0 0
      %4647 = vmatprep.subr.bf16.mxu0 0
      %4648 = vmatpush1.bf16.xpose.msra.mxu0 0
      %4649 = vmatprep.subr.bf16.mxu0 0
      %4650 = vmatpush1.bf16.xpose.msra.mxu0 0
      %4651 = vmatprep.subr.bf16.mxu0 0
      %4652 = vmatpush1.bf16.xpose.msra.mxu0 0
      %4653 = vmatprep.subr.bf16.mxu0 0
      %4654 = vmatpush1.bf16.xpose.msra.mxu0 0
      %4655 = vmatprep.mubr.bf16.mxu0 0
      %4656 = vmatmul.mubr.bf16.gmra.mrb[0].mxu0 %v4618
      %v4657 = vpop.f32.mrb[0].mxu0
      %v4658 = vadd.f32 0.0, %v4657
      %v4659 = vpop.f32.mrb[0].mxu0
      %v4660 = vpop.f32.mrb[0].mxu0
      %v4661 = vadd.f32 0.0, %v4660
      %v4662 = vpop.f32.mrb[0].mxu0
      %4663 = vdwg.mxu0
      %4664 = vrot.lane.b32.xlu0 %v4004, 120
      %v4665 = vpop.permute.xlu0 %4664
      %4666 = vrot.lane.b32.xlu0 %v4004, 88
      %v4667 = vpop.permute.xlu0 %4666
      %v4669 = vsel %vm1011, %v4665, 0
      %v4672 = vsel %vm1011, %v4667, 0
      %4674 = vmatprep.subr.bf16.mxu0 0
      %4675 = vmatpush1.bf16.xpose.msra.mxu0 %v4672
      %4676 = vmatprep.subr.bf16.mxu0 0
      %4677 = vmatpush1.bf16.xpose.msra.mxu0 0
      %4678 = vmatprep.subr.bf16.mxu0 0
      %4679 = vmatpush1.bf16.xpose.msra.mxu0 0
      %4680 = vmatprep.subr.bf16.mxu0 0
      %4681 = vmatpush1.bf16.xpose.msra.mxu0 0
      %4682 = vmatprep.subr.bf16.mxu0 0
      %4683 = vmatpush1.bf16.xpose.msra.mxu0 0
      %4684 = vmatprep.subr.bf16.mxu0 0
      %4685 = vmatpush1.bf16.xpose.msra.mxu0 0
      %4686 = vmatprep.subr.bf16.mxu0 0
      %4687 = vmatpush1.bf16.xpose.msra.mxu0 0
      %4688 = vmatprep.subr.bf16.mxu0 0
      %4689 = vmatpush1.bf16.xpose.msra.mxu0 0
      %4690 = vmatprep.subr.bf16.mxu0 0
      %4691 = vmatpush1.bf16.xpose.msra.mxu0 0
      %4692 = vmatprep.subr.bf16.mxu0 0
      %4693 = vmatpush1.bf16.xpose.msra.mxu0 0
      %4694 = vmatprep.subr.bf16.mxu0 0
      %4695 = vmatpush1.bf16.xpose.msra.mxu0 0
      %4696 = vmatprep.subr.bf16.mxu0 0
      %4697 = vmatpush1.bf16.xpose.msra.mxu0 0
      %4698 = vmatprep.subr.bf16.mxu0 0
      %4699 = vmatpush1.bf16.xpose.msra.mxu0 0
      %4700 = vmatprep.subr.bf16.mxu0 0
      %4701 = vmatpush1.bf16.xpose.msra.mxu0 0
      %4702 = vmatprep.subr.bf16.mxu0 0
      %4703 = vmatpush1.bf16.xpose.msra.mxu0 0
      %4704 = vmatprep.subr.bf16.mxu0 0
      %4705 = vmatpush1.bf16.xpose.msra.mxu0 0
      %4706 = vmatprep.mubr.bf16.mxu0 0
      %4707 = vmatmul.mubr.bf16.gmra.mrb[0].mxu0 %v4669
      %v4708 = vpop.f32.mrb[0].mxu0
      %v4709 = vadd.f32 0.0, %v4708
      %v4710 = vpop.f32.mrb[0].mxu0
      %v4711 = vpop.f32.mrb[0].mxu0
      %v4712 = vadd.f32 0.0, %v4711
      %v4713 = vpop.f32.mrb[0].mxu0
      %4714 = vdwg.mxu0
      %v4715 = vmul.f32 %v4556, 0.35355338
      %v4716 = vmul.f32 %v4559, 0.35355338
      %v4717 = vmul.f32 %v4607, 0.35355338
      %v4718 = vmul.f32 %v4610, 0.35355338
      %v4719 = vmul.f32 %v4658, 0.35355338
      %v4720 = vmul.f32 %v4661, 0.35355338
      %v4721 = vmul.f32 %v4709, 0.35355338
      %v4722 = vmul.f32 %v4712, 0.35355338
      %v4723 = vadd.f32 %v4715, %v894
      %v4724 = vadd.f32 %v4716, %v894
      %v4725 = vadd.f32 %v4717, %v894
      %v4726 = vadd.f32 %v4718, %v894
      %v4727 = vadd.f32 %v4719, %v894
      %v4728 = vadd.f32 %v4720, %v894
      %v4729 = vadd.f32 %v4721, %v894
      %v4730 = vadd.f32 %v4722, %v894
      %v4731 = vsel %vm672, %v4723, -inf
      %4732 = vmax.xlane.f32.xlu0 %v4731
      %v4733 = vpop.xlane.xlu0 %4732
      %v4734 = vsel %vm672, %v4724, -inf
      %4735 = vmax.xlane.f32.xlu0 %v4734
      %v4736 = vpop.xlane.xlu0 %4735
      %v4737 = vsel %vm672, %v4725, -inf
      %4738 = vmax.xlane.f32.xlu0 %v4737
      %v4739 = vpop.xlane.xlu0 %4738
      %v4740 = vsel %vm672, %v4726, -inf
      %4741 = vmax.xlane.f32.xlu0 %v4740
      %v4742 = vpop.xlane.xlu0 %4741
      %v4743 = vsel %vm672, %v4727, -inf
      %4744 = vmax.xlane.f32.xlu0 %v4743
      %v4745 = vpop.xlane.xlu0 %4744
      %v4746 = vsel %vm672, %v4728, -inf
      %4747 = vmax.xlane.f32.xlu0 %v4746
      %v4748 = vpop.xlane.xlu0 %4747
      %v4749 = vsel %vm672, %v4729, -inf
      %4750 = vmax.xlane.f32.xlu0 %v4749
      %v4751 = vpop.xlane.xlu0 %4750
      %v4752 = vsel %vm672, %v4730, -inf
      %4753 = vmax.xlane.f32.xlu0 %v4752
      %v4754 = vpop.xlane.xlu0 %4753
      %v4755 = vsub.f32 %v4723, %v4733
      %v4756 = vsub.f32 %v4724, %v4736
      %v4757 = vsub.f32 %v4725, %v4739
      %v4758 = vsub.f32 %v4726, %v4742
      %v4759 = vsub.f32 %v4727, %v4745
      %v4760 = vsub.f32 %v4728, %v4748
      %v4761 = vsub.f32 %v4729, %v4751
      %v4762 = vsub.f32 %v4730, %v4754
      %v4763 = vmul.f32 %v4755, 1.442695
      %v4764 = vpow.pop %v4763
      %v4765 = vmul.f32 %v4756, 1.442695
      %v4766 = vpow.pop %v4765
      %v4767 = vmul.f32 %v4757, 1.442695
      %v4768 = vpow.pop %v4767
      %v4769 = vmul.f32 %v4758, 1.442695
      %v4770 = vpow.pop %v4769
      %v4771 = vmul.f32 %v4759, 1.442695
      %v4772 = vpow.pop %v4771
      %v4773 = vmul.f32 %v4760, 1.442695
      %v4774 = vpow.pop %v4773
      %v4775 = vmul.f32 %v4761, 1.442695
      %v4776 = vpow.pop %v4775
      %v4777 = vmul.f32 %v4762, 1.442695
      %v4778 = vpow.pop %v4777
      %v4779 = vsel %vm672, %v4764, 0.0
      %4780 = vadd.xlane.f32.xlu0 %v4779
      %v4781 = vpop.xlane.xlu0 %4780
      %v4782 = vsel %vm672, %v4766, 0.0
      %4783 = vadd.xlane.f32.xlu0 %v4782
      %v4784 = vpop.xlane.xlu0 %4783
      %v4785 = vsel %vm672, %v4768, 0.0
      %4786 = vadd.xlane.f32.xlu0 %v4785
      %v4787 = vpop.xlane.xlu0 %4786
      %v4788 = vsel %vm672, %v4770, 0.0
      %4789 = vadd.xlane.f32.xlu0 %v4788
      %v4790 = vpop.xlane.xlu0 %4789
      %v4791 = vsel %vm672, %v4772, 0.0
      %4792 = vadd.xlane.f32.xlu0 %v4791
      %v4793 = vpop.xlane.xlu0 %4792
      %v4794 = vsel %vm672, %v4774, 0.0
      %4795 = vadd.xlane.f32.xlu0 %v4794
      %v4796 = vpop.xlane.xlu0 %4795
      %v4797 = vsel %vm672, %v4776, 0.0
      %4798 = vadd.xlane.f32.xlu0 %v4797
      %v4799 = vpop.xlane.xlu0 %4798
      %v4800 = vsel %vm672, %v4778, 0.0
      %4801 = vadd.xlane.f32.xlu0 %v4800
      %v4802 = vpop.xlane.xlu0 %4801
      %v4803 = vrcp.pop %v4781
      %v4804 = vrcp.pop %v4784
      %v4805 = vrcp.pop %v4787
      %v4806 = vrcp.pop %v4790
      %v4807 = vrcp.pop %v4793
      %v4808 = vrcp.pop %v4796
      %v4809 = vrcp.pop %v4799
      %v4810 = vrcp.pop %v4802
      %v4811 = vmul.f32 %v4764, %v4803
      %v4812 = vmul.f32 %v4766, %v4804
      %v4813 = vmul.f32 %v4768, %v4805
      %v4814 = vmul.f32 %v4770, %v4806
      %v4815 = vmul.f32 %v4772, %v4807
      %v4816 = vmul.f32 %v4774, %v4808
      %v4817 = vmul.f32 %v4776, %v4809
      %v4818 = vmul.f32 %v4778, %v4810
      %v4819 = vpack.c.bf16 %v4812, %v4811
      %v4820 = vpack.c.bf16 %v4814, %v4813
      %v4821 = vpack.c.bf16 %v4816, %v4815
      %v4822 = vpack.c.bf16 %v4818, %v4817
      %4823 = vrot.lane.b32.xlu0 %v4001, 56
      %v4824 = vpop.permute.xlu0 %4823
      %v4827 = vsel %vm672, %v4819, 0
      %4829 = vmatprep.subr.bf16.mxu0 0
      %4830 = vmatpush1.bf16.msra.mxu0 %v4824
      %4831 = vmatprep.subr.bf16.mxu0 0
      %4832 = vmatpush1.bf16.msra.mxu0 0
      %4833 = vmatprep.subr.bf16.mxu0 0
      %4834 = vmatpush1.bf16.msra.mxu0 0
      %4835 = vmatprep.subr.bf16.mxu0 0
      %4836 = vmatpush1.bf16.msra.mxu0 0
      %4837 = vmatprep.subr.bf16.mxu0 0
      %4838 = vmatpush1.bf16.msra.mxu0 0
      %4839 = vmatprep.subr.bf16.mxu0 0
      %4840 = vmatpush1.bf16.msra.mxu0 0
      %4841 = vmatprep.subr.bf16.mxu0 0
      %4842 = vmatpush1.bf16.msra.mxu0 0
      %4843 = vmatprep.subr.bf16.mxu0 0
      %4844 = vmatpush1.bf16.msra.mxu0 0
      %4845 = vmatprep.subr.bf16.mxu0 0
      %4846 = vmatpush1.bf16.msra.mxu0 0
      %4847 = vmatprep.subr.bf16.mxu0 0
      %4848 = vmatpush1.bf16.msra.mxu0 0
      %4849 = vmatprep.subr.bf16.mxu0 0
      %4850 = vmatpush1.bf16.msra.mxu0 0
      %4851 = vmatprep.subr.bf16.mxu0 0
      %4852 = vmatpush1.bf16.msra.mxu0 0
      %4853 = vmatprep.subr.bf16.mxu0 0
      %4854 = vmatpush1.bf16.msra.mxu0 0
      %4855 = vmatprep.subr.bf16.mxu0 0
      %4856 = vmatpush1.bf16.msra.mxu0 0
      %4857 = vmatprep.subr.bf16.mxu0 0
      %4858 = vmatpush1.bf16.msra.mxu0 0
      %4859 = vmatprep.subr.bf16.mxu0 0
      %4860 = vmatpush1.bf16.msra.mxu0 0
      %4861 = vmatprep.mubr.bf16.mxu0 0
      %4862 = vmatmul.mubr.bf16.gmra.mrb[0].mxu0 %v4827
      %v4863 = vpop.f32.mrb[0].mxu0
      %v4864 = vadd.f32 0.0, %v4863
      %v4865 = vpop.f32.mrb[0].mxu0
      %v4866 = vpop.f32.mrb[0].mxu0
      %v4867 = vadd.f32 0.0, %v4866
      %v4868 = vpop.f32.mrb[0].mxu0
      %4869 = vdwg.mxu0
      %4870 = vrot.lane.b32.xlu0 %v4002, 56
      %v4871 = vpop.permute.xlu0 %4870
      %v4874 = vsel %vm672, %v4820, 0
      %4876 = vmatprep.subr.bf16.mxu0 0
      %4877 = vmatpush1.bf16.msra.mxu0 %v4871
      %4878 = vmatprep.subr.bf16.mxu0 0
      %4879 = vmatpush1.bf16.msra.mxu0 0
      %4880 = vmatprep.subr.bf16.mxu0 0
      %4881 = vmatpush1.bf16.msra.mxu0 0
      %4882 = vmatprep.subr.bf16.mxu0 0
      %4883 = vmatpush1.bf16.msra.mxu0 0
      %4884 = vmatprep.subr.bf16.mxu0 0
      %4885 = vmatpush1.bf16.msra.mxu0 0
      %4886 = vmatprep.subr.bf16.mxu0 0
      %4887 = vmatpush1.bf16.msra.mxu0 0
      %4888 = vmatprep.subr.bf16.mxu0 0
      %4889 = vmatpush1.bf16.msra.mxu0 0
      %4890 = vmatprep.subr.bf16.mxu0 0
      %4891 = vmatpush1.bf16.msra.mxu0 0
      %4892 = vmatprep.subr.bf16.mxu0 0
      %4893 = vmatpush1.bf16.msra.mxu0 0
      %4894 = vmatprep.subr.bf16.mxu0 0
      %4895 = vmatpush1.bf16.msra.mxu0 0
      %4896 = vmatprep.subr.bf16.mxu0 0
      %4897 = vmatpush1.bf16.msra.mxu0 0
      %4898 = vmatprep.subr.bf16.mxu0 0
      %4899 = vmatpush1.bf16.msra.mxu0 0
      %4900 = vmatprep.subr.bf16.mxu0 0
      %4901 = vmatpush1.bf16.msra.mxu0 0
      %4902 = vmatprep.subr.bf16.mxu0 0
      %4903 = vmatpush1.bf16.msra.mxu0 0
      %4904 = vmatprep.subr.bf16.mxu0 0
      %4905 = vmatpush1.bf16.msra.mxu0 0
      %4906 = vmatprep.subr.bf16.mxu0 0
      %4907 = vmatpush1.bf16.msra.mxu0 0
      %4908 = vmatprep.mubr.bf16.mxu0 0
      %4909 = vmatmul.mubr.bf16.gmra.mrb[0].mxu0 %v4874
      %v4910 = vpop.f32.mrb[0].mxu0
      %v4911 = vadd.f32 0.0, %v4910
      %v4912 = vpop.f32.mrb[0].mxu0
      %v4913 = vpop.f32.mrb[0].mxu0
      %v4914 = vadd.f32 0.0, %v4913
      %v4915 = vpop.f32.mrb[0].mxu0
      %4916 = vdwg.mxu0
      %4917 = vrot.lane.b32.xlu0 %v4003, 56
      %v4918 = vpop.permute.xlu0 %4917
      %v4921 = vsel %vm672, %v4821, 0
      %4923 = vmatprep.subr.bf16.mxu0 0
      %4924 = vmatpush1.bf16.msra.mxu0 %v4918
      %4925 = vmatprep.subr.bf16.mxu0 0
      %4926 = vmatpush1.bf16.msra.mxu0 0
      %4927 = vmatprep.subr.bf16.mxu0 0
      %4928 = vmatpush1.bf16.msra.mxu0 0
      %4929 = vmatprep.subr.bf16.mxu0 0
      %4930 = vmatpush1.bf16.msra.mxu0 0
      %4931 = vmatprep.subr.bf16.mxu0 0
      %4932 = vmatpush1.bf16.msra.mxu0 0
      %4933 = vmatprep.subr.bf16.mxu0 0
      %4934 = vmatpush1.bf16.msra.mxu0 0
      %4935 = vmatprep.subr.bf16.mxu0 0
      %4936 = vmatpush1.bf16.msra.mxu0 0
      %4937 = vmatprep.subr.bf16.mxu0 0
      %4938 = vmatpush1.bf16.msra.mxu0 0
      %4939 = vmatprep.subr.bf16.mxu0 0
      %4940 = vmatpush1.bf16.msra.mxu0 0
      %4941 = vmatprep.subr.bf16.mxu0 0
      %4942 = vmatpush1.bf16.msra.mxu0 0
      %4943 = vmatprep.subr.bf16.mxu0 0
      %4944 = vmatpush1.bf16.msra.mxu0 0
      %4945 = vmatprep.subr.bf16.mxu0 0
      %4946 = vmatpush1.bf16.msra.mxu0 0
      %4947 = vmatprep.subr.bf16.mxu0 0
      %4948 = vmatpush1.bf16.msra.mxu0 0
      %4949 = vmatprep.subr.bf16.mxu0 0
      %4950 = vmatpush1.bf16.msra.mxu0 0
      %4951 = vmatprep.subr.bf16.mxu0 0
      %4952 = vmatpush1.bf16.msra.mxu0 0
      %4953 = vmatprep.subr.bf16.mxu0 0
      %4954 = vmatpush1.bf16.msra.mxu0 0
      %4955 = vmatprep.mubr.bf16.mxu0 0
      %4956 = vmatmul.mubr.bf16.gmra.mrb[0].mxu0 %v4921
      %v4957 = vpop.f32.mrb[0].mxu0
      %v4958 = vadd.f32 0.0, %v4957
      %v4959 = vpop.f32.mrb[0].mxu0
      %v4960 = vpop.f32.mrb[0].mxu0
      %v4961 = vadd.f32 0.0, %v4960
      %v4962 = vpop.f32.mrb[0].mxu0
      %4963 = vdwg.mxu0
      %4964 = vrot.lane.b32.xlu0 %v4004, 56
      %v4965 = vpop.permute.xlu0 %4964
      %v4968 = vsel %vm672, %v4822, 0
      %4970 = vmatprep.subr.bf16.mxu0 0
      %4971 = vmatpush1.bf16.msra.mxu0 %v4965
      %4972 = vmatprep.subr.bf16.mxu0 0
      %4973 = vmatpush1.bf16.msra.mxu0 0
      %4974 = vmatprep.subr.bf16.mxu0 0
      %4975 = vmatpush1.bf16.msra.mxu0 0
      %4976 = vmatprep.subr.bf16.mxu0 0
      %4977 = vmatpush1.bf16.msra.mxu0 0
      %4978 = vmatprep.subr.bf16.mxu0 0
      %4979 = vmatpush1.bf16.msra.mxu0 0
      %4980 = vmatprep.subr.bf16.mxu0 0
      %4981 = vmatpush1.bf16.msra.mxu0 0
      %4982 = vmatprep.subr.bf16.mxu0 0
      %4983 = vmatpush1.bf16.msra.mxu0 0
      %4984 = vmatprep.subr.bf16.mxu0 0
      %4985 = vmatpush1.bf16.msra.mxu0 0
      %4986 = vmatprep.subr.bf16.mxu0 0
      %4987 = vmatpush1.bf16.msra.mxu0 0
      %4988 = vmatprep.subr.bf16.mxu0 0
      %4989 = vmatpush1.bf16.msra.mxu0 0
      %4990 = vmatprep.subr.bf16.mxu0 0
      %4991 = vmatpush1.bf16.msra.mxu0 0
      %4992 = vmatprep.subr.bf16.mxu0 0
      %4993 = vmatpush1.bf16.msra.mxu0 0
      %4994 = vmatprep.subr.bf16.mxu0 0
      %4995 = vmatpush1.bf16.msra.mxu0 0
      %4996 = vmatprep.subr.bf16.mxu0 0
      %4997 = vmatpush1.bf16.msra.mxu0 0
      %4998 = vmatprep.subr.bf16.mxu0 0
      %4999 = vmatpush1.bf16.msra.mxu0 0
      %5000 = vmatprep.subr.bf16.mxu0 0
      %5001 = vmatpush1.bf16.msra.mxu0 0
      %5002 = vmatprep.mubr.bf16.mxu0 0
      %5003 = vmatmul.mubr.bf16.gmra.mrb[0].mxu0 %v4968
      %v5004 = vpop.f32.mrb[0].mxu0
      %v5005 = vadd.f32 0.0, %v5004
      %v5006 = vpop.f32.mrb[0].mxu0
      %v5007 = vpop.f32.mrb[0].mxu0
      %v5008 = vadd.f32 0.0, %v5007
      %v5009 = vpop.f32.mrb[0].mxu0
      %5010 = vdwg.mxu0
      %v5011 = vpack.c.bf16 %v4867, %v4864
      %v5012 = vpack.c.bf16 %v4914, %v4911
      %v5013 = vpack.c.bf16 %v4961, %v4958
      %v5014 = vpack.c.bf16 %v5008, %v5005
      %v5015 = vpack.c.bf16 %v4007, %v4007
      %v5017 = vsel %vm1011, %v5011, 0
      %v5020 = vsel %vm1011, %v5012, 0
      %v5023 = vsel %vm1011, %v5013, 0
      %v5026 = vsel %vm1011, %v5014, 0
      %v5029 = vsel %vm2027, %v5015, 0
      %5031 = vmatprep.subr.bf16.mxu0 0
      %5032 = vmatpush1.bf16.msra.mxu0 %v5029
      %5033 = vmatprep.subr.bf16.mxu0 0
      %5034 = vmatpush1.bf16.msra.mxu0 0
      %5035 = vmatprep.subr.bf16.mxu0 0
      %5036 = vmatpush1.bf16.msra.mxu0 0
      %5037 = vmatprep.subr.bf16.mxu0 0
      %5038 = vmatpush1.bf16.msra.mxu0 0
      %5039 = vmatprep.subr.bf16.mxu0 0
      %5040 = vmatpush1.bf16.msra.mxu0 0
      %5041 = vmatprep.subr.bf16.mxu0 0
      %5042 = vmatpush1.bf16.msra.mxu0 0
      %5043 = vmatprep.subr.bf16.mxu0 0
      %5044 = vmatpush1.bf16.msra.mxu0 0
      %5045 = vmatprep.subr.bf16.mxu0 0
      %5046 = vmatpush1.bf16.msra.mxu0 0
      %5047 = vmatprep.subr.bf16.mxu0 0
      %5048 = vmatpush1.bf16.msra.mxu0 0
      %5049 = vmatprep.subr.bf16.mxu0 0
      %5050 = vmatpush1.bf16.msra.mxu0 0
      %5051 = vmatprep.subr.bf16.mxu0 0
      %5052 = vmatpush1.bf16.msra.mxu0 0
      %5053 = vmatprep.subr.bf16.mxu0 0
      %5054 = vmatpush1.bf16.msra.mxu0 0
      %5055 = vmatprep.subr.bf16.mxu0 0
      %5056 = vmatpush1.bf16.msra.mxu0 0
      %5057 = vmatprep.subr.bf16.mxu0 0
      %5058 = vmatpush1.bf16.msra.mxu0 0
      %5059 = vmatprep.subr.bf16.mxu0 0
      %5060 = vmatpush1.bf16.msra.mxu0 0
      %5061 = vmatprep.subr.bf16.mxu0 0
      %5062 = vmatpush1.bf16.msra.mxu0 0
      %5063 = vmatprep.mubr.bf16.mxu0 0
      %5064 = vmatmul.mubr.bf16.gmra.mrb[0].mxu0 %v5017
      %v5065 = vpop.f32.mrb[0].mxu0
      %v5066 = vadd.f32 0.0, %v5065
      %v5067 = vpop.f32.mrb[0].mxu0
      %v5068 = vpop.f32.mrb[0].mxu0
      %v5069 = vadd.f32 0.0, %v5068
      %v5070 = vpop.f32.mrb[0].mxu0
      %5071 = vmatprep.mubr.bf16.mxu0 0
      %5072 = vmatmul.mubr.bf16.gmra.mrb[0].mxu0 %v5020
      %v5073 = vpop.f32.mrb[0].mxu0
      %v5074 = vadd.f32 0.0, %v5073
      %v5075 = vpop.f32.mrb[0].mxu0
      %v5076 = vpop.f32.mrb[0].mxu0
      %v5077 = vadd.f32 0.0, %v5076
      %v5078 = vpop.f32.mrb[0].mxu0
      %5079 = vmatprep.mubr.bf16.mxu0 0
      %5080 = vmatmul.mubr.bf16.gmra.mrb[0].mxu0 %v5023
      %v5081 = vpop.f32.mrb[0].mxu0
      %v5082 = vadd.f32 0.0, %v5081
      %v5083 = vpop.f32.mrb[0].mxu0
      %v5084 = vpop.f32.mrb[0].mxu0
      %v5085 = vadd.f32 0.0, %v5084
      %v5086 = vpop.f32.mrb[0].mxu0
      %5087 = vmatprep.mubr.bf16.mxu0 0
      %5088 = vmatmul.mubr.bf16.gmra.mrb[0].mxu0 %v5026
      %v5089 = vpop.f32.mrb[0].mxu0
      %v5090 = vadd.f32 0.0, %v5089
      %v5091 = vpop.f32.mrb[0].mxu0
      %v5092 = vpop.f32.mrb[0].mxu0
      %v5093 = vadd.f32 0.0, %v5092
      %v5094 = vpop.f32.mrb[0].mxu0
      %5095 = vdwg.mxu0
      %v5097 = vsel %vm1011, %v4506, 0
      %v5100 = vsel %vm1011, %v4507, 0
      %v5103 = vsel %vm1011, %v4508, 0
      %v5106 = vsel %vm1011, %v4509, 0
      %v5109 = vsel %vm2027, %v4510, 0
      %5111 = vmatprep.subr.bf16.mxu0 0
      %5112 = vmatpush1.bf16.msra.mxu0 %v5109
      %5113 = vmatprep.subr.bf16.mxu0 0
      %5114 = vmatpush1.bf16.msra.mxu0 0
      %5115 = vmatprep.subr.bf16.mxu0 0
      %5116 = vmatpush1.bf16.msra.mxu0 0
      %5117 = vmatprep.subr.bf16.mxu0 0
      %5118 = vmatpush1.bf16.msra.mxu0 0
      %5119 = vmatprep.subr.bf16.mxu0 0
      %5120 = vmatpush1.bf16.msra.mxu0 0
      %5121 = vmatprep.subr.bf16.mxu0 0
      %5122 = vmatpush1.bf16.msra.mxu0 0
      %5123 = vmatprep.subr.bf16.mxu0 0
      %5124 = vmatpush1.bf16.msra.mxu0 0
      %5125 = vmatprep.subr.bf16.mxu0 0
      %5126 = vmatpush1.bf16.msra.mxu0 0
      %5127 = vmatprep.subr.bf16.mxu0 0
      %5128 = vmatpush1.bf16.msra.mxu0 0
      %5129 = vmatprep.subr.bf16.mxu0 0
      %5130 = vmatpush1.bf16.msra.mxu0 0
      %5131 = vmatprep.subr.bf16.mxu0 0
      %5132 = vmatpush1.bf16.msra.mxu0 0
      %5133 = vmatprep.subr.bf16.mxu0 0
      %5134 = vmatpush1.bf16.msra.mxu0 0
      %5135 = vmatprep.subr.bf16.mxu0 0
      %5136 = vmatpush1.bf16.msra.mxu0 0
      %5137 = vmatprep.subr.bf16.mxu0 0
      %5138 = vmatpush1.bf16.msra.mxu0 0
      %5139 = vmatprep.subr.bf16.mxu0 0
      %5140 = vmatpush1.bf16.msra.mxu0 0
      %5141 = vmatprep.subr.bf16.mxu0 0
      %5142 = vmatpush1.bf16.msra.mxu0 0
      %5143 = vmatprep.mubr.bf16.mxu0 0
      %5144 = vmatmul.mubr.bf16.gmra.mrb[0].mxu0 %v5097
      %v5145 = vpop.f32.mrb[0].mxu0
      %v5146 = vadd.f32 %v5066, %v5145
      %v5147 = vpop.f32.mrb[0].mxu0
      %v5148 = vpop.f32.mrb[0].mxu0
      %v5149 = vadd.f32 %v5069, %v5148
      %v5150 = vpop.f32.mrb[0].mxu0
      %5151 = vmatprep.mubr.bf16.mxu0 0
      %5152 = vmatmul.mubr.bf16.gmra.mrb[0].mxu0 %v5100
      %v5153 = vpop.f32.mrb[0].mxu0
      %v5154 = vadd.f32 %v5074, %v5153
      %v5155 = vpop.f32.mrb[0].mxu0
      %v5156 = vpop.f32.mrb[0].mxu0
      %v5157 = vadd.f32 %v5077, %v5156
      %v5158 = vpop.f32.mrb[0].mxu0
      %5159 = vmatprep.mubr.bf16.mxu0 0
      %5160 = vmatmul.mubr.bf16.gmra.mrb[0].mxu0 %v5103
      %v5161 = vpop.f32.mrb[0].mxu0
      %v5162 = vadd.f32 %v5082, %v5161
      %v5163 = vpop.f32.mrb[0].mxu0
      %v5164 = vpop.f32.mrb[0].mxu0
      %v5165 = vadd.f32 %v5085, %v5164
      %v5166 = vpop.f32.mrb[0].mxu0
      %5167 = vmatprep.mubr.bf16.mxu0 0
      %5168 = vmatmul.mubr.bf16.gmra.mrb[0].mxu0 %v5106
      %v5169 = vpop.f32.mrb[0].mxu0
      %v5170 = vadd.f32 %v5090, %v5169
      %v5171 = vpop.f32.mrb[0].mxu0
      %v5172 = vpop.f32.mrb[0].mxu0
      %v5173 = vadd.f32 %v5093, %v5172
      %v5174 = vpop.f32.mrb[0].mxu0
      %5175 = vdwg.mxu0
      %5176 = vrot.lane.b32.xlu0 %v4001, 112
      %v5177 = vpop.permute.xlu0 %5176
      %5178 = vrot.lane.b32.xlu0 %v4001, 80
      %v5179 = vpop.permute.xlu0 %5178
      %v5181 = vsel %vm1011, %v5177, 0
      %v5184 = vsel %vm1011, %v5179, 0
      %5186 = vmatprep.subr.bf16.mxu0 0
      %5187 = vmatpush1.bf16.xpose.msra.mxu0 %v5184
      %5188 = vmatprep.subr.bf16.mxu0 0
      %5189 = vmatpush1.bf16.xpose.msra.mxu0 0
      %5190 = vmatprep.subr.bf16.mxu0 0
      %5191 = vmatpush1.bf16.xpose.msra.mxu0 0
      %5192 = vmatprep.subr.bf16.mxu0 0
      %5193 = vmatpush1.bf16.xpose.msra.mxu0 0
      %5194 = vmatprep.subr.bf16.mxu0 0
      %5195 = vmatpush1.bf16.xpose.msra.mxu0 0
      %5196 = vmatprep.subr.bf16.mxu0 0
      %5197 = vmatpush1.bf16.xpose.msra.mxu0 0
      %5198 = vmatprep.subr.bf16.mxu0 0
      %5199 = vmatpush1.bf16.xpose.msra.mxu0 0
      %5200 = vmatprep.subr.bf16.mxu0 0
      %5201 = vmatpush1.bf16.xpose.msra.mxu0 0
      %5202 = vmatprep.subr.bf16.mxu0 0
      %5203 = vmatpush1.bf16.xpose.msra.mxu0 0
      %5204 = vmatprep.subr.bf16.mxu0 0
      %5205 = vmatpush1.bf16.xpose.msra.mxu0 0
      %5206 = vmatprep.subr.bf16.mxu0 0
      %5207 = vmatpush1.bf16.xpose.msra.mxu0 0
      %5208 = vmatprep.subr.bf16.mxu0 0
      %5209 = vmatpush1.bf16.xpose.msra.mxu0 0
      %5210 = vmatprep.subr.bf16.mxu0 0
      %5211 = vmatpush1.bf16.xpose.msra.mxu0 0
      %5212 = vmatprep.subr.bf16.mxu0 0
      %5213 = vmatpush1.bf16.xpose.msra.mxu0 0
      %5214 = vmatprep.subr.bf16.mxu0 0
      %5215 = vmatpush1.bf16.xpose.msra.mxu0 0
      %5216 = vmatprep.subr.bf16.mxu0 0
      %5217 = vmatpush1.bf16.xpose.msra.mxu0 0
      %5218 = vmatprep.mubr.bf16.mxu0 0
      %5219 = vmatmul.mubr.bf16.gmra.mrb[0].mxu0 %v5181
      %v5220 = vpop.f32.mrb[0].mxu0
      %v5221 = vadd.f32 0.0, %v5220
      %v5222 = vpop.f32.mrb[0].mxu0
      %v5223 = vpop.f32.mrb[0].mxu0
      %v5224 = vadd.f32 0.0, %v5223
      %v5225 = vpop.f32.mrb[0].mxu0
      %5226 = vdwg.mxu0
      %5227 = vrot.lane.b32.xlu0 %v4002, 112
      %v5228 = vpop.permute.xlu0 %5227
      %5229 = vrot.lane.b32.xlu0 %v4002, 80
      %v5230 = vpop.permute.xlu0 %5229
      %v5232 = vsel %vm1011, %v5228, 0
      %v5235 = vsel %vm1011, %v5230, 0
      %5237 = vmatprep.subr.bf16.mxu0 0
      %5238 = vmatpush1.bf16.xpose.msra.mxu0 %v5235
      %5239 = vmatprep.subr.bf16.mxu0 0
      %5240 = vmatpush1.bf16.xpose.msra.mxu0 0
      %5241 = vmatprep.subr.bf16.mxu0 0
      %5242 = vmatpush1.bf16.xpose.msra.mxu0 0
      %5243 = vmatprep.subr.bf16.mxu0 0
      %5244 = vmatpush1.bf16.xpose.msra.mxu0 0
      %5245 = vmatprep.subr.bf16.mxu0 0
      %5246 = vmatpush1.bf16.xpose.msra.mxu0 0
      %5247 = vmatprep.subr.bf16.mxu0 0
      %5248 = vmatpush1.bf16.xpose.msra.mxu0 0
      %5249 = vmatprep.subr.bf16.mxu0 0
      %5250 = vmatpush1.bf16.xpose.msra.mxu0 0
      %5251 = vmatprep.subr.bf16.mxu0 0
      %5252 = vmatpush1.bf16.xpose.msra.mxu0 0
      %5253 = vmatprep.subr.bf16.mxu0 0
      %5254 = vmatpush1.bf16.xpose.msra.mxu0 0
      %5255 = vmatprep.subr.bf16.mxu0 0
      %5256 = vmatpush1.bf16.xpose.msra.mxu0 0
      %5257 = vmatprep.subr.bf16.mxu0 0
      %5258 = vmatpush1.bf16.xpose.msra.mxu0 0
      %5259 = vmatprep.subr.bf16.mxu0 0
      %5260 = vmatpush1.bf16.xpose.msra.mxu0 0
      %5261 = vmatprep.subr.bf16.mxu0 0
      %5262 = vmatpush1.bf16.xpose.msra.mxu0 0
      %5263 = vmatprep.subr.bf16.mxu0 0
      %5264 = vmatpush1.bf16.xpose.msra.mxu0 0
      %5265 = vmatprep.subr.bf16.mxu0 0
      %5266 = vmatpush1.bf16.xpose.msra.mxu0 0
      %5267 = vmatprep.subr.bf16.mxu0 0
      %5268 = vmatpush1.bf16.xpose.msra.mxu0 0
      %5269 = vmatprep.mubr.bf16.mxu0 0
      %5270 = vmatmul.mubr.bf16.gmra.mrb[0].mxu0 %v5232
      %v5271 = vpop.f32.mrb[0].mxu0
      %v5272 = vadd.f32 0.0, %v5271
      %v5273 = vpop.f32.mrb[0].mxu0
      %v5274 = vpop.f32.mrb[0].mxu0
      %v5275 = vadd.f32 0.0, %v5274
      %v5276 = vpop.f32.mrb[0].mxu0
      %5277 = vdwg.mxu0
      %5278 = vrot.lane.b32.xlu0 %v4003, 112
      %v5279 = vpop.permute.xlu0 %5278
      %5280 = vrot.lane.b32.xlu0 %v4003, 80
      %v5281 = vpop.permute.xlu0 %5280
      %v5283 = vsel %vm1011, %v5279, 0
      %v5286 = vsel %vm1011, %v5281, 0
      %5288 = vmatprep.subr.bf16.mxu0 0
      %5289 = vmatpush1.bf16.xpose.msra.mxu0 %v5286
      %5290 = vmatprep.subr.bf16.mxu0 0
      %5291 = vmatpush1.bf16.xpose.msra.mxu0 0
      %5292 = vmatprep.subr.bf16.mxu0 0
      %5293 = vmatpush1.bf16.xpose.msra.mxu0 0
      %5294 = vmatprep.subr.bf16.mxu0 0
      %5295 = vmatpush1.bf16.xpose.msra.mxu0 0
      %5296 = vmatprep.subr.bf16.mxu0 0
      %5297 = vmatpush1.bf16.xpose.msra.mxu0 0
      %5298 = vmatprep.subr.bf16.mxu0 0
      %5299 = vmatpush1.bf16.xpose.msra.mxu0 0
      %5300 = vmatprep.subr.bf16.mxu0 0
      %5301 = vmatpush1.bf16.xpose.msra.mxu0 0
      %5302 = vmatprep.subr.bf16.mxu0 0
      %5303 = vmatpush1.bf16.xpose.msra.mxu0 0
      %5304 = vmatprep.subr.bf16.mxu0 0
      %5305 = vmatpush1.bf16.xpose.msra.mxu0 0
      %5306 = vmatprep.subr.bf16.mxu0 0
      %5307 = vmatpush1.bf16.xpose.msra.mxu0 0
      %5308 = vmatprep.subr.bf16.mxu0 0
      %5309 = vmatpush1.bf16.xpose.msra.mxu0 0
      %5310 = vmatprep.subr.bf16.mxu0 0
      %5311 = vmatpush1.bf16.xpose.msra.mxu0 0
      %5312 = vmatprep.subr.bf16.mxu0 0
      %5313 = vmatpush1.bf16.xpose.msra.mxu0 0
      %5314 = vmatprep.subr.bf16.mxu0 0
      %5315 = vmatpush1.bf16.xpose.msra.mxu0 0
      %5316 = vmatprep.subr.bf16.mxu0 0
      %5317 = vmatpush1.bf16.xpose.msra.mxu0 0
      %5318 = vmatprep.subr.bf16.mxu0 0
      %5319 = vmatpush1.bf16.xpose.msra.mxu0 0
      %5320 = vmatprep.mubr.bf16.mxu0 0
      %5321 = vmatmul.mubr.bf16.gmra.mrb[0].mxu0 %v5283
      %v5322 = vpop.f32.mrb[0].mxu0
      %v5323 = vadd.f32 0.0, %v5322
      %v5324 = vpop.f32.mrb[0].mxu0
      %v5325 = vpop.f32.mrb[0].mxu0
      %v5326 = vadd.f32 0.0, %v5325
      %v5327 = vpop.f32.mrb[0].mxu0
      %5328 = vdwg.mxu0
      %5329 = vrot.lane.b32.xlu0 %v4004, 112
      %v5330 = vpop.permute.xlu0 %5329
      %5331 = vrot.lane.b32.xlu0 %v4004, 80
      %v5332 = vpop.permute.xlu0 %5331
      %v5334 = vsel %vm1011, %v5330, 0
      %v5337 = vsel %vm1011, %v5332, 0
      %5339 = vmatprep.subr.bf16.mxu0 0
      %5340 = vmatpush1.bf16.xpose.msra.mxu0 %v5337
      %5341 = vmatprep.subr.bf16.mxu0 0
      %5342 = vmatpush1.bf16.xpose.msra.mxu0 0
      %5343 = vmatprep.subr.bf16.mxu0 0
      %5344 = vmatpush1.bf16.xpose.msra.mxu0 0
      %5345 = vmatprep.subr.bf16.mxu0 0
      %5346 = vmatpush1.bf16.xpose.msra.mxu0 0
      %5347 = vmatprep.subr.bf16.mxu0 0
      %5348 = vmatpush1.bf16.xpose.msra.mxu0 0
      %5349 = vmatprep.subr.bf16.mxu0 0
      %5350 = vmatpush1.bf16.xpose.msra.mxu0 0
      %5351 = vmatprep.subr.bf16.mxu0 0
      %5352 = vmatpush1.bf16.xpose.msra.mxu0 0
      %5353 = vmatprep.subr.bf16.mxu0 0
      %5354 = vmatpush1.bf16.xpose.msra.mxu0 0
      %5355 = vmatprep.subr.bf16.mxu0 0
      %5356 = vmatpush1.bf16.xpose.msra.mxu0 0
      %5357 = vmatprep.subr.bf16.mxu0 0
      %5358 = vmatpush1.bf16.xpose.msra.mxu0 0
      %5359 = vmatprep.subr.bf16.mxu0 0
      %5360 = vmatpush1.bf16.xpose.msra.mxu0 0
      %5361 = vmatprep.subr.bf16.mxu0 0
      %5362 = vmatpush1.bf16.xpose.msra.mxu0 0
      %5363 = vmatprep.subr.bf16.mxu0 0
      %5364 = vmatpush1.bf16.xpose.msra.mxu0 0
      %5365 = vmatprep.subr.bf16.mxu0 0
      %5366 = vmatpush1.bf16.xpose.msra.mxu0 0
      %5367 = vmatprep.subr.bf16.mxu0 0
      %5368 = vmatpush1.bf16.xpose.msra.mxu0 0
      %5369 = vmatprep.subr.bf16.mxu0 0
      %5370 = vmatpush1.bf16.xpose.msra.mxu0 0
      %5371 = vmatprep.mubr.bf16.mxu0 0
      %5372 = vmatmul.mubr.bf16.gmra.mrb[0].mxu0 %v5334
      %v5373 = vpop.f32.mrb[0].mxu0
      %v5374 = vadd.f32 0.0, %v5373
      %v5375 = vpop.f32.mrb[0].mxu0
      %v5376 = vpop.f32.mrb[0].mxu0
      %v5377 = vadd.f32 0.0, %v5376
      %v5378 = vpop.f32.mrb[0].mxu0
      %5379 = vdwg.mxu0
      %v5380 = vmul.f32 %v5221, 0.35355338
      %v5381 = vmul.f32 %v5224, 0.35355338
      %v5382 = vmul.f32 %v5272, 0.35355338
      %v5383 = vmul.f32 %v5275, 0.35355338
      %v5384 = vmul.f32 %v5323, 0.35355338
      %v5385 = vmul.f32 %v5326, 0.35355338
      %v5386 = vmul.f32 %v5374, 0.35355338
      %v5387 = vmul.f32 %v5377, 0.35355338
      %v5388 = vadd.f32 %v5380, %v894
      %v5389 = vadd.f32 %v5381, %v894
      %v5390 = vadd.f32 %v5382, %v894
      %v5391 = vadd.f32 %v5383, %v894
      %v5392 = vadd.f32 %v5384, %v894
      %v5393 = vadd.f32 %v5385, %v894
      %v5394 = vadd.f32 %v5386, %v894
      %v5395 = vadd.f32 %v5387, %v894
      %v5396 = vsel %vm672, %v5388, -inf
      %5397 = vmax.xlane.f32.xlu0 %v5396
      %v5398 = vpop.xlane.xlu0 %5397
      %v5399 = vsel %vm672, %v5389, -inf
      %5400 = vmax.xlane.f32.xlu0 %v5399
      %v5401 = vpop.xlane.xlu0 %5400
      %v5402 = vsel %vm672, %v5390, -inf
      %5403 = vmax.xlane.f32.xlu0 %v5402
      %v5404 = vpop.xlane.xlu0 %5403
      %v5405 = vsel %vm672, %v5391, -inf
      %5406 = vmax.xlane.f32.xlu0 %v5405
      %v5407 = vpop.xlane.xlu0 %5406
      %v5408 = vsel %vm672, %v5392, -inf
      %5409 = vmax.xlane.f32.xlu0 %v5408
      %v5410 = vpop.xlane.xlu0 %5409
      %v5411 = vsel %vm672, %v5393, -inf
      %5412 = vmax.xlane.f32.xlu0 %v5411
      %v5413 = vpop.xlane.xlu0 %5412
      %v5414 = vsel %vm672, %v5394, -inf
      %5415 = vmax.xlane.f32.xlu0 %v5414
      %v5416 = vpop.xlane.xlu0 %5415
      %v5417 = vsel %vm672, %v5395, -inf
      %5418 = vmax.xlane.f32.xlu0 %v5417
      %v5419 = vpop.xlane.xlu0 %5418
      %v5420 = vsub.f32 %v5388, %v5398
      %v5421 = vsub.f32 %v5389, %v5401
      %v5422 = vsub.f32 %v5390, %v5404
      %v5423 = vsub.f32 %v5391, %v5407
      %v5424 = vsub.f32 %v5392, %v5410
      %v5425 = vsub.f32 %v5393, %v5413
      %v5426 = vsub.f32 %v5394, %v5416
      %v5427 = vsub.f32 %v5395, %v5419
      %v5428 = vmul.f32 %v5420, 1.442695
      %v5429 = vpow.pop %v5428
      %v5430 = vmul.f32 %v5421, 1.442695
      %v5431 = vpow.pop %v5430
      %v5432 = vmul.f32 %v5422, 1.442695
      %v5433 = vpow.pop %v5432
      %v5434 = vmul.f32 %v5423, 1.442695
      %v5435 = vpow.pop %v5434
      %v5436 = vmul.f32 %v5424, 1.442695
      %v5437 = vpow.pop %v5436
      %v5438 = vmul.f32 %v5425, 1.442695
      %v5439 = vpow.pop %v5438
      %v5440 = vmul.f32 %v5426, 1.442695
      %v5441 = vpow.pop %v5440
      %v5442 = vmul.f32 %v5427, 1.442695
      %v5443 = vpow.pop %v5442
      %v5444 = vsel %vm672, %v5429, 0.0
      %5445 = vadd.xlane.f32.xlu0 %v5444
      %v5446 = vpop.xlane.xlu0 %5445
      %v5447 = vsel %vm672, %v5431, 0.0
      %5448 = vadd.xlane.f32.xlu0 %v5447
      %v5449 = vpop.xlane.xlu0 %5448
      %v5450 = vsel %vm672, %v5433, 0.0
      %5451 = vadd.xlane.f32.xlu0 %v5450
      %v5452 = vpop.xlane.xlu0 %5451
      %v5453 = vsel %vm672, %v5435, 0.0
      %5454 = vadd.xlane.f32.xlu0 %v5453
      %v5455 = vpop.xlane.xlu0 %5454
      %v5456 = vsel %vm672, %v5437, 0.0
      %5457 = vadd.xlane.f32.xlu0 %v5456
      %v5458 = vpop.xlane.xlu0 %5457
      %v5459 = vsel %vm672, %v5439, 0.0
      %5460 = vadd.xlane.f32.xlu0 %v5459
      %v5461 = vpop.xlane.xlu0 %5460
      %v5462 = vsel %vm672, %v5441, 0.0
      %5463 = vadd.xlane.f32.xlu0 %v5462
      %v5464 = vpop.xlane.xlu0 %5463
      %v5465 = vsel %vm672, %v5443, 0.0
      %5466 = vadd.xlane.f32.xlu0 %v5465
      %v5467 = vpop.xlane.xlu0 %5466
      %v5468 = vrcp.pop %v5446
      %v5469 = vrcp.pop %v5449
      %v5470 = vrcp.pop %v5452
      %v5471 = vrcp.pop %v5455
      %v5472 = vrcp.pop %v5458
      %v5473 = vrcp.pop %v5461
      %v5474 = vrcp.pop %v5464
      %v5475 = vrcp.pop %v5467
      %v5476 = vmul.f32 %v5429, %v5468
      %v5477 = vmul.f32 %v5431, %v5469
      %v5478 = vmul.f32 %v5433, %v5470
      %v5479 = vmul.f32 %v5435, %v5471
      %v5480 = vmul.f32 %v5437, %v5472
      %v5481 = vmul.f32 %v5439, %v5473
      %v5482 = vmul.f32 %v5441, %v5474
      %v5483 = vmul.f32 %v5443, %v5475
      %v5484 = vpack.c.bf16 %v5477, %v5476
      %v5485 = vpack.c.bf16 %v5479, %v5478
      %v5486 = vpack.c.bf16 %v5481, %v5480
      %v5487 = vpack.c.bf16 %v5483, %v5482
      %5488 = vrot.lane.b32.xlu0 %v4001, 48
      %v5489 = vpop.permute.xlu0 %5488
      %v5492 = vsel %vm672, %v5484, 0
      %5494 = vmatprep.subr.bf16.mxu0 0
      %5495 = vmatpush1.bf16.msra.mxu0 %v5489
      %5496 = vmatprep.subr.bf16.mxu0 0
      %5497 = vmatpush1.bf16.msra.mxu0 0
      %5498 = vmatprep.subr.bf16.mxu0 0
      %5499 = vmatpush1.bf16.msra.mxu0 0
      %5500 = vmatprep.subr.bf16.mxu0 0
      %5501 = vmatpush1.bf16.msra.mxu0 0
      %5502 = vmatprep.subr.bf16.mxu0 0
      %5503 = vmatpush1.bf16.msra.mxu0 0
      %5504 = vmatprep.subr.bf16.mxu0 0
      %5505 = vmatpush1.bf16.msra.mxu0 0
      %5506 = vmatprep.subr.bf16.mxu0 0
      %5507 = vmatpush1.bf16.msra.mxu0 0
      %5508 = vmatprep.subr.bf16.mxu0 0
      %5509 = vmatpush1.bf16.msra.mxu0 0
      %5510 = vmatprep.subr.bf16.mxu0 0
      %5511 = vmatpush1.bf16.msra.mxu0 0
      %5512 = vmatprep.subr.bf16.mxu0 0
      %5513 = vmatpush1.bf16.msra.mxu0 0
      %5514 = vmatprep.subr.bf16.mxu0 0
      %5515 = vmatpush1.bf16.msra.mxu0 0
      %5516 = vmatprep.subr.bf16.mxu0 0
      %5517 = vmatpush1.bf16.msra.mxu0 0
      %5518 = vmatprep.subr.bf16.mxu0 0
      %5519 = vmatpush1.bf16.msra.mxu0 0
      %5520 = vmatprep.subr.bf16.mxu0 0
      %5521 = vmatpush1.bf16.msra.mxu0 0
      %5522 = vmatprep.subr.bf16.mxu0 0
      %5523 = vmatpush1.bf16.msra.mxu0 0
      %5524 = vmatprep.subr.bf16.mxu0 0
      %5525 = vmatpush1.bf16.msra.mxu0 0
      %5526 = vmatprep.mubr.bf16.mxu0 0
      %5527 = vmatmul.mubr.bf16.gmra.mrb[0].mxu0 %v5492
      %v5528 = vpop.f32.mrb[0].mxu0
      %v5529 = vadd.f32 0.0, %v5528
      %v5530 = vpop.f32.mrb[0].mxu0
      %v5531 = vpop.f32.mrb[0].mxu0
      %v5532 = vadd.f32 0.0, %v5531
      %v5533 = vpop.f32.mrb[0].mxu0
      %5534 = vdwg.mxu0
      %5535 = vrot.lane.b32.xlu0 %v4002, 48
      %v5536 = vpop.permute.xlu0 %5535
      %v5539 = vsel %vm672, %v5485, 0
      %5541 = vmatprep.subr.bf16.mxu0 0
      %5542 = vmatpush1.bf16.msra.mxu0 %v5536
      %5543 = vmatprep.subr.bf16.mxu0 0
      %5544 = vmatpush1.bf16.msra.mxu0 0
      %5545 = vmatprep.subr.bf16.mxu0 0
      %5546 = vmatpush1.bf16.msra.mxu0 0
      %5547 = vmatprep.subr.bf16.mxu0 0
      %5548 = vmatpush1.bf16.msra.mxu0 0
      %5549 = vmatprep.subr.bf16.mxu0 0
      %5550 = vmatpush1.bf16.msra.mxu0 0
      %5551 = vmatprep.subr.bf16.mxu0 0
      %5552 = vmatpush1.bf16.msra.mxu0 0
      %5553 = vmatprep.subr.bf16.mxu0 0
      %5554 = vmatpush1.bf16.msra.mxu0 0
      %5555 = vmatprep.subr.bf16.mxu0 0
      %5556 = vmatpush1.bf16.msra.mxu0 0
      %5557 = vmatprep.subr.bf16.mxu0 0
      %5558 = vmatpush1.bf16.msra.mxu0 0
      %5559 = vmatprep.subr.bf16.mxu0 0
      %5560 = vmatpush1.bf16.msra.mxu0 0
      %5561 = vmatprep.subr.bf16.mxu0 0
      %5562 = vmatpush1.bf16.msra.mxu0 0
      %5563 = vmatprep.subr.bf16.mxu0 0
      %5564 = vmatpush1.bf16.msra.mxu0 0
      %5565 = vmatprep.subr.bf16.mxu0 0
      %5566 = vmatpush1.bf16.msra.mxu0 0
      %5567 = vmatprep.subr.bf16.mxu0 0
      %5568 = vmatpush1.bf16.msra.mxu0 0
      %5569 = vmatprep.subr.bf16.mxu0 0
      %5570 = vmatpush1.bf16.msra.mxu0 0
      %5571 = vmatprep.subr.bf16.mxu0 0
      %5572 = vmatpush1.bf16.msra.mxu0 0
      %5573 = vmatprep.mubr.bf16.mxu0 0
      %5574 = vmatmul.mubr.bf16.gmra.mrb[0].mxu0 %v5539
      %v5575 = vpop.f32.mrb[0].mxu0
      %v5576 = vadd.f32 0.0, %v5575
      %v5577 = vpop.f32.mrb[0].mxu0
      %v5578 = vpop.f32.mrb[0].mxu0
      %v5579 = vadd.f32 0.0, %v5578
      %v5580 = vpop.f32.mrb[0].mxu0
      %5581 = vdwg.mxu0
      %5582 = vrot.lane.b32.xlu0 %v4003, 48
      %v5583 = vpop.permute.xlu0 %5582
      %v5586 = vsel %vm672, %v5486, 0
      %5588 = vmatprep.subr.bf16.mxu0 0
      %5589 = vmatpush1.bf16.msra.mxu0 %v5583
      %5590 = vmatprep.subr.bf16.mxu0 0
      %5591 = vmatpush1.bf16.msra.mxu0 0
      %5592 = vmatprep.subr.bf16.mxu0 0
      %5593 = vmatpush1.bf16.msra.mxu0 0
      %5594 = vmatprep.subr.bf16.mxu0 0
      %5595 = vmatpush1.bf16.msra.mxu0 0
      %5596 = vmatprep.subr.bf16.mxu0 0
      %5597 = vmatpush1.bf16.msra.mxu0 0
      %5598 = vmatprep.subr.bf16.mxu0 0
      %5599 = vmatpush1.bf16.msra.mxu0 0
      %5600 = vmatprep.subr.bf16.mxu0 0
      %5601 = vmatpush1.bf16.msra.mxu0 0
      %5602 = vmatprep.subr.bf16.mxu0 0
      %5603 = vmatpush1.bf16.msra.mxu0 0
      %5604 = vmatprep.subr.bf16.mxu0 0
      %5605 = vmatpush1.bf16.msra.mxu0 0
      %5606 = vmatprep.subr.bf16.mxu0 0
      %5607 = vmatpush1.bf16.msra.mxu0 0
      %5608 = vmatprep.subr.bf16.mxu0 0
      %5609 = vmatpush1.bf16.msra.mxu0 0
      %5610 = vmatprep.subr.bf16.mxu0 0
      %5611 = vmatpush1.bf16.msra.mxu0 0
      %5612 = vmatprep.subr.bf16.mxu0 0
      %5613 = vmatpush1.bf16.msra.mxu0 0
      %5614 = vmatprep.subr.bf16.mxu0 0
      %5615 = vmatpush1.bf16.msra.mxu0 0
      %5616 = vmatprep.subr.bf16.mxu0 0
      %5617 = vmatpush1.bf16.msra.mxu0 0
      %5618 = vmatprep.subr.bf16.mxu0 0
      %5619 = vmatpush1.bf16.msra.mxu0 0
      %5620 = vmatprep.mubr.bf16.mxu0 0
      %5621 = vmatmul.mubr.bf16.gmra.mrb[0].mxu0 %v5586
      %v5622 = vpop.f32.mrb[0].mxu0
      %v5623 = vadd.f32 0.0, %v5622
      %v5624 = vpop.f32.mrb[0].mxu0
      %v5625 = vpop.f32.mrb[0].mxu0
      %v5626 = vadd.f32 0.0, %v5625
      %v5627 = vpop.f32.mrb[0].mxu0
      %5628 = vdwg.mxu0
      %5629 = vrot.lane.b32.xlu0 %v4004, 48
      %v5630 = vpop.permute.xlu0 %5629
      %v5633 = vsel %vm672, %v5487, 0
      %5635 = vmatprep.subr.bf16.mxu0 0
      %5636 = vmatpush1.bf16.msra.mxu0 %v5630
      %5637 = vmatprep.subr.bf16.mxu0 0
      %5638 = vmatpush1.bf16.msra.mxu0 0
      %5639 = vmatprep.subr.bf16.mxu0 0
      %5640 = vmatpush1.bf16.msra.mxu0 0
      %5641 = vmatprep.subr.bf16.mxu0 0
      %5642 = vmatpush1.bf16.msra.mxu0 0
      %5643 = vmatprep.subr.bf16.mxu0 0
      %5644 = vmatpush1.bf16.msra.mxu0 0
      %5645 = vmatprep.subr.bf16.mxu0 0
      %5646 = vmatpush1.bf16.msra.mxu0 0
      %5647 = vmatprep.subr.bf16.mxu0 0
      %5648 = vmatpush1.bf16.msra.mxu0 0
      %5649 = vmatprep.subr.bf16.mxu0 0
      %5650 = vmatpush1.bf16.msra.mxu0 0
      %5651 = vmatprep.subr.bf16.mxu0 0
      %5652 = vmatpush1.bf16.msra.mxu0 0
      %5653 = vmatprep.subr.bf16.mxu0 0
      %5654 = vmatpush1.bf16.msra.mxu0 0
      %5655 = vmatprep.subr.bf16.mxu0 0
      %5656 = vmatpush1.bf16.msra.mxu0 0
      %5657 = vmatprep.subr.bf16.mxu0 0
      %5658 = vmatpush1.bf16.msra.mxu0 0
      %5659 = vmatprep.subr.bf16.mxu0 0
      %5660 = vmatpush1.bf16.msra.mxu0 0
      %5661 = vmatprep.subr.bf16.mxu0 0
      %5662 = vmatpush1.bf16.msra.mxu0 0
      %5663 = vmatprep.subr.bf16.mxu0 0
      %5664 = vmatpush1.bf16.msra.mxu0 0
      %5665 = vmatprep.subr.bf16.mxu0 0
      %5666 = vmatpush1.bf16.msra.mxu0 0
      %5667 = vmatprep.mubr.bf16.mxu0 0
      %5668 = vmatmul.mubr.bf16.gmra.mrb[0].mxu0 %v5633
      %v5669 = vpop.f32.mrb[0].mxu0
      %v5670 = vadd.f32 0.0, %v5669
      %v5671 = vpop.f32.mrb[0].mxu0
      %v5672 = vpop.f32.mrb[0].mxu0
      %v5673 = vadd.f32 0.0, %v5672
      %v5674 = vpop.f32.mrb[0].mxu0
      %5675 = vdwg.mxu0
      %v5676 = vpack.c.bf16 %v5532, %v5529
      %v5677 = vpack.c.bf16 %v5579, %v5576
      %v5678 = vpack.c.bf16 %v5626, %v5623
      %v5679 = vpack.c.bf16 %v5673, %v5670
      %v5680 = vpack.c.bf16 %v4008, %v4008
      %v5682 = vsel %vm1011, %v5676, 0
      %v5685 = vsel %vm1011, %v5677, 0
      %v5688 = vsel %vm1011, %v5678, 0
      %v5691 = vsel %vm1011, %v5679, 0
      %v5694 = vsel %vm2027, %v5680, 0
      %5696 = vmatprep.subr.bf16.mxu0 0
      %5697 = vmatpush1.bf16.msra.mxu0 %v5694
      %5698 = vmatprep.subr.bf16.mxu0 0
      %5699 = vmatpush1.bf16.msra.mxu0 0
      %5700 = vmatprep.subr.bf16.mxu0 0
      %5701 = vmatpush1.bf16.msra.mxu0 0
      %5702 = vmatprep.subr.bf16.mxu0 0
      %5703 = vmatpush1.bf16.msra.mxu0 0
      %5704 = vmatprep.subr.bf16.mxu0 0
      %5705 = vmatpush1.bf16.msra.mxu0 0
      %5706 = vmatprep.subr.bf16.mxu0 0
      %5707 = vmatpush1.bf16.msra.mxu0 0
      %5708 = vmatprep.subr.bf16.mxu0 0
      %5709 = vmatpush1.bf16.msra.mxu0 0
      %5710 = vmatprep.subr.bf16.mxu0 0
      %5711 = vmatpush1.bf16.msra.mxu0 0
      %5712 = vmatprep.subr.bf16.mxu0 0
      %5713 = vmatpush1.bf16.msra.mxu0 0
      %5714 = vmatprep.subr.bf16.mxu0 0
      %5715 = vmatpush1.bf16.msra.mxu0 0
      %5716 = vmatprep.subr.bf16.mxu0 0
      %5717 = vmatpush1.bf16.msra.mxu0 0
      %5718 = vmatprep.subr.bf16.mxu0 0
      %5719 = vmatpush1.bf16.msra.mxu0 0
      %5720 = vmatprep.subr.bf16.mxu0 0
      %5721 = vmatpush1.bf16.msra.mxu0 0
      %5722 = vmatprep.subr.bf16.mxu0 0
      %5723 = vmatpush1.bf16.msra.mxu0 0
      %5724 = vmatprep.subr.bf16.mxu0 0
      %5725 = vmatpush1.bf16.msra.mxu0 0
      %5726 = vmatprep.subr.bf16.mxu0 0
      %5727 = vmatpush1.bf16.msra.mxu0 0
      %5728 = vmatprep.mubr.bf16.mxu0 0
      %5729 = vmatmul.mubr.bf16.gmra.mrb[0].mxu0 %v5682
      %v5730 = vpop.f32.mrb[0].mxu0
      %v5731 = vadd.f32 0.0, %v5730
      %v5732 = vpop.f32.mrb[0].mxu0
      %v5733 = vpop.f32.mrb[0].mxu0
      %v5734 = vadd.f32 0.0, %v5733
      %v5735 = vpop.f32.mrb[0].mxu0
      %5736 = vmatprep.mubr.bf16.mxu0 0
      %5737 = vmatmul.mubr.bf16.gmra.mrb[0].mxu0 %v5685
      %v5738 = vpop.f32.mrb[0].mxu0
      %v5739 = vadd.f32 0.0, %v5738
      %v5740 = vpop.f32.mrb[0].mxu0
      %v5741 = vpop.f32.mrb[0].mxu0
      %v5742 = vadd.f32 0.0, %v5741
      %v5743 = vpop.f32.mrb[0].mxu0
      %5744 = vmatprep.mubr.bf16.mxu0 0
      %5745 = vmatmul.mubr.bf16.gmra.mrb[0].mxu0 %v5688
      %v5746 = vpop.f32.mrb[0].mxu0
      %v5747 = vadd.f32 0.0, %v5746
      %v5748 = vpop.f32.mrb[0].mxu0
      %v5749 = vpop.f32.mrb[0].mxu0
      %v5750 = vadd.f32 0.0, %v5749
      %v5751 = vpop.f32.mrb[0].mxu0
      %5752 = vmatprep.mubr.bf16.mxu0 0
      %5753 = vmatmul.mubr.bf16.gmra.mrb[0].mxu0 %v5691
      %v5754 = vpop.f32.mrb[0].mxu0
      %v5755 = vadd.f32 0.0, %v5754
      %v5756 = vpop.f32.mrb[0].mxu0
      %v5757 = vpop.f32.mrb[0].mxu0
      %v5758 = vadd.f32 0.0, %v5757
      %v5759 = vpop.f32.mrb[0].mxu0
      %5760 = vdwg.mxu0
      %v5761 = vadd.f32 %v5146, %v5731
      %v5762 = vadd.f32 %v5149, %v5734
      %v5763 = vadd.f32 %v5154, %v5739
      %v5764 = vadd.f32 %v5157, %v5742
      %v5765 = vadd.f32 %v5162, %v5747
      %v5766 = vadd.f32 %v5165, %v5750
      %v5767 = vadd.f32 %v5170, %v5755
      %v5768 = vadd.f32 %v5173, %v5758
      %5769 = vrot.lane.b32.xlu0 %v4001, 104
      %v5770 = vpop.permute.xlu0 %5769
      %5771 = vrot.lane.b32.xlu0 %v4001, 72
      %v5772 = vpop.permute.xlu0 %5771
      %v5774 = vsel %vm1011, %v5770, 0
      %v5777 = vsel %vm1011, %v5772, 0
      %5779 = vmatprep.subr.bf16.mxu0 0
      %5780 = vmatpush1.bf16.xpose.msra.mxu0 %v5777
      %5781 = vmatprep.subr.bf16.mxu0 0
      %5782 = vmatpush1.bf16.xpose.msra.mxu0 0
      %5783 = vmatprep.subr.bf16.mxu0 0
      %5784 = vmatpush1.bf16.xpose.msra.mxu0 0
      %5785 = vmatprep.subr.bf16.mxu0 0
      %5786 = vmatpush1.bf16.xpose.msra.mxu0 0
      %5787 = vmatprep.subr.bf16.mxu0 0
      %5788 = vmatpush1.bf16.xpose.msra.mxu0 0
      %5789 = vmatprep.subr.bf16.mxu0 0
      %5790 = vmatpush1.bf16.xpose.msra.mxu0 0
      %5791 = vmatprep.subr.bf16.mxu0 0
      %5792 = vmatpush1.bf16.xpose.msra.mxu0 0
      %5793 = vmatprep.subr.bf16.mxu0 0
      %5794 = vmatpush1.bf16.xpose.msra.mxu0 0
      %5795 = vmatprep.subr.bf16.mxu0 0
      %5796 = vmatpush1.bf16.xpose.msra.mxu0 0
      %5797 = vmatprep.subr.bf16.mxu0 0
      %5798 = vmatpush1.bf16.xpose.msra.mxu0 0
      %5799 = vmatprep.subr.bf16.mxu0 0
      %5800 = vmatpush1.bf16.xpose.msra.mxu0 0
      %5801 = vmatprep.subr.bf16.mxu0 0
      %5802 = vmatpush1.bf16.xpose.msra.mxu0 0
      %5803 = vmatprep.subr.bf16.mxu0 0
      %5804 = vmatpush1.bf16.xpose.msra.mxu0 0
      %5805 = vmatprep.subr.bf16.mxu0 0
      %5806 = vmatpush1.bf16.xpose.msra.mxu0 0
      %5807 = vmatprep.subr.bf16.mxu0 0
      %5808 = vmatpush1.bf16.xpose.msra.mxu0 0
      %5809 = vmatprep.subr.bf16.mxu0 0
      %5810 = vmatpush1.bf16.xpose.msra.mxu0 0
      %5811 = vmatprep.mubr.bf16.mxu0 0
      %5812 = vmatmul.mubr.bf16.gmra.mrb[0].mxu0 %v5774
      %v5813 = vpop.f32.mrb[0].mxu0
      %v5814 = vadd.f32 0.0, %v5813
      %v5815 = vpop.f32.mrb[0].mxu0
      %v5816 = vpop.f32.mrb[0].mxu0
      %v5817 = vadd.f32 0.0, %v5816
      %v5818 = vpop.f32.mrb[0].mxu0
      %5819 = vdwg.mxu0
      %5820 = vrot.lane.b32.xlu0 %v4002, 104
      %v5821 = vpop.permute.xlu0 %5820
      %5822 = vrot.lane.b32.xlu0 %v4002, 72
      %v5823 = vpop.permute.xlu0 %5822
      %v5825 = vsel %vm1011, %v5821, 0
      %v5828 = vsel %vm1011, %v5823, 0
      %5830 = vmatprep.subr.bf16.mxu0 0
      %5831 = vmatpush1.bf16.xpose.msra.mxu0 %v5828
      %5832 = vmatprep.subr.bf16.mxu0 0
      %5833 = vmatpush1.bf16.xpose.msra.mxu0 0
      %5834 = vmatprep.subr.bf16.mxu0 0
      %5835 = vmatpush1.bf16.xpose.msra.mxu0 0
      %5836 = vmatprep.subr.bf16.mxu0 0
      %5837 = vmatpush1.bf16.xpose.msra.mxu0 0
      %5838 = vmatprep.subr.bf16.mxu0 0
      %5839 = vmatpush1.bf16.xpose.msra.mxu0 0
      %5840 = vmatprep.subr.bf16.mxu0 0
      %5841 = vmatpush1.bf16.xpose.msra.mxu0 0
      %5842 = vmatprep.subr.bf16.mxu0 0
      %5843 = vmatpush1.bf16.xpose.msra.mxu0 0
      %5844 = vmatprep.subr.bf16.mxu0 0
      %5845 = vmatpush1.bf16.xpose.msra.mxu0 0
      %5846 = vmatprep.subr.bf16.mxu0 0
      %5847 = vmatpush1.bf16.xpose.msra.mxu0 0
      %5848 = vmatprep.subr.bf16.mxu0 0
      %5849 = vmatpush1.bf16.xpose.msra.mxu0 0
      %5850 = vmatprep.subr.bf16.mxu0 0
      %5851 = vmatpush1.bf16.xpose.msra.mxu0 0
      %5852 = vmatprep.subr.bf16.mxu0 0
      %5853 = vmatpush1.bf16.xpose.msra.mxu0 0
      %5854 = vmatprep.subr.bf16.mxu0 0
      %5855 = vmatpush1.bf16.xpose.msra.mxu0 0
      %5856 = vmatprep.subr.bf16.mxu0 0
      %5857 = vmatpush1.bf16.xpose.msra.mxu0 0
      %5858 = vmatprep.subr.bf16.mxu0 0
      %5859 = vmatpush1.bf16.xpose.msra.mxu0 0
      %5860 = vmatprep.subr.bf16.mxu0 0
      %5861 = vmatpush1.bf16.xpose.msra.mxu0 0
      %5862 = vmatprep.mubr.bf16.mxu0 0
      %5863 = vmatmul.mubr.bf16.gmra.mrb[0].mxu0 %v5825
      %v5864 = vpop.f32.mrb[0].mxu0
      %v5865 = vadd.f32 0.0, %v5864
      %v5866 = vpop.f32.mrb[0].mxu0
      %v5867 = vpop.f32.mrb[0].mxu0
      %v5868 = vadd.f32 0.0, %v5867
      %v5869 = vpop.f32.mrb[0].mxu0
      %5870 = vdwg.mxu0
      %5871 = vrot.lane.b32.xlu0 %v4003, 104
      %v5872 = vpop.permute.xlu0 %5871
      %5873 = vrot.lane.b32.xlu0 %v4003, 72
      %v5874 = vpop.permute.xlu0 %5873
      %v5876 = vsel %vm1011, %v5872, 0
      %v5879 = vsel %vm1011, %v5874, 0
      %5881 = vmatprep.subr.bf16.mxu0 0
      %5882 = vmatpush1.bf16.xpose.msra.mxu0 %v5879
      %5883 = vmatprep.subr.bf16.mxu0 0
      %5884 = vmatpush1.bf16.xpose.msra.mxu0 0
      %5885 = vmatprep.subr.bf16.mxu0 0
      %5886 = vmatpush1.bf16.xpose.msra.mxu0 0
      %5887 = vmatprep.subr.bf16.mxu0 0
      %5888 = vmatpush1.bf16.xpose.msra.mxu0 0
      %5889 = vmatprep.subr.bf16.mxu0 0
      %5890 = vmatpush1.bf16.xpose.msra.mxu0 0
      %5891 = vmatprep.subr.bf16.mxu0 0
      %5892 = vmatpush1.bf16.xpose.msra.mxu0 0
      %5893 = vmatprep.subr.bf16.mxu0 0
      %5894 = vmatpush1.bf16.xpose.msra.mxu0 0
      %5895 = vmatprep.subr.bf16.mxu0 0
      %5896 = vmatpush1.bf16.xpose.msra.mxu0 0
      %5897 = vmatprep.subr.bf16.mxu0 0
      %5898 = vmatpush1.bf16.xpose.msra.mxu0 0
      %5899 = vmatprep.subr.bf16.mxu0 0
      %5900 = vmatpush1.bf16.xpose.msra.mxu0 0
      %5901 = vmatprep.subr.bf16.mxu0 0
      %5902 = vmatpush1.bf16.xpose.msra.mxu0 0
      %5903 = vmatprep.subr.bf16.mxu0 0
      %5904 = vmatpush1.bf16.xpose.msra.mxu0 0
      %5905 = vmatprep.subr.bf16.mxu0 0
      %5906 = vmatpush1.bf16.xpose.msra.mxu0 0
      %5907 = vmatprep.subr.bf16.mxu0 0
      %5908 = vmatpush1.bf16.xpose.msra.mxu0 0
      %5909 = vmatprep.subr.bf16.mxu0 0
      %5910 = vmatpush1.bf16.xpose.msra.mxu0 0
      %5911 = vmatprep.subr.bf16.mxu0 0
      %5912 = vmatpush1.bf16.xpose.msra.mxu0 0
      %5913 = vmatprep.mubr.bf16.mxu0 0
      %5914 = vmatmul.mubr.bf16.gmra.mrb[0].mxu0 %v5876
      %v5915 = vpop.f32.mrb[0].mxu0
      %v5916 = vadd.f32 0.0, %v5915
      %v5917 = vpop.f32.mrb[0].mxu0
      %v5918 = vpop.f32.mrb[0].mxu0
      %v5919 = vadd.f32 0.0, %v5918
      %v5920 = vpop.f32.mrb[0].mxu0
      %5921 = vdwg.mxu0
      %5922 = vrot.lane.b32.xlu0 %v4004, 104
      %v5923 = vpop.permute.xlu0 %5922
      %5924 = vrot.lane.b32.xlu0 %v4004, 72
      %v5925 = vpop.permute.xlu0 %5924
      %v5927 = vsel %vm1011, %v5923, 0
      %v5930 = vsel %vm1011, %v5925, 0
      %5932 = vmatprep.subr.bf16.mxu0 0
      %5933 = vmatpush1.bf16.xpose.msra.mxu0 %v5930
      %5934 = vmatprep.subr.bf16.mxu0 0
      %5935 = vmatpush1.bf16.xpose.msra.mxu0 0
      %5936 = vmatprep.subr.bf16.mxu0 0
      %5937 = vmatpush1.bf16.xpose.msra.mxu0 0
      %5938 = vmatprep.subr.bf16.mxu0 0
      %5939 = vmatpush1.bf16.xpose.msra.mxu0 0
      %5940 = vmatprep.subr.bf16.mxu0 0
      %5941 = vmatpush1.bf16.xpose.msra.mxu0 0
      %5942 = vmatprep.subr.bf16.mxu0 0
      %5943 = vmatpush1.bf16.xpose.msra.mxu0 0
      %5944 = vmatprep.subr.bf16.mxu0 0
      %5945 = vmatpush1.bf16.xpose.msra.mxu0 0
      %5946 = vmatprep.subr.bf16.mxu0 0
      %5947 = vmatpush1.bf16.xpose.msra.mxu0 0
      %5948 = vmatprep.subr.bf16.mxu0 0
      %5949 = vmatpush1.bf16.xpose.msra.mxu0 0
      %5950 = vmatprep.subr.bf16.mxu0 0
      %5951 = vmatpush1.bf16.xpose.msra.mxu0 0
      %5952 = vmatprep.subr.bf16.mxu0 0
      %5953 = vmatpush1.bf16.xpose.msra.mxu0 0
      %5954 = vmatprep.subr.bf16.mxu0 0
      %5955 = vmatpush1.bf16.xpose.msra.mxu0 0
      %5956 = vmatprep.subr.bf16.mxu0 0
      %5957 = vmatpush1.bf16.xpose.msra.mxu0 0
      %5958 = vmatprep.subr.bf16.mxu0 0
      %5959 = vmatpush1.bf16.xpose.msra.mxu0 0
      %5960 = vmatprep.subr.bf16.mxu0 0
      %5961 = vmatpush1.bf16.xpose.msra.mxu0 0
      %5962 = vmatprep.subr.bf16.mxu0 0
      %5963 = vmatpush1.bf16.xpose.msra.mxu0 0
      %5964 = vmatprep.mubr.bf16.mxu0 0
      %5965 = vmatmul.mubr.bf16.gmra.mrb[0].mxu0 %v5927
      %v5966 = vpop.f32.mrb[0].mxu0
      %v5967 = vadd.f32 0.0, %v5966
      %v5968 = vpop.f32.mrb[0].mxu0
      %v5969 = vpop.f32.mrb[0].mxu0
      %v5970 = vadd.f32 0.0, %v5969
      %v5971 = vpop.f32.mrb[0].mxu0
      %5972 = vdwg.mxu0
      %v5973 = vmul.f32 %v5814, 0.35355338
      %v5974 = vmul.f32 %v5817, 0.35355338
      %v5975 = vmul.f32 %v5865, 0.35355338
      %v5976 = vmul.f32 %v5868, 0.35355338
      %v5977 = vmul.f32 %v5916, 0.35355338
      %v5978 = vmul.f32 %v5919, 0.35355338
      %v5979 = vmul.f32 %v5967, 0.35355338
      %v5980 = vmul.f32 %v5970, 0.35355338
      %v5981 = vadd.f32 %v5973, %v894
      %v5982 = vadd.f32 %v5974, %v894
      %v5983 = vadd.f32 %v5975, %v894
      %v5984 = vadd.f32 %v5976, %v894
      %v5985 = vadd.f32 %v5977, %v894
      %v5986 = vadd.f32 %v5978, %v894
      %v5987 = vadd.f32 %v5979, %v894
      %v5988 = vadd.f32 %v5980, %v894
      %v5989 = vsel %vm672, %v5981, -inf
      %5990 = vmax.xlane.f32.xlu0 %v5989
      %v5991 = vpop.xlane.xlu0 %5990
      %v5992 = vsel %vm672, %v5982, -inf
      %5993 = vmax.xlane.f32.xlu0 %v5992
      %v5994 = vpop.xlane.xlu0 %5993
      %v5995 = vsel %vm672, %v5983, -inf
      %5996 = vmax.xlane.f32.xlu0 %v5995
      %v5997 = vpop.xlane.xlu0 %5996
      %v5998 = vsel %vm672, %v5984, -inf
      %5999 = vmax.xlane.f32.xlu0 %v5998
      %v6000 = vpop.xlane.xlu0 %5999
      %v6001 = vsel %vm672, %v5985, -inf
      %6002 = vmax.xlane.f32.xlu0 %v6001
      %v6003 = vpop.xlane.xlu0 %6002
      %v6004 = vsel %vm672, %v5986, -inf
      %6005 = vmax.xlane.f32.xlu0 %v6004
      %v6006 = vpop.xlane.xlu0 %6005
      %v6007 = vsel %vm672, %v5987, -inf
      %6008 = vmax.xlane.f32.xlu0 %v6007
      %v6009 = vpop.xlane.xlu0 %6008
      %v6010 = vsel %vm672, %v5988, -inf
      %6011 = vmax.xlane.f32.xlu0 %v6010
      %v6012 = vpop.xlane.xlu0 %6011
      %v6013 = vsub.f32 %v5981, %v5991
      %v6014 = vsub.f32 %v5982, %v5994
      %v6015 = vsub.f32 %v5983, %v5997
      %v6016 = vsub.f32 %v5984, %v6000
      %v6017 = vsub.f32 %v5985, %v6003
      %v6018 = vsub.f32 %v5986, %v6006
      %v6019 = vsub.f32 %v5987, %v6009
      %v6020 = vsub.f32 %v5988, %v6012
      %v6021 = vmul.f32 %v6013, 1.442695
      %v6022 = vpow.pop %v6021
      %v6023 = vmul.f32 %v6014, 1.442695
      %v6024 = vpow.pop %v6023
      %v6025 = vmul.f32 %v6015, 1.442695
      %v6026 = vpow.pop %v6025
      %v6027 = vmul.f32 %v6016, 1.442695
      %v6028 = vpow.pop %v6027
      %v6029 = vmul.f32 %v6017, 1.442695
      %v6030 = vpow.pop %v6029
      %v6031 = vmul.f32 %v6018, 1.442695
      %v6032 = vpow.pop %v6031
      %v6033 = vmul.f32 %v6019, 1.442695
      %v6034 = vpow.pop %v6033
      %v6035 = vmul.f32 %v6020, 1.442695
      %v6036 = vpow.pop %v6035
      %v6037 = vsel %vm672, %v6022, 0.0
      %6038 = vadd.xlane.f32.xlu0 %v6037
      %v6039 = vpop.xlane.xlu0 %6038
      %v6040 = vsel %vm672, %v6024, 0.0
      %6041 = vadd.xlane.f32.xlu0 %v6040
      %v6042 = vpop.xlane.xlu0 %6041
      %v6043 = vsel %vm672, %v6026, 0.0
      %6044 = vadd.xlane.f32.xlu0 %v6043
      %v6045 = vpop.xlane.xlu0 %6044
      %v6046 = vsel %vm672, %v6028, 0.0
      %6047 = vadd.xlane.f32.xlu0 %v6046
      %v6048 = vpop.xlane.xlu0 %6047
      %v6049 = vsel %vm672, %v6030, 0.0
      %6050 = vadd.xlane.f32.xlu0 %v6049
      %v6051 = vpop.xlane.xlu0 %6050
      %v6052 = vsel %vm672, %v6032, 0.0
      %6053 = vadd.xlane.f32.xlu0 %v6052
      %v6054 = vpop.xlane.xlu0 %6053
      %v6055 = vsel %vm672, %v6034, 0.0
      %6056 = vadd.xlane.f32.xlu0 %v6055
      %v6057 = vpop.xlane.xlu0 %6056
      %v6058 = vsel %vm672, %v6036, 0.0
      %6059 = vadd.xlane.f32.xlu0 %v6058
      %v6060 = vpop.xlane.xlu0 %6059
      %v6061 = vrcp.pop %v6039
      %v6062 = vrcp.pop %v6042
      %v6063 = vrcp.pop %v6045
      %v6064 = vrcp.pop %v6048
      %v6065 = vrcp.pop %v6051
      %v6066 = vrcp.pop %v6054
      %v6067 = vrcp.pop %v6057
      %v6068 = vrcp.pop %v6060
      %v6069 = vmul.f32 %v6022, %v6061
      %v6070 = vmul.f32 %v6024, %v6062
      %v6071 = vmul.f32 %v6026, %v6063
      %v6072 = vmul.f32 %v6028, %v6064
      %v6073 = vmul.f32 %v6030, %v6065
      %v6074 = vmul.f32 %v6032, %v6066
      %v6075 = vmul.f32 %v6034, %v6067
      %v6076 = vmul.f32 %v6036, %v6068
      %v6077 = vpack.c.bf16 %v6070, %v6069
      %v6078 = vpack.c.bf16 %v6072, %v6071
      %v6079 = vpack.c.bf16 %v6074, %v6073
      %v6080 = vpack.c.bf16 %v6076, %v6075
      %6081 = vrot.lane.b32.xlu0 %v4001, 40
      %v6082 = vpop.permute.xlu0 %6081
      %v6085 = vsel %vm672, %v6077, 0
      %6087 = vmatprep.subr.bf16.mxu0 0
      %6088 = vmatpush1.bf16.msra.mxu0 %v6082
      %6089 = vmatprep.subr.bf16.mxu0 0
      %6090 = vmatpush1.bf16.msra.mxu0 0
      %6091 = vmatprep.subr.bf16.mxu0 0
      %6092 = vmatpush1.bf16.msra.mxu0 0
      %6093 = vmatprep.subr.bf16.mxu0 0
      %6094 = vmatpush1.bf16.msra.mxu0 0
      %6095 = vmatprep.subr.bf16.mxu0 0
      %6096 = vmatpush1.bf16.msra.mxu0 0
      %6097 = vmatprep.subr.bf16.mxu0 0
      %6098 = vmatpush1.bf16.msra.mxu0 0
      %6099 = vmatprep.subr.bf16.mxu0 0
      %6100 = vmatpush1.bf16.msra.mxu0 0
      %6101 = vmatprep.subr.bf16.mxu0 0
      %6102 = vmatpush1.bf16.msra.mxu0 0
      %6103 = vmatprep.subr.bf16.mxu0 0
      %6104 = vmatpush1.bf16.msra.mxu0 0
      %6105 = vmatprep.subr.bf16.mxu0 0
      %6106 = vmatpush1.bf16.msra.mxu0 0
      %6107 = vmatprep.subr.bf16.mxu0 0
      %6108 = vmatpush1.bf16.msra.mxu0 0
      %6109 = vmatprep.subr.bf16.mxu0 0
      %6110 = vmatpush1.bf16.msra.mxu0 0
      %6111 = vmatprep.subr.bf16.mxu0 0
      %6112 = vmatpush1.bf16.msra.mxu0 0
      %6113 = vmatprep.subr.bf16.mxu0 0
      %6114 = vmatpush1.bf16.msra.mxu0 0
      %6115 = vmatprep.subr.bf16.mxu0 0
      %6116 = vmatpush1.bf16.msra.mxu0 0
      %6117 = vmatprep.subr.bf16.mxu0 0
      %6118 = vmatpush1.bf16.msra.mxu0 0
      %6119 = vmatprep.mubr.bf16.mxu0 0
      %6120 = vmatmul.mubr.bf16.gmra.mrb[0].mxu0 %v6085
      %v6121 = vpop.f32.mrb[0].mxu0
      %v6122 = vadd.f32 0.0, %v6121
      %v6123 = vpop.f32.mrb[0].mxu0
      %v6124 = vpop.f32.mrb[0].mxu0
      %v6125 = vadd.f32 0.0, %v6124
      %v6126 = vpop.f32.mrb[0].mxu0
      %6127 = vdwg.mxu0
      %6128 = vrot.lane.b32.xlu0 %v4002, 40
      %v6129 = vpop.permute.xlu0 %6128
      %v6132 = vsel %vm672, %v6078, 0
      %6134 = vmatprep.subr.bf16.mxu0 0
      %6135 = vmatpush1.bf16.msra.mxu0 %v6129
      %6136 = vmatprep.subr.bf16.mxu0 0
      %6137 = vmatpush1.bf16.msra.mxu0 0
      %6138 = vmatprep.subr.bf16.mxu0 0
      %6139 = vmatpush1.bf16.msra.mxu0 0
      %6140 = vmatprep.subr.bf16.mxu0 0
      %6141 = vmatpush1.bf16.msra.mxu0 0
      %6142 = vmatprep.subr.bf16.mxu0 0
      %6143 = vmatpush1.bf16.msra.mxu0 0
      %6144 = vmatprep.subr.bf16.mxu0 0
      %6145 = vmatpush1.bf16.msra.mxu0 0
      %6146 = vmatprep.subr.bf16.mxu0 0
      %6147 = vmatpush1.bf16.msra.mxu0 0
      %6148 = vmatprep.subr.bf16.mxu0 0
      %6149 = vmatpush1.bf16.msra.mxu0 0
      %6150 = vmatprep.subr.bf16.mxu0 0
      %6151 = vmatpush1.bf16.msra.mxu0 0
      %6152 = vmatprep.subr.bf16.mxu0 0
      %6153 = vmatpush1.bf16.msra.mxu0 0
      %6154 = vmatprep.subr.bf16.mxu0 0
      %6155 = vmatpush1.bf16.msra.mxu0 0
      %6156 = vmatprep.subr.bf16.mxu0 0
      %6157 = vmatpush1.bf16.msra.mxu0 0
      %6158 = vmatprep.subr.bf16.mxu0 0
      %6159 = vmatpush1.bf16.msra.mxu0 0
      %6160 = vmatprep.subr.bf16.mxu0 0
      %6161 = vmatpush1.bf16.msra.mxu0 0
      %6162 = vmatprep.subr.bf16.mxu0 0
      %6163 = vmatpush1.bf16.msra.mxu0 0
      %6164 = vmatprep.subr.bf16.mxu0 0
      %6165 = vmatpush1.bf16.msra.mxu0 0
      %6166 = vmatprep.mubr.bf16.mxu0 0
      %6167 = vmatmul.mubr.bf16.gmra.mrb[0].mxu0 %v6132
      %v6168 = vpop.f32.mrb[0].mxu0
      %v6169 = vadd.f32 0.0, %v6168
      %v6170 = vpop.f32.mrb[0].mxu0
      %v6171 = vpop.f32.mrb[0].mxu0
      %v6172 = vadd.f32 0.0, %v6171
      %v6173 = vpop.f32.mrb[0].mxu0
      %6174 = vdwg.mxu0
      %6175 = vrot.lane.b32.xlu0 %v4003, 40
      %v6176 = vpop.permute.xlu0 %6175
      %v6179 = vsel %vm672, %v6079, 0
      %6181 = vmatprep.subr.bf16.mxu0 0
      %6182 = vmatpush1.bf16.msra.mxu0 %v6176
      %6183 = vmatprep.subr.bf16.mxu0 0
      %6184 = vmatpush1.bf16.msra.mxu0 0
      %6185 = vmatprep.subr.bf16.mxu0 0
      %6186 = vmatpush1.bf16.msra.mxu0 0
      %6187 = vmatprep.subr.bf16.mxu0 0
      %6188 = vmatpush1.bf16.msra.mxu0 0
      %6189 = vmatprep.subr.bf16.mxu0 0
      %6190 = vmatpush1.bf16.msra.mxu0 0
      %6191 = vmatprep.subr.bf16.mxu0 0
      %6192 = vmatpush1.bf16.msra.mxu0 0
      %6193 = vmatprep.subr.bf16.mxu0 0
      %6194 = vmatpush1.bf16.msra.mxu0 0
      %6195 = vmatprep.subr.bf16.mxu0 0
      %6196 = vmatpush1.bf16.msra.mxu0 0
      %6197 = vmatprep.subr.bf16.mxu0 0
      %6198 = vmatpush1.bf16.msra.mxu0 0
      %6199 = vmatprep.subr.bf16.mxu0 0
      %6200 = vmatpush1.bf16.msra.mxu0 0
      %6201 = vmatprep.subr.bf16.mxu0 0
      %6202 = vmatpush1.bf16.msra.mxu0 0
      %6203 = vmatprep.subr.bf16.mxu0 0
      %6204 = vmatpush1.bf16.msra.mxu0 0
      %6205 = vmatprep.subr.bf16.mxu0 0
      %6206 = vmatpush1.bf16.msra.mxu0 0
      %6207 = vmatprep.subr.bf16.mxu0 0
      %6208 = vmatpush1.bf16.msra.mxu0 0
      %6209 = vmatprep.subr.bf16.mxu0 0
      %6210 = vmatpush1.bf16.msra.mxu0 0
      %6211 = vmatprep.subr.bf16.mxu0 0
      %6212 = vmatpush1.bf16.msra.mxu0 0
      %6213 = vmatprep.mubr.bf16.mxu0 0
      %6214 = vmatmul.mubr.bf16.gmra.mrb[0].mxu0 %v6179
      %v6215 = vpop.f32.mrb[0].mxu0
      %v6216 = vadd.f32 0.0, %v6215
      %v6217 = vpop.f32.mrb[0].mxu0
      %v6218 = vpop.f32.mrb[0].mxu0
      %v6219 = vadd.f32 0.0, %v6218
      %v6220 = vpop.f32.mrb[0].mxu0
      %6221 = vdwg.mxu0
      %6222 = vrot.lane.b32.xlu0 %v4004, 40
      %v6223 = vpop.permute.xlu0 %6222
      %v6226 = vsel %vm672, %v6080, 0
      %6228 = vmatprep.subr.bf16.mxu0 0
      %6229 = vmatpush1.bf16.msra.mxu0 %v6223
      %6230 = vmatprep.subr.bf16.mxu0 0
      %6231 = vmatpush1.bf16.msra.mxu0 0
      %6232 = vmatprep.subr.bf16.mxu0 0
      %6233 = vmatpush1.bf16.msra.mxu0 0
      %6234 = vmatprep.subr.bf16.mxu0 0
      %6235 = vmatpush1.bf16.msra.mxu0 0
      %6236 = vmatprep.subr.bf16.mxu0 0
      %6237 = vmatpush1.bf16.msra.mxu0 0
      %6238 = vmatprep.subr.bf16.mxu0 0
      %6239 = vmatpush1.bf16.msra.mxu0 0
      %6240 = vmatprep.subr.bf16.mxu0 0
      %6241 = vmatpush1.bf16.msra.mxu0 0
      %6242 = vmatprep.subr.bf16.mxu0 0
      %6243 = vmatpush1.bf16.msra.mxu0 0
      %6244 = vmatprep.subr.bf16.mxu0 0
      %6245 = vmatpush1.bf16.msra.mxu0 0
      %6246 = vmatprep.subr.bf16.mxu0 0
      %6247 = vmatpush1.bf16.msra.mxu0 0
      %6248 = vmatprep.subr.bf16.mxu0 0
      %6249 = vmatpush1.bf16.msra.mxu0 0
      %6250 = vmatprep.subr.bf16.mxu0 0
      %6251 = vmatpush1.bf16.msra.mxu0 0
      %6252 = vmatprep.subr.bf16.mxu0 0
      %6253 = vmatpush1.bf16.msra.mxu0 0
      %6254 = vmatprep.subr.bf16.mxu0 0
      %6255 = vmatpush1.bf16.msra.mxu0 0
      %6256 = vmatprep.subr.bf16.mxu0 0
      %6257 = vmatpush1.bf16.msra.mxu0 0
      %6258 = vmatprep.subr.bf16.mxu0 0
      %6259 = vmatpush1.bf16.msra.mxu0 0
      %6260 = vmatprep.mubr.bf16.mxu0 0
      %6261 = vmatmul.mubr.bf16.gmra.mrb[0].mxu0 %v6226
      %v6262 = vpop.f32.mrb[0].mxu0
      %v6263 = vadd.f32 0.0, %v6262
      %v6264 = vpop.f32.mrb[0].mxu0
      %v6265 = vpop.f32.mrb[0].mxu0
      %v6266 = vadd.f32 0.0, %v6265
      %v6267 = vpop.f32.mrb[0].mxu0
      %6268 = vdwg.mxu0
      %v6269 = vpack.c.bf16 %v6125, %v6122
      %v6270 = vpack.c.bf16 %v6172, %v6169
      %v6271 = vpack.c.bf16 %v6219, %v6216
      %v6272 = vpack.c.bf16 %v6266, %v6263
      %v6273 = vpack.c.bf16 %v4009, %v4009
      %v6275 = vsel %vm1011, %v6269, 0
      %v6278 = vsel %vm1011, %v6270, 0
      %v6281 = vsel %vm1011, %v6271, 0
      %v6284 = vsel %vm1011, %v6272, 0
      %v6287 = vsel %vm2027, %v6273, 0
      %6289 = vmatprep.subr.bf16.mxu0 0
      %6290 = vmatpush1.bf16.msra.mxu0 %v6287
      %6291 = vmatprep.subr.bf16.mxu0 0
      %6292 = vmatpush1.bf16.msra.mxu0 0
      %6293 = vmatprep.subr.bf16.mxu0 0
      %6294 = vmatpush1.bf16.msra.mxu0 0
      %6295 = vmatprep.subr.bf16.mxu0 0
      %6296 = vmatpush1.bf16.msra.mxu0 0
      %6297 = vmatprep.subr.bf16.mxu0 0
      %6298 = vmatpush1.bf16.msra.mxu0 0
      %6299 = vmatprep.subr.bf16.mxu0 0
      %6300 = vmatpush1.bf16.msra.mxu0 0
      %6301 = vmatprep.subr.bf16.mxu0 0
      %6302 = vmatpush1.bf16.msra.mxu0 0
      %6303 = vmatprep.subr.bf16.mxu0 0
      %6304 = vmatpush1.bf16.msra.mxu0 0
      %6305 = vmatprep.subr.bf16.mxu0 0
      %6306 = vmatpush1.bf16.msra.mxu0 0
      %6307 = vmatprep.subr.bf16.mxu0 0
      %6308 = vmatpush1.bf16.msra.mxu0 0
      %6309 = vmatprep.subr.bf16.mxu0 0
      %6310 = vmatpush1.bf16.msra.mxu0 0
      %6311 = vmatprep.subr.bf16.mxu0 0
      %6312 = vmatpush1.bf16.msra.mxu0 0
      %6313 = vmatprep.subr.bf16.mxu0 0
      %6314 = vmatpush1.bf16.msra.mxu0 0
      %6315 = vmatprep.subr.bf16.mxu0 0
      %6316 = vmatpush1.bf16.msra.mxu0 0
      %6317 = vmatprep.subr.bf16.mxu0 0
      %6318 = vmatpush1.bf16.msra.mxu0 0
      %6319 = vmatprep.subr.bf16.mxu0 0
      %6320 = vmatpush1.bf16.msra.mxu0 0
      %6321 = vmatprep.mubr.bf16.mxu0 0
      %6322 = vmatmul.mubr.bf16.gmra.mrb[0].mxu0 %v6275
      %v6323 = vpop.f32.mrb[0].mxu0
      %v6324 = vadd.f32 0.0, %v6323
      %v6325 = vpop.f32.mrb[0].mxu0
      %v6326 = vpop.f32.mrb[0].mxu0
      %v6327 = vadd.f32 0.0, %v6326
      %v6328 = vpop.f32.mrb[0].mxu0
      %6329 = vmatprep.mubr.bf16.mxu0 0
      %6330 = vmatmul.mubr.bf16.gmra.mrb[0].mxu0 %v6278
      %v6331 = vpop.f32.mrb[0].mxu0
      %v6332 = vadd.f32 0.0, %v6331
      %v6333 = vpop.f32.mrb[0].mxu0
      %v6334 = vpop.f32.mrb[0].mxu0
      %v6335 = vadd.f32 0.0, %v6334
      %v6336 = vpop.f32.mrb[0].mxu0
      %6337 = vmatprep.mubr.bf16.mxu0 0
      %6338 = vmatmul.mubr.bf16.gmra.mrb[0].mxu0 %v6281
      %v6339 = vpop.f32.mrb[0].mxu0
      %v6340 = vadd.f32 0.0, %v6339
      %v6341 = vpop.f32.mrb[0].mxu0
      %v6342 = vpop.f32.mrb[0].mxu0
      %v6343 = vadd.f32 0.0, %v6342
      %v6344 = vpop.f32.mrb[0].mxu0
      %6345 = vmatprep.mubr.bf16.mxu0 0
      %6346 = vmatmul.mubr.bf16.gmra.mrb[0].mxu0 %v6284
      %v6347 = vpop.f32.mrb[0].mxu0
      %v6348 = vadd.f32 0.0, %v6347
      %v6349 = vpop.f32.mrb[0].mxu0
      %v6350 = vpop.f32.mrb[0].mxu0
      %v6351 = vadd.f32 0.0, %v6350
      %v6352 = vpop.f32.mrb[0].mxu0
      %6353 = vdwg.mxu0
      %v6354 = vadd.f32 %v5761, %v6324
      %v6355 = vadd.f32 %v5762, %v6327
      %v6356 = vadd.f32 %v5763, %v6332
      %v6357 = vadd.f32 %v5764, %v6335
      %v6358 = vadd.f32 %v5765, %v6340
      %v6359 = vadd.f32 %v5766, %v6343
      %v6360 = vadd.f32 %v5767, %v6348
      %v6361 = vadd.f32 %v5768, %v6351
      %s6362 = scalar_lea.vmem %s6, 1
      %v6363 = vld [vmem:[%s6362] sm:$0x1]
      %v6365 = vlaneseq
      %v6366 = vshrl.u32 %v6365, 7
      %v6367 = vsub.s32 0, %v6366
      %v6368 = vrot.slane %v6363, %v6367
      %v6370 = vadd.f32 %v6354, %v6368
      %v6371 = vadd.f32 %v6355, %v6368
      %v6372 = vadd.f32 %v6356, %v6368
      %v6373 = vadd.f32 %v6357, %v6368
      %v6374 = vadd.f32 %v6358, %v6368
      %v6375 = vadd.f32 %v6359, %v6368
      %v6376 = vadd.f32 %v6360, %v6368
      %v6377 = vadd.f32 %v6361, %v6368
      %v6378 = vadd.f32 %v3887, %v6370
      %v6379 = vadd.f32 %v3888, %v6371
      %v6380 = vadd.f32 %v3889, %v6372
      %v6381 = vadd.f32 %v3890, %v6373
      %v6382 = vadd.f32 %v3891, %v6374
      %v6383 = vadd.f32 %v3892, %v6375
      %v6384 = vadd.f32 %v3893, %v6376
      %v6385 = vadd.f32 %v3894, %v6377
      %s6386 = scalar_lea.vmem %s7, 1
      %v6387 = vld [vmem:[%s6386] sm:$0x1]
      %s6388 = scalar_lea.vmem %s8, 1
      %v6389 = vld [vmem:[%s6388] sm:$0x1]
      %v6390 = vsel %vm922, %v6378, 0.0
      %6391 = vadd.xlane.f32.xlu0 %v6390
      %v6392 = vpop.xlane.xlu0 %6391
      %v6393 = vsel %vm922, %v6379, 0.0
      %6394 = vadd.xlane.f32.xlu0 %v6393
      %v6395 = vpop.xlane.xlu0 %6394
      %v6396 = vsel %vm922, %v6380, 0.0
      %6397 = vadd.xlane.f32.xlu0 %v6396
      %v6398 = vpop.xlane.xlu0 %6397
      %v6399 = vsel %vm922, %v6381, 0.0
      %6400 = vadd.xlane.f32.xlu0 %v6399
      %v6401 = vpop.xlane.xlu0 %6400
      %v6402 = vsel %vm922, %v6382, 0.0
      %6403 = vadd.xlane.f32.xlu0 %v6402
      %v6404 = vpop.xlane.xlu0 %6403
      %v6405 = vsel %vm922, %v6383, 0.0
      %6406 = vadd.xlane.f32.xlu0 %v6405
      %v6407 = vpop.xlane.xlu0 %6406
      %v6408 = vsel %vm922, %v6384, 0.0
      %6409 = vadd.xlane.f32.xlu0 %v6408
      %v6410 = vpop.xlane.xlu0 %6409
      %v6411 = vsel %vm922, %v6385, 0.0
      %6412 = vadd.xlane.f32.xlu0 %v6411
      %v6413 = vpop.xlane.xlu0 %6412
      %v6414 = vmul.f32 %v6392, %v3411
      %v6415 = vmul.f32 %v6395, %v3411
      %v6416 = vmul.f32 %v6398, %v3411
      %v6417 = vmul.f32 %v6401, %v3411
      %v6418 = vmul.f32 %v6404, %v3411
      %v6419 = vmul.f32 %v6407, %v3411
      %v6420 = vmul.f32 %v6410, %v3411
      %v6421 = vmul.f32 %v6413, %v3411
      %v6422 = vsub.f32 %v6378, %v6414
      %v6423 = vsub.f32 %v6379, %v6415
      %v6424 = vsub.f32 %v6380, %v6416
      %v6425 = vsub.f32 %v6381, %v6417
      %v6426 = vsub.f32 %v6382, %v6418
      %v6427 = vsub.f32 %v6383, %v6419
      %v6428 = vsub.f32 %v6384, %v6420
      %v6429 = vsub.f32 %v6385, %v6421
      %v6430 = vmul.f32 %v6422, %v6422
      %v6431 = vmul.f32 %v6423, %v6423
      %v6432 = vmul.f32 %v6424, %v6424
      %v6433 = vmul.f32 %v6425, %v6425
      %v6434 = vmul.f32 %v6426, %v6426
      %v6435 = vmul.f32 %v6427, %v6427
      %v6436 = vmul.f32 %v6428, %v6428
      %v6437 = vmul.f32 %v6429, %v6429
      %v6438 = vsel %vm922, %v6430, 0.0
      %6439 = vadd.xlane.f32.xlu0 %v6438
      %v6440 = vpop.xlane.xlu0 %6439
      %v6441 = vsel %vm922, %v6431, 0.0
      %6442 = vadd.xlane.f32.xlu0 %v6441
      %v6443 = vpop.xlane.xlu0 %6442
      %v6444 = vsel %vm922, %v6432, 0.0
      %6445 = vadd.xlane.f32.xlu0 %v6444
      %v6446 = vpop.xlane.xlu0 %6445
      %v6447 = vsel %vm922, %v6433, 0.0
      %6448 = vadd.xlane.f32.xlu0 %v6447
      %v6449 = vpop.xlane.xlu0 %6448
      %v6450 = vsel %vm922, %v6434, 0.0
      %6451 = vadd.xlane.f32.xlu0 %v6450
      %v6452 = vpop.xlane.xlu0 %6451
      %v6453 = vsel %vm922, %v6435, 0.0
      %6454 = vadd.xlane.f32.xlu0 %v6453
      %v6455 = vpop.xlane.xlu0 %6454
      %v6456 = vsel %vm922, %v6436, 0.0
      %6457 = vadd.xlane.f32.xlu0 %v6456
      %v6458 = vpop.xlane.xlu0 %6457
      %v6459 = vsel %vm922, %v6437, 0.0
      %6460 = vadd.xlane.f32.xlu0 %v6459
      %v6461 = vpop.xlane.xlu0 %6460
      %v6462 = vmul.f32 %v6440, %v3411
      %v6463 = vmul.f32 %v6443, %v3411
      %v6464 = vmul.f32 %v6446, %v3411
      %v6465 = vmul.f32 %v6449, %v3411
      %v6466 = vmul.f32 %v6452, %v3411
      %v6467 = vmul.f32 %v6455, %v3411
      %v6468 = vmul.f32 %v6458, %v3411
      %v6469 = vmul.f32 %v6461, %v3411
      %v6470 = vadd.f32 %v6462, 1e-05
      %v6471 = vadd.f32 %v6463, 1e-05
      %v6472 = vadd.f32 %v6464, 1e-05
      %v6473 = vadd.f32 %v6465, 1e-05
      %v6474 = vadd.f32 %v6466, 1e-05
      %v6475 = vadd.f32 %v6467, 1e-05
      %v6476 = vadd.f32 %v6468, 1e-05
      %v6477 = vadd.f32 %v6469, 1e-05
      %v6478 = vrsqrt.pop %v6470
      %v6479 = vrsqrt.pop %v6471
      %v6480 = vrsqrt.pop %v6472
      %v6481 = vrsqrt.pop %v6473
      %v6482 = vrsqrt.pop %v6474
      %v6483 = vrsqrt.pop %v6475
      %v6484 = vrsqrt.pop %v6476
      %v6485 = vrsqrt.pop %v6477
      %v6486 = vmul.f32 %v6422, %v6478
      %v6487 = vmul.f32 %v6423, %v6479
      %v6488 = vmul.f32 %v6424, %v6480
      %v6489 = vmul.f32 %v6425, %v6481
      %v6490 = vmul.f32 %v6426, %v6482
      %v6491 = vmul.f32 %v6427, %v6483
      %v6492 = vmul.f32 %v6428, %v6484
      %v6493 = vmul.f32 %v6429, %v6485
      %v6495 = vlaneseq
      %v6496 = vshrl.u32 %v6495, 7
      %v6497 = vsub.s32 0, %v6496
      %v6498 = vrot.slane %v6387, %v6497
      %v6500 = vmul.f32 %v6486, %v6498
      %v6501 = vmul.f32 %v6487, %v6498
      %v6502 = vmul.f32 %v6488, %v6498
      %v6503 = vmul.f32 %v6489, %v6498
      %v6504 = vmul.f32 %v6490, %v6498
      %v6505 = vmul.f32 %v6491, %v6498
      %v6506 = vmul.f32 %v6492, %v6498
      %v6507 = vmul.f32 %v6493, %v6498
      %v6509 = vlaneseq
      %v6510 = vshrl.u32 %v6509, 7
      %v6511 = vsub.s32 0, %v6510
      %v6512 = vrot.slane %v6389, %v6511
      %v6514 = vadd.f32 %v6500, %v6512
      %v6515 = vadd.f32 %v6501, %v6512
      %v6516 = vadd.f32 %v6502, %v6512
      %v6517 = vadd.f32 %v6503, %v6512
      %v6518 = vadd.f32 %v6504, %v6512
      %v6519 = vadd.f32 %v6505, %v6512
      %v6520 = vadd.f32 %v6506, %v6512
      %v6521 = vadd.f32 %v6507, %v6512
      %s6522 = scalar_lea.vmem %s9, 16
      %v6523 = vld [vmem:[%s6522] sm:$0xf]
      %v6524 = vld [vmem:[%s6522 + $0x4] sm:$0xf]
      %v6525 = vld [vmem:[%s6522 + $0x8] sm:$0xf]
      %v6526 = vld [vmem:[%s6522 + $0xc] sm:$0xf]
      %v6527 = vpack.c.bf16 %v6515, %v6514
      %v6528 = vpack.c.bf16 %v6517, %v6516
      %v6529 = vpack.c.bf16 %v6519, %v6518
      %v6530 = vpack.c.bf16 %v6521, %v6520
      %s6531 = scalar_lea.vmem %s10, 1
      %v6532 = vld [vmem:[%s6531] sm:$0x1]
      %v6534 = vlaneseq
      %v6535 = vshrl.u32 %v6534, 7
      %v6536 = vsub.s32 0, %v6535
      %v6537 = vrot.slane %v6532, %v6536
      %v6543 = vunpack.c.l.b16 %v6523
      %v6544 = vunpack.c.l.b16 %v6524
      %v6545 = vunpack.c.l.b16 %v6525
      %v6546 = vunpack.c.l.b16 %v6526
      %v6547 = vpack.c.b16 %v6544, %v6543
      %v6548 = vpack.c.b16 %v6546, %v6545
      %v6552 = vsel %vm922, %v6527, 0
      %v6555 = vsel %vm922, %v6528, 0
      %v6558 = vsel %vm922, %v6529, 0
      %v6561 = vsel %vm922, %v6530, 0
      %6563 = vmatprep.subr.bf16.mxu0 0
      %6564 = vmatpush1.bf16.msra.mxu0 %v6547
      %6565 = vmatprep.subr.bf16.mxu0 0
      %6566 = vmatpush1.bf16.msra.mxu0 %v6548
      %6567 = vmatprep.subr.bf16.mxu0 0
      %6568 = vmatpush1.bf16.msra.mxu0 0
      %6569 = vmatprep.subr.bf16.mxu0 0
      %6570 = vmatpush1.bf16.msra.mxu0 0
      %6571 = vmatprep.subr.bf16.mxu0 0
      %6572 = vmatpush1.bf16.msra.mxu0 0
      %6573 = vmatprep.subr.bf16.mxu0 0
      %6574 = vmatpush1.bf16.msra.mxu0 0
      %6575 = vmatprep.subr.bf16.mxu0 0
      %6576 = vmatpush1.bf16.msra.mxu0 0
      %6577 = vmatprep.subr.bf16.mxu0 0
      %6578 = vmatpush1.bf16.msra.mxu0 0
      %6579 = vmatprep.subr.bf16.mxu0 0
      %6580 = vmatpush1.bf16.msra.mxu0 0
      %6581 = vmatprep.subr.bf16.mxu0 0
      %6582 = vmatpush1.bf16.msra.mxu0 0
      %6583 = vmatprep.subr.bf16.mxu0 0
      %6584 = vmatpush1.bf16.msra.mxu0 0
      %6585 = vmatprep.subr.bf16.mxu0 0
      %6586 = vmatpush1.bf16.msra.mxu0 0
      %6587 = vmatprep.subr.bf16.mxu0 0
      %6588 = vmatpush1.bf16.msra.mxu0 0
      %6589 = vmatprep.subr.bf16.mxu0 0
      %6590 = vmatpush1.bf16.msra.mxu0 0
      %6591 = vmatprep.subr.bf16.mxu0 0
      %6592 = vmatpush1.bf16.msra.mxu0 0
      %6593 = vmatprep.subr.bf16.mxu0 0
      %6594 = vmatpush1.bf16.msra.mxu0 0
      %6595 = vmatprep.mubr.bf16.mxu0 0
      %6596 = vmatmul.mubr.bf16.gmra.mrb[0].mxu0 %v6552
      %v6597 = vpop.f32.mrb[0].mxu0
      %v6598 = vadd.f32 %v6537, %v6597
      %v6599 = vpop.f32.mrb[0].mxu0
      %v6600 = vpop.f32.mrb[0].mxu0
      %v6601 = vadd.f32 %v6537, %v6600
      %v6602 = vpop.f32.mrb[0].mxu0
      %6603 = vmatprep.mubr.bf16.mxu0 0
      %6604 = vmatmul.mubr.bf16.gmra.mrb[0].mxu0 %v6555
      %v6605 = vpop.f32.mrb[0].mxu0
      %v6606 = vadd.f32 %v6537, %v6605
      %v6607 = vpop.f32.mrb[0].mxu0
      %v6608 = vpop.f32.mrb[0].mxu0
      %v6609 = vadd.f32 %v6537, %v6608
      %v6610 = vpop.f32.mrb[0].mxu0
      %6611 = vmatprep.mubr.bf16.mxu0 0
      %6612 = vmatmul.mubr.bf16.gmra.mrb[0].mxu0 %v6558
      %v6613 = vpop.f32.mrb[0].mxu0
      %v6614 = vadd.f32 %v6537, %v6613
      %v6615 = vpop.f32.mrb[0].mxu0
      %v6616 = vpop.f32.mrb[0].mxu0
      %v6617 = vadd.f32 %v6537, %v6616
      %v6618 = vpop.f32.mrb[0].mxu0
      %6619 = vmatprep.mubr.bf16.mxu0 0
      %6620 = vmatmul.mubr.bf16.gmra.mrb[0].mxu0 %v6561
      %v6621 = vpop.f32.mrb[0].mxu0
      %v6622 = vadd.f32 %v6537, %v6621
      %v6623 = vpop.f32.mrb[0].mxu0
      %v6624 = vpop.f32.mrb[0].mxu0
      %v6625 = vadd.f32 %v6537, %v6624
      %v6626 = vpop.f32.mrb[0].mxu0
      %6627 = vdwg.mxu0
      %v6628 = vmax.f32 %v6598, 0.0
      %v6629 = vmax.f32 %v6601, 0.0
      %v6630 = vmax.f32 %v6606, 0.0
      %v6631 = vmax.f32 %v6609, 0.0
      %v6632 = vmax.f32 %v6614, 0.0
      %v6633 = vmax.f32 %v6617, 0.0
      %v6634 = vmax.f32 %v6622, 0.0
      %v6635 = vmax.f32 %v6625, 0.0
      %s6636 = scalar_lea.vmem %s11, 32
      %v6637 = vld [vmem:[%s6636] sm:$0xf]
      %v6638 = vld [vmem:[%s6636 + $0x4] sm:$0xf]
      %v6639 = vld [vmem:[%s6636 + $0x8] sm:$0xf]
      %v6640 = vld [vmem:[%s6636 + $0xc] sm:$0xf]
      %v6641 = vld [vmem:[%s6636 + $0x10] sm:$0xf]
      %v6642 = vld [vmem:[%s6636 + $0x14] sm:$0xf]
      %v6643 = vld [vmem:[%s6636 + $0x18] sm:$0xf]
      %v6644 = vld [vmem:[%s6636 + $0x1c] sm:$0xf]
      %v6645 = vpack.c.bf16 %v6629, %v6628
      %v6646 = vpack.c.bf16 %v6631, %v6630
      %v6647 = vpack.c.bf16 %v6633, %v6632
      %v6648 = vpack.c.bf16 %v6635, %v6634
      %s6649 = scalar_lea.vmem %s12, 1
      %v6650 = vld [vmem:[%s6649] sm:$0x1]
      %v6652 = vlaneseq
      %v6653 = vshrl.u32 %v6652, 7
      %v6654 = vsub.s32 0, %v6653
      %v6655 = vrot.slane %v6650, %v6654
      %v6665 = vunpack.c.l.b16 %v6637
      %v6666 = vunpack.c.l.b16 %v6638
      %v6667 = vunpack.c.l.b16 %v6639
      %v6668 = vunpack.c.l.b16 %v6640
      %v6669 = vunpack.c.l.b16 %v6641
      %v6670 = vunpack.c.l.b16 %v6642
      %v6671 = vunpack.c.l.b16 %v6643
      %v6672 = vunpack.c.l.b16 %v6644
      %v6673 = vpack.c.b16 %v6666, %v6665
      %v6674 = vpack.c.b16 %v6668, %v6667
      %v6675 = vpack.c.b16 %v6670, %v6669
      %v6676 = vpack.c.b16 %v6672, %v6671
      %v6682 = vsel %vm3675, %v6645, 0
      %v6685 = vsel %vm3675, %v6646, 0
      %v6688 = vsel %vm3675, %v6647, 0
      %v6691 = vsel %vm3675, %v6648, 0
      %6693 = vmatprep.subr.bf16.mxu0 0
      %6694 = vmatpush1.bf16.msra.mxu0 %v6673
      %6695 = vmatprep.subr.bf16.mxu0 0
      %6696 = vmatpush1.bf16.msra.mxu0 %v6674
      %6697 = vmatprep.subr.bf16.mxu0 0
      %6698 = vmatpush1.bf16.msra.mxu0 %v6675
      %6699 = vmatprep.subr.bf16.mxu0 0
      %6700 = vmatpush1.bf16.msra.mxu0 %v6676
      %6701 = vmatprep.subr.bf16.mxu0 0
      %6702 = vmatpush1.bf16.msra.mxu0 0
      %6703 = vmatprep.subr.bf16.mxu0 0
      %6704 = vmatpush1.bf16.msra.mxu0 0
      %6705 = vmatprep.subr.bf16.mxu0 0
      %6706 = vmatpush1.bf16.msra.mxu0 0
      %6707 = vmatprep.subr.bf16.mxu0 0
      %6708 = vmatpush1.bf16.msra.mxu0 0
      %6709 = vmatprep.subr.bf16.mxu0 0
      %6710 = vmatpush1.bf16.msra.mxu0 0
      %6711 = vmatprep.subr.bf16.mxu0 0
      %6712 = vmatpush1.bf16.msra.mxu0 0
      %6713 = vmatprep.subr.bf16.mxu0 0
      %6714 = vmatpush1.bf16.msra.mxu0 0
      %6715 = vmatprep.subr.bf16.mxu0 0
      %6716 = vmatpush1.bf16.msra.mxu0 0
      %6717 = vmatprep.subr.bf16.mxu0 0
      %6718 = vmatpush1.bf16.msra.mxu0 0
      %6719 = vmatprep.subr.bf16.mxu0 0
      %6720 = vmatpush1.bf16.msra.mxu0 0
      %6721 = vmatprep.subr.bf16.mxu0 0
      %6722 = vmatpush1.bf16.msra.mxu0 0
      %6723 = vmatprep.subr.bf16.mxu0 0
      %6724 = vmatpush1.bf16.msra.mxu0 0
      %6725 = vmatprep.mubr.bf16.mxu0 0
      %6726 = vmatmul.mubr.bf16.gmra.mrb[0].mxu0 %v6682
      %v6727 = vpop.f32.mrb[0].mxu0
      %v6728 = vadd.f32 %v6655, %v6727
      %v6729 = vpop.f32.mrb[0].mxu0
      %v6730 = vpop.f32.mrb[0].mxu0
      %v6731 = vadd.f32 %v6655, %v6730
      %v6732 = vpop.f32.mrb[0].mxu0
      %6733 = vmatprep.mubr.bf16.mxu0 0
      %6734 = vmatmul.mubr.bf16.gmra.mrb[0].mxu0 %v6685
      %v6735 = vpop.f32.mrb[0].mxu0
      %v6736 = vadd.f32 %v6655, %v6735
      %v6737 = vpop.f32.mrb[0].mxu0
      %v6738 = vpop.f32.mrb[0].mxu0
      %v6739 = vadd.f32 %v6655, %v6738
      %v6740 = vpop.f32.mrb[0].mxu0
      %6741 = vmatprep.mubr.bf16.mxu0 0
      %6742 = vmatmul.mubr.bf16.gmra.mrb[0].mxu0 %v6688
      %v6743 = vpop.f32.mrb[0].mxu0
      %v6744 = vadd.f32 %v6655, %v6743
      %v6745 = vpop.f32.mrb[0].mxu0
      %v6746 = vpop.f32.mrb[0].mxu0
      %v6747 = vadd.f32 %v6655, %v6746
      %v6748 = vpop.f32.mrb[0].mxu0
      %6749 = vmatprep.mubr.bf16.mxu0 0
      %6750 = vmatmul.mubr.bf16.gmra.mrb[0].mxu0 %v6691
      %v6751 = vpop.f32.mrb[0].mxu0
      %v6752 = vadd.f32 %v6655, %v6751
      %v6753 = vpop.f32.mrb[0].mxu0
      %v6754 = vpop.f32.mrb[0].mxu0
      %v6755 = vadd.f32 %v6655, %v6754
      %v6756 = vpop.f32.mrb[0].mxu0
      %6757 = vdwg.mxu0
      %v6758 = vadd.f32 %v6514, %v6728
      %v6759 = vadd.f32 %v6515, %v6731
      %v6760 = vadd.f32 %v6516, %v6736
      %v6761 = vadd.f32 %v6517, %v6739
      %v6762 = vadd.f32 %v6518, %v6744
      %v6763 = vadd.f32 %v6519, %v6747
      %v6764 = vadd.f32 %v6520, %v6752
      %v6765 = vadd.f32 %v6521, %v6755
      %s6766 = scalar_lea.vmem %s13, 1
      %v6767 = vld [vmem:[%s6766] sm:$0x1]
      %s6768 = scalar_lea.vmem %s14, 1
      %v6769 = vld [vmem:[%s6768] sm:$0x1]
      %v6770 = vsel %vm922, %v6758, 0.0
      %6771 = vadd.xlane.f32.xlu0 %v6770
      %v6772 = vpop.xlane.xlu0 %6771
      %v6773 = vsel %vm922, %v6759, 0.0
      %6774 = vadd.xlane.f32.xlu0 %v6773
      %v6775 = vpop.xlane.xlu0 %6774
      %v6776 = vsel %vm922, %v6760, 0.0
      %6777 = vadd.xlane.f32.xlu0 %v6776
      %v6778 = vpop.xlane.xlu0 %6777
      %v6779 = vsel %vm922, %v6761, 0.0
      %6780 = vadd.xlane.f32.xlu0 %v6779
      %v6781 = vpop.xlane.xlu0 %6780
      %v6782 = vsel %vm922, %v6762, 0.0
      %6783 = vadd.xlane.f32.xlu0 %v6782
      %v6784 = vpop.xlane.xlu0 %6783
      %v6785 = vsel %vm922, %v6763, 0.0
      %6786 = vadd.xlane.f32.xlu0 %v6785
      %v6787 = vpop.xlane.xlu0 %6786
      %v6788 = vsel %vm922, %v6764, 0.0
      %6789 = vadd.xlane.f32.xlu0 %v6788
      %v6790 = vpop.xlane.xlu0 %6789
      %v6791 = vsel %vm922, %v6765, 0.0
      %6792 = vadd.xlane.f32.xlu0 %v6791
      %v6793 = vpop.xlane.xlu0 %6792
      %v6794 = vmul.f32 %v6772, %v3411
      %v6795 = vmul.f32 %v6775, %v3411
      %v6796 = vmul.f32 %v6778, %v3411
      %v6797 = vmul.f32 %v6781, %v3411
      %v6798 = vmul.f32 %v6784, %v3411
      %v6799 = vmul.f32 %v6787, %v3411
      %v6800 = vmul.f32 %v6790, %v3411
      %v6801 = vmul.f32 %v6793, %v3411
      %v6802 = vsub.f32 %v6758, %v6794
      %v6803 = vsub.f32 %v6759, %v6795
      %v6804 = vsub.f32 %v6760, %v6796
      %v6805 = vsub.f32 %v6761, %v6797
      %v6806 = vsub.f32 %v6762, %v6798
      %v6807 = vsub.f32 %v6763, %v6799
      %v6808 = vsub.f32 %v6764, %v6800
      %v6809 = vsub.f32 %v6765, %v6801
      %v6810 = vmul.f32 %v6802, %v6802
      %v6811 = vmul.f32 %v6803, %v6803
      %v6812 = vmul.f32 %v6804, %v6804
      %v6813 = vmul.f32 %v6805, %v6805
      %v6814 = vmul.f32 %v6806, %v6806
      %v6815 = vmul.f32 %v6807, %v6807
      %v6816 = vmul.f32 %v6808, %v6808
      %v6817 = vmul.f32 %v6809, %v6809
      %v6818 = vsel %vm922, %v6810, 0.0
      %6819 = vadd.xlane.f32.xlu0 %v6818
      %v6820 = vpop.xlane.xlu0 %6819
      %v6821 = vsel %vm922, %v6811, 0.0
      %6822 = vadd.xlane.f32.xlu0 %v6821
      %v6823 = vpop.xlane.xlu0 %6822
      %v6824 = vsel %vm922, %v6812, 0.0
      %6825 = vadd.xlane.f32.xlu0 %v6824
      %v6826 = vpop.xlane.xlu0 %6825
      %v6827 = vsel %vm922, %v6813, 0.0
      %6828 = vadd.xlane.f32.xlu0 %v6827
      %v6829 = vpop.xlane.xlu0 %6828
      %v6830 = vsel %vm922, %v6814, 0.0
      %6831 = vadd.xlane.f32.xlu0 %v6830
      %v6832 = vpop.xlane.xlu0 %6831
      %v6833 = vsel %vm922, %v6815, 0.0
      %6834 = vadd.xlane.f32.xlu0 %v6833
      %v6835 = vpop.xlane.xlu0 %6834
      %v6836 = vsel %vm922, %v6816, 0.0
      %6837 = vadd.xlane.f32.xlu0 %v6836
      %v6838 = vpop.xlane.xlu0 %6837
      %v6839 = vsel %vm922, %v6817, 0.0
      %6840 = vadd.xlane.f32.xlu0 %v6839
      %v6841 = vpop.xlane.xlu0 %6840
      %v6842 = vmul.f32 %v6820, %v3411
      %v6843 = vmul.f32 %v6823, %v3411
      %v6844 = vmul.f32 %v6826, %v3411
      %v6845 = vmul.f32 %v6829, %v3411
      %v6846 = vmul.f32 %v6832, %v3411
      %v6847 = vmul.f32 %v6835, %v3411
      %v6848 = vmul.f32 %v6838, %v3411
      %v6849 = vmul.f32 %v6841, %v3411
      %v6850 = vadd.f32 %v6842, 1e-05
      %v6851 = vadd.f32 %v6843, 1e-05
      %v6852 = vadd.f32 %v6844, 1e-05
      %v6853 = vadd.f32 %v6845, 1e-05
      %v6854 = vadd.f32 %v6846, 1e-05
      %v6855 = vadd.f32 %v6847, 1e-05
      %v6856 = vadd.f32 %v6848, 1e-05
      %v6857 = vadd.f32 %v6849, 1e-05
      %v6858 = vrsqrt.pop %v6850
      %v6859 = vrsqrt.pop %v6851
      %v6860 = vrsqrt.pop %v6852
      %v6861 = vrsqrt.pop %v6853
      %v6862 = vrsqrt.pop %v6854
      %v6863 = vrsqrt.pop %v6855
      %v6864 = vrsqrt.pop %v6856
      %v6865 = vrsqrt.pop %v6857
      %v6866 = vmul.f32 %v6802, %v6858
      %v6867 = vmul.f32 %v6803, %v6859
      %v6868 = vmul.f32 %v6804, %v6860
      %v6869 = vmul.f32 %v6805, %v6861
      %v6870 = vmul.f32 %v6806, %v6862
      %v6871 = vmul.f32 %v6807, %v6863
      %v6872 = vmul.f32 %v6808, %v6864
      %v6873 = vmul.f32 %v6809, %v6865
      %v6875 = vlaneseq
      %v6876 = vshrl.u32 %v6875, 7
      %v6877 = vsub.s32 0, %v6876
      %v6878 = vrot.slane %v6767, %v6877
      %v6880 = vmul.f32 %v6866, %v6878
      %v6881 = vmul.f32 %v6867, %v6878
      %v6882 = vmul.f32 %v6868, %v6878
      %v6883 = vmul.f32 %v6869, %v6878
      %v6884 = vmul.f32 %v6870, %v6878
      %v6885 = vmul.f32 %v6871, %v6878
      %v6886 = vmul.f32 %v6872, %v6878
      %v6887 = vmul.f32 %v6873, %v6878
      %v6889 = vlaneseq
      %v6890 = vshrl.u32 %v6889, 7
      %v6891 = vsub.s32 0, %v6890
      %v6892 = vrot.slane %v6769, %v6891
      %v6894 = vadd.f32 %v6880, %v6892
      %v6895 = vadd.f32 %v6881, %v6892
      %v6896 = vadd.f32 %v6882, %v6892
      %v6897 = vadd.f32 %v6883, %v6892
      %v6898 = vadd.f32 %v6884, %v6892
      %v6899 = vadd.f32 %v6885, %v6892
      %v6900 = vadd.f32 %v6886, %v6892
      %v6901 = vadd.f32 %v6887, %v6892
      %v6902 = vld [vmem:[%s15] sm:$0x1]
      %v6903 = vld [vmem:[%s16] sm:$0x1]
      %v6904 = vsel %vm922, %v6894, 0.0
      %6905 = vadd.xlane.f32.xlu0 %v6904
      %v6906 = vpop.xlane.xlu0 %6905
      %v6907 = vsel %vm922, %v6895, 0.0
      %6908 = vadd.xlane.f32.xlu0 %v6907
      %v6909 = vpop.xlane.xlu0 %6908
      %v6910 = vsel %vm922, %v6896, 0.0
      %6911 = vadd.xlane.f32.xlu0 %v6910
      %v6912 = vpop.xlane.xlu0 %6911
      %v6913 = vsel %vm922, %v6897, 0.0
      %6914 = vadd.xlane.f32.xlu0 %v6913
      %v6915 = vpop.xlane.xlu0 %6914
      %v6916 = vsel %vm922, %v6898, 0.0
      %6917 = vadd.xlane.f32.xlu0 %v6916
      %v6918 = vpop.xlane.xlu0 %6917
      %v6919 = vsel %vm922, %v6899, 0.0
      %6920 = vadd.xlane.f32.xlu0 %v6919
      %v6921 = vpop.xlane.xlu0 %6920
      %v6922 = vsel %vm922, %v6900, 0.0
      %6923 = vadd.xlane.f32.xlu0 %v6922
      %v6924 = vpop.xlane.xlu0 %6923
      %v6925 = vsel %vm922, %v6901, 0.0
      %6926 = vadd.xlane.f32.xlu0 %v6925
      %v6927 = vpop.xlane.xlu0 %6926
      %v6928 = vmul.f32 %v6906, %v3411
      %v6929 = vmul.f32 %v6909, %v3411
      %v6930 = vmul.f32 %v6912, %v3411
      %v6931 = vmul.f32 %v6915, %v3411
      %v6932 = vmul.f32 %v6918, %v3411
      %v6933 = vmul.f32 %v6921, %v3411
      %v6934 = vmul.f32 %v6924, %v3411
      %v6935 = vmul.f32 %v6927, %v3411
      %v6936 = vsub.f32 %v6894, %v6928
      %v6937 = vsub.f32 %v6895, %v6929
      %v6938 = vsub.f32 %v6896, %v6930
      %v6939 = vsub.f32 %v6897, %v6931
      %v6940 = vsub.f32 %v6898, %v6932
      %v6941 = vsub.f32 %v6899, %v6933
      %v6942 = vsub.f32 %v6900, %v6934
      %v6943 = vsub.f32 %v6901, %v6935
      %v6944 = vmul.f32 %v6936, %v6936
      %v6945 = vmul.f32 %v6937, %v6937
      %v6946 = vmul.f32 %v6938, %v6938
      %v6947 = vmul.f32 %v6939, %v6939
      %v6948 = vmul.f32 %v6940, %v6940
      %v6949 = vmul.f32 %v6941, %v6941
      %v6950 = vmul.f32 %v6942, %v6942
      %v6951 = vmul.f32 %v6943, %v6943
      %v6952 = vsel %vm922, %v6944, 0.0
      %6953 = vadd.xlane.f32.xlu0 %v6952
      %v6954 = vpop.xlane.xlu0 %6953
      %v6955 = vsel %vm922, %v6945, 0.0
      %6956 = vadd.xlane.f32.xlu0 %v6955
      %v6957 = vpop.xlane.xlu0 %6956
      %v6958 = vsel %vm922, %v6946, 0.0
      %6959 = vadd.xlane.f32.xlu0 %v6958
      %v6960 = vpop.xlane.xlu0 %6959
      %v6961 = vsel %vm922, %v6947, 0.0
      %6962 = vadd.xlane.f32.xlu0 %v6961
      %v6963 = vpop.xlane.xlu0 %6962
      %v6964 = vsel %vm922, %v6948, 0.0
      %6965 = vadd.xlane.f32.xlu0 %v6964
      %v6966 = vpop.xlane.xlu0 %6965
      %v6967 = vsel %vm922, %v6949, 0.0
      %6968 = vadd.xlane.f32.xlu0 %v6967
      %v6969 = vpop.xlane.xlu0 %6968
      %v6970 = vsel %vm922, %v6950, 0.0
      %6971 = vadd.xlane.f32.xlu0 %v6970
      %v6972 = vpop.xlane.xlu0 %6971
      %v6973 = vsel %vm922, %v6951, 0.0
      %6974 = vadd.xlane.f32.xlu0 %v6973
      %v6975 = vpop.xlane.xlu0 %6974
      %v6976 = vmul.f32 %v6954, %v3411
      %v6977 = vmul.f32 %v6957, %v3411
      %v6978 = vmul.f32 %v6960, %v3411
      %v6979 = vmul.f32 %v6963, %v3411
      %v6980 = vmul.f32 %v6966, %v3411
      %v6981 = vmul.f32 %v6969, %v3411
      %v6982 = vmul.f32 %v6972, %v3411
      %v6983 = vmul.f32 %v6975, %v3411
      %v6984 = vadd.f32 %v6976, 1e-05
      %v6985 = vadd.f32 %v6977, 1e-05
      %v6986 = vadd.f32 %v6978, 1e-05
      %v6987 = vadd.f32 %v6979, 1e-05
      %v6988 = vadd.f32 %v6980, 1e-05
      %v6989 = vadd.f32 %v6981, 1e-05
      %v6990 = vadd.f32 %v6982, 1e-05
      %v6991 = vadd.f32 %v6983, 1e-05
      %v6992 = vrsqrt.pop %v6984
      %v6993 = vrsqrt.pop %v6985
      %v6994 = vrsqrt.pop %v6986
      %v6995 = vrsqrt.pop %v6987
      %v6996 = vrsqrt.pop %v6988
      %v6997 = vrsqrt.pop %v6989
      %v6998 = vrsqrt.pop %v6990
      %v6999 = vrsqrt.pop %v6991
      %v7000 = vmul.f32 %v6936, %v6992
      %v7001 = vmul.f32 %v6937, %v6993
      %v7002 = vmul.f32 %v6938, %v6994
      %v7003 = vmul.f32 %v6939, %v6995
      %v7004 = vmul.f32 %v6940, %v6996
      %v7005 = vmul.f32 %v6941, %v6997
      %v7006 = vmul.f32 %v6942, %v6998
      %v7007 = vmul.f32 %v6943, %v6999
      %v7009 = vlaneseq
      %v7010 = vshrl.u32 %v7009, 7
      %v7011 = vsub.s32 0, %v7010
      %v7012 = vrot.slane %v6902, %v7011
      %v7014 = vmul.f32 %v7000, %v7012
      %v7015 = vmul.f32 %v7001, %v7012
      %v7016 = vmul.f32 %v7002, %v7012
      %v7017 = vmul.f32 %v7003, %v7012
      %v7018 = vmul.f32 %v7004, %v7012
      %v7019 = vmul.f32 %v7005, %v7012
      %v7020 = vmul.f32 %v7006, %v7012
      %v7021 = vmul.f32 %v7007, %v7012
      %v7023 = vlaneseq
      %v7024 = vshrl.u32 %v7023, 7
      %v7025 = vsub.s32 0, %v7024
      %v7026 = vrot.slane %v6903, %v7025
      %v7028 = vadd.f32 %v7014, %v7026
      %v7029 = vadd.f32 %v7015, %v7026
      %v7030 = vadd.f32 %v7016, %v7026
      %v7031 = vadd.f32 %v7017, %v7026
      %v7032 = vadd.f32 %v7018, %v7026
      %v7033 = vadd.f32 %v7019, %v7026
      %v7034 = vadd.f32 %v7020, %v7026
      %v7035 = vadd.f32 %v7021, %v7026
      %v7036 = vld [vmem:[%s17] sm:$0xf]
      %v7037 = vld [vmem:[%s17 + $0x4] sm:$0xf]
      %v7038 = vld [vmem:[%s17 + $0x8] sm:$0xf]
      %v7039 = vld [vmem:[%s17 + $0xc] sm:$0xf]
      %v7040 = vpack.c.bf16 %v7029, %v7028
      %v7041 = vpack.c.bf16 %v7031, %v7030
      %v7042 = vpack.c.bf16 %v7033, %v7032
      %v7043 = vpack.c.bf16 %v7035, %v7034
      %v7044 = vld [vmem:[%s18] sm:$0x1]
      %v7046 = vlaneseq
      %v7047 = vshrl.u32 %v7046, 7
      %v7048 = vsub.s32 0, %v7047
      %v7049 = vrot.slane %v7044, %v7048
      %v7055 = vunpack.c.l.b16 %v7036
      %v7056 = vunpack.c.l.b16 %v7037
      %v7057 = vunpack.c.l.b16 %v7038
      %v7058 = vunpack.c.l.b16 %v7039
      %v7059 = vpack.c.b16 %v7056, %v7055
      %v7060 = vpack.c.b16 %v7058, %v7057
      %v7064 = vsel %vm922, %v7040, 0
      %v7067 = vsel %vm922, %v7041, 0
      %v7070 = vsel %vm922, %v7042, 0
      %v7073 = vsel %vm922, %v7043, 0
      %7075 = vmatprep.subr.bf16.mxu0 0
      %7076 = vmatpush1.bf16.msra.mxu0 %v7059
      %7077 = vmatprep.subr.bf16.mxu0 0
      %7078 = vmatpush1.bf16.msra.mxu0 %v7060
      %7079 = vmatprep.subr.bf16.mxu0 0
      %7080 = vmatpush1.bf16.msra.mxu0 0
      %7081 = vmatprep.subr.bf16.mxu0 0
      %7082 = vmatpush1.bf16.msra.mxu0 0
      %7083 = vmatprep.subr.bf16.mxu0 0
      %7084 = vmatpush1.bf16.msra.mxu0 0
      %7085 = vmatprep.subr.bf16.mxu0 0
      %7086 = vmatpush1.bf16.msra.mxu0 0
      %7087 = vmatprep.subr.bf16.mxu0 0
      %7088 = vmatpush1.bf16.msra.mxu0 0
      %7089 = vmatprep.subr.bf16.mxu0 0
      %7090 = vmatpush1.bf16.msra.mxu0 0
      %7091 = vmatprep.subr.bf16.mxu0 0
      %7092 = vmatpush1.bf16.msra.mxu0 0
      %7093 = vmatprep.subr.bf16.mxu0 0
      %7094 = vmatpush1.bf16.msra.mxu0 0
      %7095 = vmatprep.subr.bf16.mxu0 0
      %7096 = vmatpush1.bf16.msra.mxu0 0
      %7097 = vmatprep.subr.bf16.mxu0 0
      %7098 = vmatpush1.bf16.msra.mxu0 0
      %7099 = vmatprep.subr.bf16.mxu0 0
      %7100 = vmatpush1.bf16.msra.mxu0 0
      %7101 = vmatprep.subr.bf16.mxu0 0
      %7102 = vmatpush1.bf16.msra.mxu0 0
      %7103 = vmatprep.subr.bf16.mxu0 0
      %7104 = vmatpush1.bf16.msra.mxu0 0
      %7105 = vmatprep.subr.bf16.mxu0 0
      %7106 = vmatpush1.bf16.msra.mxu0 0
      %7107 = vmatprep.mubr.bf16.mxu0 0
      %7108 = vmatmul.mubr.bf16.gmra.mrb[0].mxu0 %v7064
      %v7109 = vpop.f32.mrb[0].mxu0
      %v7110 = vadd.f32 %v7049, %v7109
      %v7111 = vpop.f32.mrb[0].mxu0
      %v7112 = vpop.f32.mrb[0].mxu0
      %v7113 = vadd.f32 %v7049, %v7112
      %v7114 = vpop.f32.mrb[0].mxu0
      %7115 = vmatprep.mubr.bf16.mxu0 0
      %7116 = vmatmul.mubr.bf16.gmra.mrb[0].mxu0 %v7067
      %v7117 = vpop.f32.mrb[0].mxu0
      %v7118 = vadd.f32 %v7049, %v7117
      %v7119 = vpop.f32.mrb[0].mxu0
      %v7120 = vpop.f32.mrb[0].mxu0
      %v7121 = vadd.f32 %v7049, %v7120
      %v7122 = vpop.f32.mrb[0].mxu0
      %7123 = vmatprep.mubr.bf16.mxu0 0
      %7124 = vmatmul.mubr.bf16.gmra.mrb[0].mxu0 %v7070
      %v7125 = vpop.f32.mrb[0].mxu0
      %v7126 = vadd.f32 %v7049, %v7125
      %v7127 = vpop.f32.mrb[0].mxu0
      %v7128 = vpop.f32.mrb[0].mxu0
      %v7129 = vadd.f32 %v7049, %v7128
      %v7130 = vpop.f32.mrb[0].mxu0
      %7131 = vmatprep.mubr.bf16.mxu0 0
      %7132 = vmatmul.mubr.bf16.gmra.mrb[0].mxu0 %v7073
      %v7133 = vpop.f32.mrb[0].mxu0
      %v7134 = vadd.f32 %v7049, %v7133
      %v7135 = vpop.f32.mrb[0].mxu0
      %v7136 = vpop.f32.mrb[0].mxu0
      %v7137 = vadd.f32 %v7049, %v7136
      %v7138 = vpop.f32.mrb[0].mxu0
      %7139 = vdwg.mxu0
      %v7140 = vpack.c.bf16 %v7113, %v7110
      %v7141 = vpack.c.bf16 %v7121, %v7118
      %v7142 = vpack.c.bf16 %v7129, %v7126
      %v7143 = vpack.c.bf16 %v7137, %v7134
      %v7144 = vld [vmem:[%s19] sm:$0x7]
      %v7145 = vld [vmem:[%s19 + $0x4] sm:$0x7]
      %v7146 = vld [vmem:[%s19 + $0x8] sm:$0x7]
      %v7147 = vld [vmem:[%s19 + $0xc] sm:$0x7]
      %v7148 = vld [vmem:[%s20] sm:$0x3f]
      %7150 = vset.pattern.permute.xlu0 0
      %7151 = vperm.xlu0 %7150, %v7148
      %v7152 = vpop.permute.xlu0 %7151
      %v7155 = vsel %vm672, %v7144, 0
      %7157 = vmatprep.subr.bf16.mxu0 0
      %7158 = vmatpush1.bf16.msra.mxu0 %v7140
      %7159 = vmatprep.subr.bf16.mxu0 0
      %7160 = vmatpush1.bf16.msra.mxu0 0
      %7161 = vmatprep.subr.bf16.mxu0 0
      %7162 = vmatpush1.bf16.msra.mxu0 0
      %7163 = vmatprep.subr.bf16.mxu0 0
      %7164 = vmatpush1.bf16.msra.mxu0 0
      %7165 = vmatprep.subr.bf16.mxu0 0
      %7166 = vmatpush1.bf16.msra.mxu0 0
      %7167 = vmatprep.subr.bf16.mxu0 0
      %7168 = vmatpush1.bf16.msra.mxu0 0
      %7169 = vmatprep.subr.bf16.mxu0 0
      %7170 = vmatpush1.bf16.msra.mxu0 0
      %7171 = vmatprep.subr.bf16.mxu0 0
      %7172 = vmatpush1.bf16.msra.mxu0 0
      %7173 = vmatprep.subr.bf16.mxu0 0
      %7174 = vmatpush1.bf16.msra.mxu0 0
      %7175 = vmatprep.subr.bf16.mxu0 0
      %7176 = vmatpush1.bf16.msra.mxu0 0
      %7177 = vmatprep.subr.bf16.mxu0 0
      %7178 = vmatpush1.bf16.msra.mxu0 0
      %7179 = vmatprep.subr.bf16.mxu0 0
      %7180 = vmatpush1.bf16.msra.mxu0 0
      %7181 = vmatprep.subr.bf16.mxu0 0
      %7182 = vmatpush1.bf16.msra.mxu0 0
      %7183 = vmatprep.subr.bf16.mxu0 0
      %7184 = vmatpush1.bf16.msra.mxu0 0
      %7185 = vmatprep.subr.bf16.mxu0 0
      %7186 = vmatpush1.bf16.msra.mxu0 0
      %7187 = vmatprep.subr.bf16.mxu0 0
      %7188 = vmatpush1.bf16.msra.mxu0 0
      %7189 = vmatprep.mubr.bf16.mxu0 0
      %7190 = vmatmul.mubr.bf16.gmra.mrb[0].mxu0 %v7155
      %v7191 = vpop.f32.mrb[0].mxu0
      %v7192 = vadd.f32 %v7152, %v7191
      %v7193 = vpop.f32.mrb[0].mxu0
      %v7194 = vpop.f32.mrb[0].mxu0
      %v7195 = vpop.f32.mrb[0].mxu0
      %7196 = vdwg.mxu0
      %v7198 = vsel %vm672, %v7145, 0
      %7200 = vmatprep.subr.bf16.mxu0 0
      %7201 = vmatpush1.bf16.msra.mxu0 %v7141
      %7202 = vmatprep.subr.bf16.mxu0 0
      %7203 = vmatpush1.bf16.msra.mxu0 0
      %7204 = vmatprep.subr.bf16.mxu0 0
      %7205 = vmatpush1.bf16.msra.mxu0 0
      %7206 = vmatprep.subr.bf16.mxu0 0
      %7207 = vmatpush1.bf16.msra.mxu0 0
      %7208 = vmatprep.subr.bf16.mxu0 0
      %7209 = vmatpush1.bf16.msra.mxu0 0
      %7210 = vmatprep.subr.bf16.mxu0 0
      %7211 = vmatpush1.bf16.msra.mxu0 0
      %7212 = vmatprep.subr.bf16.mxu0 0
      %7213 = vmatpush1.bf16.msra.mxu0 0
      %7214 = vmatprep.subr.bf16.mxu0 0
      %7215 = vmatpush1.bf16.msra.mxu0 0
      %7216 = vmatprep.subr.bf16.mxu0 0
      %7217 = vmatpush1.bf16.msra.mxu0 0
      %7218 = vmatprep.subr.bf16.mxu0 0
      %7219 = vmatpush1.bf16.msra.mxu0 0
      %7220 = vmatprep.subr.bf16.mxu0 0
      %7221 = vmatpush1.bf16.msra.mxu0 0
      %7222 = vmatprep.subr.bf16.mxu0 0
      %7223 = vmatpush1.bf16.msra.mxu0 0
      %7224 = vmatprep.subr.bf16.mxu0 0
      %7225 = vmatpush1.bf16.msra.mxu0 0
      %7226 = vmatprep.subr.bf16.mxu0 0
      %7227 = vmatpush1.bf16.msra.mxu0 0
      %7228 = vmatprep.subr.bf16.mxu0 0
      %7229 = vmatpush1.bf16.msra.mxu0 0
      %7230 = vmatprep.subr.bf16.mxu0 0
      %7231 = vmatpush1.bf16.msra.mxu0 0
      %7232 = vmatprep.mubr.bf16.mxu0 0
      %7233 = vmatmul.mubr.bf16.gmra.mrb[0].mxu0 %v7198
      %v7234 = vpop.f32.mrb[0].mxu0
      %v7235 = vadd.f32 %v7152, %v7234
      %v7236 = vpop.f32.mrb[0].mxu0
      %v7237 = vpop.f32.mrb[0].mxu0
      %v7238 = vpop.f32.mrb[0].mxu0
      %7239 = vdwg.mxu0
      %v7241 = vsel %vm672, %v7146, 0
      %7243 = vmatprep.subr.bf16.mxu0 0
      %7244 = vmatpush1.bf16.msra.mxu0 %v7142
      %7245 = vmatprep.subr.bf16.mxu0 0
      %7246 = vmatpush1.bf16.msra.mxu0 0
      %7247 = vmatprep.subr.bf16.mxu0 0
      %7248 = vmatpush1.bf16.msra.mxu0 0
      %7249 = vmatprep.subr.bf16.mxu0 0
      %7250 = vmatpush1.bf16.msra.mxu0 0
      %7251 = vmatprep.subr.bf16.mxu0 0
      %7252 = vmatpush1.bf16.msra.mxu0 0
      %7253 = vmatprep.subr.bf16.mxu0 0
      %7254 = vmatpush1.bf16.msra.mxu0 0
      %7255 = vmatprep.subr.bf16.mxu0 0
      %7256 = vmatpush1.bf16.msra.mxu0 0
      %7257 = vmatprep.subr.bf16.mxu0 0
      %7258 = vmatpush1.bf16.msra.mxu0 0
      %7259 = vmatprep.subr.bf16.mxu0 0
      %7260 = vmatpush1.bf16.msra.mxu0 0
      %7261 = vmatprep.subr.bf16.mxu0 0
      %7262 = vmatpush1.bf16.msra.mxu0 0
      %7263 = vmatprep.subr.bf16.mxu0 0
      %7264 = vmatpush1.bf16.msra.mxu0 0
      %7265 = vmatprep.subr.bf16.mxu0 0
      %7266 = vmatpush1.bf16.msra.mxu0 0
      %7267 = vmatprep.subr.bf16.mxu0 0
      %7268 = vmatpush1.bf16.msra.mxu0 0
      %7269 = vmatprep.subr.bf16.mxu0 0
      %7270 = vmatpush1.bf16.msra.mxu0 0
      %7271 = vmatprep.subr.bf16.mxu0 0
      %7272 = vmatpush1.bf16.msra.mxu0 0
      %7273 = vmatprep.subr.bf16.mxu0 0
      %7274 = vmatpush1.bf16.msra.mxu0 0
      %7275 = vmatprep.mubr.bf16.mxu0 0
      %7276 = vmatmul.mubr.bf16.gmra.mrb[0].mxu0 %v7241
      %v7277 = vpop.f32.mrb[0].mxu0
      %v7278 = vadd.f32 %v7152, %v7277
      %v7279 = vpop.f32.mrb[0].mxu0
      %v7280 = vpop.f32.mrb[0].mxu0
      %v7281 = vpop.f32.mrb[0].mxu0
      %7282 = vdwg.mxu0
      %v7284 = vsel %vm672, %v7147, 0
      %7286 = vmatprep.subr.bf16.mxu0 0
      %7287 = vmatpush1.bf16.msra.mxu0 %v7143
      %7288 = vmatprep.subr.bf16.mxu0 0
      %7289 = vmatpush1.bf16.msra.mxu0 0
      %7290 = vmatprep.subr.bf16.mxu0 0
      %7291 = vmatpush1.bf16.msra.mxu0 0
      %7292 = vmatprep.subr.bf16.mxu0 0
      %7293 = vmatpush1.bf16.msra.mxu0 0
      %7294 = vmatprep.subr.bf16.mxu0 0
      %7295 = vmatpush1.bf16.msra.mxu0 0
      %7296 = vmatprep.subr.bf16.mxu0 0
      %7297 = vmatpush1.bf16.msra.mxu0 0
      %7298 = vmatprep.subr.bf16.mxu0 0
      %7299 = vmatpush1.bf16.msra.mxu0 0
      %7300 = vmatprep.subr.bf16.mxu0 0
      %7301 = vmatpush1.bf16.msra.mxu0 0
      %7302 = vmatprep.subr.bf16.mxu0 0
      %7303 = vmatpush1.bf16.msra.mxu0 0
      %7304 = vmatprep.subr.bf16.mxu0 0
      %7305 = vmatpush1.bf16.msra.mxu0 0
      %7306 = vmatprep.subr.bf16.mxu0 0
      %7307 = vmatpush1.bf16.msra.mxu0 0
      %7308 = vmatprep.subr.bf16.mxu0 0
      %7309 = vmatpush1.bf16.msra.mxu0 0
      %7310 = vmatprep.subr.bf16.mxu0 0
      %7311 = vmatpush1.bf16.msra.mxu0 0
      %7312 = vmatprep.subr.bf16.mxu0 0
      %7313 = vmatpush1.bf16.msra.mxu0 0
      %7314 = vmatprep.subr.bf16.mxu0 0
      %7315 = vmatpush1.bf16.msra.mxu0 0
      %7316 = vmatprep.subr.bf16.mxu0 0
      %7317 = vmatpush1.bf16.msra.mxu0 0
      %7318 = vmatprep.mubr.bf16.mxu0 0
      %7319 = vmatmul.mubr.bf16.gmra.mrb[0].mxu0 %v7284
      %v7320 = vpop.f32.mrb[0].mxu0
      %v7321 = vadd.f32 %v7152, %v7320
      %v7322 = vpop.f32.mrb[0].mxu0
      %v7323 = vpop.f32.mrb[0].mxu0
      %v7324 = vpop.f32.mrb[0].mxu0
      %7325 = vdwg.mxu0
      %vm7326 = vcmask 128000
      %7327 = vst.msk [vmem:[%s661] sm:$0x3f] %vm7326, %v7192
      %7328 = vst.msk [vmem:[%s661 + $0x8] sm:$0x3f] %vm7326, %v7235
      %7329 = vst.msk [vmem:[%s661 + $0x10] sm:$0x3f] %vm7326, %v7278
      %7330 = vst.msk [vmem:[%s661 + $0x18] sm:$0x3f] %vm7326, %v7321
      %s7331 = smul.u32 4, %s32
      %p7332 = scmp.lt.s32.totalorder %s7331, 7
      %s7333 = scalar_select %p7332, %s7331, 7
      %s7334 = smul.addr %s7333, 8
      %s7335 = scalar_lea.vmem %s21, %s7334
      // Predicated region
      $region105: #{forward.1} parent=103 // pred_check
        %p7336 = pneg %p496
      $region106: #{forward.1} parent=103 // pred_check_branch
        %7338 = sbr.rel (%p7336) target = $region108
      $region107: #{forward.1} parent=103 // pred_region
        %s7339 = smul.u32 4, %s32
      $region108: #{forward.1} parent=103 // pred_fallthru
        _
    $region104: #{forward.1} parent=5 // pred_fallthru
      _
    %p7340 = scmp.le.s32.totalorder 2, %s27
    // Predicated region
    $region109: #{forward.1} parent=5 // pred_check
      %p7341 = pneg %p7340
    $region110: #{forward.1} parent=5 // pred_check_branch
      %7343 = sbr.rel (%p7341) target = $region112
    $region111: #{forward.1} parent=5 // pred_region
      %s7344 = ssub.s32 %s27, 2
      // Predicated region
      $region113: #{forward.1} parent=111 // pred_check
        %p7345 = pneg %p502
      $region114: #{forward.1} parent=111 // pred_check_branch
        %7347 = sbr.rel (%p7345) target = $region116
      $region115: #{forward.1} parent=111 // pred_region
        %s7348 = smul.u32 4, %s33
        %p7349 = scmp.lt.s32.totalorder %s7348, 7
        %s7350 = scalar_select %p7349, %s7348, 7
        %s7351 = smul.addr %s7350, 8
        %s7352 = scalar_lea.vmem %s21, %s7351
      $region116: #{forward.1} parent=111 // pred_fallthru
        _
    $region112: #{forward.1} parent=5 // pred_fallthru
      _
  $region6: #{forward.1} parent=0 // loop_footer
    %s31 = sadd.s32 1, %s27
  $region7: #{forward.1} parent=0 // loop_footer_branch
    %26 = sbr.rel target = $region3
  $region8: #{forward.1} parent=0 // loop_exit
    _

</llo_original>
